<compile_context>
chip_gen: v5e
topology: v5e:2x2
jax: 0.10.0
libtpu: 0.0.40
codegen_flags: <defaults>
</compile_context>

<pallas_src>
import functools

import jax
import jax.numpy as jnp
from jax import lax
from jax.experimental import pallas as pl
from jax.experimental.pallas import tpu as pltpu


def _conv_axis_sizes(dim, stride):
    """(out, q, padded) extents along one spatial axis for a 3x3 / pad=1 conv.

    `padded = stride * q` is the zero-padded extent (covers the 1-pixel conv padding
    plus space-to-depth rounding); `q` is the per-phase extent after the split.
    """
    out = (dim - 1) // stride + 1
    need = max(dim + 1, stride * (out - 1) + 3)   # left pad + data, and the last tap
    q = -(-need // stride)                        # ceil division
    return out, q, stride * q


def _conv2_fused_kernel(x_ref, w1_ref, b1_ref, a1_ref, w2_ref, b2_ref, a2_ref,
                        o_ref, h_ref, *, stride, Ho, Wo, Cin, Cout):
    """Fused conv3x3(stride)+PReLU -> conv3x3(1)+PReLU for one batch element.

    x_ref : (1, s, s, Hq, Cin, Wq) bf16   space-to-depth, zero-padded input
    w1_ref: (9, Cout, Cin)         bf16   conv1 taps, tap index = kh*3 + kw
    w2_ref: (9, Cout, Cout)        bf16   conv2 taps
    b*_ref/a*_ref: (Cout, 1)       f32    biases / PReLU slopes (lane-broadcast)
    o_ref : (1, Ho, Cout, Wo)      f32    per-image output (W in the lane dim)
    h_ref : (Ho+2, Cout, Wo+2)     bf16   VMEM scratch: conv1 activation + zero halo
    """
    s = stride

    # Zero once: the untouched 1-pixel border provides conv2's padding=1.
    h_ref[...] = jnp.zeros_like(h_ref)

    # ---- stage 1: 3x3 conv (stride s) + PReLU; rows stay in VMEM ------------------
    for i in range(Ho):
        acc = jnp.zeros((Cout, Wo), jnp.float32)
        for kh in range(3):
            for kw in range(3):
                # Contiguous static window of the (kh%s, kw%s) space-to-depth phase.
                tap = x_ref[0, kh % s, kw % s, kh // s + i, :,
                            kw // s:kw // s + Wo]                  # (Cin, Wo) bf16
                acc = acc + jnp.dot(w1_ref[kh * 3 + kw, :, :], tap,
                                    preferred_element_type=jnp.float32)
        acc = acc + b1_ref[...]
        acc = jnp.where(acc >= 0.0, acc, a1_ref[...] * acc)        # PReLU (per chan)
        h_ref[1 + i, :, 1:1 + Wo] = acc.astype(h_ref.dtype)

    # ---- stage 2: 3x3 conv (stride 1) + PReLU over the VMEM scratch ---------------
    for i in range(Ho):
        acc = jnp.zeros((Cout, Wo), jnp.float32)
        for kh in range(3):
            for kw in range(3):
                tap = h_ref[kh + i, :, kw:kw + Wo]                 # (Cout, Wo) bf16
                acc = acc + jnp.dot(w2_ref[kh * 3 + kw, :, :], tap,
                                    preferred_element_type=jnp.float32)
        acc = acc + b2_ref[...]
        acc = jnp.where(acc >= 0.0, acc, a2_ref[...] * acc)        # PReLU (per chan)
        o_ref[0, i, :, :] = acc.astype(o_ref.dtype)


def conv2_pallas(x_nchw, params, stride=2):
    """Conv2.forward as one fused Pallas kernel; input/output are NCHW like PyTorch."""
    N, Cin, H, W = x_nchw.shape
    Cout = params["w1"].shape[0]
    s = stride
    Ho, Hq, HP = _conv_axis_sizes(H, s)
    Wo, Wq, WP = _conv_axis_sizes(W, s)

    # NCHW -> (N, H, Cin, W): keep the (large) W axis as the lane dimension.
    xr = jnp.transpose(x_nchw, (0, 2, 1, 3))
    xr = jnp.pad(xr, ((0, 0), (1, HP - H - 1), (0, 0), (1, WP - W - 1)))
    # 1x space-to-depth (factor = stride): phase (pr, pc), row q, col r holds the
    # padded pixel (s*q + pr, s*r + pc).  Every conv1 tap row then becomes a
    # contiguous static window in-kernel.
    xs2d = xr.reshape(N, Hq, s, Cin, Wq, s).transpose(0, 2, 5, 1, 3, 4)
    xs2d = xs2d.astype(jnp.bfloat16)                    # (N, s, s, Hq, Cin, Wq)

    # OIHW -> (kh*3+kw, Cout, Cin): channel-first per-tap matrices for the row dots.
    w1 = jnp.transpose(params["w1"], (2, 3, 0, 1)).reshape(9, Cout, Cin)
    w2 = jnp.transpose(params["w2"], (2, 3, 0, 1)).reshape(9, Cout, Cout)
    w1 = w1.astype(jnp.bfloat16)
    w2 = w2.astype(jnp.bfloat16)
    b1 = params["b1"].reshape(Cout, 1).astype(jnp.float32)
    a1 = params["a1"].reshape(Cout, 1).astype(jnp.float32)
    b2 = params["b2"].reshape(Cout, 1).astype(jnp.float32)
    a2 = params["a2"].reshape(Cout, 1).astype(jnp.float32)

    kernel = functools.partial(_conv2_fused_kernel, stride=s, Ho=Ho, Wo=Wo,
                               Cin=Cin, Cout=Cout)

    out = pl.pallas_call(
        kernel,
        out_shape=jax.ShapeDtypeStruct((N, Ho, Cout, Wo), jnp.float32),
        grid_spec=pltpu.PrefetchScalarGridSpec(
            num_scalar_prefetch=0,
            grid=(N,),                                   # one image per grid step
            in_specs=[
                pl.BlockSpec((1, s, s, Hq, Cin, Wq),
                             lambda n: (n, 0, 0, 0, 0, 0)),      # streamed activations
                pl.BlockSpec((9, Cout, Cin), lambda n: (0, 0, 0)),   # conv1 weights
                pl.BlockSpec((Cout, 1), lambda n: (0, 0)),           # conv1 bias
                pl.BlockSpec((Cout, 1), lambda n: (0, 0)),           # conv1 PReLU slope
                pl.BlockSpec((9, Cout, Cout), lambda n: (0, 0, 0)),  # conv2 weights
                pl.BlockSpec((Cout, 1), lambda n: (0, 0)),           # conv2 bias
                pl.BlockSpec((Cout, 1), lambda n: (0, 0)),           # conv2 PReLU slope
            ],
            out_specs=pl.BlockSpec((1, Ho, Cout, Wo), lambda n: (n, 0, 0, 0)),
            scratch_shapes=[pltpu.VMEM((Ho + 2, Cout, Wo + 2), jnp.bfloat16)],
        ),
        compiler_params=pltpu.CompilerParams(
            dimension_semantics=("parallel",),           # megacore-shardable on v7x
            vmem_limit_bytes=32 * 1024 * 1024,
        ),
    )(xs2d, w1, b1, a1, w2, b2, a2)

    # (N, Ho, Cout, Wo) -> (N, Cout, Ho, Wo)  (NCHW, like the PyTorch module)
    return jnp.transpose(out, (0, 2, 1, 3))


def init_conv2_params(key, in_planes, out_planes):
    """Deterministic synthetic parameters matching nn.Conv2d/nn.PReLU shapes."""
    k1, k2, k3, k4 = jax.random.split(key, 4)
    return {
        "w1": 0.1 * jax.random.normal(k1, (out_planes, in_planes, 3, 3), jnp.float32),
        "b1": 0.1 * jax.random.normal(k2, (out_planes,), jnp.float32),
        "a1": jnp.full((out_planes,), 0.25, jnp.float32),   # PReLU default init
        "w2": 0.1 * jax.random.normal(k3, (out_planes, out_planes, 3, 3), jnp.float32),
        "b2": 0.1 * jax.random.normal(k4, (out_planes,), jnp.float32),
        "a2": jnp.full((out_planes,), 0.25, jnp.float32),
    }


@functools.partial(jax.jit, static_argnames=("stride",))
def conv2_forward(x_nchw, params, stride=2):
    """Conv2.forward: conv1(3x3, stride) + PReLU, then conv2(3x3, stride 1) + PReLU."""
    return conv2_pallas(x_nchw, params, stride=stride)


def _reference_forward(x, params, stride=2, quantize_bf16=False):
    """Plain-JAX reference (lax conv). quantize_bf16=True rounds the GEMM operands the
    same way the kernel does, giving a tight implementation check."""
    def q(v):
        return v.astype(jnp.bfloat16).astype(jnp.float32) if quantize_bf16 else v

    def block(x, w, b, a, s):
        y = lax.conv_general_dilated(
            q(x), q(w), window_strides=(s, s), padding=((1, 1), (1, 1)),
            dimension_numbers=("NCHW", "OIHW", "NCHW"),
            precision=lax.Precision.HIGHEST)
        y = y + b[None, :, None, None]
        return jnp.where(y >= 0, y, a[None, :, None, None] * y)

    y = block(x, params["w1"], params["b1"], params["a1"], stride)
    y = block(y, params["w2"], params["b2"], params["a2"], 1)
    return y


if __name__ == "__main__":
    key = jax.random.PRNGKey(0)
    kx, kp = jax.random.split(key)

    N, Cin, H, W = 2, 4, 16, 16
    Cout = 8

    x = jax.random.normal(kx, (N, Cin, H, W), jnp.float32)
    params = init_conv2_params(kp, Cin, Cout)

    out = conv2_forward(x, params, stride=2)
    out = jax.block_until_ready(out)

    assert out.shape == (N, Cout, H // 2, W // 2), out.shape

    # Tight check: reference fed the same bf16-rounded GEMM operands (isolates kernel
    # correctness from the deliberate bf16 MXU cast).
    ref_q = _reference_forward(x, params, stride=2, quantize_bf16=True)
    assert jnp.allclose(out, ref_q, atol=5e-3, rtol=5e-3), "mismatch vs bf16-rounded ref"

    # Loose check vs exact f32 module semantics (bf16 operand rounding error budget).
    ref = _reference_forward(x, params, stride=2, quantize_bf16=False)
    assert jnp.allclose(out, ref, atol=1e-1, rtol=1e-1), "mismatch vs f32 reference"

    print("KERNEL_OK")
</pallas_src>

<mosaic_0001>
module attributes {stable_mosaic.version = 11 : i64} {
  func.func @_conv2_fused_kernel(%arg0: i32, %arg1: memref<1x2x2x9x4x9xbf16, #tpu.memory_space<vmem>>, %arg2: memref<9x8x4xbf16, #tpu.memory_space<vmem>>, %arg3: memref<8x1xf32, #tpu.memory_space<vmem>>, %arg4: memref<8x1xf32, #tpu.memory_space<vmem>>, %arg5: memref<9x8x8xbf16, #tpu.memory_space<vmem>>, %arg6: memref<8x1xf32, #tpu.memory_space<vmem>>, %arg7: memref<8x1xf32, #tpu.memory_space<vmem>>, %arg8: memref<1x8x8x8xf32, #tpu.memory_space<vmem>>, %arg9: memref<10x8x10xbf16, #tpu.memory_space<vmem>>) attributes {dimension_semantics = [#tpu.dimension_semantics<parallel>], iteration_bounds = array<i64: 2>, scalar_prefetch = 0 : i64, scratch_operands = 1 : i64, tpu.core_type = #tpu.core_type<tc>, window_params = [{transform_indices = @transform_0, window_bounds = array<i64: 1, 2, 2, 9, 4, 9>}, {pipeline_mode = #tpu.pipeline_mode<synchronous>, transform_indices = @transform_1, window_bounds = array<i64: 9, 8, 4>}, {pipeline_mode = #tpu.pipeline_mode<synchronous>, transform_indices = @transform_2, window_bounds = array<i64: 8, 1>}, {pipeline_mode = #tpu.pipeline_mode<synchronous>, transform_indices = @transform_3, window_bounds = array<i64: 8, 1>}, {pipeline_mode = #tpu.pipeline_mode<synchronous>, transform_indices = @transform_4, window_bounds = array<i64: 9, 8, 8>}, {pipeline_mode = #tpu.pipeline_mode<synchronous>, transform_indices = @transform_5, window_bounds = array<i64: 8, 1>}, {pipeline_mode = #tpu.pipeline_mode<synchronous>, transform_indices = @transform_6, window_bounds = array<i64: 8, 1>}, {transform_indices = @transform_7, window_bounds = array<i64: 1, 8, 8, 8>}]} {
    %cst = arith.constant 0.000000e+00 : bf16
    %0 = vector.broadcast %cst : bf16 to vector<10x8x10xbf16>
    %c0 = arith.constant 0 : index
    %c0_0 = arith.constant 0 : index
    %c0_1 = arith.constant 0 : index
    %1 = vector.load %arg9[%c0, %c0_0, %c0_1] : memref<10x8x10xbf16, #tpu.memory_space<vmem>>, vector<10x8x10xbf16>
    tpu.vector_store %arg9[%c0, %c0_0, %c0_1], %0 {strides = array<i32>} : memref<10x8x10xbf16, #tpu.memory_space<vmem>>, vector<10x8x10xbf16>,
    %cst_2 = arith.constant 0.000000e+00 : f32
    %2 = vector.broadcast %cst_2 : f32 to vector<8x8xf32>
    %c0_3 = arith.constant 0 : index
    %c0_4 = arith.constant 0 : index
    %c0_5 = arith.constant 0 : index
    %c0_6 = arith.constant 0 : index
    %c0_7 = arith.constant 0 : index
    %c0_8 = arith.constant 0 : index
    %3 = vector.load %arg1[%c0_3, %c0_4, %c0_5, %c0_6, %c0_7, %c0_8] : memref<1x2x2x9x4x9xbf16, #tpu.memory_space<vmem>>, vector<1x1x1x1x4x8xbf16>
    %4 = vector.shape_cast %3 : vector<1x1x1x1x4x8xbf16> to vector<4x8xbf16>
    %c0_9 = arith.constant 0 : index
    %c0_10 = arith.constant 0 : index
    %c0_11 = arith.constant 0 : index
    %5 = vector.load %arg2[%c0_9, %c0_10, %c0_11] : memref<9x8x4xbf16, #tpu.memory_space<vmem>>, vector<1x8x4xbf16>
    %6 = vector.shape_cast %5 : vector<1x8x4xbf16> to vector<8x4xbf16>
    %cst_12 = arith.constant dense<0.000000e+00> : vector<8x8xf32>
    %7 = tpu.matmul %6, %4, %cst_12 {dimension_numbers = #tpu.dot_dimension_numbers<[1], [0], [0], [1], [0, 0, 1, 1], [], []>} : vector<8x4xbf16>, vector<4x8xbf16>, vector<8x8xf32> -> vector<8x8xf32>
    %8 = arith.addf %2, %7 : vector<8x8xf32>
    %c0_13 = arith.constant 0 : index
    %c0_14 = arith.constant 0 : index
    %c1 = arith.constant 1 : index
    %c0_15 = arith.constant 0 : index
    %c0_16 = arith.constant 0 : index
    %c0_17 = arith.constant 0 : index
    %9 = vector.load %arg1[%c0_13, %c0_14, %c1, %c0_15, %c0_16, %c0_17] : memref<1x2x2x9x4x9xbf16, #tpu.memory_space<vmem>>, vector<1x1x1x1x4x8xbf16>
    %10 = vector.shape_cast %9 : vector<1x1x1x1x4x8xbf16> to vector<4x8xbf16>
    %c1_18 = arith.constant 1 : index
    %c0_19 = arith.constant 0 : index
    %c0_20 = arith.constant 0 : index
    %11 = vector.load %arg2[%c1_18, %c0_19, %c0_20] : memref<9x8x4xbf16, #tpu.memory_space<vmem>>, vector<1x8x4xbf16>
    %12 = vector.shape_cast %11 : vector<1x8x4xbf16> to vector<8x4xbf16>
    %cst_21 = arith.constant dense<0.000000e+00> : vector<8x8xf32>
    %13 = tpu.matmul %12, %10, %cst_21 {dimension_numbers = #tpu.dot_dimension_numbers<[1], [0], [0], [1], [0, 0, 1, 1], [], []>} : vector<8x4xbf16>, vector<4x8xbf16>, vector<8x8xf32> -> vector<8x8xf32>
    %14 = arith.addf %8, %13 : vector<8x8xf32>
    %c0_22 = arith.constant 0 : index
    %c0_23 = arith.constant 0 : index
    %c0_24 = arith.constant 0 : index
    %c0_25 = arith.constant 0 : index
    %c0_26 = arith.constant 0 : index
    %c1_27 = arith.constant 1 : index
    %15 = vector.load %arg1[%c0_22, %c0_23, %c0_24, %c0_25, %c0_26, %c1_27] : memref<1x2x2x9x4x9xbf16, #tpu.memory_space<vmem>>, vector<1x1x1x1x4x8xbf16>
    %16 = vector.shape_cast %15 : vector<1x1x1x1x4x8xbf16> to vector<4x8xbf16>
    %c2 = arith.constant 2 : index
    %c0_28 = arith.constant 0 : index
    %c0_29 = arith.constant 0 : index
    %17 = vector.load %arg2[%c2, %c0_28, %c0_29] : memref<9x8x4xbf16, #tpu.memory_space<vmem>>, vector<1x8x4xbf16>
    %18 = vector.shape_cast %17 : vector<1x8x4xbf16> to vector<8x4xbf16>
    %cst_30 = arith.constant dense<0.000000e+00> : vector<8x8xf32>
    %19 = tpu.matmul %18, %16, %cst_30 {dimension_numbers = #tpu.dot_dimension_numbers<[1], [0], [0], [1], [0, 0, 1, 1], [], []>} : vector<8x4xbf16>, vector<4x8xbf16>, vector<8x8xf32> -> vector<8x8xf32>
    %20 = arith.addf %14, %19 : vector<8x8xf32>
    %c0_31 = arith.constant 0 : index
    %c1_32 = arith.constant 1 : index
    %c0_33 = arith.constant 0 : index
    %c0_34 = arith.constant 0 : index
    %c0_35 = arith.constant 0 : index
    %c0_36 = arith.constant 0 : index
    %21 = vector.load %arg1[%c0_31, %c1_32, %c0_33, %c0_34, %c0_35, %c0_36] : memref<1x2x2x9x4x9xbf16, #tpu.memory_space<vmem>>, vector<1x1x1x1x4x8xbf16>
    %22 = vector.shape_cast %21 : vector<1x1x1x1x4x8xbf16> to vector<4x8xbf16>
    %c3 = arith.constant 3 : index
    %c0_37 = arith.constant 0 : index
    %c0_38 = arith.constant 0 : index
    %23 = vector.load %arg2[%c3, %c0_37, %c0_38] : memref<9x8x4xbf16, #tpu.memory_space<vmem>>, vector<1x8x4xbf16>
    %24 = vector.shape_cast %23 : vector<1x8x4xbf16> to vector<8x4xbf16>
    %cst_39 = arith.constant dense<0.000000e+00> : vector<8x8xf32>
    %25 = tpu.matmul %24, %22, %cst_39 {dimension_numbers = #tpu.dot_dimension_numbers<[1], [0], [0], [1], [0, 0, 1, 1], [], []>} : vector<8x4xbf16>, vector<4x8xbf16>, vector<8x8xf32> -> vector<8x8xf32>
    %26 = arith.addf %20, %25 : vector<8x8xf32>
    %c0_40 = arith.constant 0 : index
    %c1_41 = arith.constant 1 : index
    %c1_42 = arith.constant 1 : index
    %c0_43 = arith.constant 0 : index
    %c0_44 = arith.constant 0 : index
    %c0_45 = arith.constant 0 : index
    %27 = vector.load %arg1[%c0_40, %c1_41, %c1_42, %c0_43, %c0_44, %c0_45] : memref<1x2x2x9x4x9xbf16, #tpu.memory_space<vmem>>, vector<1x1x1x1x4x8xbf16>
    %28 = vector.shape_cast %27 : vector<1x1x1x1x4x8xbf16> to vector<4x8xbf16>
    %c4 = arith.constant 4 : index
    %c0_46 = arith.constant 0 : index
    %c0_47 = arith.constant 0 : index
    %29 = vector.load %arg2[%c4, %c0_46, %c0_47] : memref<9x8x4xbf16, #tpu.memory_space<vmem>>, vector<1x8x4xbf16>
    %30 = vector.shape_cast %29 : vector<1x8x4xbf16> to vector<8x4xbf16>
    %cst_48 = arith.constant dense<0.000000e+00> : vector<8x8xf32>
    %31 = tpu.matmul %30, %28, %cst_48 {dimension_numbers = #tpu.dot_dimension_numbers<[1], [0], [0], [1], [0, 0, 1, 1], [], []>} : vector<8x4xbf16>, vector<4x8xbf16>, vector<8x8xf32> -> vector<8x8xf32>
    %32 = arith.addf %26, %31 : vector<8x8xf32>
    %c0_49 = arith.constant 0 : index
    %c1_50 = arith.constant 1 : index
    %c0_51 = arith.constant 0 : index
    %c0_52 = arith.constant 0 : index
    %c0_53 = arith.constant 0 : index
    %c1_54 = arith.constant 1 : index
    %33 = vector.load %arg1[%c0_49, %c1_50, %c0_51, %c0_52, %c0_53, %c1_54] : memref<1x2x2x9x4x9xbf16, #tpu.memory_space<vmem>>, vector<1x1x1x1x4x8xbf16>
    %34 = vector.shape_cast %33 : vector<1x1x1x1x4x8xbf16> to vector<4x8xbf16>
    %c5 = arith.constant 5 : index
    %c0_55 = arith.constant 0 : index
    %c0_56 = arith.constant 0 : index
    %35 = vector.load %arg2[%c5, %c0_55, %c0_56] : memref<9x8x4xbf16, #tpu.memory_space<vmem>>, vector<1x8x4xbf16>
    %36 = vector.shape_cast %35 : vector<1x8x4xbf16> to vector<8x4xbf16>
    %cst_57 = arith.constant dense<0.000000e+00> : vector<8x8xf32>
    %37 = tpu.matmul %36, %34, %cst_57 {dimension_numbers = #tpu.dot_dimension_numbers<[1], [0], [0], [1], [0, 0, 1, 1], [], []>} : vector<8x4xbf16>, vector<4x8xbf16>, vector<8x8xf32> -> vector<8x8xf32>
    %38 = arith.addf %32, %37 : vector<8x8xf32>
    %c0_58 = arith.constant 0 : index
    %c0_59 = arith.constant 0 : index
    %c0_60 = arith.constant 0 : index
    %c1_61 = arith.constant 1 : index
    %c0_62 = arith.constant 0 : index
    %c0_63 = arith.constant 0 : index
    %39 = vector.load %arg1[%c0_58, %c0_59, %c0_60, %c1_61, %c0_62, %c0_63] : memref<1x2x2x9x4x9xbf16, #tpu.memory_space<vmem>>, vector<1x1x1x1x4x8xbf16>
    %40 = vector.shape_cast %39 : vector<1x1x1x1x4x8xbf16> to vector<4x8xbf16>
    %c6 = arith.constant 6 : index
    %c0_64 = arith.constant 0 : index
    %c0_65 = arith.constant 0 : index
    %41 = vector.load %arg2[%c6, %c0_64, %c0_65] : memref<9x8x4xbf16, #tpu.memory_space<vmem>>, vector<1x8x4xbf16>
    %42 = vector.shape_cast %41 : vector<1x8x4xbf16> to vector<8x4xbf16>
    %cst_66 = arith.constant dense<0.000000e+00> : vector<8x8xf32>
    %43 = tpu.matmul %42, %40, %cst_66 {dimension_numbers = #tpu.dot_dimension_numbers<[1], [0], [0], [1], [0, 0, 1, 1], [], []>} : vector<8x4xbf16>, vector<4x8xbf16>, vector<8x8xf32> -> vector<8x8xf32>
    %44 = arith.addf %38, %43 : vector<8x8xf32>
    %c0_67 = arith.constant 0 : index
    %c0_68 = arith.constant 0 : index
    %c1_69 = arith.constant 1 : index
    %c1_70 = arith.constant 1 : index
    %c0_71 = arith.constant 0 : index
    %c0_72 = arith.constant 0 : index
    %45 = vector.load %arg1[%c0_67, %c0_68, %c1_69, %c1_70, %c0_71, %c0_72] : memref<1x2x2x9x4x9xbf16, #tpu.memory_space<vmem>>, vector<1x1x1x1x4x8xbf16>
    %46 = vector.shape_cast %45 : vector<1x1x1x1x4x8xbf16> to vector<4x8xbf16>
    %c7 = arith.constant 7 : index
    %c0_73 = arith.constant 0 : index
    %c0_74 = arith.constant 0 : index
    %47 = vector.load %arg2[%c7, %c0_73, %c0_74] : memref<9x8x4xbf16, #tpu.memory_space<vmem>>, vector<1x8x4xbf16>
    %48 = vector.shape_cast %47 : vector<1x8x4xbf16> to vector<8x4xbf16>
    %cst_75 = arith.constant dense<0.000000e+00> : vector<8x8xf32>
    %49 = tpu.matmul %48, %46, %cst_75 {dimension_numbers = #tpu.dot_dimension_numbers<[1], [0], [0], [1], [0, 0, 1, 1], [], []>} : vector<8x4xbf16>, vector<4x8xbf16>, vector<8x8xf32> -> vector<8x8xf32>
    %50 = arith.addf %44, %49 : vector<8x8xf32>
    %c0_76 = arith.constant 0 : index
    %c0_77 = arith.constant 0 : index
    %c0_78 = arith.constant 0 : index
    %c1_79 = arith.constant 1 : index
    %c0_80 = arith.constant 0 : index
    %c1_81 = arith.constant 1 : index
    %51 = vector.load %arg1[%c0_76, %c0_77, %c0_78, %c1_79, %c0_80, %c1_81] : memref<1x2x2x9x4x9xbf16, #tpu.memory_space<vmem>>, vector<1x1x1x1x4x8xbf16>
    %52 = vector.shape_cast %51 : vector<1x1x1x1x4x8xbf16> to vector<4x8xbf16>
    %c8 = arith.constant 8 : index
    %c0_82 = arith.constant 0 : index
    %c0_83 = arith.constant 0 : index
    %53 = vector.load %arg2[%c8, %c0_82, %c0_83] : memref<9x8x4xbf16, #tpu.memory_space<vmem>>, vector<1x8x4xbf16>
    %54 = vector.shape_cast %53 : vector<1x8x4xbf16> to vector<8x4xbf16>
    %cst_84 = arith.constant dense<0.000000e+00> : vector<8x8xf32>
    %55 = tpu.matmul %54, %52, %cst_84 {dimension_numbers = #tpu.dot_dimension_numbers<[1], [0], [0], [1], [0, 0, 1, 1], [], []>} : vector<8x4xbf16>, vector<4x8xbf16>, vector<8x8xf32> -> vector<8x8xf32>
    %56 = arith.addf %50, %55 : vector<8x8xf32>
    %c0_85 = arith.constant 0 : index
    %c0_86 = arith.constant 0 : index
    %57 = vector.load %arg3[%c0_85, %c0_86] : memref<8x1xf32, #tpu.memory_space<vmem>>, vector<8x1xf32>
    %58 = vector.broadcast %57 : vector<8x1xf32> to vector<8x8xf32>
    %59 = arith.addf %56, %58 : vector<8x8xf32>
    %cst_87 = arith.constant 0.000000e+00 : f32
    %60 = vector.broadcast %cst_87 : f32 to vector<8x8xf32>
    %61 = arith.cmpf oge, %59, %60 : vector<8x8xf32>
    %c0_88 = arith.constant 0 : index
    %c0_89 = arith.constant 0 : index
    %62 = vector.load %arg4[%c0_88, %c0_89] : memref<8x1xf32, #tpu.memory_space<vmem>>, vector<8x1xf32>
    %63 = vector.broadcast %62 : vector<8x1xf32> to vector<8x8xf32>
    %64 = arith.mulf %63, %59 : vector<8x8xf32>
    %65 = arith.select %61, %59, %64 : vector<8x8xi1>, vector<8x8xf32>
    %66 = arith.truncf %65 : vector<8x8xf32> to vector<8x8xbf16>
    %c1_90 = arith.constant 1 : index
    %c0_91 = arith.constant 0 : index
    %c1_92 = arith.constant 1 : index
    %67 = vector.load %arg9[%c1_90, %c0_91, %c1_92] : memref<10x8x10xbf16, #tpu.memory_space<vmem>>, vector<1x8x8xbf16>
    %68 = vector.shape_cast %67 : vector<1x8x8xbf16> to vector<8x8xbf16>
    %69 = vector.shape_cast %66 : vector<8x8xbf16> to vector<1x8x8xbf16>
    tpu.vector_store %arg9[%c1_90, %c0_91, %c1_92], %69 {strides = array<i32>} : memref<10x8x10xbf16, #tpu.memory_space<vmem>>, vector<1x8x8xbf16>,
    %cst_93 = arith.constant 0.000000e+00 : f32
    %70 = vector.broadcast %cst_93 : f32 to vector<8x8xf32>
    %c0_94 = arith.constant 0 : index
    %c0_95 = arith.constant 0 : index
    %c0_96 = arith.constant 0 : index
    %c1_97 = arith.constant 1 : index
    %c0_98 = arith.constant 0 : index
    %c0_99 = arith.constant 0 : index
    %71 = vector.load %arg1[%c0_94, %c0_95, %c0_96, %c1_97, %c0_98, %c0_99] : memref<1x2x2x9x4x9xbf16, #tpu.memory_space<vmem>>, vector<1x1x1x1x4x8xbf16>
    %72 = vector.shape_cast %71 : vector<1x1x1x1x4x8xbf16> to vector<4x8xbf16>
    %c0_100 = arith.constant 0 : index
    %c0_101 = arith.constant 0 : index
    %c0_102 = arith.constant 0 : index
    %73 = vector.load %arg2[%c0_100, %c0_101, %c0_102] : memref<9x8x4xbf16, #tpu.memory_space<vmem>>, vector<1x8x4xbf16>
    %74 = vector.shape_cast %73 : vector<1x8x4xbf16> to vector<8x4xbf16>
    %cst_103 = arith.constant dense<0.000000e+00> : vector<8x8xf32>
    %75 = tpu.matmul %74, %72, %cst_103 {dimension_numbers = #tpu.dot_dimension_numbers<[1], [0], [0], [1], [0, 0, 1, 1], [], []>} : vector<8x4xbf16>, vector<4x8xbf16>, vector<8x8xf32> -> vector<8x8xf32>
    %76 = arith.addf %70, %75 : vector<8x8xf32>
    %c0_104 = arith.constant 0 : index
    %c0_105 = arith.constant 0 : index
    %c1_106 = arith.constant 1 : index
    %c1_107 = arith.constant 1 : index
    %c0_108 = arith.constant 0 : index
    %c0_109 = arith.constant 0 : index
    %77 = vector.load %arg1[%c0_104, %c0_105, %c1_106, %c1_107, %c0_108, %c0_109] : memref<1x2x2x9x4x9xbf16, #tpu.memory_space<vmem>>, vector<1x1x1x1x4x8xbf16>
    %78 = vector.shape_cast %77 : vector<1x1x1x1x4x8xbf16> to vector<4x8xbf16>
    %c1_110 = arith.constant 1 : index
    %c0_111 = arith.constant 0 : index
    %c0_112 = arith.constant 0 : index
    %79 = vector.load %arg2[%c1_110, %c0_111, %c0_112] : memref<9x8x4xbf16, #tpu.memory_space<vmem>>, vector<1x8x4xbf16>
    %80 = vector.shape_cast %79 : vector<1x8x4xbf16> to vector<8x4xbf16>
    %cst_113 = arith.constant dense<0.000000e+00> : vector<8x8xf32>
    %81 = tpu.matmul %80, %78, %cst_113 {dimension_numbers = #tpu.dot_dimension_numbers<[1], [0], [0], [1], [0, 0, 1, 1], [], []>} : vector<8x4xbf16>, vector<4x8xbf16>, vector<8x8xf32> -> vector<8x8xf32>
    %82 = arith.addf %76, %81 : vector<8x8xf32>
    %c0_114 = arith.constant 0 : index
    %c0_115 = arith.constant 0 : index
    %c0_116 = arith.constant 0 : index
    %c1_117 = arith.constant 1 : index
    %c0_118 = arith.constant 0 : index
    %c1_119 = arith.constant 1 : index
    %83 = vector.load %arg1[%c0_114, %c0_115, %c0_116, %c1_117, %c0_118, %c1_119] : memref<1x2x2x9x4x9xbf16, #tpu.memory_space<vmem>>, vector<1x1x1x1x4x8xbf16>
    %84 = vector.shape_cast %83 : vector<1x1x1x1x4x8xbf16> to vector<4x8xbf16>
    %c2_120 = arith.constant 2 : index
    %c0_121 = arith.constant 0 : index
    %c0_122 = arith.constant 0 : index
    %85 = vector.load %arg2[%c2_120, %c0_121, %c0_122] : memref<9x8x4xbf16, #tpu.memory_space<vmem>>, vector<1x8x4xbf16>
    %86 = vector.shape_cast %85 : vector<1x8x4xbf16> to vector<8x4xbf16>
    %cst_123 = arith.constant dense<0.000000e+00> : vector<8x8xf32>
    %87 = tpu.matmul %86, %84, %cst_123 {dimension_numbers = #tpu.dot_dimension_numbers<[1], [0], [0], [1], [0, 0, 1, 1], [], []>} : vector<8x4xbf16>, vector<4x8xbf16>, vector<8x8xf32> -> vector<8x8xf32>
    %88 = arith.addf %82, %87 : vector<8x8xf32>
    %c0_124 = arith.constant 0 : index
    %c1_125 = arith.constant 1 : index
    %c0_126 = arith.constant 0 : index
    %c1_127 = arith.constant 1 : index
    %c0_128 = arith.constant 0 : index
    %c0_129 = arith.constant 0 : index
    %89 = vector.load %arg1[%c0_124, %c1_125, %c0_126, %c1_127, %c0_128, %c0_129] : memref<1x2x2x9x4x9xbf16, #tpu.memory_space<vmem>>, vector<1x1x1x1x4x8xbf16>
    %90 = vector.shape_cast %89 : vector<1x1x1x1x4x8xbf16> to vector<4x8xbf16>
    %c3_130 = arith.constant 3 : index
    %c0_131 = arith.constant 0 : index
    %c0_132 = arith.constant 0 : index
    %91 = vector.load %arg2[%c3_130, %c0_131, %c0_132] : memref<9x8x4xbf16, #tpu.memory_space<vmem>>, vector<1x8x4xbf16>
    %92 = vector.shape_cast %91 : vector<1x8x4xbf16> to vector<8x4xbf16>
    %cst_133 = arith.constant dense<0.000000e+00> : vector<8x8xf32>
    %93 = tpu.matmul %92, %90, %cst_133 {dimension_numbers = #tpu.dot_dimension_numbers<[1], [0], [0], [1], [0, 0, 1, 1], [], []>} : vector<8x4xbf16>, vector<4x8xbf16>, vector<8x8xf32> -> vector<8x8xf32>
    %94 = arith.addf %88, %93 : vector<8x8xf32>
    %c0_134 = arith.constant 0 : index
    %c1_135 = arith.constant 1 : index
    %c1_136 = arith.constant 1 : index
    %c1_137 = arith.constant 1 : index
    %c0_138 = arith.constant 0 : index
    %c0_139 = arith.constant 0 : index
    %95 = vector.load %arg1[%c0_134, %c1_135, %c1_136, %c1_137, %c0_138, %c0_139] : memref<1x2x2x9x4x9xbf16, #tpu.memory_space<vmem>>, vector<1x1x1x1x4x8xbf16>
    %96 = vector.shape_cast %95 : vector<1x1x1x1x4x8xbf16> to vector<4x8xbf16>
    %c4_140 = arith.constant 4 : index
    %c0_141 = arith.constant 0 : index
    %c0_142 = arith.constant 0 : index
    %97 = vector.load %arg2[%c4_140, %c0_141, %c0_142] : memref<9x8x4xbf16, #tpu.memory_space<vmem>>, vector<1x8x4xbf16>
    %98 = vector.shape_cast %97 : vector<1x8x4xbf16> to vector<8x4xbf16>
    %cst_143 = arith.constant dense<0.000000e+00> : vector<8x8xf32>
    %99 = tpu.matmul %98, %96, %cst_143 {dimension_numbers = #tpu.dot_dimension_numbers<[1], [0], [0], [1], [0, 0, 1, 1], [], []>} : vector<8x4xbf16>, vector<4x8xbf16>, vector<8x8xf32> -> vector<8x8xf32>
    %100 = arith.addf %94, %99 : vector<8x8xf32>
    %c0_144 = arith.constant 0 : index
    %c1_145 = arith.constant 1 : index
    %c0_146 = arith.constant 0 : index
    %c1_147 = arith.constant 1 : index
    %c0_148 = arith.constant 0 : index
    %c1_149 = arith.constant 1 : index
    %101 = vector.load %arg1[%c0_144, %c1_145, %c0_146, %c1_147, %c0_148, %c1_149] : memref<1x2x2x9x4x9xbf16, #tpu.memory_space<vmem>>, vector<1x1x1x1x4x8xbf16>
    %102 = vector.shape_cast %101 : vector<1x1x1x1x4x8xbf16> to vector<4x8xbf16>
    %c5_150 = arith.constant 5 : index
    %c0_151 = arith.constant 0 : index
    %c0_152 = arith.constant 0 : index
    %103 = vector.load %arg2[%c5_150, %c0_151, %c0_152] : memref<9x8x4xbf16, #tpu.memory_space<vmem>>, vector<1x8x4xbf16>
    %104 = vector.shape_cast %103 : vector<1x8x4xbf16> to vector<8x4xbf16>
    %cst_153 = arith.constant dense<0.000000e+00> : vector<8x8xf32>
    %105 = tpu.matmul %104, %102, %cst_153 {dimension_numbers = #tpu.dot_dimension_numbers<[1], [0], [0], [1], [0, 0, 1, 1], [], []>} : vector<8x4xbf16>, vector<4x8xbf16>, vector<8x8xf32> -> vector<8x8xf32>
    %106 = arith.addf %100, %105 : vector<8x8xf32>
    %c0_154 = arith.constant 0 : index
    %c0_155 = arith.constant 0 : index
    %c0_156 = arith.constant 0 : index
    %c2_157 = arith.constant 2 : index
    %c0_158 = arith.constant 0 : index
    %c0_159 = arith.constant 0 : index
    %107 = vector.load %arg1[%c0_154, %c0_155, %c0_156, %c2_157, %c0_158, %c0_159] : memref<1x2x2x9x4x9xbf16, #tpu.memory_space<vmem>>, vector<1x1x1x1x4x8xbf16>
    %108 = vector.shape_cast %107 : vector<1x1x1x1x4x8xbf16> to vector<4x8xbf16>
    %c6_160 = arith.constant 6 : index
    %c0_161 = arith.constant 0 : index
    %c0_162 = arith.constant 0 : index
    %109 = vector.load %arg2[%c6_160, %c0_161, %c0_162] : memref<9x8x4xbf16, #tpu.memory_space<vmem>>, vector<1x8x4xbf16>
    %110 = vector.shape_cast %109 : vector<1x8x4xbf16> to vector<8x4xbf16>
    %cst_163 = arith.constant dense<0.000000e+00> : vector<8x8xf32>
    %111 = tpu.matmul %110, %108, %cst_163 {dimension_numbers = #tpu.dot_dimension_numbers<[1], [0], [0], [1], [0, 0, 1, 1], [], []>} : vector<8x4xbf16>, vector<4x8xbf16>, vector<8x8xf32> -> vector<8x8xf32>
    %112 = arith.addf %106, %111 : vector<8x8xf32>
    %c0_164 = arith.constant 0 : index
    %c0_165 = arith.constant 0 : index
    %c1_166 = arith.constant 1 : index
    %c2_167 = arith.constant 2 : index
    %c0_168 = arith.constant 0 : index
    %c0_169 = arith.constant 0 : index
    %113 = vector.load %arg1[%c0_164, %c0_165, %c1_166, %c2_167, %c0_168, %c0_169] : memref<1x2x2x9x4x9xbf16, #tpu.memory_space<vmem>>, vector<1x1x1x1x4x8xbf16>
    %114 = vector.shape_cast %113 : vector<1x1x1x1x4x8xbf16> to vector<4x8xbf16>
    %c7_170 = arith.constant 7 : index
    %c0_171 = arith.constant 0 : index
    %c0_172 = arith.constant 0 : index
    %115 = vector.load %arg2[%c7_170, %c0_171, %c0_172] : memref<9x8x4xbf16, #tpu.memory_space<vmem>>, vector<1x8x4xbf16>
    %116 = vector.shape_cast %115 : vector<1x8x4xbf16> to vector<8x4xbf16>
    %cst_173 = arith.constant dense<0.000000e+00> : vector<8x8xf32>
    %117 = tpu.matmul %116, %114, %cst_173 {dimension_numbers = #tpu.dot_dimension_numbers<[1], [0], [0], [1], [0, 0, 1, 1], [], []>} : vector<8x4xbf16>, vector<4x8xbf16>, vector<8x8xf32> -> vector<8x8xf32>
    %118 = arith.addf %112, %117 : vector<8x8xf32>
    %c0_174 = arith.constant 0 : index
    %c0_175 = arith.constant 0 : index
    %c0_176 = arith.constant 0 : index
    %c2_177 = arith.constant 2 : index
    %c0_178 = arith.constant 0 : index
    %c1_179 = arith.constant 1 : index
    %119 = vector.load %arg1[%c0_174, %c0_175, %c0_176, %c2_177, %c0_178, %c1_179] : memref<1x2x2x9x4x9xbf16, #tpu.memory_space<vmem>>, vector<1x1x1x1x4x8xbf16>
    %120 = vector.shape_cast %119 : vector<1x1x1x1x4x8xbf16> to vector<4x8xbf16>
    %c8_180 = arith.constant 8 : index
    %c0_181 = arith.constant 0 : index
    %c0_182 = arith.constant 0 : index
    %121 = vector.load %arg2[%c8_180, %c0_181, %c0_182] : memref<9x8x4xbf16, #tpu.memory_space<vmem>>, vector<1x8x4xbf16>
    %122 = vector.shape_cast %121 : vector<1x8x4xbf16> to vector<8x4xbf16>
    %cst_183 = arith.constant dense<0.000000e+00> : vector<8x8xf32>
    %123 = tpu.matmul %122, %120, %cst_183 {dimension_numbers = #tpu.dot_dimension_numbers<[1], [0], [0], [1], [0, 0, 1, 1], [], []>} : vector<8x4xbf16>, vector<4x8xbf16>, vector<8x8xf32> -> vector<8x8xf32>
    %124 = arith.addf %118, %123 : vector<8x8xf32>
    %c0_184 = arith.constant 0 : index
    %c0_185 = arith.constant 0 : index
    %125 = vector.load %arg3[%c0_184, %c0_185] : memref<8x1xf32, #tpu.memory_space<vmem>>, vector<8x1xf32>
    %126 = vector.broadcast %125 : vector<8x1xf32> to vector<8x8xf32>
    %127 = arith.addf %124, %126 : vector<8x8xf32>
    %cst_186 = arith.constant 0.000000e+00 : f32
    %128 = vector.broadcast %cst_186 : f32 to vector<8x8xf32>
    %129 = arith.cmpf oge, %127, %128 : vector<8x8xf32>
    %c0_187 = arith.constant 0 : index
    %c0_188 = arith.constant 0 : index
    %130 = vector.load %arg4[%c0_187, %c0_188] : memref<8x1xf32, #tpu.memory_space<vmem>>, vector<8x1xf32>
    %131 = vector.broadcast %130 : vector<8x1xf32> to vector<8x8xf32>
    %132 = arith.mulf %131, %127 : vector<8x8xf32>
    %133 = arith.select %129, %127, %132 : vector<8x8xi1>, vector<8x8xf32>
    %134 = arith.truncf %133 : vector<8x8xf32> to vector<8x8xbf16>
    %c2_189 = arith.constant 2 : index
    %c0_190 = arith.constant 0 : index
    %c1_191 = arith.constant 1 : index
    %135 = vector.load %arg9[%c2_189, %c0_190, %c1_191] : memref<10x8x10xbf16, #tpu.memory_space<vmem>>, vector<1x8x8xbf16>
    %136 = vector.shape_cast %135 : vector<1x8x8xbf16> to vector<8x8xbf16>
    %137 = vector.shape_cast %134 : vector<8x8xbf16> to vector<1x8x8xbf16>
    tpu.vector_store %arg9[%c2_189, %c0_190, %c1_191], %137 {strides = array<i32>} : memref<10x8x10xbf16, #tpu.memory_space<vmem>>, vector<1x8x8xbf16>,
    %cst_192 = arith.constant 0.000000e+00 : f32
    %138 = vector.broadcast %cst_192 : f32 to vector<8x8xf32>
    %c0_193 = arith.constant 0 : index
    %c0_194 = arith.constant 0 : index
    %c0_195 = arith.constant 0 : index
    %c2_196 = arith.constant 2 : index
    %c0_197 = arith.constant 0 : index
    %c0_198 = arith.constant 0 : index
    %139 = vector.load %arg1[%c0_193, %c0_194, %c0_195, %c2_196, %c0_197, %c0_198] : memref<1x2x2x9x4x9xbf16, #tpu.memory_space<vmem>>, vector<1x1x1x1x4x8xbf16>
    %140 = vector.shape_cast %139 : vector<1x1x1x1x4x8xbf16> to vector<4x8xbf16>
    %c0_199 = arith.constant 0 : index
    %c0_200 = arith.constant 0 : index
    %c0_201 = arith.constant 0 : index
    %141 = vector.load %arg2[%c0_199, %c0_200, %c0_201] : memref<9x8x4xbf16, #tpu.memory_space<vmem>>, vector<1x8x4xbf16>
    %142 = vector.shape_cast %141 : vector<1x8x4xbf16> to vector<8x4xbf16>
    %cst_202 = arith.constant dense<0.000000e+00> : vector<8x8xf32>
    %143 = tpu.matmul %142, %140, %cst_202 {dimension_numbers = #tpu.dot_dimension_numbers<[1], [0], [0], [1], [0, 0, 1, 1], [], []>} : vector<8x4xbf16>, vector<4x8xbf16>, vector<8x8xf32> -> vector<8x8xf32>
    %144 = arith.addf %138, %143 : vector<8x8xf32>
    %c0_203 = arith.constant 0 : index
    %c0_204 = arith.constant 0 : index
    %c1_205 = arith.constant 1 : index
    %c2_206 = arith.constant 2 : index
    %c0_207 = arith.constant 0 : index
    %c0_208 = arith.constant 0 : index
    %145 = vector.load %arg1[%c0_203, %c0_204, %c1_205, %c2_206, %c0_207, %c0_208] : memref<1x2x2x9x4x9xbf16, #tpu.memory_space<vmem>>, vector<1x1x1x1x4x8xbf16>
    %146 = vector.shape_cast %145 : vector<1x1x1x1x4x8xbf16> to vector<4x8xbf16>
    %c1_209 = arith.constant 1 : index
    %c0_210 = arith.constant 0 : index
    %c0_211 = arith.constant 0 : index
    %147 = vector.load %arg2[%c1_209, %c0_210, %c0_211] : memref<9x8x4xbf16, #tpu.memory_space<vmem>>, vector<1x8x4xbf16>
    %148 = vector.shape_cast %147 : vector<1x8x4xbf16> to vector<8x4xbf16>
    %cst_212 = arith.constant dense<0.000000e+00> : vector<8x8xf32>
    %149 = tpu.matmul %148, %146, %cst_212 {dimension_numbers = #tpu.dot_dimension_numbers<[1], [0], [0], [1], [0, 0, 1, 1], [], []>} : vector<8x4xbf16>, vector<4x8xbf16>, vector<8x8xf32> -> vector<8x8xf32>
    %150 = arith.addf %144, %149 : vector<8x8xf32>
    %c0_213 = arith.constant 0 : index
    %c0_214 = arith.constant 0 : index
    %c0_215 = arith.constant 0 : index
    %c2_216 = arith.constant 2 : index
    %c0_217 = arith.constant 0 : index
    %c1_218 = arith.constant 1 : index
    %151 = vector.load %arg1[%c0_213, %c0_214, %c0_215, %c2_216, %c0_217, %c1_218] : memref<1x2x2x9x4x9xbf16, #tpu.memory_space<vmem>>, vector<1x1x1x1x4x8xbf16>
    %152 = vector.shape_cast %151 : vector<1x1x1x1x4x8xbf16> to vector<4x8xbf16>
    %c2_219 = arith.constant 2 : index
    %c0_220 = arith.constant 0 : index
    %c0_221 = arith.constant 0 : index
    %153 = vector.load %arg2[%c2_219, %c0_220, %c0_221] : memref<9x8x4xbf16, #tpu.memory_space<vmem>>, vector<1x8x4xbf16>
    %154 = vector.shape_cast %153 : vector<1x8x4xbf16> to vector<8x4xbf16>
    %cst_222 = arith.constant dense<0.000000e+00> : vector<8x8xf32>
    %155 = tpu.matmul %154, %152, %cst_222 {dimension_numbers = #tpu.dot_dimension_numbers<[1], [0], [0], [1], [0, 0, 1, 1], [], []>} : vector<8x4xbf16>, vector<4x8xbf16>, vector<8x8xf32> -> vector<8x8xf32>
    %156 = arith.addf %150, %155 : vector<8x8xf32>
    %c0_223 = arith.constant 0 : index
    %c1_224 = arith.constant 1 : index
    %c0_225 = arith.constant 0 : index
    %c2_226 = arith.constant 2 : index
    %c0_227 = arith.constant 0 : index
    %c0_228 = arith.constant 0 : index
    %157 = vector.load %arg1[%c0_223, %c1_224, %c0_225, %c2_226, %c0_227, %c0_228] : memref<1x2x2x9x4x9xbf16, #tpu.memory_space<vmem>>, vector<1x1x1x1x4x8xbf16>
    %158 = vector.shape_cast %157 : vector<1x1x1x1x4x8xbf16> to vector<4x8xbf16>
    %c3_229 = arith.constant 3 : index
    %c0_230 = arith.constant 0 : index
    %c0_231 = arith.constant 0 : index
    %159 = vector.load %arg2[%c3_229, %c0_230, %c0_231] : memref<9x8x4xbf16, #tpu.memory_space<vmem>>, vector<1x8x4xbf16>
    %160 = vector.shape_cast %159 : vector<1x8x4xbf16> to vector<8x4xbf16>
    %cst_232 = arith.constant dense<0.000000e+00> : vector<8x8xf32>
    %161 = tpu.matmul %160, %158, %cst_232 {dimension_numbers = #tpu.dot_dimension_numbers<[1], [0], [0], [1], [0, 0, 1, 1], [], []>} : vector<8x4xbf16>, vector<4x8xbf16>, vector<8x8xf32> -> vector<8x8xf32>
    %162 = arith.addf %156, %161 : vector<8x8xf32>
    %c0_233 = arith.constant 0 : index
    %c1_234 = arith.constant 1 : index
    %c1_235 = arith.constant 1 : index
    %c2_236 = arith.constant 2 : index
    %c0_237 = arith.constant 0 : index
    %c0_238 = arith.constant 0 : index
    %163 = vector.load %arg1[%c0_233, %c1_234, %c1_235, %c2_236, %c0_237, %c0_238] : memref<1x2x2x9x4x9xbf16, #tpu.memory_space<vmem>>, vector<1x1x1x1x4x8xbf16>
    %164 = vector.shape_cast %163 : vector<1x1x1x1x4x8xbf16> to vector<4x8xbf16>
    %c4_239 = arith.constant 4 : index
    %c0_240 = arith.constant 0 : index
    %c0_241 = arith.constant 0 : index
    %165 = vector.load %arg2[%c4_239, %c0_240, %c0_241] : memref<9x8x4xbf16, #tpu.memory_space<vmem>>, vector<1x8x4xbf16>
    %166 = vector.shape_cast %165 : vector<1x8x4xbf16> to vector<8x4xbf16>
    %cst_242 = arith.constant dense<0.000000e+00> : vector<8x8xf32>
    %167 = tpu.matmul %166, %164, %cst_242 {dimension_numbers = #tpu.dot_dimension_numbers<[1], [0], [0], [1], [0, 0, 1, 1], [], []>} : vector<8x4xbf16>, vector<4x8xbf16>, vector<8x8xf32> -> vector<8x8xf32>
    %168 = arith.addf %162, %167 : vector<8x8xf32>
    %c0_243 = arith.constant 0 : index
    %c1_244 = arith.constant 1 : index
    %c0_245 = arith.constant 0 : index
    %c2_246 = arith.constant 2 : index
    %c0_247 = arith.constant 0 : index
    %c1_248 = arith.constant 1 : index
    %169 = vector.load %arg1[%c0_243, %c1_244, %c0_245, %c2_246, %c0_247, %c1_248] : memref<1x2x2x9x4x9xbf16, #tpu.memory_space<vmem>>, vector<1x1x1x1x4x8xbf16>
    %170 = vector.shape_cast %169 : vector<1x1x1x1x4x8xbf16> to vector<4x8xbf16>
    %c5_249 = arith.constant 5 : index
    %c0_250 = arith.constant 0 : index
    %c0_251 = arith.constant 0 : index
    %171 = vector.load %arg2[%c5_249, %c0_250, %c0_251] : memref<9x8x4xbf16, #tpu.memory_space<vmem>>, vector<1x8x4xbf16>
    %172 = vector.shape_cast %171 : vector<1x8x4xbf16> to vector<8x4xbf16>
    %cst_252 = arith.constant dense<0.000000e+00> : vector<8x8xf32>
    %173 = tpu.matmul %172, %170, %cst_252 {dimension_numbers = #tpu.dot_dimension_numbers<[1], [0], [0], [1], [0, 0, 1, 1], [], []>} : vector<8x4xbf16>, vector<4x8xbf16>, vector<8x8xf32> -> vector<8x8xf32>
    %174 = arith.addf %168, %173 : vector<8x8xf32>
    %c0_253 = arith.constant 0 : index
    %c0_254 = arith.constant 0 : index
    %c0_255 = arith.constant 0 : index
    %c3_256 = arith.constant 3 : index
    %c0_257 = arith.constant 0 : index
    %c0_258 = arith.constant 0 : index
    %175 = vector.load %arg1[%c0_253, %c0_254, %c0_255, %c3_256, %c0_257, %c0_258] : memref<1x2x2x9x4x9xbf16, #tpu.memory_space<vmem>>, vector<1x1x1x1x4x8xbf16>
    %176 = vector.shape_cast %175 : vector<1x1x1x1x4x8xbf16> to vector<4x8xbf16>
    %c6_259 = arith.constant 6 : index
    %c0_260 = arith.constant 0 : index
    %c0_261 = arith.constant 0 : index
    %177 = vector.load %arg2[%c6_259, %c0_260, %c0_261] : memref<9x8x4xbf16, #tpu.memory_space<vmem>>, vector<1x8x4xbf16>
    %178 = vector.shape_cast %177 : vector<1x8x4xbf16> to vector<8x4xbf16>
    %cst_262 = arith.constant dense<0.000000e+00> : vector<8x8xf32>
    %179 = tpu.matmul %178, %176, %cst_262 {dimension_numbers = #tpu.dot_dimension_numbers<[1], [0], [0], [1], [0, 0, 1, 1], [], []>} : vector<8x4xbf16>, vector<4x8xbf16>, vector<8x8xf32> -> vector<8x8xf32>
    %180 = arith.addf %174, %179 : vector<8x8xf32>
    %c0_263 = arith.constant 0 : index
    %c0_264 = arith.constant 0 : index
    %c1_265 = arith.constant 1 : index
    %c3_266 = arith.constant 3 : index
    %c0_267 = arith.constant 0 : index
    %c0_268 = arith.constant 0 : index
    %181 = vector.load %arg1[%c0_263, %c0_264, %c1_265, %c3_266, %c0_267, %c0_268] : memref<1x2x2x9x4x9xbf16, #tpu.memory_space<vmem>>, vector<1x1x1x1x4x8xbf16>
    %182 = vector.shape_cast %181 : vector<1x1x1x1x4x8xbf16> to vector<4x8xbf16>
    %c7_269 = arith.constant 7 : index
    %c0_270 = arith.constant 0 : index
    %c0_271 = arith.constant 0 : index
    %183 = vector.load %arg2[%c7_269, %c0_270, %c0_271] : memref<9x8x4xbf16, #tpu.memory_space<vmem>>, vector<1x8x4xbf16>
    %184 = vector.shape_cast %183 : vector<1x8x4xbf16> to vector<8x4xbf16>
    %cst_272 = arith.constant dense<0.000000e+00> : vector<8x8xf32>
    %185 = tpu.matmul %184, %182, %cst_272 {dimension_numbers = #tpu.dot_dimension_numbers<[1], [0], [0], [1], [0, 0, 1, 1], [], []>} : vector<8x4xbf16>, vector<4x8xbf16>, vector<8x8xf32> -> vector<8x8xf32>
    %186 = arith.addf %180, %185 : vector<8x8xf32>
    %c0_273 = arith.constant 0 : index
    %c0_274 = arith.constant 0 : index
    %c0_275 = arith.constant 0 : index
    %c3_276 = arith.constant 3 : index
    %c0_277 = arith.constant 0 : index
    %c1_278 = arith.constant 1 : index
    %187 = vector.load %arg1[%c0_273, %c0_274, %c0_275, %c3_276, %c0_277, %c1_278] : memref<1x2x2x9x4x9xbf16, #tpu.memory_space<vmem>>, vector<1x1x1x1x4x8xbf16>
    %188 = vector.shape_cast %187 : vector<1x1x1x1x4x8xbf16> to vector<4x8xbf16>
    %c8_279 = arith.constant 8 : index
    %c0_280 = arith.constant 0 : index
    %c0_281 = arith.constant 0 : index
    %189 = vector.load %arg2[%c8_279, %c0_280, %c0_281] : memref<9x8x4xbf16, #tpu.memory_space<vmem>>, vector<1x8x4xbf16>
    %190 = vector.shape_cast %189 : vector<1x8x4xbf16> to vector<8x4xbf16>
    %cst_282 = arith.constant dense<0.000000e+00> : vector<8x8xf32>
    %191 = tpu.matmul %190, %188, %cst_282 {dimension_numbers = #tpu.dot_dimension_numbers<[1], [0], [0], [1], [0, 0, 1, 1], [], []>} : vector<8x4xbf16>, vector<4x8xbf16>, vector<8x8xf32> -> vector<8x8xf32>
    %192 = arith.addf %186, %191 : vector<8x8xf32>
    %c0_283 = arith.constant 0 : index
    %c0_284 = arith.constant 0 : index
    %193 = vector.load %arg3[%c0_283, %c0_284] : memref<8x1xf32, #tpu.memory_space<vmem>>, vector<8x1xf32>
    %194 = vector.broadcast %193 : vector<8x1xf32> to vector<8x8xf32>
    %195 = arith.addf %192, %194 : vector<8x8xf32>
    %cst_285 = arith.constant 0.000000e+00 : f32
    %196 = vector.broadcast %cst_285 : f32 to vector<8x8xf32>
    %197 = arith.cmpf oge, %195, %196 : vector<8x8xf32>
    %c0_286 = arith.constant 0 : index
    %c0_287 = arith.constant 0 : index
    %198 = vector.load %arg4[%c0_286, %c0_287] : memref<8x1xf32, #tpu.memory_space<vmem>>, vector<8x1xf32>
    %199 = vector.broadcast %198 : vector<8x1xf32> to vector<8x8xf32>
    %200 = arith.mulf %199, %195 : vector<8x8xf32>
    %201 = arith.select %197, %195, %200 : vector<8x8xi1>, vector<8x8xf32>
    %202 = arith.truncf %201 : vector<8x8xf32> to vector<8x8xbf16>
    %c3_288 = arith.constant 3 : index
    %c0_289 = arith.constant 0 : index
    %c1_290 = arith.constant 1 : index
    %203 = vector.load %arg9[%c3_288, %c0_289, %c1_290] : memref<10x8x10xbf16, #tpu.memory_space<vmem>>, vector<1x8x8xbf16>
    %204 = vector.shape_cast %203 : vector<1x8x8xbf16> to vector<8x8xbf16>
    %205 = vector.shape_cast %202 : vector<8x8xbf16> to vector<1x8x8xbf16>
    tpu.vector_store %arg9[%c3_288, %c0_289, %c1_290], %205 {strides = array<i32>} : memref<10x8x10xbf16, #tpu.memory_space<vmem>>, vector<1x8x8xbf16>,
    %cst_291 = arith.constant 0.000000e+00 : f32
    %206 = vector.broadcast %cst_291 : f32 to vector<8x8xf32>
    %c0_292 = arith.constant 0 : index
    %c0_293 = arith.constant 0 : index
    %c0_294 = arith.constant 0 : index
    %c3_295 = arith.constant 3 : index
    %c0_296 = arith.constant 0 : index
    %c0_297 = arith.constant 0 : index
    %207 = vector.load %arg1[%c0_292, %c0_293, %c0_294, %c3_295, %c0_296, %c0_297] : memref<1x2x2x9x4x9xbf16, #tpu.memory_space<vmem>>, vector<1x1x1x1x4x8xbf16>
    %208 = vector.shape_cast %207 : vector<1x1x1x1x4x8xbf16> to vector<4x8xbf16>
    %c0_298 = arith.constant 0 : index
    %c0_299 = arith.constant 0 : index
    %c0_300 = arith.constant 0 : index
    %209 = vector.load %arg2[%c0_298, %c0_299, %c0_300] : memref<9x8x4xbf16, #tpu.memory_space<vmem>>, vector<1x8x4xbf16>
    %210 = vector.shape_cast %209 : vector<1x8x4xbf16> to vector<8x4xbf16>
    %cst_301 = arith.constant dense<0.000000e+00> : vector<8x8xf32>
    %211 = tpu.matmul %210, %208, %cst_301 {dimension_numbers = #tpu.dot_dimension_numbers<[1], [0], [0], [1], [0, 0, 1, 1], [], []>} : vector<8x4xbf16>, vector<4x8xbf16>, vector<8x8xf32> -> vector<8x8xf32>
    %212 = arith.addf %206, %211 : vector<8x8xf32>
    %c0_302 = arith.constant 0 : index
    %c0_303 = arith.constant 0 : index
    %c1_304 = arith.constant 1 : index
    %c3_305 = arith.constant 3 : index
    %c0_306 = arith.constant 0 : index
    %c0_307 = arith.constant 0 : index
    %213 = vector.load %arg1[%c0_302, %c0_303, %c1_304, %c3_305, %c0_306, %c0_307] : memref<1x2x2x9x4x9xbf16, #tpu.memory_space<vmem>>, vector<1x1x1x1x4x8xbf16>
    %214 = vector.shape_cast %213 : vector<1x1x1x1x4x8xbf16> to vector<4x8xbf16>
    %c1_308 = arith.constant 1 : index
    %c0_309 = arith.constant 0 : index
    %c0_310 = arith.constant 0 : index
    %215 = vector.load %arg2[%c1_308, %c0_309, %c0_310] : memref<9x8x4xbf16, #tpu.memory_space<vmem>>, vector<1x8x4xbf16>
    %216 = vector.shape_cast %215 : vector<1x8x4xbf16> to vector<8x4xbf16>
    %cst_311 = arith.constant dense<0.000000e+00> : vector<8x8xf32>
    %217 = tpu.matmul %216, %214, %cst_311 {dimension_numbers = #tpu.dot_dimension_numbers<[1], [0], [0], [1], [0, 0, 1, 1], [], []>} : vector<8x4xbf16>, vector<4x8xbf16>, vector<8x8xf32> -> vector<8x8xf32>
    %218 = arith.addf %212, %217 : vector<8x8xf32>
    %c0_312 = arith.constant 0 : index
    %c0_313 = arith.constant 0 : index
    %c0_314 = arith.constant 0 : index
    %c3_315 = arith.constant 3 : index
    %c0_316 = arith.constant 0 : index
    %c1_317 = arith.constant 1 : index
    %219 = vector.load %arg1[%c0_312, %c0_313, %c0_314, %c3_315, %c0_316, %c1_317] : memref<1x2x2x9x4x9xbf16, #tpu.memory_space<vmem>>, vector<1x1x1x1x4x8xbf16>
    %220 = vector.shape_cast %219 : vector<1x1x1x1x4x8xbf16> to vector<4x8xbf16>
    %c2_318 = arith.constant 2 : index
    %c0_319 = arith.constant 0 : index
    %c0_320 = arith.constant 0 : index
    %221 = vector.load %arg2[%c2_318, %c0_319, %c0_320] : memref<9x8x4xbf16, #tpu.memory_space<vmem>>, vector<1x8x4xbf16>
    %222 = vector.shape_cast %221 : vector<1x8x4xbf16> to vector<8x4xbf16>
    %cst_321 = arith.constant dense<0.000000e+00> : vector<8x8xf32>
    %223 = tpu.matmul %222, %220, %cst_321 {dimension_numbers = #tpu.dot_dimension_numbers<[1], [0], [0], [1], [0, 0, 1, 1], [], []>} : vector<8x4xbf16>, vector<4x8xbf16>, vector<8x8xf32> -> vector<8x8xf32>
    %224 = arith.addf %218, %223 : vector<8x8xf32>
    %c0_322 = arith.constant 0 : index
    %c1_323 = arith.constant 1 : index
    %c0_324 = arith.constant 0 : index
    %c3_325 = arith.constant 3 : index
    %c0_326 = arith.constant 0 : index
    %c0_327 = arith.constant 0 : index
    %225 = vector.load %arg1[%c0_322, %c1_323, %c0_324, %c3_325, %c0_326, %c0_327] : memref<1x2x2x9x4x9xbf16, #tpu.memory_space<vmem>>, vector<1x1x1x1x4x8xbf16>
    %226 = vector.shape_cast %225 : vector<1x1x1x1x4x8xbf16> to vector<4x8xbf16>
    %c3_328 = arith.constant 3 : index
    %c0_329 = arith.constant 0 : index
    %c0_330 = arith.constant 0 : index
    %227 = vector.load %arg2[%c3_328, %c0_329, %c0_330] : memref<9x8x4xbf16, #tpu.memory_space<vmem>>, vector<1x8x4xbf16>
    %228 = vector.shape_cast %227 : vector<1x8x4xbf16> to vector<8x4xbf16>
    %cst_331 = arith.constant dense<0.000000e+00> : vector<8x8xf32>
    %229 = tpu.matmul %228, %226, %cst_331 {dimension_numbers = #tpu.dot_dimension_numbers<[1], [0], [0], [1], [0, 0, 1, 1], [], []>} : vector<8x4xbf16>, vector<4x8xbf16>, vector<8x8xf32> -> vector<8x8xf32>
    %230 = arith.addf %224, %229 : vector<8x8xf32>
    %c0_332 = arith.constant 0 : index
    %c1_333 = arith.constant 1 : index
    %c1_334 = arith.constant 1 : index
    %c3_335 = arith.constant 3 : index
    %c0_336 = arith.constant 0 : index
    %c0_337 = arith.constant 0 : index
    %231 = vector.load %arg1[%c0_332, %c1_333, %c1_334, %c3_335, %c0_336, %c0_337] : memref<1x2x2x9x4x9xbf16, #tpu.memory_space<vmem>>, vector<1x1x1x1x4x8xbf16>
    %232 = vector.shape_cast %231 : vector<1x1x1x1x4x8xbf16> to vector<4x8xbf16>
    %c4_338 = arith.constant 4 : index
    %c0_339 = arith.constant 0 : index
    %c0_340 = arith.constant 0 : index
    %233 = vector.load %arg2[%c4_338, %c0_339, %c0_340] : memref<9x8x4xbf16, #tpu.memory_space<vmem>>, vector<1x8x4xbf16>
    %234 = vector.shape_cast %233 : vector<1x8x4xbf16> to vector<8x4xbf16>
    %cst_341 = arith.constant dense<0.000000e+00> : vector<8x8xf32>
    %235 = tpu.matmul %234, %232, %cst_341 {dimension_numbers = #tpu.dot_dimension_numbers<[1], [0], [0], [1], [0, 0, 1, 1], [], []>} : vector<8x4xbf16>, vector<4x8xbf16>, vector<8x8xf32> -> vector<8x8xf32>
    %236 = arith.addf %230, %235 : vector<8x8xf32>
    %c0_342 = arith.constant 0 : index
    %c1_343 = arith.constant 1 : index
    %c0_344 = arith.constant 0 : index
    %c3_345 = arith.constant 3 : index
    %c0_346 = arith.constant 0 : index
    %c1_347 = arith.constant 1 : index
    %237 = vector.load %arg1[%c0_342, %c1_343, %c0_344, %c3_345, %c0_346, %c1_347] : memref<1x2x2x9x4x9xbf16, #tpu.memory_space<vmem>>, vector<1x1x1x1x4x8xbf16>
    %238 = vector.shape_cast %237 : vector<1x1x1x1x4x8xbf16> to vector<4x8xbf16>
    %c5_348 = arith.constant 5 : index
    %c0_349 = arith.constant 0 : index
    %c0_350 = arith.constant 0 : index
    %239 = vector.load %arg2[%c5_348, %c0_349, %c0_350] : memref<9x8x4xbf16, #tpu.memory_space<vmem>>, vector<1x8x4xbf16>
    %240 = vector.shape_cast %239 : vector<1x8x4xbf16> to vector<8x4xbf16>
    %cst_351 = arith.constant dense<0.000000e+00> : vector<8x8xf32>
    %241 = tpu.matmul %240, %238, %cst_351 {dimension_numbers = #tpu.dot_dimension_numbers<[1], [0], [0], [1], [0, 0, 1, 1], [], []>} : vector<8x4xbf16>, vector<4x8xbf16>, vector<8x8xf32> -> vector<8x8xf32>
    %242 = arith.addf %236, %241 : vector<8x8xf32>
    %c0_352 = arith.constant 0 : index
    %c0_353 = arith.constant 0 : index
    %c0_354 = arith.constant 0 : index
    %c4_355 = arith.constant 4 : index
    %c0_356 = arith.constant 0 : index
    %c0_357 = arith.constant 0 : index
    %243 = vector.load %arg1[%c0_352, %c0_353, %c0_354, %c4_355, %c0_356, %c0_357] : memref<1x2x2x9x4x9xbf16, #tpu.memory_space<vmem>>, vector<1x1x1x1x4x8xbf16>
    %244 = vector.shape_cast %243 : vector<1x1x1x1x4x8xbf16> to vector<4x8xbf16>
    %c6_358 = arith.constant 6 : index
    %c0_359 = arith.constant 0 : index
    %c0_360 = arith.constant 0 : index
    %245 = vector.load %arg2[%c6_358, %c0_359, %c0_360] : memref<9x8x4xbf16, #tpu.memory_space<vmem>>, vector<1x8x4xbf16>
    %246 = vector.shape_cast %245 : vector<1x8x4xbf16> to vector<8x4xbf16>
    %cst_361 = arith.constant dense<0.000000e+00> : vector<8x8xf32>
    %247 = tpu.matmul %246, %244, %cst_361 {dimension_numbers = #tpu.dot_dimension_numbers<[1], [0], [0], [1], [0, 0, 1, 1], [], []>} : vector<8x4xbf16>, vector<4x8xbf16>, vector<8x8xf32> -> vector<8x8xf32>
    %248 = arith.addf %242, %247 : vector<8x8xf32>
    %c0_362 = arith.constant 0 : index
    %c0_363 = arith.constant 0 : index
    %c1_364 = arith.constant 1 : index
    %c4_365 = arith.constant 4 : index
    %c0_366 = arith.constant 0 : index
    %c0_367 = arith.constant 0 : index
    %249 = vector.load %arg1[%c0_362, %c0_363, %c1_364, %c4_365, %c0_366, %c0_367] : memref<1x2x2x9x4x9xbf16, #tpu.memory_space<vmem>>, vector<1x1x1x1x4x8xbf16>
    %250 = vector.shape_cast %249 : vector<1x1x1x1x4x8xbf16> to vector<4x8xbf16>
    %c7_368 = arith.constant 7 : index
    %c0_369 = arith.constant 0 : index
    %c0_370 = arith.constant 0 : index
    %251 = vector.load %arg2[%c7_368, %c0_369, %c0_370] : memref<9x8x4xbf16, #tpu.memory_space<vmem>>, vector<1x8x4xbf16>
    %252 = vector.shape_cast %251 : vector<1x8x4xbf16> to vector<8x4xbf16>
    %cst_371 = arith.constant dense<0.000000e+00> : vector<8x8xf32>
    %253 = tpu.matmul %252, %250, %cst_371 {dimension_numbers = #tpu.dot_dimension_numbers<[1], [0], [0], [1], [0, 0, 1, 1], [], []>} : vector<8x4xbf16>, vector<4x8xbf16>, vector<8x8xf32> -> vector<8x8xf32>
    %254 = arith.addf %248, %253 : vector<8x8xf32>
    %c0_372 = arith.constant 0 : index
    %c0_373 = arith.constant 0 : index
    %c0_374 = arith.constant 0 : index
    %c4_375 = arith.constant 4 : index
    %c0_376 = arith.constant 0 : index
    %c1_377 = arith.constant 1 : index
    %255 = vector.load %arg1[%c0_372, %c0_373, %c0_374, %c4_375, %c0_376, %c1_377] : memref<1x2x2x9x4x9xbf16, #tpu.memory_space<vmem>>, vector<1x1x1x1x4x8xbf16>
    %256 = vector.shape_cast %255 : vector<1x1x1x1x4x8xbf16> to vector<4x8xbf16>
    %c8_378 = arith.constant 8 : index
    %c0_379 = arith.constant 0 : index
    %c0_380 = arith.constant 0 : index
    %257 = vector.load %arg2[%c8_378, %c0_379, %c0_380] : memref<9x8x4xbf16, #tpu.memory_space<vmem>>, vector<1x8x4xbf16>
    %258 = vector.shape_cast %257 : vector<1x8x4xbf16> to vector<8x4xbf16>
    %cst_381 = arith.constant dense<0.000000e+00> : vector<8x8xf32>
    %259 = tpu.matmul %258, %256, %cst_381 {dimension_numbers = #tpu.dot_dimension_numbers<[1], [0], [0], [1], [0, 0, 1, 1], [], []>} : vector<8x4xbf16>, vector<4x8xbf16>, vector<8x8xf32> -> vector<8x8xf32>
    %260 = arith.addf %254, %259 : vector<8x8xf32>
    %c0_382 = arith.constant 0 : index
    %c0_383 = arith.constant 0 : index
    %261 = vector.load %arg3[%c0_382, %c0_383] : memref<8x1xf32, #tpu.memory_space<vmem>>, vector<8x1xf32>
    %262 = vector.broadcast %261 : vector<8x1xf32> to vector<8x8xf32>
    %263 = arith.addf %260, %262 : vector<8x8xf32>
    %cst_384 = arith.constant 0.000000e+00 : f32
    %264 = vector.broadcast %cst_384 : f32 to vector<8x8xf32>
    %265 = arith.cmpf oge, %263, %264 : vector<8x8xf32>
    %c0_385 = arith.constant 0 : index
    %c0_386 = arith.constant 0 : index
    %266 = vector.load %arg4[%c0_385, %c0_386] : memref<8x1xf32, #tpu.memory_space<vmem>>, vector<8x1xf32>
    %267 = vector.broadcast %266 : vector<8x1xf32> to vector<8x8xf32>
    %268 = arith.mulf %267, %263 : vector<8x8xf32>
    %269 = arith.select %265, %263, %268 : vector<8x8xi1>, vector<8x8xf32>
    %270 = arith.truncf %269 : vector<8x8xf32> to vector<8x8xbf16>
    %c4_387 = arith.constant 4 : index
    %c0_388 = arith.constant 0 : index
    %c1_389 = arith.constant 1 : index
    %271 = vector.load %arg9[%c4_387, %c0_388, %c1_389] : memref<10x8x10xbf16, #tpu.memory_space<vmem>>, vector<1x8x8xbf16>
    %272 = vector.shape_cast %271 : vector<1x8x8xbf16> to vector<8x8xbf16>
    %273 = vector.shape_cast %270 : vector<8x8xbf16> to vector<1x8x8xbf16>
    tpu.vector_store %arg9[%c4_387, %c0_388, %c1_389], %273 {strides = array<i32>} : memref<10x8x10xbf16, #tpu.memory_space<vmem>>, vector<1x8x8xbf16>,
    %cst_390 = arith.constant 0.000000e+00 : f32
    %274 = vector.broadcast %cst_390 : f32 to vector<8x8xf32>
    %c0_391 = arith.constant 0 : index
    %c0_392 = arith.constant 0 : index
    %c0_393 = arith.constant 0 : index
    %c4_394 = arith.constant 4 : index
    %c0_395 = arith.constant 0 : index
    %c0_396 = arith.constant 0 : index
    %275 = vector.load %arg1[%c0_391, %c0_392, %c0_393, %c4_394, %c0_395, %c0_396] : memref<1x2x2x9x4x9xbf16, #tpu.memory_space<vmem>>, vector<1x1x1x1x4x8xbf16>
    %276 = vector.shape_cast %275 : vector<1x1x1x1x4x8xbf16> to vector<4x8xbf16>
    %c0_397 = arith.constant 0 : index
    %c0_398 = arith.constant 0 : index
    %c0_399 = arith.constant 0 : index
    %277 = vector.load %arg2[%c0_397, %c0_398, %c0_399] : memref<9x8x4xbf16, #tpu.memory_space<vmem>>, vector<1x8x4xbf16>
    %278 = vector.shape_cast %277 : vector<1x8x4xbf16> to vector<8x4xbf16>
    %cst_400 = arith.constant dense<0.000000e+00> : vector<8x8xf32>
    %279 = tpu.matmul %278, %276, %cst_400 {dimension_numbers = #tpu.dot_dimension_numbers<[1], [0], [0], [1], [0, 0, 1, 1], [], []>} : vector<8x4xbf16>, vector<4x8xbf16>, vector<8x8xf32> -> vector<8x8xf32>
    %280 = arith.addf %274, %279 : vector<8x8xf32>
    %c0_401 = arith.constant 0 : index
    %c0_402 = arith.constant 0 : index
    %c1_403 = arith.constant 1 : index
    %c4_404 = arith.constant 4 : index
    %c0_405 = arith.constant 0 : index
    %c0_406 = arith.constant 0 : index
    %281 = vector.load %arg1[%c0_401, %c0_402, %c1_403, %c4_404, %c0_405, %c0_406] : memref<1x2x2x9x4x9xbf16, #tpu.memory_space<vmem>>, vector<1x1x1x1x4x8xbf16>
    %282 = vector.shape_cast %281 : vector<1x1x1x1x4x8xbf16> to vector<4x8xbf16>
    %c1_407 = arith.constant 1 : index
    %c0_408 = arith.constant 0 : index
    %c0_409 = arith.constant 0 : index
    %283 = vector.load %arg2[%c1_407, %c0_408, %c0_409] : memref<9x8x4xbf16, #tpu.memory_space<vmem>>, vector<1x8x4xbf16>
    %284 = vector.shape_cast %283 : vector<1x8x4xbf16> to vector<8x4xbf16>
    %cst_410 = arith.constant dense<0.000000e+00> : vector<8x8xf32>
    %285 = tpu.matmul %284, %282, %cst_410 {dimension_numbers = #tpu.dot_dimension_numbers<[1], [0], [0], [1], [0, 0, 1, 1], [], []>} : vector<8x4xbf16>, vector<4x8xbf16>, vector<8x8xf32> -> vector<8x8xf32>
    %286 = arith.addf %280, %285 : vector<8x8xf32>
    %c0_411 = arith.constant 0 : index
    %c0_412 = arith.constant 0 : index
    %c0_413 = arith.constant 0 : index
    %c4_414 = arith.constant 4 : index
    %c0_415 = arith.constant 0 : index
    %c1_416 = arith.constant 1 : index
    %287 = vector.load %arg1[%c0_411, %c0_412, %c0_413, %c4_414, %c0_415, %c1_416] : memref<1x2x2x9x4x9xbf16, #tpu.memory_space<vmem>>, vector<1x1x1x1x4x8xbf16>
    %288 = vector.shape_cast %287 : vector<1x1x1x1x4x8xbf16> to vector<4x8xbf16>
    %c2_417 = arith.constant 2 : index
    %c0_418 = arith.constant 0 : index
    %c0_419 = arith.constant 0 : index
    %289 = vector.load %arg2[%c2_417, %c0_418, %c0_419] : memref<9x8x4xbf16, #tpu.memory_space<vmem>>, vector<1x8x4xbf16>
    %290 = vector.shape_cast %289 : vector<1x8x4xbf16> to vector<8x4xbf16>
    %cst_420 = arith.constant dense<0.000000e+00> : vector<8x8xf32>
    %291 = tpu.matmul %290, %288, %cst_420 {dimension_numbers = #tpu.dot_dimension_numbers<[1], [0], [0], [1], [0, 0, 1, 1], [], []>} : vector<8x4xbf16>, vector<4x8xbf16>, vector<8x8xf32> -> vector<8x8xf32>
    %292 = arith.addf %286, %291 : vector<8x8xf32>
    %c0_421 = arith.constant 0 : index
    %c1_422 = arith.constant 1 : index
    %c0_423 = arith.constant 0 : index
    %c4_424 = arith.constant 4 : index
    %c0_425 = arith.constant 0 : index
    %c0_426 = arith.constant 0 : index
    %293 = vector.load %arg1[%c0_421, %c1_422, %c0_423, %c4_424, %c0_425, %c0_426] : memref<1x2x2x9x4x9xbf16, #tpu.memory_space<vmem>>, vector<1x1x1x1x4x8xbf16>
    %294 = vector.shape_cast %293 : vector<1x1x1x1x4x8xbf16> to vector<4x8xbf16>
    %c3_427 = arith.constant 3 : index
    %c0_428 = arith.constant 0 : index
    %c0_429 = arith.constant 0 : index
    %295 = vector.load %arg2[%c3_427, %c0_428, %c0_429] : memref<9x8x4xbf16, #tpu.memory_space<vmem>>, vector<1x8x4xbf16>
    %296 = vector.shape_cast %295 : vector<1x8x4xbf16> to vector<8x4xbf16>
    %cst_430 = arith.constant dense<0.000000e+00> : vector<8x8xf32>
    %297 = tpu.matmul %296, %294, %cst_430 {dimension_numbers = #tpu.dot_dimension_numbers<[1], [0], [0], [1], [0, 0, 1, 1], [], []>} : vector<8x4xbf16>, vector<4x8xbf16>, vector<8x8xf32> -> vector<8x8xf32>
    %298 = arith.addf %292, %297 : vector<8x8xf32>
    %c0_431 = arith.constant 0 : index
    %c1_432 = arith.constant 1 : index
    %c1_433 = arith.constant 1 : index
    %c4_434 = arith.constant 4 : index
    %c0_435 = arith.constant 0 : index
    %c0_436 = arith.constant 0 : index
    %299 = vector.load %arg1[%c0_431, %c1_432, %c1_433, %c4_434, %c0_435, %c0_436] : memref<1x2x2x9x4x9xbf16, #tpu.memory_space<vmem>>, vector<1x1x1x1x4x8xbf16>
    %300 = vector.shape_cast %299 : vector<1x1x1x1x4x8xbf16> to vector<4x8xbf16>
    %c4_437 = arith.constant 4 : index
    %c0_438 = arith.constant 0 : index
    %c0_439 = arith.constant 0 : index
    %301 = vector.load %arg2[%c4_437, %c0_438, %c0_439] : memref<9x8x4xbf16, #tpu.memory_space<vmem>>, vector<1x8x4xbf16>
    %302 = vector.shape_cast %301 : vector<1x8x4xbf16> to vector<8x4xbf16>
    %cst_440 = arith.constant dense<0.000000e+00> : vector<8x8xf32>
    %303 = tpu.matmul %302, %300, %cst_440 {dimension_numbers = #tpu.dot_dimension_numbers<[1], [0], [0], [1], [0, 0, 1, 1], [], []>} : vector<8x4xbf16>, vector<4x8xbf16>, vector<8x8xf32> -> vector<8x8xf32>
    %304 = arith.addf %298, %303 : vector<8x8xf32>
    %c0_441 = arith.constant 0 : index
    %c1_442 = arith.constant 1 : index
    %c0_443 = arith.constant 0 : index
    %c4_444 = arith.constant 4 : index
    %c0_445 = arith.constant 0 : index
    %c1_446 = arith.constant 1 : index
    %305 = vector.load %arg1[%c0_441, %c1_442, %c0_443, %c4_444, %c0_445, %c1_446] : memref<1x2x2x9x4x9xbf16, #tpu.memory_space<vmem>>, vector<1x1x1x1x4x8xbf16>
    %306 = vector.shape_cast %305 : vector<1x1x1x1x4x8xbf16> to vector<4x8xbf16>
    %c5_447 = arith.constant 5 : index
    %c0_448 = arith.constant 0 : index
    %c0_449 = arith.constant 0 : index
    %307 = vector.load %arg2[%c5_447, %c0_448, %c0_449] : memref<9x8x4xbf16, #tpu.memory_space<vmem>>, vector<1x8x4xbf16>
    %308 = vector.shape_cast %307 : vector<1x8x4xbf16> to vector<8x4xbf16>
    %cst_450 = arith.constant dense<0.000000e+00> : vector<8x8xf32>
    %309 = tpu.matmul %308, %306, %cst_450 {dimension_numbers = #tpu.dot_dimension_numbers<[1], [0], [0], [1], [0, 0, 1, 1], [], []>} : vector<8x4xbf16>, vector<4x8xbf16>, vector<8x8xf32> -> vector<8x8xf32>
    %310 = arith.addf %304, %309 : vector<8x8xf32>
    %c0_451 = arith.constant 0 : index
    %c0_452 = arith.constant 0 : index
    %c0_453 = arith.constant 0 : index
    %c5_454 = arith.constant 5 : index
    %c0_455 = arith.constant 0 : index
    %c0_456 = arith.constant 0 : index
    %311 = vector.load %arg1[%c0_451, %c0_452, %c0_453, %c5_454, %c0_455, %c0_456] : memref<1x2x2x9x4x9xbf16, #tpu.memory_space<vmem>>, vector<1x1x1x1x4x8xbf16>
    %312 = vector.shape_cast %311 : vector<1x1x1x1x4x8xbf16> to vector<4x8xbf16>
    %c6_457 = arith.constant 6 : index
    %c0_458 = arith.constant 0 : index
    %c0_459 = arith.constant 0 : index
    %313 = vector.load %arg2[%c6_457, %c0_458, %c0_459] : memref<9x8x4xbf16, #tpu.memory_space<vmem>>, vector<1x8x4xbf16>
    %314 = vector.shape_cast %313 : vector<1x8x4xbf16> to vector<8x4xbf16>
    %cst_460 = arith.constant dense<0.000000e+00> : vector<8x8xf32>
    %315 = tpu.matmul %314, %312, %cst_460 {dimension_numbers = #tpu.dot_dimension_numbers<[1], [0], [0], [1], [0, 0, 1, 1], [], []>} : vector<8x4xbf16>, vector<4x8xbf16>, vector<8x8xf32> -> vector<8x8xf32>
    %316 = arith.addf %310, %315 : vector<8x8xf32>
    %c0_461 = arith.constant 0 : index
    %c0_462 = arith.constant 0 : index
    %c1_463 = arith.constant 1 : index
    %c5_464 = arith.constant 5 : index
    %c0_465 = arith.constant 0 : index
    %c0_466 = arith.constant 0 : index
    %317 = vector.load %arg1[%c0_461, %c0_462, %c1_463, %c5_464, %c0_465, %c0_466] : memref<1x2x2x9x4x9xbf16, #tpu.memory_space<vmem>>, vector<1x1x1x1x4x8xbf16>
    %318 = vector.shape_cast %317 : vector<1x1x1x1x4x8xbf16> to vector<4x8xbf16>
    %c7_467 = arith.constant 7 : index
    %c0_468 = arith.constant 0 : index
    %c0_469 = arith.constant 0 : index
    %319 = vector.load %arg2[%c7_467, %c0_468, %c0_469] : memref<9x8x4xbf16, #tpu.memory_space<vmem>>, vector<1x8x4xbf16>
    %320 = vector.shape_cast %319 : vector<1x8x4xbf16> to vector<8x4xbf16>
    %cst_470 = arith.constant dense<0.000000e+00> : vector<8x8xf32>
    %321 = tpu.matmul %320, %318, %cst_470 {dimension_numbers = #tpu.dot_dimension_numbers<[1], [0], [0], [1], [0, 0, 1, 1], [], []>} : vector<8x4xbf16>, vector<4x8xbf16>, vector<8x8xf32> -> vector<8x8xf32>
    %322 = arith.addf %316, %321 : vector<8x8xf32>
    %c0_471 = arith.constant 0 : index
    %c0_472 = arith.constant 0 : index
    %c0_473 = arith.constant 0 : index
    %c5_474 = arith.constant 5 : index
    %c0_475 = arith.constant 0 : index
    %c1_476 = arith.constant 1 : index
    %323 = vector.load %arg1[%c0_471, %c0_472, %c0_473, %c5_474, %c0_475, %c1_476] : memref<1x2x2x9x4x9xbf16, #tpu.memory_space<vmem>>, vector<1x1x1x1x4x8xbf16>
    %324 = vector.shape_cast %323 : vector<1x1x1x1x4x8xbf16> to vector<4x8xbf16>
    %c8_477 = arith.constant 8 : index
    %c0_478 = arith.constant 0 : index
    %c0_479 = arith.constant 0 : index
    %325 = vector.load %arg2[%c8_477, %c0_478, %c0_479] : memref<9x8x4xbf16, #tpu.memory_space<vmem>>, vector<1x8x4xbf16>
    %326 = vector.shape_cast %325 : vector<1x8x4xbf16> to vector<8x4xbf16>
    %cst_480 = arith.constant dense<0.000000e+00> : vector<8x8xf32>
    %327 = tpu.matmul %326, %324, %cst_480 {dimension_numbers = #tpu.dot_dimension_numbers<[1], [0], [0], [1], [0, 0, 1, 1], [], []>} : vector<8x4xbf16>, vector<4x8xbf16>, vector<8x8xf32> -> vector<8x8xf32>
    %328 = arith.addf %322, %327 : vector<8x8xf32>
    %c0_481 = arith.constant 0 : index
    %c0_482 = arith.constant 0 : index
    %329 = vector.load %arg3[%c0_481, %c0_482] : memref<8x1xf32, #tpu.memory_space<vmem>>, vector<8x1xf32>
    %330 = vector.broadcast %329 : vector<8x1xf32> to vector<8x8xf32>
    %331 = arith.addf %328, %330 : vector<8x8xf32>
    %cst_483 = arith.constant 0.000000e+00 : f32
    %332 = vector.broadcast %cst_483 : f32 to vector<8x8xf32>
    %333 = arith.cmpf oge, %331, %332 : vector<8x8xf32>
    %c0_484 = arith.constant 0 : index
    %c0_485 = arith.constant 0 : index
    %334 = vector.load %arg4[%c0_484, %c0_485] : memref<8x1xf32, #tpu.memory_space<vmem>>, vector<8x1xf32>
    %335 = vector.broadcast %334 : vector<8x1xf32> to vector<8x8xf32>
    %336 = arith.mulf %335, %331 : vector<8x8xf32>
    %337 = arith.select %333, %331, %336 : vector<8x8xi1>, vector<8x8xf32>
    %338 = arith.truncf %337 : vector<8x8xf32> to vector<8x8xbf16>
    %c5_486 = arith.constant 5 : index
    %c0_487 = arith.constant 0 : index
    %c1_488 = arith.constant 1 : index
    %339 = vector.load %arg9[%c5_486, %c0_487, %c1_488] : memref<10x8x10xbf16, #tpu.memory_space<vmem>>, vector<1x8x8xbf16>
    %340 = vector.shape_cast %339 : vector<1x8x8xbf16> to vector<8x8xbf16>
    %341 = vector.shape_cast %338 : vector<8x8xbf16> to vector<1x8x8xbf16>
    tpu.vector_store %arg9[%c5_486, %c0_487, %c1_488], %341 {strides = array<i32>} : memref<10x8x10xbf16, #tpu.memory_space<vmem>>, vector<1x8x8xbf16>,
    %cst_489 = arith.constant 0.000000e+00 : f32
    %342 = vector.broadcast %cst_489 : f32 to vector<8x8xf32>
    %c0_490 = arith.constant 0 : index
    %c0_491 = arith.constant 0 : index
    %c0_492 = arith.constant 0 : index
    %c5_493 = arith.constant 5 : index
    %c0_494 = arith.constant 0 : index
    %c0_495 = arith.constant 0 : index
    %343 = vector.load %arg1[%c0_490, %c0_491, %c0_492, %c5_493, %c0_494, %c0_495] : memref<1x2x2x9x4x9xbf16, #tpu.memory_space<vmem>>, vector<1x1x1x1x4x8xbf16>
    %344 = vector.shape_cast %343 : vector<1x1x1x1x4x8xbf16> to vector<4x8xbf16>
    %c0_496 = arith.constant 0 : index
    %c0_497 = arith.constant 0 : index
    %c0_498 = arith.constant 0 : index
    %345 = vector.load %arg2[%c0_496, %c0_497, %c0_498] : memref<9x8x4xbf16, #tpu.memory_space<vmem>>, vector<1x8x4xbf16>
    %346 = vector.shape_cast %345 : vector<1x8x4xbf16> to vector<8x4xbf16>
    %cst_499 = arith.constant dense<0.000000e+00> : vector<8x8xf32>
    %347 = tpu.matmul %346, %344, %cst_499 {dimension_numbers = #tpu.dot_dimension_numbers<[1], [0], [0], [1], [0, 0, 1, 1], [], []>} : vector<8x4xbf16>, vector<4x8xbf16>, vector<8x8xf32> -> vector<8x8xf32>
    %348 = arith.addf %342, %347 : vector<8x8xf32>
    %c0_500 = arith.constant 0 : index
    %c0_501 = arith.constant 0 : index
    %c1_502 = arith.constant 1 : index
    %c5_503 = arith.constant 5 : index
    %c0_504 = arith.constant 0 : index
    %c0_505 = arith.constant 0 : index
    %349 = vector.load %arg1[%c0_500, %c0_501, %c1_502, %c5_503, %c0_504, %c0_505] : memref<1x2x2x9x4x9xbf16, #tpu.memory_space<vmem>>, vector<1x1x1x1x4x8xbf16>
    %350 = vector.shape_cast %349 : vector<1x1x1x1x4x8xbf16> to vector<4x8xbf16>
    %c1_506 = arith.constant 1 : index
    %c0_507 = arith.constant 0 : index
    %c0_508 = arith.constant 0 : index
    %351 = vector.load %arg2[%c1_506, %c0_507, %c0_508] : memref<9x8x4xbf16, #tpu.memory_space<vmem>>, vector<1x8x4xbf16>
    %352 = vector.shape_cast %351 : vector<1x8x4xbf16> to vector<8x4xbf16>
    %cst_509 = arith.constant dense<0.000000e+00> : vector<8x8xf32>
    %353 = tpu.matmul %352, %350, %cst_509 {dimension_numbers = #tpu.dot_dimension_numbers<[1], [0], [0], [1], [0, 0, 1, 1], [], []>} : vector<8x4xbf16>, vector<4x8xbf16>, vector<8x8xf32> -> vector<8x8xf32>
    %354 = arith.addf %348, %353 : vector<8x8xf32>
    %c0_510 = arith.constant 0 : index
    %c0_511 = arith.constant 0 : index
    %c0_512 = arith.constant 0 : index
    %c5_513 = arith.constant 5 : index
    %c0_514 = arith.constant 0 : index
    %c1_515 = arith.constant 1 : index
    %355 = vector.load %arg1[%c0_510, %c0_511, %c0_512, %c5_513, %c0_514, %c1_515] : memref<1x2x2x9x4x9xbf16, #tpu.memory_space<vmem>>, vector<1x1x1x1x4x8xbf16>
    %356 = vector.shape_cast %355 : vector<1x1x1x1x4x8xbf16> to vector<4x8xbf16>
    %c2_516 = arith.constant 2 : index
    %c0_517 = arith.constant 0 : index
    %c0_518 = arith.constant 0 : index
    %357 = vector.load %arg2[%c2_516, %c0_517, %c0_518] : memref<9x8x4xbf16, #tpu.memory_space<vmem>>, vector<1x8x4xbf16>
    %358 = vector.shape_cast %357 : vector<1x8x4xbf16> to vector<8x4xbf16>
    %cst_519 = arith.constant dense<0.000000e+00> : vector<8x8xf32>
    %359 = tpu.matmul %358, %356, %cst_519 {dimension_numbers = #tpu.dot_dimension_numbers<[1], [0], [0], [1], [0, 0, 1, 1], [], []>} : vector<8x4xbf16>, vector<4x8xbf16>, vector<8x8xf32> -> vector<8x8xf32>
    %360 = arith.addf %354, %359 : vector<8x8xf32>
    %c0_520 = arith.constant 0 : index
    %c1_521 = arith.constant 1 : index
    %c0_522 = arith.constant 0 : index
    %c5_523 = arith.constant 5 : index
    %c0_524 = arith.constant 0 : index
    %c0_525 = arith.constant 0 : index
    %361 = vector.load %arg1[%c0_520, %c1_521, %c0_522, %c5_523, %c0_524, %c0_525] : memref<1x2x2x9x4x9xbf16, #tpu.memory_space<vmem>>, vector<1x1x1x1x4x8xbf16>
    %362 = vector.shape_cast %361 : vector<1x1x1x1x4x8xbf16> to vector<4x8xbf16>
    %c3_526 = arith.constant 3 : index
    %c0_527 = arith.constant 0 : index
    %c0_528 = arith.constant 0 : index
    %363 = vector.load %arg2[%c3_526, %c0_527, %c0_528] : memref<9x8x4xbf16, #tpu.memory_space<vmem>>, vector<1x8x4xbf16>
    %364 = vector.shape_cast %363 : vector<1x8x4xbf16> to vector<8x4xbf16>
    %cst_529 = arith.constant dense<0.000000e+00> : vector<8x8xf32>
    %365 = tpu.matmul %364, %362, %cst_529 {dimension_numbers = #tpu.dot_dimension_numbers<[1], [0], [0], [1], [0, 0, 1, 1], [], []>} : vector<8x4xbf16>, vector<4x8xbf16>, vector<8x8xf32> -> vector<8x8xf32>
    %366 = arith.addf %360, %365 : vector<8x8xf32>
    %c0_530 = arith.constant 0 : index
    %c1_531 = arith.constant 1 : index
    %c1_532 = arith.constant 1 : index
    %c5_533 = arith.constant 5 : index
    %c0_534 = arith.constant 0 : index
    %c0_535 = arith.constant 0 : index
    %367 = vector.load %arg1[%c0_530, %c1_531, %c1_532, %c5_533, %c0_534, %c0_535] : memref<1x2x2x9x4x9xbf16, #tpu.memory_space<vmem>>, vector<1x1x1x1x4x8xbf16>
    %368 = vector.shape_cast %367 : vector<1x1x1x1x4x8xbf16> to vector<4x8xbf16>
    %c4_536 = arith.constant 4 : index
    %c0_537 = arith.constant 0 : index
    %c0_538 = arith.constant 0 : index
    %369 = vector.load %arg2[%c4_536, %c0_537, %c0_538] : memref<9x8x4xbf16, #tpu.memory_space<vmem>>, vector<1x8x4xbf16>
    %370 = vector.shape_cast %369 : vector<1x8x4xbf16> to vector<8x4xbf16>
    %cst_539 = arith.constant dense<0.000000e+00> : vector<8x8xf32>
    %371 = tpu.matmul %370, %368, %cst_539 {dimension_numbers = #tpu.dot_dimension_numbers<[1], [0], [0], [1], [0, 0, 1, 1], [], []>} : vector<8x4xbf16>, vector<4x8xbf16>, vector<8x8xf32> -> vector<8x8xf32>
    %372 = arith.addf %366, %371 : vector<8x8xf32>
    %c0_540 = arith.constant 0 : index
    %c1_541 = arith.constant 1 : index
    %c0_542 = arith.constant 0 : index
    %c5_543 = arith.constant 5 : index
    %c0_544 = arith.constant 0 : index
    %c1_545 = arith.constant 1 : index
    %373 = vector.load %arg1[%c0_540, %c1_541, %c0_542, %c5_543, %c0_544, %c1_545] : memref<1x2x2x9x4x9xbf16, #tpu.memory_space<vmem>>, vector<1x1x1x1x4x8xbf16>
    %374 = vector.shape_cast %373 : vector<1x1x1x1x4x8xbf16> to vector<4x8xbf16>
    %c5_546 = arith.constant 5 : index
    %c0_547 = arith.constant 0 : index
    %c0_548 = arith.constant 0 : index
    %375 = vector.load %arg2[%c5_546, %c0_547, %c0_548] : memref<9x8x4xbf16, #tpu.memory_space<vmem>>, vector<1x8x4xbf16>
    %376 = vector.shape_cast %375 : vector<1x8x4xbf16> to vector<8x4xbf16>
    %cst_549 = arith.constant dense<0.000000e+00> : vector<8x8xf32>
    %377 = tpu.matmul %376, %374, %cst_549 {dimension_numbers = #tpu.dot_dimension_numbers<[1], [0], [0], [1], [0, 0, 1, 1], [], []>} : vector<8x4xbf16>, vector<4x8xbf16>, vector<8x8xf32> -> vector<8x8xf32>
    %378 = arith.addf %372, %377 : vector<8x8xf32>
    %c0_550 = arith.constant 0 : index
    %c0_551 = arith.constant 0 : index
    %c0_552 = arith.constant 0 : index
    %c6_553 = arith.constant 6 : index
    %c0_554 = arith.constant 0 : index
    %c0_555 = arith.constant 0 : index
    %379 = vector.load %arg1[%c0_550, %c0_551, %c0_552, %c6_553, %c0_554, %c0_555] : memref<1x2x2x9x4x9xbf16, #tpu.memory_space<vmem>>, vector<1x1x1x1x4x8xbf16>
    %380 = vector.shape_cast %379 : vector<1x1x1x1x4x8xbf16> to vector<4x8xbf16>
    %c6_556 = arith.constant 6 : index
    %c0_557 = arith.constant 0 : index
    %c0_558 = arith.constant 0 : index
    %381 = vector.load %arg2[%c6_556, %c0_557, %c0_558] : memref<9x8x4xbf16, #tpu.memory_space<vmem>>, vector<1x8x4xbf16>
    %382 = vector.shape_cast %381 : vector<1x8x4xbf16> to vector<8x4xbf16>
    %cst_559 = arith.constant dense<0.000000e+00> : vector<8x8xf32>
    %383 = tpu.matmul %382, %380, %cst_559 {dimension_numbers = #tpu.dot_dimension_numbers<[1], [0], [0], [1], [0, 0, 1, 1], [], []>} : vector<8x4xbf16>, vector<4x8xbf16>, vector<8x8xf32> -> vector<8x8xf32>
    %384 = arith.addf %378, %383 : vector<8x8xf32>
    %c0_560 = arith.constant 0 : index
    %c0_561 = arith.constant 0 : index
    %c1_562 = arith.constant 1 : index
    %c6_563 = arith.constant 6 : index
    %c0_564 = arith.constant 0 : index
    %c0_565 = arith.constant 0 : index
    %385 = vector.load %arg1[%c0_560, %c0_561, %c1_562, %c6_563, %c0_564, %c0_565] : memref<1x2x2x9x4x9xbf16, #tpu.memory_space<vmem>>, vector<1x1x1x1x4x8xbf16>
    %386 = vector.shape_cast %385 : vector<1x1x1x1x4x8xbf16> to vector<4x8xbf16>
    %c7_566 = arith.constant 7 : index
    %c0_567 = arith.constant 0 : index
    %c0_568 = arith.constant 0 : index
    %387 = vector.load %arg2[%c7_566, %c0_567, %c0_568] : memref<9x8x4xbf16, #tpu.memory_space<vmem>>, vector<1x8x4xbf16>
    %388 = vector.shape_cast %387 : vector<1x8x4xbf16> to vector<8x4xbf16>
    %cst_569 = arith.constant dense<0.000000e+00> : vector<8x8xf32>
    %389 = tpu.matmul %388, %386, %cst_569 {dimension_numbers = #tpu.dot_dimension_numbers<[1], [0], [0], [1], [0, 0, 1, 1], [], []>} : vector<8x4xbf16>, vector<4x8xbf16>, vector<8x8xf32> -> vector<8x8xf32>
    %390 = arith.addf %384, %389 : vector<8x8xf32>
    %c0_570 = arith.constant 0 : index
    %c0_571 = arith.constant 0 : index
    %c0_572 = arith.constant 0 : index
    %c6_573 = arith.constant 6 : index
    %c0_574 = arith.constant 0 : index
    %c1_575 = arith.constant 1 : index
    %391 = vector.load %arg1[%c0_570, %c0_571, %c0_572, %c6_573, %c0_574, %c1_575] : memref<1x2x2x9x4x9xbf16, #tpu.memory_space<vmem>>, vector<1x1x1x1x4x8xbf16>
    %392 = vector.shape_cast %391 : vector<1x1x1x1x4x8xbf16> to vector<4x8xbf16>
    %c8_576 = arith.constant 8 : index
    %c0_577 = arith.constant 0 : index
    %c0_578 = arith.constant 0 : index
    %393 = vector.load %arg2[%c8_576, %c0_577, %c0_578] : memref<9x8x4xbf16, #tpu.memory_space<vmem>>, vector<1x8x4xbf16>
    %394 = vector.shape_cast %393 : vector<1x8x4xbf16> to vector<8x4xbf16>
    %cst_579 = arith.constant dense<0.000000e+00> : vector<8x8xf32>
    %395 = tpu.matmul %394, %392, %cst_579 {dimension_numbers = #tpu.dot_dimension_numbers<[1], [0], [0], [1], [0, 0, 1, 1], [], []>} : vector<8x4xbf16>, vector<4x8xbf16>, vector<8x8xf32> -> vector<8x8xf32>
    %396 = arith.addf %390, %395 : vector<8x8xf32>
    %c0_580 = arith.constant 0 : index
    %c0_581 = arith.constant 0 : index
    %397 = vector.load %arg3[%c0_580, %c0_581] : memref<8x1xf32, #tpu.memory_space<vmem>>, vector<8x1xf32>
    %398 = vector.broadcast %397 : vector<8x1xf32> to vector<8x8xf32>
    %399 = arith.addf %396, %398 : vector<8x8xf32>
    %cst_582 = arith.constant 0.000000e+00 : f32
    %400 = vector.broadcast %cst_582 : f32 to vector<8x8xf32>
    %401 = arith.cmpf oge, %399, %400 : vector<8x8xf32>
    %c0_583 = arith.constant 0 : index
    %c0_584 = arith.constant 0 : index
    %402 = vector.load %arg4[%c0_583, %c0_584] : memref<8x1xf32, #tpu.memory_space<vmem>>, vector<8x1xf32>
    %403 = vector.broadcast %402 : vector<8x1xf32> to vector<8x8xf32>
    %404 = arith.mulf %403, %399 : vector<8x8xf32>
    %405 = arith.select %401, %399, %404 : vector<8x8xi1>, vector<8x8xf32>
    %406 = arith.truncf %405 : vector<8x8xf32> to vector<8x8xbf16>
    %c6_585 = arith.constant 6 : index
    %c0_586 = arith.constant 0 : index
    %c1_587 = arith.constant 1 : index
    %407 = vector.load %arg9[%c6_585, %c0_586, %c1_587] : memref<10x8x10xbf16, #tpu.memory_space<vmem>>, vector<1x8x8xbf16>
    %408 = vector.shape_cast %407 : vector<1x8x8xbf16> to vector<8x8xbf16>
    %409 = vector.shape_cast %406 : vector<8x8xbf16> to vector<1x8x8xbf16>
    tpu.vector_store %arg9[%c6_585, %c0_586, %c1_587], %409 {strides = array<i32>} : memref<10x8x10xbf16, #tpu.memory_space<vmem>>, vector<1x8x8xbf16>,
    %cst_588 = arith.constant 0.000000e+00 : f32
    %410 = vector.broadcast %cst_588 : f32 to vector<8x8xf32>
    %c0_589 = arith.constant 0 : index
    %c0_590 = arith.constant 0 : index
    %c0_591 = arith.constant 0 : index
    %c6_592 = arith.constant 6 : index
    %c0_593 = arith.constant 0 : index
    %c0_594 = arith.constant 0 : index
    %411 = vector.load %arg1[%c0_589, %c0_590, %c0_591, %c6_592, %c0_593, %c0_594] : memref<1x2x2x9x4x9xbf16, #tpu.memory_space<vmem>>, vector<1x1x1x1x4x8xbf16>
    %412 = vector.shape_cast %411 : vector<1x1x1x1x4x8xbf16> to vector<4x8xbf16>
    %c0_595 = arith.constant 0 : index
    %c0_596 = arith.constant 0 : index
    %c0_597 = arith.constant 0 : index
    %413 = vector.load %arg2[%c0_595, %c0_596, %c0_597] : memref<9x8x4xbf16, #tpu.memory_space<vmem>>, vector<1x8x4xbf16>
    %414 = vector.shape_cast %413 : vector<1x8x4xbf16> to vector<8x4xbf16>
    %cst_598 = arith.constant dense<0.000000e+00> : vector<8x8xf32>
    %415 = tpu.matmul %414, %412, %cst_598 {dimension_numbers = #tpu.dot_dimension_numbers<[1], [0], [0], [1], [0, 0, 1, 1], [], []>} : vector<8x4xbf16>, vector<4x8xbf16>, vector<8x8xf32> -> vector<8x8xf32>
    %416 = arith.addf %410, %415 : vector<8x8xf32>
    %c0_599 = arith.constant 0 : index
    %c0_600 = arith.constant 0 : index
    %c1_601 = arith.constant 1 : index
    %c6_602 = arith.constant 6 : index
    %c0_603 = arith.constant 0 : index
    %c0_604 = arith.constant 0 : index
    %417 = vector.load %arg1[%c0_599, %c0_600, %c1_601, %c6_602, %c0_603, %c0_604] : memref<1x2x2x9x4x9xbf16, #tpu.memory_space<vmem>>, vector<1x1x1x1x4x8xbf16>
    %418 = vector.shape_cast %417 : vector<1x1x1x1x4x8xbf16> to vector<4x8xbf16>
    %c1_605 = arith.constant 1 : index
    %c0_606 = arith.constant 0 : index
    %c0_607 = arith.constant 0 : index
    %419 = vector.load %arg2[%c1_605, %c0_606, %c0_607] : memref<9x8x4xbf16, #tpu.memory_space<vmem>>, vector<1x8x4xbf16>
    %420 = vector.shape_cast %419 : vector<1x8x4xbf16> to vector<8x4xbf16>
    %cst_608 = arith.constant dense<0.000000e+00> : vector<8x8xf32>
    %421 = tpu.matmul %420, %418, %cst_608 {dimension_numbers = #tpu.dot_dimension_numbers<[1], [0], [0], [1], [0, 0, 1, 1], [], []>} : vector<8x4xbf16>, vector<4x8xbf16>, vector<8x8xf32> -> vector<8x8xf32>
    %422 = arith.addf %416, %421 : vector<8x8xf32>
    %c0_609 = arith.constant 0 : index
    %c0_610 = arith.constant 0 : index
    %c0_611 = arith.constant 0 : index
    %c6_612 = arith.constant 6 : index
    %c0_613 = arith.constant 0 : index
    %c1_614 = arith.constant 1 : index
    %423 = vector.load %arg1[%c0_609, %c0_610, %c0_611, %c6_612, %c0_613, %c1_614] : memref<1x2x2x9x4x9xbf16, #tpu.memory_space<vmem>>, vector<1x1x1x1x4x8xbf16>
    %424 = vector.shape_cast %423 : vector<1x1x1x1x4x8xbf16> to vector<4x8xbf16>
    %c2_615 = arith.constant 2 : index
    %c0_616 = arith.constant 0 : index
    %c0_617 = arith.constant 0 : index
    %425 = vector.load %arg2[%c2_615, %c0_616, %c0_617] : memref<9x8x4xbf16, #tpu.memory_space<vmem>>, vector<1x8x4xbf16>
    %426 = vector.shape_cast %425 : vector<1x8x4xbf16> to vector<8x4xbf16>
    %cst_618 = arith.constant dense<0.000000e+00> : vector<8x8xf32>
    %427 = tpu.matmul %426, %424, %cst_618 {dimension_numbers = #tpu.dot_dimension_numbers<[1], [0], [0], [1], [0, 0, 1, 1], [], []>} : vector<8x4xbf16>, vector<4x8xbf16>, vector<8x8xf32> -> vector<8x8xf32>
    %428 = arith.addf %422, %427 : vector<8x8xf32>
    %c0_619 = arith.constant 0 : index
    %c1_620 = arith.constant 1 : index
    %c0_621 = arith.constant 0 : index
    %c6_622 = arith.constant 6 : index
    %c0_623 = arith.constant 0 : index
    %c0_624 = arith.constant 0 : index
    %429 = vector.load %arg1[%c0_619, %c1_620, %c0_621, %c6_622, %c0_623, %c0_624] : memref<1x2x2x9x4x9xbf16, #tpu.memory_space<vmem>>, vector<1x1x1x1x4x8xbf16>
    %430 = vector.shape_cast %429 : vector<1x1x1x1x4x8xbf16> to vector<4x8xbf16>
    %c3_625 = arith.constant 3 : index
    %c0_626 = arith.constant 0 : index
    %c0_627 = arith.constant 0 : index
    %431 = vector.load %arg2[%c3_625, %c0_626, %c0_627] : memref<9x8x4xbf16, #tpu.memory_space<vmem>>, vector<1x8x4xbf16>
    %432 = vector.shape_cast %431 : vector<1x8x4xbf16> to vector<8x4xbf16>
    %cst_628 = arith.constant dense<0.000000e+00> : vector<8x8xf32>
    %433 = tpu.matmul %432, %430, %cst_628 {dimension_numbers = #tpu.dot_dimension_numbers<[1], [0], [0], [1], [0, 0, 1, 1], [], []>} : vector<8x4xbf16>, vector<4x8xbf16>, vector<8x8xf32> -> vector<8x8xf32>
    %434 = arith.addf %428, %433 : vector<8x8xf32>
    %c0_629 = arith.constant 0 : index
    %c1_630 = arith.constant 1 : index
    %c1_631 = arith.constant 1 : index
    %c6_632 = arith.constant 6 : index
    %c0_633 = arith.constant 0 : index
    %c0_634 = arith.constant 0 : index
    %435 = vector.load %arg1[%c0_629, %c1_630, %c1_631, %c6_632, %c0_633, %c0_634] : memref<1x2x2x9x4x9xbf16, #tpu.memory_space<vmem>>, vector<1x1x1x1x4x8xbf16>
    %436 = vector.shape_cast %435 : vector<1x1x1x1x4x8xbf16> to vector<4x8xbf16>
    %c4_635 = arith.constant 4 : index
    %c0_636 = arith.constant 0 : index
    %c0_637 = arith.constant 0 : index
    %437 = vector.load %arg2[%c4_635, %c0_636, %c0_637] : memref<9x8x4xbf16, #tpu.memory_space<vmem>>, vector<1x8x4xbf16>
    %438 = vector.shape_cast %437 : vector<1x8x4xbf16> to vector<8x4xbf16>
    %cst_638 = arith.constant dense<0.000000e+00> : vector<8x8xf32>
    %439 = tpu.matmul %438, %436, %cst_638 {dimension_numbers = #tpu.dot_dimension_numbers<[1], [0], [0], [1], [0, 0, 1, 1], [], []>} : vector<8x4xbf16>, vector<4x8xbf16>, vector<8x8xf32> -> vector<8x8xf32>
    %440 = arith.addf %434, %439 : vector<8x8xf32>
    %c0_639 = arith.constant 0 : index
    %c1_640 = arith.constant 1 : index
    %c0_641 = arith.constant 0 : index
    %c6_642 = arith.constant 6 : index
    %c0_643 = arith.constant 0 : index
    %c1_644 = arith.constant 1 : index
    %441 = vector.load %arg1[%c0_639, %c1_640, %c0_641, %c6_642, %c0_643, %c1_644] : memref<1x2x2x9x4x9xbf16, #tpu.memory_space<vmem>>, vector<1x1x1x1x4x8xbf16>
    %442 = vector.shape_cast %441 : vector<1x1x1x1x4x8xbf16> to vector<4x8xbf16>
    %c5_645 = arith.constant 5 : index
    %c0_646 = arith.constant 0 : index
    %c0_647 = arith.constant 0 : index
    %443 = vector.load %arg2[%c5_645, %c0_646, %c0_647] : memref<9x8x4xbf16, #tpu.memory_space<vmem>>, vector<1x8x4xbf16>
    %444 = vector.shape_cast %443 : vector<1x8x4xbf16> to vector<8x4xbf16>
    %cst_648 = arith.constant dense<0.000000e+00> : vector<8x8xf32>
    %445 = tpu.matmul %444, %442, %cst_648 {dimension_numbers = #tpu.dot_dimension_numbers<[1], [0], [0], [1], [0, 0, 1, 1], [], []>} : vector<8x4xbf16>, vector<4x8xbf16>, vector<8x8xf32> -> vector<8x8xf32>
    %446 = arith.addf %440, %445 : vector<8x8xf32>
    %c0_649 = arith.constant 0 : index
    %c0_650 = arith.constant 0 : index
    %c0_651 = arith.constant 0 : index
    %c7_652 = arith.constant 7 : index
    %c0_653 = arith.constant 0 : index
    %c0_654 = arith.constant 0 : index
    %447 = vector.load %arg1[%c0_649, %c0_650, %c0_651, %c7_652, %c0_653, %c0_654] : memref<1x2x2x9x4x9xbf16, #tpu.memory_space<vmem>>, vector<1x1x1x1x4x8xbf16>
    %448 = vector.shape_cast %447 : vector<1x1x1x1x4x8xbf16> to vector<4x8xbf16>
    %c6_655 = arith.constant 6 : index
    %c0_656 = arith.constant 0 : index
    %c0_657 = arith.constant 0 : index
    %449 = vector.load %arg2[%c6_655, %c0_656, %c0_657] : memref<9x8x4xbf16, #tpu.memory_space<vmem>>, vector<1x8x4xbf16>
    %450 = vector.shape_cast %449 : vector<1x8x4xbf16> to vector<8x4xbf16>
    %cst_658 = arith.constant dense<0.000000e+00> : vector<8x8xf32>
    %451 = tpu.matmul %450, %448, %cst_658 {dimension_numbers = #tpu.dot_dimension_numbers<[1], [0], [0], [1], [0, 0, 1, 1], [], []>} : vector<8x4xbf16>, vector<4x8xbf16>, vector<8x8xf32> -> vector<8x8xf32>
    %452 = arith.addf %446, %451 : vector<8x8xf32>
    %c0_659 = arith.constant 0 : index
    %c0_660 = arith.constant 0 : index
    %c1_661 = arith.constant 1 : index
    %c7_662 = arith.constant 7 : index
    %c0_663 = arith.constant 0 : index
    %c0_664 = arith.constant 0 : index
    %453 = vector.load %arg1[%c0_659, %c0_660, %c1_661, %c7_662, %c0_663, %c0_664] : memref<1x2x2x9x4x9xbf16, #tpu.memory_space<vmem>>, vector<1x1x1x1x4x8xbf16>
    %454 = vector.shape_cast %453 : vector<1x1x1x1x4x8xbf16> to vector<4x8xbf16>
    %c7_665 = arith.constant 7 : index
    %c0_666 = arith.constant 0 : index
    %c0_667 = arith.constant 0 : index
    %455 = vector.load %arg2[%c7_665, %c0_666, %c0_667] : memref<9x8x4xbf16, #tpu.memory_space<vmem>>, vector<1x8x4xbf16>
    %456 = vector.shape_cast %455 : vector<1x8x4xbf16> to vector<8x4xbf16>
    %cst_668 = arith.constant dense<0.000000e+00> : vector<8x8xf32>
    %457 = tpu.matmul %456, %454, %cst_668 {dimension_numbers = #tpu.dot_dimension_numbers<[1], [0], [0], [1], [0, 0, 1, 1], [], []>} : vector<8x4xbf16>, vector<4x8xbf16>, vector<8x8xf32> -> vector<8x8xf32>
    %458 = arith.addf %452, %457 : vector<8x8xf32>
    %c0_669 = arith.constant 0 : index
    %c0_670 = arith.constant 0 : index
    %c0_671 = arith.constant 0 : index
    %c7_672 = arith.constant 7 : index
    %c0_673 = arith.constant 0 : index
    %c1_674 = arith.constant 1 : index
    %459 = vector.load %arg1[%c0_669, %c0_670, %c0_671, %c7_672, %c0_673, %c1_674] : memref<1x2x2x9x4x9xbf16, #tpu.memory_space<vmem>>, vector<1x1x1x1x4x8xbf16>
    %460 = vector.shape_cast %459 : vector<1x1x1x1x4x8xbf16> to vector<4x8xbf16>
    %c8_675 = arith.constant 8 : index
    %c0_676 = arith.constant 0 : index
    %c0_677 = arith.constant 0 : index
    %461 = vector.load %arg2[%c8_675, %c0_676, %c0_677] : memref<9x8x4xbf16, #tpu.memory_space<vmem>>, vector<1x8x4xbf16>
    %462 = vector.shape_cast %461 : vector<1x8x4xbf16> to vector<8x4xbf16>
    %cst_678 = arith.constant dense<0.000000e+00> : vector<8x8xf32>
    %463 = tpu.matmul %462, %460, %cst_678 {dimension_numbers = #tpu.dot_dimension_numbers<[1], [0], [0], [1], [0, 0, 1, 1], [], []>} : vector<8x4xbf16>, vector<4x8xbf16>, vector<8x8xf32> -> vector<8x8xf32>
    %464 = arith.addf %458, %463 : vector<8x8xf32>
    %c0_679 = arith.constant 0 : index
    %c0_680 = arith.constant 0 : index
    %465 = vector.load %arg3[%c0_679, %c0_680] : memref<8x1xf32, #tpu.memory_space<vmem>>, vector<8x1xf32>
    %466 = vector.broadcast %465 : vector<8x1xf32> to vector<8x8xf32>
    %467 = arith.addf %464, %466 : vector<8x8xf32>
    %cst_681 = arith.constant 0.000000e+00 : f32
    %468 = vector.broadcast %cst_681 : f32 to vector<8x8xf32>
    %469 = arith.cmpf oge, %467, %468 : vector<8x8xf32>
    %c0_682 = arith.constant 0 : index
    %c0_683 = arith.constant 0 : index
    %470 = vector.load %arg4[%c0_682, %c0_683] : memref<8x1xf32, #tpu.memory_space<vmem>>, vector<8x1xf32>
    %471 = vector.broadcast %470 : vector<8x1xf32> to vector<8x8xf32>
    %472 = arith.mulf %471, %467 : vector<8x8xf32>
    %473 = arith.select %469, %467, %472 : vector<8x8xi1>, vector<8x8xf32>
    %474 = arith.truncf %473 : vector<8x8xf32> to vector<8x8xbf16>
    %c7_684 = arith.constant 7 : index
    %c0_685 = arith.constant 0 : index
    %c1_686 = arith.constant 1 : index
    %475 = vector.load %arg9[%c7_684, %c0_685, %c1_686] : memref<10x8x10xbf16, #tpu.memory_space<vmem>>, vector<1x8x8xbf16>
    %476 = vector.shape_cast %475 : vector<1x8x8xbf16> to vector<8x8xbf16>
    %477 = vector.shape_cast %474 : vector<8x8xbf16> to vector<1x8x8xbf16>
    tpu.vector_store %arg9[%c7_684, %c0_685, %c1_686], %477 {strides = array<i32>} : memref<10x8x10xbf16, #tpu.memory_space<vmem>>, vector<1x8x8xbf16>,
    %cst_687 = arith.constant 0.000000e+00 : f32
    %478 = vector.broadcast %cst_687 : f32 to vector<8x8xf32>
    %c0_688 = arith.constant 0 : index
    %c0_689 = arith.constant 0 : index
    %c0_690 = arith.constant 0 : index
    %c7_691 = arith.constant 7 : index
    %c0_692 = arith.constant 0 : index
    %c0_693 = arith.constant 0 : index
    %479 = vector.load %arg1[%c0_688, %c0_689, %c0_690, %c7_691, %c0_692, %c0_693] : memref<1x2x2x9x4x9xbf16, #tpu.memory_space<vmem>>, vector<1x1x1x1x4x8xbf16>
    %480 = vector.shape_cast %479 : vector<1x1x1x1x4x8xbf16> to vector<4x8xbf16>
    %c0_694 = arith.constant 0 : index
    %c0_695 = arith.constant 0 : index
    %c0_696 = arith.constant 0 : index
    %481 = vector.load %arg2[%c0_694, %c0_695, %c0_696] : memref<9x8x4xbf16, #tpu.memory_space<vmem>>, vector<1x8x4xbf16>
    %482 = vector.shape_cast %481 : vector<1x8x4xbf16> to vector<8x4xbf16>
    %cst_697 = arith.constant dense<0.000000e+00> : vector<8x8xf32>
    %483 = tpu.matmul %482, %480, %cst_697 {dimension_numbers = #tpu.dot_dimension_numbers<[1], [0], [0], [1], [0, 0, 1, 1], [], []>} : vector<8x4xbf16>, vector<4x8xbf16>, vector<8x8xf32> -> vector<8x8xf32>
    %484 = arith.addf %478, %483 : vector<8x8xf32>
    %c0_698 = arith.constant 0 : index
    %c0_699 = arith.constant 0 : index
    %c1_700 = arith.constant 1 : index
    %c7_701 = arith.constant 7 : index
    %c0_702 = arith.constant 0 : index
    %c0_703 = arith.constant 0 : index
    %485 = vector.load %arg1[%c0_698, %c0_699, %c1_700, %c7_701, %c0_702, %c0_703] : memref<1x2x2x9x4x9xbf16, #tpu.memory_space<vmem>>, vector<1x1x1x1x4x8xbf16>
    %486 = vector.shape_cast %485 : vector<1x1x1x1x4x8xbf16> to vector<4x8xbf16>
    %c1_704 = arith.constant 1 : index
    %c0_705 = arith.constant 0 : index
    %c0_706 = arith.constant 0 : index
    %487 = vector.load %arg2[%c1_704, %c0_705, %c0_706] : memref<9x8x4xbf16, #tpu.memory_space<vmem>>, vector<1x8x4xbf16>
    %488 = vector.shape_cast %487 : vector<1x8x4xbf16> to vector<8x4xbf16>
    %cst_707 = arith.constant dense<0.000000e+00> : vector<8x8xf32>
    %489 = tpu.matmul %488, %486, %cst_707 {dimension_numbers = #tpu.dot_dimension_numbers<[1], [0], [0], [1], [0, 0, 1, 1], [], []>} : vector<8x4xbf16>, vector<4x8xbf16>, vector<8x8xf32> -> vector<8x8xf32>
    %490 = arith.addf %484, %489 : vector<8x8xf32>
    %c0_708 = arith.constant 0 : index
    %c0_709 = arith.constant 0 : index
    %c0_710 = arith.constant 0 : index
    %c7_711 = arith.constant 7 : index
    %c0_712 = arith.constant 0 : index
    %c1_713 = arith.constant 1 : index
    %491 = vector.load %arg1[%c0_708, %c0_709, %c0_710, %c7_711, %c0_712, %c1_713] : memref<1x2x2x9x4x9xbf16, #tpu.memory_space<vmem>>, vector<1x1x1x1x4x8xbf16>
    %492 = vector.shape_cast %491 : vector<1x1x1x1x4x8xbf16> to vector<4x8xbf16>
    %c2_714 = arith.constant 2 : index
    %c0_715 = arith.constant 0 : index
    %c0_716 = arith.constant 0 : index
    %493 = vector.load %arg2[%c2_714, %c0_715, %c0_716] : memref<9x8x4xbf16, #tpu.memory_space<vmem>>, vector<1x8x4xbf16>
    %494 = vector.shape_cast %493 : vector<1x8x4xbf16> to vector<8x4xbf16>
    %cst_717 = arith.constant dense<0.000000e+00> : vector<8x8xf32>
    %495 = tpu.matmul %494, %492, %cst_717 {dimension_numbers = #tpu.dot_dimension_numbers<[1], [0], [0], [1], [0, 0, 1, 1], [], []>} : vector<8x4xbf16>, vector<4x8xbf16>, vector<8x8xf32> -> vector<8x8xf32>
    %496 = arith.addf %490, %495 : vector<8x8xf32>
    %c0_718 = arith.constant 0 : index
    %c1_719 = arith.constant 1 : index
    %c0_720 = arith.constant 0 : index
    %c7_721 = arith.constant 7 : index
    %c0_722 = arith.constant 0 : index
    %c0_723 = arith.constant 0 : index
    %497 = vector.load %arg1[%c0_718, %c1_719, %c0_720, %c7_721, %c0_722, %c0_723] : memref<1x2x2x9x4x9xbf16, #tpu.memory_space<vmem>>, vector<1x1x1x1x4x8xbf16>
    %498 = vector.shape_cast %497 : vector<1x1x1x1x4x8xbf16> to vector<4x8xbf16>
    %c3_724 = arith.constant 3 : index
    %c0_725 = arith.constant 0 : index
    %c0_726 = arith.constant 0 : index
    %499 = vector.load %arg2[%c3_724, %c0_725, %c0_726] : memref<9x8x4xbf16, #tpu.memory_space<vmem>>, vector<1x8x4xbf16>
    %500 = vector.shape_cast %499 : vector<1x8x4xbf16> to vector<8x4xbf16>
    %cst_727 = arith.constant dense<0.000000e+00> : vector<8x8xf32>
    %501 = tpu.matmul %500, %498, %cst_727 {dimension_numbers = #tpu.dot_dimension_numbers<[1], [0], [0], [1], [0, 0, 1, 1], [], []>} : vector<8x4xbf16>, vector<4x8xbf16>, vector<8x8xf32> -> vector<8x8xf32>
    %502 = arith.addf %496, %501 : vector<8x8xf32>
    %c0_728 = arith.constant 0 : index
    %c1_729 = arith.constant 1 : index
    %c1_730 = arith.constant 1 : index
    %c7_731 = arith.constant 7 : index
    %c0_732 = arith.constant 0 : index
    %c0_733 = arith.constant 0 : index
    %503 = vector.load %arg1[%c0_728, %c1_729, %c1_730, %c7_731, %c0_732, %c0_733] : memref<1x2x2x9x4x9xbf16, #tpu.memory_space<vmem>>, vector<1x1x1x1x4x8xbf16>
    %504 = vector.shape_cast %503 : vector<1x1x1x1x4x8xbf16> to vector<4x8xbf16>
    %c4_734 = arith.constant 4 : index
    %c0_735 = arith.constant 0 : index
    %c0_736 = arith.constant 0 : index
    %505 = vector.load %arg2[%c4_734, %c0_735, %c0_736] : memref<9x8x4xbf16, #tpu.memory_space<vmem>>, vector<1x8x4xbf16>
    %506 = vector.shape_cast %505 : vector<1x8x4xbf16> to vector<8x4xbf16>
    %cst_737 = arith.constant dense<0.000000e+00> : vector<8x8xf32>
    %507 = tpu.matmul %506, %504, %cst_737 {dimension_numbers = #tpu.dot_dimension_numbers<[1], [0], [0], [1], [0, 0, 1, 1], [], []>} : vector<8x4xbf16>, vector<4x8xbf16>, vector<8x8xf32> -> vector<8x8xf32>
    %508 = arith.addf %502, %507 : vector<8x8xf32>
    %c0_738 = arith.constant 0 : index
    %c1_739 = arith.constant 1 : index
    %c0_740 = arith.constant 0 : index
    %c7_741 = arith.constant 7 : index
    %c0_742 = arith.constant 0 : index
    %c1_743 = arith.constant 1 : index
    %509 = vector.load %arg1[%c0_738, %c1_739, %c0_740, %c7_741, %c0_742, %c1_743] : memref<1x2x2x9x4x9xbf16, #tpu.memory_space<vmem>>, vector<1x1x1x1x4x8xbf16>
    %510 = vector.shape_cast %509 : vector<1x1x1x1x4x8xbf16> to vector<4x8xbf16>
    %c5_744 = arith.constant 5 : index
    %c0_745 = arith.constant 0 : index
    %c0_746 = arith.constant 0 : index
    %511 = vector.load %arg2[%c5_744, %c0_745, %c0_746] : memref<9x8x4xbf16, #tpu.memory_space<vmem>>, vector<1x8x4xbf16>
    %512 = vector.shape_cast %511 : vector<1x8x4xbf16> to vector<8x4xbf16>
    %cst_747 = arith.constant dense<0.000000e+00> : vector<8x8xf32>
    %513 = tpu.matmul %512, %510, %cst_747 {dimension_numbers = #tpu.dot_dimension_numbers<[1], [0], [0], [1], [0, 0, 1, 1], [], []>} : vector<8x4xbf16>, vector<4x8xbf16>, vector<8x8xf32> -> vector<8x8xf32>
    %514 = arith.addf %508, %513 : vector<8x8xf32>
    %c0_748 = arith.constant 0 : index
    %c0_749 = arith.constant 0 : index
    %c0_750 = arith.constant 0 : index
    %c8_751 = arith.constant 8 : index
    %c0_752 = arith.constant 0 : index
    %c0_753 = arith.constant 0 : index
    %515 = vector.load %arg1[%c0_748, %c0_749, %c0_750, %c8_751, %c0_752, %c0_753] : memref<1x2x2x9x4x9xbf16, #tpu.memory_space<vmem>>, vector<1x1x1x1x4x8xbf16>
    %516 = vector.shape_cast %515 : vector<1x1x1x1x4x8xbf16> to vector<4x8xbf16>
    %c6_754 = arith.constant 6 : index
    %c0_755 = arith.constant 0 : index
    %c0_756 = arith.constant 0 : index
    %517 = vector.load %arg2[%c6_754, %c0_755, %c0_756] : memref<9x8x4xbf16, #tpu.memory_space<vmem>>, vector<1x8x4xbf16>
    %518 = vector.shape_cast %517 : vector<1x8x4xbf16> to vector<8x4xbf16>
    %cst_757 = arith.constant dense<0.000000e+00> : vector<8x8xf32>
    %519 = tpu.matmul %518, %516, %cst_757 {dimension_numbers = #tpu.dot_dimension_numbers<[1], [0], [0], [1], [0, 0, 1, 1], [], []>} : vector<8x4xbf16>, vector<4x8xbf16>, vector<8x8xf32> -> vector<8x8xf32>
    %520 = arith.addf %514, %519 : vector<8x8xf32>
    %c0_758 = arith.constant 0 : index
    %c0_759 = arith.constant 0 : index
    %c1_760 = arith.constant 1 : index
    %c8_761 = arith.constant 8 : index
    %c0_762 = arith.constant 0 : index
    %c0_763 = arith.constant 0 : index
    %521 = vector.load %arg1[%c0_758, %c0_759, %c1_760, %c8_761, %c0_762, %c0_763] : memref<1x2x2x9x4x9xbf16, #tpu.memory_space<vmem>>, vector<1x1x1x1x4x8xbf16>
    %522 = vector.shape_cast %521 : vector<1x1x1x1x4x8xbf16> to vector<4x8xbf16>
    %c7_764 = arith.constant 7 : index
    %c0_765 = arith.constant 0 : index
    %c0_766 = arith.constant 0 : index
    %523 = vector.load %arg2[%c7_764, %c0_765, %c0_766] : memref<9x8x4xbf16, #tpu.memory_space<vmem>>, vector<1x8x4xbf16>
    %524 = vector.shape_cast %523 : vector<1x8x4xbf16> to vector<8x4xbf16>
    %cst_767 = arith.constant dense<0.000000e+00> : vector<8x8xf32>
    %525 = tpu.matmul %524, %522, %cst_767 {dimension_numbers = #tpu.dot_dimension_numbers<[1], [0], [0], [1], [0, 0, 1, 1], [], []>} : vector<8x4xbf16>, vector<4x8xbf16>, vector<8x8xf32> -> vector<8x8xf32>
    %526 = arith.addf %520, %525 : vector<8x8xf32>
    %c0_768 = arith.constant 0 : index
    %c0_769 = arith.constant 0 : index
    %c0_770 = arith.constant 0 : index
    %c8_771 = arith.constant 8 : index
    %c0_772 = arith.constant 0 : index
    %c1_773 = arith.constant 1 : index
    %527 = vector.load %arg1[%c0_768, %c0_769, %c0_770, %c8_771, %c0_772, %c1_773] : memref<1x2x2x9x4x9xbf16, #tpu.memory_space<vmem>>, vector<1x1x1x1x4x8xbf16>
    %528 = vector.shape_cast %527 : vector<1x1x1x1x4x8xbf16> to vector<4x8xbf16>
    %c8_774 = arith.constant 8 : index
    %c0_775 = arith.constant 0 : index
    %c0_776 = arith.constant 0 : index
    %529 = vector.load %arg2[%c8_774, %c0_775, %c0_776] : memref<9x8x4xbf16, #tpu.memory_space<vmem>>, vector<1x8x4xbf16>
    %530 = vector.shape_cast %529 : vector<1x8x4xbf16> to vector<8x4xbf16>
    %cst_777 = arith.constant dense<0.000000e+00> : vector<8x8xf32>
    %531 = tpu.matmul %530, %528, %cst_777 {dimension_numbers = #tpu.dot_dimension_numbers<[1], [0], [0], [1], [0, 0, 1, 1], [], []>} : vector<8x4xbf16>, vector<4x8xbf16>, vector<8x8xf32> -> vector<8x8xf32>
    %532 = arith.addf %526, %531 : vector<8x8xf32>
    %c0_778 = arith.constant 0 : index
    %c0_779 = arith.constant 0 : index
    %533 = vector.load %arg3[%c0_778, %c0_779] : memref<8x1xf32, #tpu.memory_space<vmem>>, vector<8x1xf32>
    %534 = vector.broadcast %533 : vector<8x1xf32> to vector<8x8xf32>
    %535 = arith.addf %532, %534 : vector<8x8xf32>
    %cst_780 = arith.constant 0.000000e+00 : f32
    %536 = vector.broadcast %cst_780 : f32 to vector<8x8xf32>
    %537 = arith.cmpf oge, %535, %536 : vector<8x8xf32>
    %c0_781 = arith.constant 0 : index
    %c0_782 = arith.constant 0 : index
    %538 = vector.load %arg4[%c0_781, %c0_782] : memref<8x1xf32, #tpu.memory_space<vmem>>, vector<8x1xf32>
    %539 = vector.broadcast %538 : vector<8x1xf32> to vector<8x8xf32>
    %540 = arith.mulf %539, %535 : vector<8x8xf32>
    %541 = arith.select %537, %535, %540 : vector<8x8xi1>, vector<8x8xf32>
    %542 = arith.truncf %541 : vector<8x8xf32> to vector<8x8xbf16>
    %c8_783 = arith.constant 8 : index
    %c0_784 = arith.constant 0 : index
    %c1_785 = arith.constant 1 : index
    %543 = vector.load %arg9[%c8_783, %c0_784, %c1_785] : memref<10x8x10xbf16, #tpu.memory_space<vmem>>, vector<1x8x8xbf16>
    %544 = vector.shape_cast %543 : vector<1x8x8xbf16> to vector<8x8xbf16>
    %545 = vector.shape_cast %542 : vector<8x8xbf16> to vector<1x8x8xbf16>
    tpu.vector_store %arg9[%c8_783, %c0_784, %c1_785], %545 {strides = array<i32>} : memref<10x8x10xbf16, #tpu.memory_space<vmem>>, vector<1x8x8xbf16>,
    %cst_786 = arith.constant 0.000000e+00 : f32
    %546 = vector.broadcast %cst_786 : f32 to vector<8x8xf32>
    %c0_787 = arith.constant 0 : index
    %c0_788 = arith.constant 0 : index
    %c0_789 = arith.constant 0 : index
    %547 = vector.load %arg9[%c0_787, %c0_788, %c0_789] : memref<10x8x10xbf16, #tpu.memory_space<vmem>>, vector<1x8x8xbf16>
    %548 = vector.shape_cast %547 : vector<1x8x8xbf16> to vector<8x8xbf16>
    %c0_790 = arith.constant 0 : index
    %c0_791 = arith.constant 0 : index
    %c0_792 = arith.constant 0 : index
    %549 = vector.load %arg5[%c0_790, %c0_791, %c0_792] : memref<9x8x8xbf16, #tpu.memory_space<vmem>>, vector<1x8x8xbf16>
    %550 = vector.shape_cast %549 : vector<1x8x8xbf16> to vector<8x8xbf16>
    %cst_793 = arith.constant dense<0.000000e+00> : vector<8x8xf32>
    %551 = tpu.matmul %550, %548, %cst_793 {dimension_numbers = #tpu.dot_dimension_numbers<[1], [0], [0], [1], [0, 0, 1, 1], [], []>} : vector<8x8xbf16>, vector<8x8xbf16>, vector<8x8xf32> -> vector<8x8xf32>
    %552 = arith.addf %546, %551 : vector<8x8xf32>
    %c0_794 = arith.constant 0 : index
    %c0_795 = arith.constant 0 : index
    %c1_796 = arith.constant 1 : index
    %553 = vector.load %arg9[%c0_794, %c0_795, %c1_796] : memref<10x8x10xbf16, #tpu.memory_space<vmem>>, vector<1x8x8xbf16>
    %554 = vector.shape_cast %553 : vector<1x8x8xbf16> to vector<8x8xbf16>
    %c1_797 = arith.constant 1 : index
    %c0_798 = arith.constant 0 : index
    %c0_799 = arith.constant 0 : index
    %555 = vector.load %arg5[%c1_797, %c0_798, %c0_799] : memref<9x8x8xbf16, #tpu.memory_space<vmem>>, vector<1x8x8xbf16>
    %556 = vector.shape_cast %555 : vector<1x8x8xbf16> to vector<8x8xbf16>
    %cst_800 = arith.constant dense<0.000000e+00> : vector<8x8xf32>
    %557 = tpu.matmul %556, %554, %cst_800 {dimension_numbers = #tpu.dot_dimension_numbers<[1], [0], [0], [1], [0, 0, 1, 1], [], []>} : vector<8x8xbf16>, vector<8x8xbf16>, vector<8x8xf32> -> vector<8x8xf32>
    %558 = arith.addf %552, %557 : vector<8x8xf32>
    %c0_801 = arith.constant 0 : index
    %c0_802 = arith.constant 0 : index
    %c2_803 = arith.constant 2 : index
    %559 = vector.load %arg9[%c0_801, %c0_802, %c2_803] : memref<10x8x10xbf16, #tpu.memory_space<vmem>>, vector<1x8x8xbf16>
    %560 = vector.shape_cast %559 : vector<1x8x8xbf16> to vector<8x8xbf16>
    %c2_804 = arith.constant 2 : index
    %c0_805 = arith.constant 0 : index
    %c0_806 = arith.constant 0 : index
    %561 = vector.load %arg5[%c2_804, %c0_805, %c0_806] : memref<9x8x8xbf16, #tpu.memory_space<vmem>>, vector<1x8x8xbf16>
    %562 = vector.shape_cast %561 : vector<1x8x8xbf16> to vector<8x8xbf16>
    %cst_807 = arith.constant dense<0.000000e+00> : vector<8x8xf32>
    %563 = tpu.matmul %562, %560, %cst_807 {dimension_numbers = #tpu.dot_dimension_numbers<[1], [0], [0], [1], [0, 0, 1, 1], [], []>} : vector<8x8xbf16>, vector<8x8xbf16>, vector<8x8xf32> -> vector<8x8xf32>
    %564 = arith.addf %558, %563 : vector<8x8xf32>
    %c1_808 = arith.constant 1 : index
    %c0_809 = arith.constant 0 : index
    %c0_810 = arith.constant 0 : index
    %565 = vector.load %arg9[%c1_808, %c0_809, %c0_810] : memref<10x8x10xbf16, #tpu.memory_space<vmem>>, vector<1x8x8xbf16>
    %566 = vector.shape_cast %565 : vector<1x8x8xbf16> to vector<8x8xbf16>
    %c3_811 = arith.constant 3 : index
    %c0_812 = arith.constant 0 : index
    %c0_813 = arith.constant 0 : index
    %567 = vector.load %arg5[%c3_811, %c0_812, %c0_813] : memref<9x8x8xbf16, #tpu.memory_space<vmem>>, vector<1x8x8xbf16>
    %568 = vector.shape_cast %567 : vector<1x8x8xbf16> to vector<8x8xbf16>
    %cst_814 = arith.constant dense<0.000000e+00> : vector<8x8xf32>
    %569 = tpu.matmul %568, %566, %cst_814 {dimension_numbers = #tpu.dot_dimension_numbers<[1], [0], [0], [1], [0, 0, 1, 1], [], []>} : vector<8x8xbf16>, vector<8x8xbf16>, vector<8x8xf32> -> vector<8x8xf32>
    %570 = arith.addf %564, %569 : vector<8x8xf32>
    %c1_815 = arith.constant 1 : index
    %c0_816 = arith.constant 0 : index
    %c1_817 = arith.constant 1 : index
    %571 = vector.load %arg9[%c1_815, %c0_816, %c1_817] : memref<10x8x10xbf16, #tpu.memory_space<vmem>>, vector<1x8x8xbf16>
    %572 = vector.shape_cast %571 : vector<1x8x8xbf16> to vector<8x8xbf16>
    %c4_818 = arith.constant 4 : index
    %c0_819 = arith.constant 0 : index
    %c0_820 = arith.constant 0 : index
    %573 = vector.load %arg5[%c4_818, %c0_819, %c0_820] : memref<9x8x8xbf16, #tpu.memory_space<vmem>>, vector<1x8x8xbf16>
    %574 = vector.shape_cast %573 : vector<1x8x8xbf16> to vector<8x8xbf16>
    %cst_821 = arith.constant dense<0.000000e+00> : vector<8x8xf32>
    %575 = tpu.matmul %574, %572, %cst_821 {dimension_numbers = #tpu.dot_dimension_numbers<[1], [0], [0], [1], [0, 0, 1, 1], [], []>} : vector<8x8xbf16>, vector<8x8xbf16>, vector<8x8xf32> -> vector<8x8xf32>
    %576 = arith.addf %570, %575 : vector<8x8xf32>
    %c1_822 = arith.constant 1 : index
    %c0_823 = arith.constant 0 : index
    %c2_824 = arith.constant 2 : index
    %577 = vector.load %arg9[%c1_822, %c0_823, %c2_824] : memref<10x8x10xbf16, #tpu.memory_space<vmem>>, vector<1x8x8xbf16>
    %578 = vector.shape_cast %577 : vector<1x8x8xbf16> to vector<8x8xbf16>
    %c5_825 = arith.constant 5 : index
    %c0_826 = arith.constant 0 : index
    %c0_827 = arith.constant 0 : index
    %579 = vector.load %arg5[%c5_825, %c0_826, %c0_827] : memref<9x8x8xbf16, #tpu.memory_space<vmem>>, vector<1x8x8xbf16>
    %580 = vector.shape_cast %579 : vector<1x8x8xbf16> to vector<8x8xbf16>
    %cst_828 = arith.constant dense<0.000000e+00> : vector<8x8xf32>
    %581 = tpu.matmul %580, %578, %cst_828 {dimension_numbers = #tpu.dot_dimension_numbers<[1], [0], [0], [1], [0, 0, 1, 1], [], []>} : vector<8x8xbf16>, vector<8x8xbf16>, vector<8x8xf32> -> vector<8x8xf32>
    %582 = arith.addf %576, %581 : vector<8x8xf32>
    %c2_829 = arith.constant 2 : index
    %c0_830 = arith.constant 0 : index
    %c0_831 = arith.constant 0 : index
    %583 = vector.load %arg9[%c2_829, %c0_830, %c0_831] : memref<10x8x10xbf16, #tpu.memory_space<vmem>>, vector<1x8x8xbf16>
    %584 = vector.shape_cast %583 : vector<1x8x8xbf16> to vector<8x8xbf16>
    %c6_832 = arith.constant 6 : index
    %c0_833 = arith.constant 0 : index
    %c0_834 = arith.constant 0 : index
    %585 = vector.load %arg5[%c6_832, %c0_833, %c0_834] : memref<9x8x8xbf16, #tpu.memory_space<vmem>>, vector<1x8x8xbf16>
    %586 = vector.shape_cast %585 : vector<1x8x8xbf16> to vector<8x8xbf16>
    %cst_835 = arith.constant dense<0.000000e+00> : vector<8x8xf32>
    %587 = tpu.matmul %586, %584, %cst_835 {dimension_numbers = #tpu.dot_dimension_numbers<[1], [0], [0], [1], [0, 0, 1, 1], [], []>} : vector<8x8xbf16>, vector<8x8xbf16>, vector<8x8xf32> -> vector<8x8xf32>
    %588 = arith.addf %582, %587 : vector<8x8xf32>
    %c2_836 = arith.constant 2 : index
    %c0_837 = arith.constant 0 : index
    %c1_838 = arith.constant 1 : index
    %589 = vector.load %arg9[%c2_836, %c0_837, %c1_838] : memref<10x8x10xbf16, #tpu.memory_space<vmem>>, vector<1x8x8xbf16>
    %590 = vector.shape_cast %589 : vector<1x8x8xbf16> to vector<8x8xbf16>
    %c7_839 = arith.constant 7 : index
    %c0_840 = arith.constant 0 : index
    %c0_841 = arith.constant 0 : index
    %591 = vector.load %arg5[%c7_839, %c0_840, %c0_841] : memref<9x8x8xbf16, #tpu.memory_space<vmem>>, vector<1x8x8xbf16>
    %592 = vector.shape_cast %591 : vector<1x8x8xbf16> to vector<8x8xbf16>
    %cst_842 = arith.constant dense<0.000000e+00> : vector<8x8xf32>
    %593 = tpu.matmul %592, %590, %cst_842 {dimension_numbers = #tpu.dot_dimension_numbers<[1], [0], [0], [1], [0, 0, 1, 1], [], []>} : vector<8x8xbf16>, vector<8x8xbf16>, vector<8x8xf32> -> vector<8x8xf32>
    %594 = arith.addf %588, %593 : vector<8x8xf32>
    %c2_843 = arith.constant 2 : index
    %c0_844 = arith.constant 0 : index
    %c2_845 = arith.constant 2 : index
    %595 = vector.load %arg9[%c2_843, %c0_844, %c2_845] : memref<10x8x10xbf16, #tpu.memory_space<vmem>>, vector<1x8x8xbf16>
    %596 = vector.shape_cast %595 : vector<1x8x8xbf16> to vector<8x8xbf16>
    %c8_846 = arith.constant 8 : index
    %c0_847 = arith.constant 0 : index
    %c0_848 = arith.constant 0 : index
    %597 = vector.load %arg5[%c8_846, %c0_847, %c0_848] : memref<9x8x8xbf16, #tpu.memory_space<vmem>>, vector<1x8x8xbf16>
    %598 = vector.shape_cast %597 : vector<1x8x8xbf16> to vector<8x8xbf16>
    %cst_849 = arith.constant dense<0.000000e+00> : vector<8x8xf32>
    %599 = tpu.matmul %598, %596, %cst_849 {dimension_numbers = #tpu.dot_dimension_numbers<[1], [0], [0], [1], [0, 0, 1, 1], [], []>} : vector<8x8xbf16>, vector<8x8xbf16>, vector<8x8xf32> -> vector<8x8xf32>
    %600 = arith.addf %594, %599 : vector<8x8xf32>
    %c0_850 = arith.constant 0 : index
    %c0_851 = arith.constant 0 : index
    %601 = vector.load %arg6[%c0_850, %c0_851] : memref<8x1xf32, #tpu.memory_space<vmem>>, vector<8x1xf32>
    %602 = vector.broadcast %601 : vector<8x1xf32> to vector<8x8xf32>
    %603 = arith.addf %600, %602 : vector<8x8xf32>
    %cst_852 = arith.constant 0.000000e+00 : f32
    %604 = vector.broadcast %cst_852 : f32 to vector<8x8xf32>
    %605 = arith.cmpf oge, %603, %604 : vector<8x8xf32>
    %c0_853 = arith.constant 0 : index
    %c0_854 = arith.constant 0 : index
    %606 = vector.load %arg7[%c0_853, %c0_854] : memref<8x1xf32, #tpu.memory_space<vmem>>, vector<8x1xf32>
    %607 = vector.broadcast %606 : vector<8x1xf32> to vector<8x8xf32>
    %608 = arith.mulf %607, %603 : vector<8x8xf32>
    %609 = arith.select %605, %603, %608 : vector<8x8xi1>, vector<8x8xf32>
    %c0_855 = arith.constant 0 : index
    %c0_856 = arith.constant 0 : index
    %c0_857 = arith.constant 0 : index
    %c0_858 = arith.constant 0 : index
    %610 = vector.load %arg8[%c0_855, %c0_856, %c0_857, %c0_858] : memref<1x8x8x8xf32, #tpu.memory_space<vmem>>, vector<1x1x8x8xf32>
    %611 = vector.shape_cast %610 : vector<1x1x8x8xf32> to vector<8x8xf32>
    %612 = vector.shape_cast %609 : vector<8x8xf32> to vector<1x1x8x8xf32>
    tpu.vector_store %arg8[%c0_855, %c0_856, %c0_857, %c0_858], %612 {strides = array<i32>} : memref<1x8x8x8xf32, #tpu.memory_space<vmem>>, vector<1x1x8x8xf32>,
    %cst_859 = arith.constant 0.000000e+00 : f32
    %613 = vector.broadcast %cst_859 : f32 to vector<8x8xf32>
    %c1_860 = arith.constant 1 : index
    %c0_861 = arith.constant 0 : index
    %c0_862 = arith.constant 0 : index
    %614 = vector.load %arg9[%c1_860, %c0_861, %c0_862] : memref<10x8x10xbf16, #tpu.memory_space<vmem>>, vector<1x8x8xbf16>
    %615 = vector.shape_cast %614 : vector<1x8x8xbf16> to vector<8x8xbf16>
    %c0_863 = arith.constant 0 : index
    %c0_864 = arith.constant 0 : index
    %c0_865 = arith.constant 0 : index
    %616 = vector.load %arg5[%c0_863, %c0_864, %c0_865] : memref<9x8x8xbf16, #tpu.memory_space<vmem>>, vector<1x8x8xbf16>
    %617 = vector.shape_cast %616 : vector<1x8x8xbf16> to vector<8x8xbf16>
    %cst_866 = arith.constant dense<0.000000e+00> : vector<8x8xf32>
    %618 = tpu.matmul %617, %615, %cst_866 {dimension_numbers = #tpu.dot_dimension_numbers<[1], [0], [0], [1], [0, 0, 1, 1], [], []>} : vector<8x8xbf16>, vector<8x8xbf16>, vector<8x8xf32> -> vector<8x8xf32>
    %619 = arith.addf %613, %618 : vector<8x8xf32>
    %c1_867 = arith.constant 1 : index
    %c0_868 = arith.constant 0 : index
    %c1_869 = arith.constant 1 : index
    %620 = vector.load %arg9[%c1_867, %c0_868, %c1_869] : memref<10x8x10xbf16, #tpu.memory_space<vmem>>, vector<1x8x8xbf16>
    %621 = vector.shape_cast %620 : vector<1x8x8xbf16> to vector<8x8xbf16>
    %c1_870 = arith.constant 1 : index
    %c0_871 = arith.constant 0 : index
    %c0_872 = arith.constant 0 : index
    %622 = vector.load %arg5[%c1_870, %c0_871, %c0_872] : memref<9x8x8xbf16, #tpu.memory_space<vmem>>, vector<1x8x8xbf16>
    %623 = vector.shape_cast %622 : vector<1x8x8xbf16> to vector<8x8xbf16>
    %cst_873 = arith.constant dense<0.000000e+00> : vector<8x8xf32>
    %624 = tpu.matmul %623, %621, %cst_873 {dimension_numbers = #tpu.dot_dimension_numbers<[1], [0], [0], [1], [0, 0, 1, 1], [], []>} : vector<8x8xbf16>, vector<8x8xbf16>, vector<8x8xf32> -> vector<8x8xf32>
    %625 = arith.addf %619, %624 : vector<8x8xf32>
    %c1_874 = arith.constant 1 : index
    %c0_875 = arith.constant 0 : index
    %c2_876 = arith.constant 2 : index
    %626 = vector.load %arg9[%c1_874, %c0_875, %c2_876] : memref<10x8x10xbf16, #tpu.memory_space<vmem>>, vector<1x8x8xbf16>
    %627 = vector.shape_cast %626 : vector<1x8x8xbf16> to vector<8x8xbf16>
    %c2_877 = arith.constant 2 : index
    %c0_878 = arith.constant 0 : index
    %c0_879 = arith.constant 0 : index
    %628 = vector.load %arg5[%c2_877, %c0_878, %c0_879] : memref<9x8x8xbf16, #tpu.memory_space<vmem>>, vector<1x8x8xbf16>
    %629 = vector.shape_cast %628 : vector<1x8x8xbf16> to vector<8x8xbf16>
    %cst_880 = arith.constant dense<0.000000e+00> : vector<8x8xf32>
    %630 = tpu.matmul %629, %627, %cst_880 {dimension_numbers = #tpu.dot_dimension_numbers<[1], [0], [0], [1], [0, 0, 1, 1], [], []>} : vector<8x8xbf16>, vector<8x8xbf16>, vector<8x8xf32> -> vector<8x8xf32>
    %631 = arith.addf %625, %630 : vector<8x8xf32>
    %c2_881 = arith.constant 2 : index
    %c0_882 = arith.constant 0 : index
    %c0_883 = arith.constant 0 : index
    %632 = vector.load %arg9[%c2_881, %c0_882, %c0_883] : memref<10x8x10xbf16, #tpu.memory_space<vmem>>, vector<1x8x8xbf16>
    %633 = vector.shape_cast %632 : vector<1x8x8xbf16> to vector<8x8xbf16>
    %c3_884 = arith.constant 3 : index
    %c0_885 = arith.constant 0 : index
    %c0_886 = arith.constant 0 : index
    %634 = vector.load %arg5[%c3_884, %c0_885, %c0_886] : memref<9x8x8xbf16, #tpu.memory_space<vmem>>, vector<1x8x8xbf16>
    %635 = vector.shape_cast %634 : vector<1x8x8xbf16> to vector<8x8xbf16>
    %cst_887 = arith.constant dense<0.000000e+00> : vector<8x8xf32>
    %636 = tpu.matmul %635, %633, %cst_887 {dimension_numbers = #tpu.dot_dimension_numbers<[1], [0], [0], [1], [0, 0, 1, 1], [], []>} : vector<8x8xbf16>, vector<8x8xbf16>, vector<8x8xf32> -> vector<8x8xf32>
    %637 = arith.addf %631, %636 : vector<8x8xf32>
    %c2_888 = arith.constant 2 : index
    %c0_889 = arith.constant 0 : index
    %c1_890 = arith.constant 1 : index
    %638 = vector.load %arg9[%c2_888, %c0_889, %c1_890] : memref<10x8x10xbf16, #tpu.memory_space<vmem>>, vector<1x8x8xbf16>
    %639 = vector.shape_cast %638 : vector<1x8x8xbf16> to vector<8x8xbf16>
    %c4_891 = arith.constant 4 : index
    %c0_892 = arith.constant 0 : index
    %c0_893 = arith.constant 0 : index
    %640 = vector.load %arg5[%c4_891, %c0_892, %c0_893] : memref<9x8x8xbf16, #tpu.memory_space<vmem>>, vector<1x8x8xbf16>
    %641 = vector.shape_cast %640 : vector<1x8x8xbf16> to vector<8x8xbf16>
    %cst_894 = arith.constant dense<0.000000e+00> : vector<8x8xf32>
    %642 = tpu.matmul %641, %639, %cst_894 {dimension_numbers = #tpu.dot_dimension_numbers<[1], [0], [0], [1], [0, 0, 1, 1], [], []>} : vector<8x8xbf16>, vector<8x8xbf16>, vector<8x8xf32> -> vector<8x8xf32>
    %643 = arith.addf %637, %642 : vector<8x8xf32>
    %c2_895 = arith.constant 2 : index
    %c0_896 = arith.constant 0 : index
    %c2_897 = arith.constant 2 : index
    %644 = vector.load %arg9[%c2_895, %c0_896, %c2_897] : memref<10x8x10xbf16, #tpu.memory_space<vmem>>, vector<1x8x8xbf16>
    %645 = vector.shape_cast %644 : vector<1x8x8xbf16> to vector<8x8xbf16>
    %c5_898 = arith.constant 5 : index
    %c0_899 = arith.constant 0 : index
    %c0_900 = arith.constant 0 : index
    %646 = vector.load %arg5[%c5_898, %c0_899, %c0_900] : memref<9x8x8xbf16, #tpu.memory_space<vmem>>, vector<1x8x8xbf16>
    %647 = vector.shape_cast %646 : vector<1x8x8xbf16> to vector<8x8xbf16>
    %cst_901 = arith.constant dense<0.000000e+00> : vector<8x8xf32>
    %648 = tpu.matmul %647, %645, %cst_901 {dimension_numbers = #tpu.dot_dimension_numbers<[1], [0], [0], [1], [0, 0, 1, 1], [], []>} : vector<8x8xbf16>, vector<8x8xbf16>, vector<8x8xf32> -> vector<8x8xf32>
    %649 = arith.addf %643, %648 : vector<8x8xf32>
    %c3_902 = arith.constant 3 : index
    %c0_903 = arith.constant 0 : index
    %c0_904 = arith.constant 0 : index
    %650 = vector.load %arg9[%c3_902, %c0_903, %c0_904] : memref<10x8x10xbf16, #tpu.memory_space<vmem>>, vector<1x8x8xbf16>
    %651 = vector.shape_cast %650 : vector<1x8x8xbf16> to vector<8x8xbf16>
    %c6_905 = arith.constant 6 : index
    %c0_906 = arith.constant 0 : index
    %c0_907 = arith.constant 0 : index
    %652 = vector.load %arg5[%c6_905, %c0_906, %c0_907] : memref<9x8x8xbf16, #tpu.memory_space<vmem>>, vector<1x8x8xbf16>
    %653 = vector.shape_cast %652 : vector<1x8x8xbf16> to vector<8x8xbf16>
    %cst_908 = arith.constant dense<0.000000e+00> : vector<8x8xf32>
    %654 = tpu.matmul %653, %651, %cst_908 {dimension_numbers = #tpu.dot_dimension_numbers<[1], [0], [0], [1], [0, 0, 1, 1], [], []>} : vector<8x8xbf16>, vector<8x8xbf16>, vector<8x8xf32> -> vector<8x8xf32>
    %655 = arith.addf %649, %654 : vector<8x8xf32>
    %c3_909 = arith.constant 3 : index
    %c0_910 = arith.constant 0 : index
    %c1_911 = arith.constant 1 : index
    %656 = vector.load %arg9[%c3_909, %c0_910, %c1_911] : memref<10x8x10xbf16, #tpu.memory_space<vmem>>, vector<1x8x8xbf16>
    %657 = vector.shape_cast %656 : vector<1x8x8xbf16> to vector<8x8xbf16>
    %c7_912 = arith.constant 7 : index
    %c0_913 = arith.constant 0 : index
    %c0_914 = arith.constant 0 : index
    %658 = vector.load %arg5[%c7_912, %c0_913, %c0_914] : memref<9x8x8xbf16, #tpu.memory_space<vmem>>, vector<1x8x8xbf16>
    %659 = vector.shape_cast %658 : vector<1x8x8xbf16> to vector<8x8xbf16>
    %cst_915 = arith.constant dense<0.000000e+00> : vector<8x8xf32>
    %660 = tpu.matmul %659, %657, %cst_915 {dimension_numbers = #tpu.dot_dimension_numbers<[1], [0], [0], [1], [0, 0, 1, 1], [], []>} : vector<8x8xbf16>, vector<8x8xbf16>, vector<8x8xf32> -> vector<8x8xf32>
    %661 = arith.addf %655, %660 : vector<8x8xf32>
    %c3_916 = arith.constant 3 : index
    %c0_917 = arith.constant 0 : index
    %c2_918 = arith.constant 2 : index
    %662 = vector.load %arg9[%c3_916, %c0_917, %c2_918] : memref<10x8x10xbf16, #tpu.memory_space<vmem>>, vector<1x8x8xbf16>
    %663 = vector.shape_cast %662 : vector<1x8x8xbf16> to vector<8x8xbf16>
    %c8_919 = arith.constant 8 : index
    %c0_920 = arith.constant 0 : index
    %c0_921 = arith.constant 0 : index
    %664 = vector.load %arg5[%c8_919, %c0_920, %c0_921] : memref<9x8x8xbf16, #tpu.memory_space<vmem>>, vector<1x8x8xbf16>
    %665 = vector.shape_cast %664 : vector<1x8x8xbf16> to vector<8x8xbf16>
    %cst_922 = arith.constant dense<0.000000e+00> : vector<8x8xf32>
    %666 = tpu.matmul %665, %663, %cst_922 {dimension_numbers = #tpu.dot_dimension_numbers<[1], [0], [0], [1], [0, 0, 1, 1], [], []>} : vector<8x8xbf16>, vector<8x8xbf16>, vector<8x8xf32> -> vector<8x8xf32>
    %667 = arith.addf %661, %666 : vector<8x8xf32>
    %c0_923 = arith.constant 0 : index
    %c0_924 = arith.constant 0 : index
    %668 = vector.load %arg6[%c0_923, %c0_924] : memref<8x1xf32, #tpu.memory_space<vmem>>, vector<8x1xf32>
    %669 = vector.broadcast %668 : vector<8x1xf32> to vector<8x8xf32>
    %670 = arith.addf %667, %669 : vector<8x8xf32>
    %cst_925 = arith.constant 0.000000e+00 : f32
    %671 = vector.broadcast %cst_925 : f32 to vector<8x8xf32>
    %672 = arith.cmpf oge, %670, %671 : vector<8x8xf32>
    %c0_926 = arith.constant 0 : index
    %c0_927 = arith.constant 0 : index
    %673 = vector.load %arg7[%c0_926, %c0_927] : memref<8x1xf32, #tpu.memory_space<vmem>>, vector<8x1xf32>
    %674 = vector.broadcast %673 : vector<8x1xf32> to vector<8x8xf32>
    %675 = arith.mulf %674, %670 : vector<8x8xf32>
    %676 = arith.select %672, %670, %675 : vector<8x8xi1>, vector<8x8xf32>
    %c0_928 = arith.constant 0 : index
    %c1_929 = arith.constant 1 : index
    %c0_930 = arith.constant 0 : index
    %c0_931 = arith.constant 0 : index
    %677 = vector.load %arg8[%c0_928, %c1_929, %c0_930, %c0_931] : memref<1x8x8x8xf32, #tpu.memory_space<vmem>>, vector<1x1x8x8xf32>
    %678 = vector.shape_cast %677 : vector<1x1x8x8xf32> to vector<8x8xf32>
    %679 = vector.shape_cast %676 : vector<8x8xf32> to vector<1x1x8x8xf32>
    tpu.vector_store %arg8[%c0_928, %c1_929, %c0_930, %c0_931], %679 {strides = array<i32>} : memref<1x8x8x8xf32, #tpu.memory_space<vmem>>, vector<1x1x8x8xf32>,
    %cst_932 = arith.constant 0.000000e+00 : f32
    %680 = vector.broadcast %cst_932 : f32 to vector<8x8xf32>
    %c2_933 = arith.constant 2 : index
    %c0_934 = arith.constant 0 : index
    %c0_935 = arith.constant 0 : index
    %681 = vector.load %arg9[%c2_933, %c0_934, %c0_935] : memref<10x8x10xbf16, #tpu.memory_space<vmem>>, vector<1x8x8xbf16>
    %682 = vector.shape_cast %681 : vector<1x8x8xbf16> to vector<8x8xbf16>
    %c0_936 = arith.constant 0 : index
    %c0_937 = arith.constant 0 : index
    %c0_938 = arith.constant 0 : index
    %683 = vector.load %arg5[%c0_936, %c0_937, %c0_938] : memref<9x8x8xbf16, #tpu.memory_space<vmem>>, vector<1x8x8xbf16>
    %684 = vector.shape_cast %683 : vector<1x8x8xbf16> to vector<8x8xbf16>
    %cst_939 = arith.constant dense<0.000000e+00> : vector<8x8xf32>
    %685 = tpu.matmul %684, %682, %cst_939 {dimension_numbers = #tpu.dot_dimension_numbers<[1], [0], [0], [1], [0, 0, 1, 1], [], []>} : vector<8x8xbf16>, vector<8x8xbf16>, vector<8x8xf32> -> vector<8x8xf32>
    %686 = arith.addf %680, %685 : vector<8x8xf32>
    %c2_940 = arith.constant 2 : index
    %c0_941 = arith.constant 0 : index
    %c1_942 = arith.constant 1 : index
    %687 = vector.load %arg9[%c2_940, %c0_941, %c1_942] : memref<10x8x10xbf16, #tpu.memory_space<vmem>>, vector<1x8x8xbf16>
    %688 = vector.shape_cast %687 : vector<1x8x8xbf16> to vector<8x8xbf16>
    %c1_943 = arith.constant 1 : index
    %c0_944 = arith.constant 0 : index
    %c0_945 = arith.constant 0 : index
    %689 = vector.load %arg5[%c1_943, %c0_944, %c0_945] : memref<9x8x8xbf16, #tpu.memory_space<vmem>>, vector<1x8x8xbf16>
    %690 = vector.shape_cast %689 : vector<1x8x8xbf16> to vector<8x8xbf16>
    %cst_946 = arith.constant dense<0.000000e+00> : vector<8x8xf32>
    %691 = tpu.matmul %690, %688, %cst_946 {dimension_numbers = #tpu.dot_dimension_numbers<[1], [0], [0], [1], [0, 0, 1, 1], [], []>} : vector<8x8xbf16>, vector<8x8xbf16>, vector<8x8xf32> -> vector<8x8xf32>
    %692 = arith.addf %686, %691 : vector<8x8xf32>
    %c2_947 = arith.constant 2 : index
    %c0_948 = arith.constant 0 : index
    %c2_949 = arith.constant 2 : index
    %693 = vector.load %arg9[%c2_947, %c0_948, %c2_949] : memref<10x8x10xbf16, #tpu.memory_space<vmem>>, vector<1x8x8xbf16>
    %694 = vector.shape_cast %693 : vector<1x8x8xbf16> to vector<8x8xbf16>
    %c2_950 = arith.constant 2 : index
    %c0_951 = arith.constant 0 : index
    %c0_952 = arith.constant 0 : index
    %695 = vector.load %arg5[%c2_950, %c0_951, %c0_952] : memref<9x8x8xbf16, #tpu.memory_space<vmem>>, vector<1x8x8xbf16>
    %696 = vector.shape_cast %695 : vector<1x8x8xbf16> to vector<8x8xbf16>
    %cst_953 = arith.constant dense<0.000000e+00> : vector<8x8xf32>
    %697 = tpu.matmul %696, %694, %cst_953 {dimension_numbers = #tpu.dot_dimension_numbers<[1], [0], [0], [1], [0, 0, 1, 1], [], []>} : vector<8x8xbf16>, vector<8x8xbf16>, vector<8x8xf32> -> vector<8x8xf32>
    %698 = arith.addf %692, %697 : vector<8x8xf32>
    %c3_954 = arith.constant 3 : index
    %c0_955 = arith.constant 0 : index
    %c0_956 = arith.constant 0 : index
    %699 = vector.load %arg9[%c3_954, %c0_955, %c0_956] : memref<10x8x10xbf16, #tpu.memory_space<vmem>>, vector<1x8x8xbf16>
    %700 = vector.shape_cast %699 : vector<1x8x8xbf16> to vector<8x8xbf16>
    %c3_957 = arith.constant 3 : index
    %c0_958 = arith.constant 0 : index
    %c0_959 = arith.constant 0 : index
    %701 = vector.load %arg5[%c3_957, %c0_958, %c0_959] : memref<9x8x8xbf16, #tpu.memory_space<vmem>>, vector<1x8x8xbf16>
    %702 = vector.shape_cast %701 : vector<1x8x8xbf16> to vector<8x8xbf16>
    %cst_960 = arith.constant dense<0.000000e+00> : vector<8x8xf32>
    %703 = tpu.matmul %702, %700, %cst_960 {dimension_numbers = #tpu.dot_dimension_numbers<[1], [0], [0], [1], [0, 0, 1, 1], [], []>} : vector<8x8xbf16>, vector<8x8xbf16>, vector<8x8xf32> -> vector<8x8xf32>
    %704 = arith.addf %698, %703 : vector<8x8xf32>
    %c3_961 = arith.constant 3 : index
    %c0_962 = arith.constant 0 : index
    %c1_963 = arith.constant 1 : index
    %705 = vector.load %arg9[%c3_961, %c0_962, %c1_963] : memref<10x8x10xbf16, #tpu.memory_space<vmem>>, vector<1x8x8xbf16>
    %706 = vector.shape_cast %705 : vector<1x8x8xbf16> to vector<8x8xbf16>
    %c4_964 = arith.constant 4 : index
    %c0_965 = arith.constant 0 : index
    %c0_966 = arith.constant 0 : index
    %707 = vector.load %arg5[%c4_964, %c0_965, %c0_966] : memref<9x8x8xbf16, #tpu.memory_space<vmem>>, vector<1x8x8xbf16>
    %708 = vector.shape_cast %707 : vector<1x8x8xbf16> to vector<8x8xbf16>
    %cst_967 = arith.constant dense<0.000000e+00> : vector<8x8xf32>
    %709 = tpu.matmul %708, %706, %cst_967 {dimension_numbers = #tpu.dot_dimension_numbers<[1], [0], [0], [1], [0, 0, 1, 1], [], []>} : vector<8x8xbf16>, vector<8x8xbf16>, vector<8x8xf32> -> vector<8x8xf32>
    %710 = arith.addf %704, %709 : vector<8x8xf32>
    %c3_968 = arith.constant 3 : index
    %c0_969 = arith.constant 0 : index
    %c2_970 = arith.constant 2 : index
    %711 = vector.load %arg9[%c3_968, %c0_969, %c2_970] : memref<10x8x10xbf16, #tpu.memory_space<vmem>>, vector<1x8x8xbf16>
    %712 = vector.shape_cast %711 : vector<1x8x8xbf16> to vector<8x8xbf16>
    %c5_971 = arith.constant 5 : index
    %c0_972 = arith.constant 0 : index
    %c0_973 = arith.constant 0 : index
    %713 = vector.load %arg5[%c5_971, %c0_972, %c0_973] : memref<9x8x8xbf16, #tpu.memory_space<vmem>>, vector<1x8x8xbf16>
    %714 = vector.shape_cast %713 : vector<1x8x8xbf16> to vector<8x8xbf16>
    %cst_974 = arith.constant dense<0.000000e+00> : vector<8x8xf32>
    %715 = tpu.matmul %714, %712, %cst_974 {dimension_numbers = #tpu.dot_dimension_numbers<[1], [0], [0], [1], [0, 0, 1, 1], [], []>} : vector<8x8xbf16>, vector<8x8xbf16>, vector<8x8xf32> -> vector<8x8xf32>
    %716 = arith.addf %710, %715 : vector<8x8xf32>
    %c4_975 = arith.constant 4 : index
    %c0_976 = arith.constant 0 : index
    %c0_977 = arith.constant 0 : index
    %717 = vector.load %arg9[%c4_975, %c0_976, %c0_977] : memref<10x8x10xbf16, #tpu.memory_space<vmem>>, vector<1x8x8xbf16>
    %718 = vector.shape_cast %717 : vector<1x8x8xbf16> to vector<8x8xbf16>
    %c6_978 = arith.constant 6 : index
    %c0_979 = arith.constant 0 : index
    %c0_980 = arith.constant 0 : index
    %719 = vector.load %arg5[%c6_978, %c0_979, %c0_980] : memref<9x8x8xbf16, #tpu.memory_space<vmem>>, vector<1x8x8xbf16>
    %720 = vector.shape_cast %719 : vector<1x8x8xbf16> to vector<8x8xbf16>
    %cst_981 = arith.constant dense<0.000000e+00> : vector<8x8xf32>
    %721 = tpu.matmul %720, %718, %cst_981 {dimension_numbers = #tpu.dot_dimension_numbers<[1], [0], [0], [1], [0, 0, 1, 1], [], []>} : vector<8x8xbf16>, vector<8x8xbf16>, vector<8x8xf32> -> vector<8x8xf32>
    %722 = arith.addf %716, %721 : vector<8x8xf32>
    %c4_982 = arith.constant 4 : index
    %c0_983 = arith.constant 0 : index
    %c1_984 = arith.constant 1 : index
    %723 = vector.load %arg9[%c4_982, %c0_983, %c1_984] : memref<10x8x10xbf16, #tpu.memory_space<vmem>>, vector<1x8x8xbf16>
    %724 = vector.shape_cast %723 : vector<1x8x8xbf16> to vector<8x8xbf16>
    %c7_985 = arith.constant 7 : index
    %c0_986 = arith.constant 0 : index
    %c0_987 = arith.constant 0 : index
    %725 = vector.load %arg5[%c7_985, %c0_986, %c0_987] : memref<9x8x8xbf16, #tpu.memory_space<vmem>>, vector<1x8x8xbf16>
    %726 = vector.shape_cast %725 : vector<1x8x8xbf16> to vector<8x8xbf16>
    %cst_988 = arith.constant dense<0.000000e+00> : vector<8x8xf32>
    %727 = tpu.matmul %726, %724, %cst_988 {dimension_numbers = #tpu.dot_dimension_numbers<[1], [0], [0], [1], [0, 0, 1, 1], [], []>} : vector<8x8xbf16>, vector<8x8xbf16>, vector<8x8xf32> -> vector<8x8xf32>
    %728 = arith.addf %722, %727 : vector<8x8xf32>
    %c4_989 = arith.constant 4 : index
    %c0_990 = arith.constant 0 : index
    %c2_991 = arith.constant 2 : index
    %729 = vector.load %arg9[%c4_989, %c0_990, %c2_991] : memref<10x8x10xbf16, #tpu.memory_space<vmem>>, vector<1x8x8xbf16>
    %730 = vector.shape_cast %729 : vector<1x8x8xbf16> to vector<8x8xbf16>
    %c8_992 = arith.constant 8 : index
    %c0_993 = arith.constant 0 : index
    %c0_994 = arith.constant 0 : index
    %731 = vector.load %arg5[%c8_992, %c0_993, %c0_994] : memref<9x8x8xbf16, #tpu.memory_space<vmem>>, vector<1x8x8xbf16>
    %732 = vector.shape_cast %731 : vector<1x8x8xbf16> to vector<8x8xbf16>
    %cst_995 = arith.constant dense<0.000000e+00> : vector<8x8xf32>
    %733 = tpu.matmul %732, %730, %cst_995 {dimension_numbers = #tpu.dot_dimension_numbers<[1], [0], [0], [1], [0, 0, 1, 1], [], []>} : vector<8x8xbf16>, vector<8x8xbf16>, vector<8x8xf32> -> vector<8x8xf32>
    %734 = arith.addf %728, %733 : vector<8x8xf32>
    %c0_996 = arith.constant 0 : index
    %c0_997 = arith.constant 0 : index
    %735 = vector.load %arg6[%c0_996, %c0_997] : memref<8x1xf32, #tpu.memory_space<vmem>>, vector<8x1xf32>
    %736 = vector.broadcast %735 : vector<8x1xf32> to vector<8x8xf32>
    %737 = arith.addf %734, %736 : vector<8x8xf32>
    %cst_998 = arith.constant 0.000000e+00 : f32
    %738 = vector.broadcast %cst_998 : f32 to vector<8x8xf32>
    %739 = arith.cmpf oge, %737, %738 : vector<8x8xf32>
    %c0_999 = arith.constant 0 : index
    %c0_1000 = arith.constant 0 : index
    %740 = vector.load %arg7[%c0_999, %c0_1000] : memref<8x1xf32, #tpu.memory_space<vmem>>, vector<8x1xf32>
    %741 = vector.broadcast %740 : vector<8x1xf32> to vector<8x8xf32>
    %742 = arith.mulf %741, %737 : vector<8x8xf32>
    %743 = arith.select %739, %737, %742 : vector<8x8xi1>, vector<8x8xf32>
    %c0_1001 = arith.constant 0 : index
    %c2_1002 = arith.constant 2 : index
    %c0_1003 = arith.constant 0 : index
    %c0_1004 = arith.constant 0 : index
    %744 = vector.load %arg8[%c0_1001, %c2_1002, %c0_1003, %c0_1004] : memref<1x8x8x8xf32, #tpu.memory_space<vmem>>, vector<1x1x8x8xf32>
    %745 = vector.shape_cast %744 : vector<1x1x8x8xf32> to vector<8x8xf32>
    %746 = vector.shape_cast %743 : vector<8x8xf32> to vector<1x1x8x8xf32>
    tpu.vector_store %arg8[%c0_1001, %c2_1002, %c0_1003, %c0_1004], %746 {strides = array<i32>} : memref<1x8x8x8xf32, #tpu.memory_space<vmem>>, vector<1x1x8x8xf32>,
    %cst_1005 = arith.constant 0.000000e+00 : f32
    %747 = vector.broadcast %cst_1005 : f32 to vector<8x8xf32>
    %c3_1006 = arith.constant 3 : index
    %c0_1007 = arith.constant 0 : index
    %c0_1008 = arith.constant 0 : index
    %748 = vector.load %arg9[%c3_1006, %c0_1007, %c0_1008] : memref<10x8x10xbf16, #tpu.memory_space<vmem>>, vector<1x8x8xbf16>
    %749 = vector.shape_cast %748 : vector<1x8x8xbf16> to vector<8x8xbf16>
    %c0_1009 = arith.constant 0 : index
    %c0_1010 = arith.constant 0 : index
    %c0_1011 = arith.constant 0 : index
    %750 = vector.load %arg5[%c0_1009, %c0_1010, %c0_1011] : memref<9x8x8xbf16, #tpu.memory_space<vmem>>, vector<1x8x8xbf16>
    %751 = vector.shape_cast %750 : vector<1x8x8xbf16> to vector<8x8xbf16>
    %cst_1012 = arith.constant dense<0.000000e+00> : vector<8x8xf32>
    %752 = tpu.matmul %751, %749, %cst_1012 {dimension_numbers = #tpu.dot_dimension_numbers<[1], [0], [0], [1], [0, 0, 1, 1], [], []>} : vector<8x8xbf16>, vector<8x8xbf16>, vector<8x8xf32> -> vector<8x8xf32>
    %753 = arith.addf %747, %752 : vector<8x8xf32>
    %c3_1013 = arith.constant 3 : index
    %c0_1014 = arith.constant 0 : index
    %c1_1015 = arith.constant 1 : index
    %754 = vector.load %arg9[%c3_1013, %c0_1014, %c1_1015] : memref<10x8x10xbf16, #tpu.memory_space<vmem>>, vector<1x8x8xbf16>
    %755 = vector.shape_cast %754 : vector<1x8x8xbf16> to vector<8x8xbf16>
    %c1_1016 = arith.constant 1 : index
    %c0_1017 = arith.constant 0 : index
    %c0_1018 = arith.constant 0 : index
    %756 = vector.load %arg5[%c1_1016, %c0_1017, %c0_1018] : memref<9x8x8xbf16, #tpu.memory_space<vmem>>, vector<1x8x8xbf16>
    %757 = vector.shape_cast %756 : vector<1x8x8xbf16> to vector<8x8xbf16>
    %cst_1019 = arith.constant dense<0.000000e+00> : vector<8x8xf32>
    %758 = tpu.matmul %757, %755, %cst_1019 {dimension_numbers = #tpu.dot_dimension_numbers<[1], [0], [0], [1], [0, 0, 1, 1], [], []>} : vector<8x8xbf16>, vector<8x8xbf16>, vector<8x8xf32> -> vector<8x8xf32>
    %759 = arith.addf %753, %758 : vector<8x8xf32>
    %c3_1020 = arith.constant 3 : index
    %c0_1021 = arith.constant 0 : index
    %c2_1022 = arith.constant 2 : index
    %760 = vector.load %arg9[%c3_1020, %c0_1021, %c2_1022] : memref<10x8x10xbf16, #tpu.memory_space<vmem>>, vector<1x8x8xbf16>
    %761 = vector.shape_cast %760 : vector<1x8x8xbf16> to vector<8x8xbf16>
    %c2_1023 = arith.constant 2 : index
    %c0_1024 = arith.constant 0 : index
    %c0_1025 = arith.constant 0 : index
    %762 = vector.load %arg5[%c2_1023, %c0_1024, %c0_1025] : memref<9x8x8xbf16, #tpu.memory_space<vmem>>, vector<1x8x8xbf16>
    %763 = vector.shape_cast %762 : vector<1x8x8xbf16> to vector<8x8xbf16>
    %cst_1026 = arith.constant dense<0.000000e+00> : vector<8x8xf32>
    %764 = tpu.matmul %763, %761, %cst_1026 {dimension_numbers = #tpu.dot_dimension_numbers<[1], [0], [0], [1], [0, 0, 1, 1], [], []>} : vector<8x8xbf16>, vector<8x8xbf16>, vector<8x8xf32> -> vector<8x8xf32>
    %765 = arith.addf %759, %764 : vector<8x8xf32>
    %c4_1027 = arith.constant 4 : index
    %c0_1028 = arith.constant 0 : index
    %c0_1029 = arith.constant 0 : index
    %766 = vector.load %arg9[%c4_1027, %c0_1028, %c0_1029] : memref<10x8x10xbf16, #tpu.memory_space<vmem>>, vector<1x8x8xbf16>
    %767 = vector.shape_cast %766 : vector<1x8x8xbf16> to vector<8x8xbf16>
    %c3_1030 = arith.constant 3 : index
    %c0_1031 = arith.constant 0 : index
    %c0_1032 = arith.constant 0 : index
    %768 = vector.load %arg5[%c3_1030, %c0_1031, %c0_1032] : memref<9x8x8xbf16, #tpu.memory_space<vmem>>, vector<1x8x8xbf16>
    %769 = vector.shape_cast %768 : vector<1x8x8xbf16> to vector<8x8xbf16>
    %cst_1033 = arith.constant dense<0.000000e+00> : vector<8x8xf32>
    %770 = tpu.matmul %769, %767, %cst_1033 {dimension_numbers = #tpu.dot_dimension_numbers<[1], [0], [0], [1], [0, 0, 1, 1], [], []>} : vector<8x8xbf16>, vector<8x8xbf16>, vector<8x8xf32> -> vector<8x8xf32>
    %771 = arith.addf %765, %770 : vector<8x8xf32>
    %c4_1034 = arith.constant 4 : index
    %c0_1035 = arith.constant 0 : index
    %c1_1036 = arith.constant 1 : index
    %772 = vector.load %arg9[%c4_1034, %c0_1035, %c1_1036] : memref<10x8x10xbf16, #tpu.memory_space<vmem>>, vector<1x8x8xbf16>
    %773 = vector.shape_cast %772 : vector<1x8x8xbf16> to vector<8x8xbf16>
    %c4_1037 = arith.constant 4 : index
    %c0_1038 = arith.constant 0 : index
    %c0_1039 = arith.constant 0 : index
    %774 = vector.load %arg5[%c4_1037, %c0_1038, %c0_1039] : memref<9x8x8xbf16, #tpu.memory_space<vmem>>, vector<1x8x8xbf16>
    %775 = vector.shape_cast %774 : vector<1x8x8xbf16> to vector<8x8xbf16>
    %cst_1040 = arith.constant dense<0.000000e+00> : vector<8x8xf32>
    %776 = tpu.matmul %775, %773, %cst_1040 {dimension_numbers = #tpu.dot_dimension_numbers<[1], [0], [0], [1], [0, 0, 1, 1], [], []>} : vector<8x8xbf16>, vector<8x8xbf16>, vector<8x8xf32> -> vector<8x8xf32>
    %777 = arith.addf %771, %776 : vector<8x8xf32>
    %c4_1041 = arith.constant 4 : index
    %c0_1042 = arith.constant 0 : index
    %c2_1043 = arith.constant 2 : index
    %778 = vector.load %arg9[%c4_1041, %c0_1042, %c2_1043] : memref<10x8x10xbf16, #tpu.memory_space<vmem>>, vector<1x8x8xbf16>
    %779 = vector.shape_cast %778 : vector<1x8x8xbf16> to vector<8x8xbf16>
    %c5_1044 = arith.constant 5 : index
    %c0_1045 = arith.constant 0 : index
    %c0_1046 = arith.constant 0 : index
    %780 = vector.load %arg5[%c5_1044, %c0_1045, %c0_1046] : memref<9x8x8xbf16, #tpu.memory_space<vmem>>, vector<1x8x8xbf16>
    %781 = vector.shape_cast %780 : vector<1x8x8xbf16> to vector<8x8xbf16>
    %cst_1047 = arith.constant dense<0.000000e+00> : vector<8x8xf32>
    %782 = tpu.matmul %781, %779, %cst_1047 {dimension_numbers = #tpu.dot_dimension_numbers<[1], [0], [0], [1], [0, 0, 1, 1], [], []>} : vector<8x8xbf16>, vector<8x8xbf16>, vector<8x8xf32> -> vector<8x8xf32>
    %783 = arith.addf %777, %782 : vector<8x8xf32>
    %c5_1048 = arith.constant 5 : index
    %c0_1049 = arith.constant 0 : index
    %c0_1050 = arith.constant 0 : index
    %784 = vector.load %arg9[%c5_1048, %c0_1049, %c0_1050] : memref<10x8x10xbf16, #tpu.memory_space<vmem>>, vector<1x8x8xbf16>
    %785 = vector.shape_cast %784 : vector<1x8x8xbf16> to vector<8x8xbf16>
    %c6_1051 = arith.constant 6 : index
    %c0_1052 = arith.constant 0 : index
    %c0_1053 = arith.constant 0 : index
    %786 = vector.load %arg5[%c6_1051, %c0_1052, %c0_1053] : memref<9x8x8xbf16, #tpu.memory_space<vmem>>, vector<1x8x8xbf16>
    %787 = vector.shape_cast %786 : vector<1x8x8xbf16> to vector<8x8xbf16>
    %cst_1054 = arith.constant dense<0.000000e+00> : vector<8x8xf32>
    %788 = tpu.matmul %787, %785, %cst_1054 {dimension_numbers = #tpu.dot_dimension_numbers<[1], [0], [0], [1], [0, 0, 1, 1], [], []>} : vector<8x8xbf16>, vector<8x8xbf16>, vector<8x8xf32> -> vector<8x8xf32>
    %789 = arith.addf %783, %788 : vector<8x8xf32>
    %c5_1055 = arith.constant 5 : index
    %c0_1056 = arith.constant 0 : index
    %c1_1057 = arith.constant 1 : index
    %790 = vector.load %arg9[%c5_1055, %c0_1056, %c1_1057] : memref<10x8x10xbf16, #tpu.memory_space<vmem>>, vector<1x8x8xbf16>
    %791 = vector.shape_cast %790 : vector<1x8x8xbf16> to vector<8x8xbf16>
    %c7_1058 = arith.constant 7 : index
    %c0_1059 = arith.constant 0 : index
    %c0_1060 = arith.constant 0 : index
    %792 = vector.load %arg5[%c7_1058, %c0_1059, %c0_1060] : memref<9x8x8xbf16, #tpu.memory_space<vmem>>, vector<1x8x8xbf16>
    %793 = vector.shape_cast %792 : vector<1x8x8xbf16> to vector<8x8xbf16>
    %cst_1061 = arith.constant dense<0.000000e+00> : vector<8x8xf32>
    %794 = tpu.matmul %793, %791, %cst_1061 {dimension_numbers = #tpu.dot_dimension_numbers<[1], [0], [0], [1], [0, 0, 1, 1], [], []>} : vector<8x8xbf16>, vector<8x8xbf16>, vector<8x8xf32> -> vector<8x8xf32>
    %795 = arith.addf %789, %794 : vector<8x8xf32>
    %c5_1062 = arith.constant 5 : index
    %c0_1063 = arith.constant 0 : index
    %c2_1064 = arith.constant 2 : index
    %796 = vector.load %arg9[%c5_1062, %c0_1063, %c2_1064] : memref<10x8x10xbf16, #tpu.memory_space<vmem>>, vector<1x8x8xbf16>
    %797 = vector.shape_cast %796 : vector<1x8x8xbf16> to vector<8x8xbf16>
    %c8_1065 = arith.constant 8 : index
    %c0_1066 = arith.constant 0 : index
    %c0_1067 = arith.constant 0 : index
    %798 = vector.load %arg5[%c8_1065, %c0_1066, %c0_1067] : memref<9x8x8xbf16, #tpu.memory_space<vmem>>, vector<1x8x8xbf16>
    %799 = vector.shape_cast %798 : vector<1x8x8xbf16> to vector<8x8xbf16>
    %cst_1068 = arith.constant dense<0.000000e+00> : vector<8x8xf32>
    %800 = tpu.matmul %799, %797, %cst_1068 {dimension_numbers = #tpu.dot_dimension_numbers<[1], [0], [0], [1], [0, 0, 1, 1], [], []>} : vector<8x8xbf16>, vector<8x8xbf16>, vector<8x8xf32> -> vector<8x8xf32>
    %801 = arith.addf %795, %800 : vector<8x8xf32>
    %c0_1069 = arith.constant 0 : index
    %c0_1070 = arith.constant 0 : index
    %802 = vector.load %arg6[%c0_1069, %c0_1070] : memref<8x1xf32, #tpu.memory_space<vmem>>, vector<8x1xf32>
    %803 = vector.broadcast %802 : vector<8x1xf32> to vector<8x8xf32>
    %804 = arith.addf %801, %803 : vector<8x8xf32>
    %cst_1071 = arith.constant 0.000000e+00 : f32
    %805 = vector.broadcast %cst_1071 : f32 to vector<8x8xf32>
    %806 = arith.cmpf oge, %804, %805 : vector<8x8xf32>
    %c0_1072 = arith.constant 0 : index
    %c0_1073 = arith.constant 0 : index
    %807 = vector.load %arg7[%c0_1072, %c0_1073] : memref<8x1xf32, #tpu.memory_space<vmem>>, vector<8x1xf32>
    %808 = vector.broadcast %807 : vector<8x1xf32> to vector<8x8xf32>
    %809 = arith.mulf %808, %804 : vector<8x8xf32>
    %810 = arith.select %806, %804, %809 : vector<8x8xi1>, vector<8x8xf32>
    %c0_1074 = arith.constant 0 : index
    %c3_1075 = arith.constant 3 : index
    %c0_1076 = arith.constant 0 : index
    %c0_1077 = arith.constant 0 : index
    %811 = vector.load %arg8[%c0_1074, %c3_1075, %c0_1076, %c0_1077] : memref<1x8x8x8xf32, #tpu.memory_space<vmem>>, vector<1x1x8x8xf32>
    %812 = vector.shape_cast %811 : vector<1x1x8x8xf32> to vector<8x8xf32>
    %813 = vector.shape_cast %810 : vector<8x8xf32> to vector<1x1x8x8xf32>
    tpu.vector_store %arg8[%c0_1074, %c3_1075, %c0_1076, %c0_1077], %813 {strides = array<i32>} : memref<1x8x8x8xf32, #tpu.memory_space<vmem>>, vector<1x1x8x8xf32>,
    %cst_1078 = arith.constant 0.000000e+00 : f32
    %814 = vector.broadcast %cst_1078 : f32 to vector<8x8xf32>
    %c4_1079 = arith.constant 4 : index
    %c0_1080 = arith.constant 0 : index
    %c0_1081 = arith.constant 0 : index
    %815 = vector.load %arg9[%c4_1079, %c0_1080, %c0_1081] : memref<10x8x10xbf16, #tpu.memory_space<vmem>>, vector<1x8x8xbf16>
    %816 = vector.shape_cast %815 : vector<1x8x8xbf16> to vector<8x8xbf16>
    %c0_1082 = arith.constant 0 : index
    %c0_1083 = arith.constant 0 : index
    %c0_1084 = arith.constant 0 : index
    %817 = vector.load %arg5[%c0_1082, %c0_1083, %c0_1084] : memref<9x8x8xbf16, #tpu.memory_space<vmem>>, vector<1x8x8xbf16>
    %818 = vector.shape_cast %817 : vector<1x8x8xbf16> to vector<8x8xbf16>
    %cst_1085 = arith.constant dense<0.000000e+00> : vector<8x8xf32>
    %819 = tpu.matmul %818, %816, %cst_1085 {dimension_numbers = #tpu.dot_dimension_numbers<[1], [0], [0], [1], [0, 0, 1, 1], [], []>} : vector<8x8xbf16>, vector<8x8xbf16>, vector<8x8xf32> -> vector<8x8xf32>
    %820 = arith.addf %814, %819 : vector<8x8xf32>
    %c4_1086 = arith.constant 4 : index
    %c0_1087 = arith.constant 0 : index
    %c1_1088 = arith.constant 1 : index
    %821 = vector.load %arg9[%c4_1086, %c0_1087, %c1_1088] : memref<10x8x10xbf16, #tpu.memory_space<vmem>>, vector<1x8x8xbf16>
    %822 = vector.shape_cast %821 : vector<1x8x8xbf16> to vector<8x8xbf16>
    %c1_1089 = arith.constant 1 : index
    %c0_1090 = arith.constant 0 : index
    %c0_1091 = arith.constant 0 : index
    %823 = vector.load %arg5[%c1_1089, %c0_1090, %c0_1091] : memref<9x8x8xbf16, #tpu.memory_space<vmem>>, vector<1x8x8xbf16>
    %824 = vector.shape_cast %823 : vector<1x8x8xbf16> to vector<8x8xbf16>
    %cst_1092 = arith.constant dense<0.000000e+00> : vector<8x8xf32>
    %825 = tpu.matmul %824, %822, %cst_1092 {dimension_numbers = #tpu.dot_dimension_numbers<[1], [0], [0], [1], [0, 0, 1, 1], [], []>} : vector<8x8xbf16>, vector<8x8xbf16>, vector<8x8xf32> -> vector<8x8xf32>
    %826 = arith.addf %820, %825 : vector<8x8xf32>
    %c4_1093 = arith.constant 4 : index
    %c0_1094 = arith.constant 0 : index
    %c2_1095 = arith.constant 2 : index
    %827 = vector.load %arg9[%c4_1093, %c0_1094, %c2_1095] : memref<10x8x10xbf16, #tpu.memory_space<vmem>>, vector<1x8x8xbf16>
    %828 = vector.shape_cast %827 : vector<1x8x8xbf16> to vector<8x8xbf16>
    %c2_1096 = arith.constant 2 : index
    %c0_1097 = arith.constant 0 : index
    %c0_1098 = arith.constant 0 : index
    %829 = vector.load %arg5[%c2_1096, %c0_1097, %c0_1098] : memref<9x8x8xbf16, #tpu.memory_space<vmem>>, vector<1x8x8xbf16>
    %830 = vector.shape_cast %829 : vector<1x8x8xbf16> to vector<8x8xbf16>
    %cst_1099 = arith.constant dense<0.000000e+00> : vector<8x8xf32>
    %831 = tpu.matmul %830, %828, %cst_1099 {dimension_numbers = #tpu.dot_dimension_numbers<[1], [0], [0], [1], [0, 0, 1, 1], [], []>} : vector<8x8xbf16>, vector<8x8xbf16>, vector<8x8xf32> -> vector<8x8xf32>
    %832 = arith.addf %826, %831 : vector<8x8xf32>
    %c5_1100 = arith.constant 5 : index
    %c0_1101 = arith.constant 0 : index
    %c0_1102 = arith.constant 0 : index
    %833 = vector.load %arg9[%c5_1100, %c0_1101, %c0_1102] : memref<10x8x10xbf16, #tpu.memory_space<vmem>>, vector<1x8x8xbf16>
    %834 = vector.shape_cast %833 : vector<1x8x8xbf16> to vector<8x8xbf16>
    %c3_1103 = arith.constant 3 : index
    %c0_1104 = arith.constant 0 : index
    %c0_1105 = arith.constant 0 : index
    %835 = vector.load %arg5[%c3_1103, %c0_1104, %c0_1105] : memref<9x8x8xbf16, #tpu.memory_space<vmem>>, vector<1x8x8xbf16>
    %836 = vector.shape_cast %835 : vector<1x8x8xbf16> to vector<8x8xbf16>
    %cst_1106 = arith.constant dense<0.000000e+00> : vector<8x8xf32>
    %837 = tpu.matmul %836, %834, %cst_1106 {dimension_numbers = #tpu.dot_dimension_numbers<[1], [0], [0], [1], [0, 0, 1, 1], [], []>} : vector<8x8xbf16>, vector<8x8xbf16>, vector<8x8xf32> -> vector<8x8xf32>
    %838 = arith.addf %832, %837 : vector<8x8xf32>
    %c5_1107 = arith.constant 5 : index
    %c0_1108 = arith.constant 0 : index
    %c1_1109 = arith.constant 1 : index
    %839 = vector.load %arg9[%c5_1107, %c0_1108, %c1_1109] : memref<10x8x10xbf16, #tpu.memory_space<vmem>>, vector<1x8x8xbf16>
    %840 = vector.shape_cast %839 : vector<1x8x8xbf16> to vector<8x8xbf16>
    %c4_1110 = arith.constant 4 : index
    %c0_1111 = arith.constant 0 : index
    %c0_1112 = arith.constant 0 : index
    %841 = vector.load %arg5[%c4_1110, %c0_1111, %c0_1112] : memref<9x8x8xbf16, #tpu.memory_space<vmem>>, vector<1x8x8xbf16>
    %842 = vector.shape_cast %841 : vector<1x8x8xbf16> to vector<8x8xbf16>
    %cst_1113 = arith.constant dense<0.000000e+00> : vector<8x8xf32>
    %843 = tpu.matmul %842, %840, %cst_1113 {dimension_numbers = #tpu.dot_dimension_numbers<[1], [0], [0], [1], [0, 0, 1, 1], [], []>} : vector<8x8xbf16>, vector<8x8xbf16>, vector<8x8xf32> -> vector<8x8xf32>
    %844 = arith.addf %838, %843 : vector<8x8xf32>
    %c5_1114 = arith.constant 5 : index
    %c0_1115 = arith.constant 0 : index
    %c2_1116 = arith.constant 2 : index
    %845 = vector.load %arg9[%c5_1114, %c0_1115, %c2_1116] : memref<10x8x10xbf16, #tpu.memory_space<vmem>>, vector<1x8x8xbf16>
    %846 = vector.shape_cast %845 : vector<1x8x8xbf16> to vector<8x8xbf16>
    %c5_1117 = arith.constant 5 : index
    %c0_1118 = arith.constant 0 : index
    %c0_1119 = arith.constant 0 : index
    %847 = vector.load %arg5[%c5_1117, %c0_1118, %c0_1119] : memref<9x8x8xbf16, #tpu.memory_space<vmem>>, vector<1x8x8xbf16>
    %848 = vector.shape_cast %847 : vector<1x8x8xbf16> to vector<8x8xbf16>
    %cst_1120 = arith.constant dense<0.000000e+00> : vector<8x8xf32>
    %849 = tpu.matmul %848, %846, %cst_1120 {dimension_numbers = #tpu.dot_dimension_numbers<[1], [0], [0], [1], [0, 0, 1, 1], [], []>} : vector<8x8xbf16>, vector<8x8xbf16>, vector<8x8xf32> -> vector<8x8xf32>
    %850 = arith.addf %844, %849 : vector<8x8xf32>
    %c6_1121 = arith.constant 6 : index
    %c0_1122 = arith.constant 0 : index
    %c0_1123 = arith.constant 0 : index
    %851 = vector.load %arg9[%c6_1121, %c0_1122, %c0_1123] : memref<10x8x10xbf16, #tpu.memory_space<vmem>>, vector<1x8x8xbf16>
    %852 = vector.shape_cast %851 : vector<1x8x8xbf16> to vector<8x8xbf16>
    %c6_1124 = arith.constant 6 : index
    %c0_1125 = arith.constant 0 : index
    %c0_1126 = arith.constant 0 : index
    %853 = vector.load %arg5[%c6_1124, %c0_1125, %c0_1126] : memref<9x8x8xbf16, #tpu.memory_space<vmem>>, vector<1x8x8xbf16>
    %854 = vector.shape_cast %853 : vector<1x8x8xbf16> to vector<8x8xbf16>
    %cst_1127 = arith.constant dense<0.000000e+00> : vector<8x8xf32>
    %855 = tpu.matmul %854, %852, %cst_1127 {dimension_numbers = #tpu.dot_dimension_numbers<[1], [0], [0], [1], [0, 0, 1, 1], [], []>} : vector<8x8xbf16>, vector<8x8xbf16>, vector<8x8xf32> -> vector<8x8xf32>
    %856 = arith.addf %850, %855 : vector<8x8xf32>
    %c6_1128 = arith.constant 6 : index
    %c0_1129 = arith.constant 0 : index
    %c1_1130 = arith.constant 1 : index
    %857 = vector.load %arg9[%c6_1128, %c0_1129, %c1_1130] : memref<10x8x10xbf16, #tpu.memory_space<vmem>>, vector<1x8x8xbf16>
    %858 = vector.shape_cast %857 : vector<1x8x8xbf16> to vector<8x8xbf16>
    %c7_1131 = arith.constant 7 : index
    %c0_1132 = arith.constant 0 : index
    %c0_1133 = arith.constant 0 : index
    %859 = vector.load %arg5[%c7_1131, %c0_1132, %c0_1133] : memref<9x8x8xbf16, #tpu.memory_space<vmem>>, vector<1x8x8xbf16>
    %860 = vector.shape_cast %859 : vector<1x8x8xbf16> to vector<8x8xbf16>
    %cst_1134 = arith.constant dense<0.000000e+00> : vector<8x8xf32>
    %861 = tpu.matmul %860, %858, %cst_1134 {dimension_numbers = #tpu.dot_dimension_numbers<[1], [0], [0], [1], [0, 0, 1, 1], [], []>} : vector<8x8xbf16>, vector<8x8xbf16>, vector<8x8xf32> -> vector<8x8xf32>
    %862 = arith.addf %856, %861 : vector<8x8xf32>
    %c6_1135 = arith.constant 6 : index
    %c0_1136 = arith.constant 0 : index
    %c2_1137 = arith.constant 2 : index
    %863 = vector.load %arg9[%c6_1135, %c0_1136, %c2_1137] : memref<10x8x10xbf16, #tpu.memory_space<vmem>>, vector<1x8x8xbf16>
    %864 = vector.shape_cast %863 : vector<1x8x8xbf16> to vector<8x8xbf16>
    %c8_1138 = arith.constant 8 : index
    %c0_1139 = arith.constant 0 : index
    %c0_1140 = arith.constant 0 : index
    %865 = vector.load %arg5[%c8_1138, %c0_1139, %c0_1140] : memref<9x8x8xbf16, #tpu.memory_space<vmem>>, vector<1x8x8xbf16>
    %866 = vector.shape_cast %865 : vector<1x8x8xbf16> to vector<8x8xbf16>
    %cst_1141 = arith.constant dense<0.000000e+00> : vector<8x8xf32>
    %867 = tpu.matmul %866, %864, %cst_1141 {dimension_numbers = #tpu.dot_dimension_numbers<[1], [0], [0], [1], [0, 0, 1, 1], [], []>} : vector<8x8xbf16>, vector<8x8xbf16>, vector<8x8xf32> -> vector<8x8xf32>
    %868 = arith.addf %862, %867 : vector<8x8xf32>
    %c0_1142 = arith.constant 0 : index
    %c0_1143 = arith.constant 0 : index
    %869 = vector.load %arg6[%c0_1142, %c0_1143] : memref<8x1xf32, #tpu.memory_space<vmem>>, vector<8x1xf32>
    %870 = vector.broadcast %869 : vector<8x1xf32> to vector<8x8xf32>
    %871 = arith.addf %868, %870 : vector<8x8xf32>
    %cst_1144 = arith.constant 0.000000e+00 : f32
    %872 = vector.broadcast %cst_1144 : f32 to vector<8x8xf32>
    %873 = arith.cmpf oge, %871, %872 : vector<8x8xf32>
    %c0_1145 = arith.constant 0 : index
    %c0_1146 = arith.constant 0 : index
    %874 = vector.load %arg7[%c0_1145, %c0_1146] : memref<8x1xf32, #tpu.memory_space<vmem>>, vector<8x1xf32>
    %875 = vector.broadcast %874 : vector<8x1xf32> to vector<8x8xf32>
    %876 = arith.mulf %875, %871 : vector<8x8xf32>
    %877 = arith.select %873, %871, %876 : vector<8x8xi1>, vector<8x8xf32>
    %c0_1147 = arith.constant 0 : index
    %c4_1148 = arith.constant 4 : index
    %c0_1149 = arith.constant 0 : index
    %c0_1150 = arith.constant 0 : index
    %878 = vector.load %arg8[%c0_1147, %c4_1148, %c0_1149, %c0_1150] : memref<1x8x8x8xf32, #tpu.memory_space<vmem>>, vector<1x1x8x8xf32>
    %879 = vector.shape_cast %878 : vector<1x1x8x8xf32> to vector<8x8xf32>
    %880 = vector.shape_cast %877 : vector<8x8xf32> to vector<1x1x8x8xf32>
    tpu.vector_store %arg8[%c0_1147, %c4_1148, %c0_1149, %c0_1150], %880 {strides = array<i32>} : memref<1x8x8x8xf32, #tpu.memory_space<vmem>>, vector<1x1x8x8xf32>,
    %cst_1151 = arith.constant 0.000000e+00 : f32
    %881 = vector.broadcast %cst_1151 : f32 to vector<8x8xf32>
    %c5_1152 = arith.constant 5 : index
    %c0_1153 = arith.constant 0 : index
    %c0_1154 = arith.constant 0 : index
    %882 = vector.load %arg9[%c5_1152, %c0_1153, %c0_1154] : memref<10x8x10xbf16, #tpu.memory_space<vmem>>, vector<1x8x8xbf16>
    %883 = vector.shape_cast %882 : vector<1x8x8xbf16> to vector<8x8xbf16>
    %c0_1155 = arith.constant 0 : index
    %c0_1156 = arith.constant 0 : index
    %c0_1157 = arith.constant 0 : index
    %884 = vector.load %arg5[%c0_1155, %c0_1156, %c0_1157] : memref<9x8x8xbf16, #tpu.memory_space<vmem>>, vector<1x8x8xbf16>
    %885 = vector.shape_cast %884 : vector<1x8x8xbf16> to vector<8x8xbf16>
    %cst_1158 = arith.constant dense<0.000000e+00> : vector<8x8xf32>
    %886 = tpu.matmul %885, %883, %cst_1158 {dimension_numbers = #tpu.dot_dimension_numbers<[1], [0], [0], [1], [0, 0, 1, 1], [], []>} : vector<8x8xbf16>, vector<8x8xbf16>, vector<8x8xf32> -> vector<8x8xf32>
    %887 = arith.addf %881, %886 : vector<8x8xf32>
    %c5_1159 = arith.constant 5 : index
    %c0_1160 = arith.constant 0 : index
    %c1_1161 = arith.constant 1 : index
    %888 = vector.load %arg9[%c5_1159, %c0_1160, %c1_1161] : memref<10x8x10xbf16, #tpu.memory_space<vmem>>, vector<1x8x8xbf16>
    %889 = vector.shape_cast %888 : vector<1x8x8xbf16> to vector<8x8xbf16>
    %c1_1162 = arith.constant 1 : index
    %c0_1163 = arith.constant 0 : index
    %c0_1164 = arith.constant 0 : index
    %890 = vector.load %arg5[%c1_1162, %c0_1163, %c0_1164] : memref<9x8x8xbf16, #tpu.memory_space<vmem>>, vector<1x8x8xbf16>
    %891 = vector.shape_cast %890 : vector<1x8x8xbf16> to vector<8x8xbf16>
    %cst_1165 = arith.constant dense<0.000000e+00> : vector<8x8xf32>
    %892 = tpu.matmul %891, %889, %cst_1165 {dimension_numbers = #tpu.dot_dimension_numbers<[1], [0], [0], [1], [0, 0, 1, 1], [], []>} : vector<8x8xbf16>, vector<8x8xbf16>, vector<8x8xf32> -> vector<8x8xf32>
    %893 = arith.addf %887, %892 : vector<8x8xf32>
    %c5_1166 = arith.constant 5 : index
    %c0_1167 = arith.constant 0 : index
    %c2_1168 = arith.constant 2 : index
    %894 = vector.load %arg9[%c5_1166, %c0_1167, %c2_1168] : memref<10x8x10xbf16, #tpu.memory_space<vmem>>, vector<1x8x8xbf16>
    %895 = vector.shape_cast %894 : vector<1x8x8xbf16> to vector<8x8xbf16>
    %c2_1169 = arith.constant 2 : index
    %c0_1170 = arith.constant 0 : index
    %c0_1171 = arith.constant 0 : index
    %896 = vector.load %arg5[%c2_1169, %c0_1170, %c0_1171] : memref<9x8x8xbf16, #tpu.memory_space<vmem>>, vector<1x8x8xbf16>
    %897 = vector.shape_cast %896 : vector<1x8x8xbf16> to vector<8x8xbf16>
    %cst_1172 = arith.constant dense<0.000000e+00> : vector<8x8xf32>
    %898 = tpu.matmul %897, %895, %cst_1172 {dimension_numbers = #tpu.dot_dimension_numbers<[1], [0], [0], [1], [0, 0, 1, 1], [], []>} : vector<8x8xbf16>, vector<8x8xbf16>, vector<8x8xf32> -> vector<8x8xf32>
    %899 = arith.addf %893, %898 : vector<8x8xf32>
    %c6_1173 = arith.constant 6 : index
    %c0_1174 = arith.constant 0 : index
    %c0_1175 = arith.constant 0 : index
    %900 = vector.load %arg9[%c6_1173, %c0_1174, %c0_1175] : memref<10x8x10xbf16, #tpu.memory_space<vmem>>, vector<1x8x8xbf16>
    %901 = vector.shape_cast %900 : vector<1x8x8xbf16> to vector<8x8xbf16>
    %c3_1176 = arith.constant 3 : index
    %c0_1177 = arith.constant 0 : index
    %c0_1178 = arith.constant 0 : index
    %902 = vector.load %arg5[%c3_1176, %c0_1177, %c0_1178] : memref<9x8x8xbf16, #tpu.memory_space<vmem>>, vector<1x8x8xbf16>
    %903 = vector.shape_cast %902 : vector<1x8x8xbf16> to vector<8x8xbf16>
    %cst_1179 = arith.constant dense<0.000000e+00> : vector<8x8xf32>
    %904 = tpu.matmul %903, %901, %cst_1179 {dimension_numbers = #tpu.dot_dimension_numbers<[1], [0], [0], [1], [0, 0, 1, 1], [], []>} : vector<8x8xbf16>, vector<8x8xbf16>, vector<8x8xf32> -> vector<8x8xf32>
    %905 = arith.addf %899, %904 : vector<8x8xf32>
    %c6_1180 = arith.constant 6 : index
    %c0_1181 = arith.constant 0 : index
    %c1_1182 = arith.constant 1 : index
    %906 = vector.load %arg9[%c6_1180, %c0_1181, %c1_1182] : memref<10x8x10xbf16, #tpu.memory_space<vmem>>, vector<1x8x8xbf16>
    %907 = vector.shape_cast %906 : vector<1x8x8xbf16> to vector<8x8xbf16>
    %c4_1183 = arith.constant 4 : index
    %c0_1184 = arith.constant 0 : index
    %c0_1185 = arith.constant 0 : index
    %908 = vector.load %arg5[%c4_1183, %c0_1184, %c0_1185] : memref<9x8x8xbf16, #tpu.memory_space<vmem>>, vector<1x8x8xbf16>
    %909 = vector.shape_cast %908 : vector<1x8x8xbf16> to vector<8x8xbf16>
    %cst_1186 = arith.constant dense<0.000000e+00> : vector<8x8xf32>
    %910 = tpu.matmul %909, %907, %cst_1186 {dimension_numbers = #tpu.dot_dimension_numbers<[1], [0], [0], [1], [0, 0, 1, 1], [], []>} : vector<8x8xbf16>, vector<8x8xbf16>, vector<8x8xf32> -> vector<8x8xf32>
    %911 = arith.addf %905, %910 : vector<8x8xf32>
    %c6_1187 = arith.constant 6 : index
    %c0_1188 = arith.constant 0 : index
    %c2_1189 = arith.constant 2 : index
    %912 = vector.load %arg9[%c6_1187, %c0_1188, %c2_1189] : memref<10x8x10xbf16, #tpu.memory_space<vmem>>, vector<1x8x8xbf16>
    %913 = vector.shape_cast %912 : vector<1x8x8xbf16> to vector<8x8xbf16>
    %c5_1190 = arith.constant 5 : index
    %c0_1191 = arith.constant 0 : index
    %c0_1192 = arith.constant 0 : index
    %914 = vector.load %arg5[%c5_1190, %c0_1191, %c0_1192] : memref<9x8x8xbf16, #tpu.memory_space<vmem>>, vector<1x8x8xbf16>
    %915 = vector.shape_cast %914 : vector<1x8x8xbf16> to vector<8x8xbf16>
    %cst_1193 = arith.constant dense<0.000000e+00> : vector<8x8xf32>
    %916 = tpu.matmul %915, %913, %cst_1193 {dimension_numbers = #tpu.dot_dimension_numbers<[1], [0], [0], [1], [0, 0, 1, 1], [], []>} : vector<8x8xbf16>, vector<8x8xbf16>, vector<8x8xf32> -> vector<8x8xf32>
    %917 = arith.addf %911, %916 : vector<8x8xf32>
    %c7_1194 = arith.constant 7 : index
    %c0_1195 = arith.constant 0 : index
    %c0_1196 = arith.constant 0 : index
    %918 = vector.load %arg9[%c7_1194, %c0_1195, %c0_1196] : memref<10x8x10xbf16, #tpu.memory_space<vmem>>, vector<1x8x8xbf16>
    %919 = vector.shape_cast %918 : vector<1x8x8xbf16> to vector<8x8xbf16>
    %c6_1197 = arith.constant 6 : index
    %c0_1198 = arith.constant 0 : index
    %c0_1199 = arith.constant 0 : index
    %920 = vector.load %arg5[%c6_1197, %c0_1198, %c0_1199] : memref<9x8x8xbf16, #tpu.memory_space<vmem>>, vector<1x8x8xbf16>
    %921 = vector.shape_cast %920 : vector<1x8x8xbf16> to vector<8x8xbf16>
    %cst_1200 = arith.constant dense<0.000000e+00> : vector<8x8xf32>
    %922 = tpu.matmul %921, %919, %cst_1200 {dimension_numbers = #tpu.dot_dimension_numbers<[1], [0], [0], [1], [0, 0, 1, 1], [], []>} : vector<8x8xbf16>, vector<8x8xbf16>, vector<8x8xf32> -> vector<8x8xf32>
    %923 = arith.addf %917, %922 : vector<8x8xf32>
    %c7_1201 = arith.constant 7 : index
    %c0_1202 = arith.constant 0 : index
    %c1_1203 = arith.constant 1 : index
    %924 = vector.load %arg9[%c7_1201, %c0_1202, %c1_1203] : memref<10x8x10xbf16, #tpu.memory_space<vmem>>, vector<1x8x8xbf16>
    %925 = vector.shape_cast %924 : vector<1x8x8xbf16> to vector<8x8xbf16>
    %c7_1204 = arith.constant 7 : index
    %c0_1205 = arith.constant 0 : index
    %c0_1206 = arith.constant 0 : index
    %926 = vector.load %arg5[%c7_1204, %c0_1205, %c0_1206] : memref<9x8x8xbf16, #tpu.memory_space<vmem>>, vector<1x8x8xbf16>
    %927 = vector.shape_cast %926 : vector<1x8x8xbf16> to vector<8x8xbf16>
    %cst_1207 = arith.constant dense<0.000000e+00> : vector<8x8xf32>
    %928 = tpu.matmul %927, %925, %cst_1207 {dimension_numbers = #tpu.dot_dimension_numbers<[1], [0], [0], [1], [0, 0, 1, 1], [], []>} : vector<8x8xbf16>, vector<8x8xbf16>, vector<8x8xf32> -> vector<8x8xf32>
    %929 = arith.addf %923, %928 : vector<8x8xf32>
    %c7_1208 = arith.constant 7 : index
    %c0_1209 = arith.constant 0 : index
    %c2_1210 = arith.constant 2 : index
    %930 = vector.load %arg9[%c7_1208, %c0_1209, %c2_1210] : memref<10x8x10xbf16, #tpu.memory_space<vmem>>, vector<1x8x8xbf16>
    %931 = vector.shape_cast %930 : vector<1x8x8xbf16> to vector<8x8xbf16>
    %c8_1211 = arith.constant 8 : index
    %c0_1212 = arith.constant 0 : index
    %c0_1213 = arith.constant 0 : index
    %932 = vector.load %arg5[%c8_1211, %c0_1212, %c0_1213] : memref<9x8x8xbf16, #tpu.memory_space<vmem>>, vector<1x8x8xbf16>
    %933 = vector.shape_cast %932 : vector<1x8x8xbf16> to vector<8x8xbf16>
    %cst_1214 = arith.constant dense<0.000000e+00> : vector<8x8xf32>
    %934 = tpu.matmul %933, %931, %cst_1214 {dimension_numbers = #tpu.dot_dimension_numbers<[1], [0], [0], [1], [0, 0, 1, 1], [], []>} : vector<8x8xbf16>, vector<8x8xbf16>, vector<8x8xf32> -> vector<8x8xf32>
    %935 = arith.addf %929, %934 : vector<8x8xf32>
    %c0_1215 = arith.constant 0 : index
    %c0_1216 = arith.constant 0 : index
    %936 = vector.load %arg6[%c0_1215, %c0_1216] : memref<8x1xf32, #tpu.memory_space<vmem>>, vector<8x1xf32>
    %937 = vector.broadcast %936 : vector<8x1xf32> to vector<8x8xf32>
    %938 = arith.addf %935, %937 : vector<8x8xf32>
    %cst_1217 = arith.constant 0.000000e+00 : f32
    %939 = vector.broadcast %cst_1217 : f32 to vector<8x8xf32>
    %940 = arith.cmpf oge, %938, %939 : vector<8x8xf32>
    %c0_1218 = arith.constant 0 : index
    %c0_1219 = arith.constant 0 : index
    %941 = vector.load %arg7[%c0_1218, %c0_1219] : memref<8x1xf32, #tpu.memory_space<vmem>>, vector<8x1xf32>
    %942 = vector.broadcast %941 : vector<8x1xf32> to vector<8x8xf32>
    %943 = arith.mulf %942, %938 : vector<8x8xf32>
    %944 = arith.select %940, %938, %943 : vector<8x8xi1>, vector<8x8xf32>
    %c0_1220 = arith.constant 0 : index
    %c5_1221 = arith.constant 5 : index
    %c0_1222 = arith.constant 0 : index
    %c0_1223 = arith.constant 0 : index
    %945 = vector.load %arg8[%c0_1220, %c5_1221, %c0_1222, %c0_1223] : memref<1x8x8x8xf32, #tpu.memory_space<vmem>>, vector<1x1x8x8xf32>
    %946 = vector.shape_cast %945 : vector<1x1x8x8xf32> to vector<8x8xf32>
    %947 = vector.shape_cast %944 : vector<8x8xf32> to vector<1x1x8x8xf32>
    tpu.vector_store %arg8[%c0_1220, %c5_1221, %c0_1222, %c0_1223], %947 {strides = array<i32>} : memref<1x8x8x8xf32, #tpu.memory_space<vmem>>, vector<1x1x8x8xf32>,
    %cst_1224 = arith.constant 0.000000e+00 : f32
    %948 = vector.broadcast %cst_1224 : f32 to vector<8x8xf32>
    %c6_1225 = arith.constant 6 : index
    %c0_1226 = arith.constant 0 : index
    %c0_1227 = arith.constant 0 : index
    %949 = vector.load %arg9[%c6_1225, %c0_1226, %c0_1227] : memref<10x8x10xbf16, #tpu.memory_space<vmem>>, vector<1x8x8xbf16>
    %950 = vector.shape_cast %949 : vector<1x8x8xbf16> to vector<8x8xbf16>
    %c0_1228 = arith.constant 0 : index
    %c0_1229 = arith.constant 0 : index
    %c0_1230 = arith.constant 0 : index
    %951 = vector.load %arg5[%c0_1228, %c0_1229, %c0_1230] : memref<9x8x8xbf16, #tpu.memory_space<vmem>>, vector<1x8x8xbf16>
    %952 = vector.shape_cast %951 : vector<1x8x8xbf16> to vector<8x8xbf16>
    %cst_1231 = arith.constant dense<0.000000e+00> : vector<8x8xf32>
    %953 = tpu.matmul %952, %950, %cst_1231 {dimension_numbers = #tpu.dot_dimension_numbers<[1], [0], [0], [1], [0, 0, 1, 1], [], []>} : vector<8x8xbf16>, vector<8x8xbf16>, vector<8x8xf32> -> vector<8x8xf32>
    %954 = arith.addf %948, %953 : vector<8x8xf32>
    %c6_1232 = arith.constant 6 : index
    %c0_1233 = arith.constant 0 : index
    %c1_1234 = arith.constant 1 : index
    %955 = vector.load %arg9[%c6_1232, %c0_1233, %c1_1234] : memref<10x8x10xbf16, #tpu.memory_space<vmem>>, vector<1x8x8xbf16>
    %956 = vector.shape_cast %955 : vector<1x8x8xbf16> to vector<8x8xbf16>
    %c1_1235 = arith.constant 1 : index
    %c0_1236 = arith.constant 0 : index
    %c0_1237 = arith.constant 0 : index
    %957 = vector.load %arg5[%c1_1235, %c0_1236, %c0_1237] : memref<9x8x8xbf16, #tpu.memory_space<vmem>>, vector<1x8x8xbf16>
    %958 = vector.shape_cast %957 : vector<1x8x8xbf16> to vector<8x8xbf16>
    %cst_1238 = arith.constant dense<0.000000e+00> : vector<8x8xf32>
    %959 = tpu.matmul %958, %956, %cst_1238 {dimension_numbers = #tpu.dot_dimension_numbers<[1], [0], [0], [1], [0, 0, 1, 1], [], []>} : vector<8x8xbf16>, vector<8x8xbf16>, vector<8x8xf32> -> vector<8x8xf32>
    %960 = arith.addf %954, %959 : vector<8x8xf32>
    %c6_1239 = arith.constant 6 : index
    %c0_1240 = arith.constant 0 : index
    %c2_1241 = arith.constant 2 : index
    %961 = vector.load %arg9[%c6_1239, %c0_1240, %c2_1241] : memref<10x8x10xbf16, #tpu.memory_space<vmem>>, vector<1x8x8xbf16>
    %962 = vector.shape_cast %961 : vector<1x8x8xbf16> to vector<8x8xbf16>
    %c2_1242 = arith.constant 2 : index
    %c0_1243 = arith.constant 0 : index
    %c0_1244 = arith.constant 0 : index
    %963 = vector.load %arg5[%c2_1242, %c0_1243, %c0_1244] : memref<9x8x8xbf16, #tpu.memory_space<vmem>>, vector<1x8x8xbf16>
    %964 = vector.shape_cast %963 : vector<1x8x8xbf16> to vector<8x8xbf16>
    %cst_1245 = arith.constant dense<0.000000e+00> : vector<8x8xf32>
    %965 = tpu.matmul %964, %962, %cst_1245 {dimension_numbers = #tpu.dot_dimension_numbers<[1], [0], [0], [1], [0, 0, 1, 1], [], []>} : vector<8x8xbf16>, vector<8x8xbf16>, vector<8x8xf32> -> vector<8x8xf32>
    %966 = arith.addf %960, %965 : vector<8x8xf32>
    %c7_1246 = arith.constant 7 : index
    %c0_1247 = arith.constant 0 : index
    %c0_1248 = arith.constant 0 : index
    %967 = vector.load %arg9[%c7_1246, %c0_1247, %c0_1248] : memref<10x8x10xbf16, #tpu.memory_space<vmem>>, vector<1x8x8xbf16>
    %968 = vector.shape_cast %967 : vector<1x8x8xbf16> to vector<8x8xbf16>
    %c3_1249 = arith.constant 3 : index
    %c0_1250 = arith.constant 0 : index
    %c0_1251 = arith.constant 0 : index
    %969 = vector.load %arg5[%c3_1249, %c0_1250, %c0_1251] : memref<9x8x8xbf16, #tpu.memory_space<vmem>>, vector<1x8x8xbf16>
    %970 = vector.shape_cast %969 : vector<1x8x8xbf16> to vector<8x8xbf16>
    %cst_1252 = arith.constant dense<0.000000e+00> : vector<8x8xf32>
    %971 = tpu.matmul %970, %968, %cst_1252 {dimension_numbers = #tpu.dot_dimension_numbers<[1], [0], [0], [1], [0, 0, 1, 1], [], []>} : vector<8x8xbf16>, vector<8x8xbf16>, vector<8x8xf32> -> vector<8x8xf32>
    %972 = arith.addf %966, %971 : vector<8x8xf32>
    %c7_1253 = arith.constant 7 : index
    %c0_1254 = arith.constant 0 : index
    %c1_1255 = arith.constant 1 : index
    %973 = vector.load %arg9[%c7_1253, %c0_1254, %c1_1255] : memref<10x8x10xbf16, #tpu.memory_space<vmem>>, vector<1x8x8xbf16>
    %974 = vector.shape_cast %973 : vector<1x8x8xbf16> to vector<8x8xbf16>
    %c4_1256 = arith.constant 4 : index
    %c0_1257 = arith.constant 0 : index
    %c0_1258 = arith.constant 0 : index
    %975 = vector.load %arg5[%c4_1256, %c0_1257, %c0_1258] : memref<9x8x8xbf16, #tpu.memory_space<vmem>>, vector<1x8x8xbf16>
    %976 = vector.shape_cast %975 : vector<1x8x8xbf16> to vector<8x8xbf16>
    %cst_1259 = arith.constant dense<0.000000e+00> : vector<8x8xf32>
    %977 = tpu.matmul %976, %974, %cst_1259 {dimension_numbers = #tpu.dot_dimension_numbers<[1], [0], [0], [1], [0, 0, 1, 1], [], []>} : vector<8x8xbf16>, vector<8x8xbf16>, vector<8x8xf32> -> vector<8x8xf32>
    %978 = arith.addf %972, %977 : vector<8x8xf32>
    %c7_1260 = arith.constant 7 : index
    %c0_1261 = arith.constant 0 : index
    %c2_1262 = arith.constant 2 : index
    %979 = vector.load %arg9[%c7_1260, %c0_1261, %c2_1262] : memref<10x8x10xbf16, #tpu.memory_space<vmem>>, vector<1x8x8xbf16>
    %980 = vector.shape_cast %979 : vector<1x8x8xbf16> to vector<8x8xbf16>
    %c5_1263 = arith.constant 5 : index
    %c0_1264 = arith.constant 0 : index
    %c0_1265 = arith.constant 0 : index
    %981 = vector.load %arg5[%c5_1263, %c0_1264, %c0_1265] : memref<9x8x8xbf16, #tpu.memory_space<vmem>>, vector<1x8x8xbf16>
    %982 = vector.shape_cast %981 : vector<1x8x8xbf16> to vector<8x8xbf16>
    %cst_1266 = arith.constant dense<0.000000e+00> : vector<8x8xf32>
    %983 = tpu.matmul %982, %980, %cst_1266 {dimension_numbers = #tpu.dot_dimension_numbers<[1], [0], [0], [1], [0, 0, 1, 1], [], []>} : vector<8x8xbf16>, vector<8x8xbf16>, vector<8x8xf32> -> vector<8x8xf32>
    %984 = arith.addf %978, %983 : vector<8x8xf32>
    %c8_1267 = arith.constant 8 : index
    %c0_1268 = arith.constant 0 : index
    %c0_1269 = arith.constant 0 : index
    %985 = vector.load %arg9[%c8_1267, %c0_1268, %c0_1269] : memref<10x8x10xbf16, #tpu.memory_space<vmem>>, vector<1x8x8xbf16>
    %986 = vector.shape_cast %985 : vector<1x8x8xbf16> to vector<8x8xbf16>
    %c6_1270 = arith.constant 6 : index
    %c0_1271 = arith.constant 0 : index
    %c0_1272 = arith.constant 0 : index
    %987 = vector.load %arg5[%c6_1270, %c0_1271, %c0_1272] : memref<9x8x8xbf16, #tpu.memory_space<vmem>>, vector<1x8x8xbf16>
    %988 = vector.shape_cast %987 : vector<1x8x8xbf16> to vector<8x8xbf16>
    %cst_1273 = arith.constant dense<0.000000e+00> : vector<8x8xf32>
    %989 = tpu.matmul %988, %986, %cst_1273 {dimension_numbers = #tpu.dot_dimension_numbers<[1], [0], [0], [1], [0, 0, 1, 1], [], []>} : vector<8x8xbf16>, vector<8x8xbf16>, vector<8x8xf32> -> vector<8x8xf32>
    %990 = arith.addf %984, %989 : vector<8x8xf32>
    %c8_1274 = arith.constant 8 : index
    %c0_1275 = arith.constant 0 : index
    %c1_1276 = arith.constant 1 : index
    %991 = vector.load %arg9[%c8_1274, %c0_1275, %c1_1276] : memref<10x8x10xbf16, #tpu.memory_space<vmem>>, vector<1x8x8xbf16>
    %992 = vector.shape_cast %991 : vector<1x8x8xbf16> to vector<8x8xbf16>
    %c7_1277 = arith.constant 7 : index
    %c0_1278 = arith.constant 0 : index
    %c0_1279 = arith.constant 0 : index
    %993 = vector.load %arg5[%c7_1277, %c0_1278, %c0_1279] : memref<9x8x8xbf16, #tpu.memory_space<vmem>>, vector<1x8x8xbf16>
    %994 = vector.shape_cast %993 : vector<1x8x8xbf16> to vector<8x8xbf16>
    %cst_1280 = arith.constant dense<0.000000e+00> : vector<8x8xf32>
    %995 = tpu.matmul %994, %992, %cst_1280 {dimension_numbers = #tpu.dot_dimension_numbers<[1], [0], [0], [1], [0, 0, 1, 1], [], []>} : vector<8x8xbf16>, vector<8x8xbf16>, vector<8x8xf32> -> vector<8x8xf32>
    %996 = arith.addf %990, %995 : vector<8x8xf32>
    %c8_1281 = arith.constant 8 : index
    %c0_1282 = arith.constant 0 : index
    %c2_1283 = arith.constant 2 : index
    %997 = vector.load %arg9[%c8_1281, %c0_1282, %c2_1283] : memref<10x8x10xbf16, #tpu.memory_space<vmem>>, vector<1x8x8xbf16>
    %998 = vector.shape_cast %997 : vector<1x8x8xbf16> to vector<8x8xbf16>
    %c8_1284 = arith.constant 8 : index
    %c0_1285 = arith.constant 0 : index
    %c0_1286 = arith.constant 0 : index
    %999 = vector.load %arg5[%c8_1284, %c0_1285, %c0_1286] : memref<9x8x8xbf16, #tpu.memory_space<vmem>>, vector<1x8x8xbf16>
    %1000 = vector.shape_cast %999 : vector<1x8x8xbf16> to vector<8x8xbf16>
    %cst_1287 = arith.constant dense<0.000000e+00> : vector<8x8xf32>
    %1001 = tpu.matmul %1000, %998, %cst_1287 {dimension_numbers = #tpu.dot_dimension_numbers<[1], [0], [0], [1], [0, 0, 1, 1], [], []>} : vector<8x8xbf16>, vector<8x8xbf16>, vector<8x8xf32> -> vector<8x8xf32>
    %1002 = arith.addf %996, %1001 : vector<8x8xf32>
    %c0_1288 = arith.constant 0 : index
    %c0_1289 = arith.constant 0 : index
    %1003 = vector.load %arg6[%c0_1288, %c0_1289] : memref<8x1xf32, #tpu.memory_space<vmem>>, vector<8x1xf32>
    %1004 = vector.broadcast %1003 : vector<8x1xf32> to vector<8x8xf32>
    %1005 = arith.addf %1002, %1004 : vector<8x8xf32>
    %cst_1290 = arith.constant 0.000000e+00 : f32
    %1006 = vector.broadcast %cst_1290 : f32 to vector<8x8xf32>
    %1007 = arith.cmpf oge, %1005, %1006 : vector<8x8xf32>
    %c0_1291 = arith.constant 0 : index
    %c0_1292 = arith.constant 0 : index
    %1008 = vector.load %arg7[%c0_1291, %c0_1292] : memref<8x1xf32, #tpu.memory_space<vmem>>, vector<8x1xf32>
    %1009 = vector.broadcast %1008 : vector<8x1xf32> to vector<8x8xf32>
    %1010 = arith.mulf %1009, %1005 : vector<8x8xf32>
    %1011 = arith.select %1007, %1005, %1010 : vector<8x8xi1>, vector<8x8xf32>
    %c0_1293 = arith.constant 0 : index
    %c6_1294 = arith.constant 6 : index
    %c0_1295 = arith.constant 0 : index
    %c0_1296 = arith.constant 0 : index
    %1012 = vector.load %arg8[%c0_1293, %c6_1294, %c0_1295, %c0_1296] : memref<1x8x8x8xf32, #tpu.memory_space<vmem>>, vector<1x1x8x8xf32>
    %1013 = vector.shape_cast %1012 : vector<1x1x8x8xf32> to vector<8x8xf32>
    %1014 = vector.shape_cast %1011 : vector<8x8xf32> to vector<1x1x8x8xf32>
    tpu.vector_store %arg8[%c0_1293, %c6_1294, %c0_1295, %c0_1296], %1014 {strides = array<i32>} : memref<1x8x8x8xf32, #tpu.memory_space<vmem>>, vector<1x1x8x8xf32>,
    %cst_1297 = arith.constant 0.000000e+00 : f32
    %1015 = vector.broadcast %cst_1297 : f32 to vector<8x8xf32>
    %c7_1298 = arith.constant 7 : index
    %c0_1299 = arith.constant 0 : index
    %c0_1300 = arith.constant 0 : index
    %1016 = vector.load %arg9[%c7_1298, %c0_1299, %c0_1300] : memref<10x8x10xbf16, #tpu.memory_space<vmem>>, vector<1x8x8xbf16>
    %1017 = vector.shape_cast %1016 : vector<1x8x8xbf16> to vector<8x8xbf16>
    %c0_1301 = arith.constant 0 : index
    %c0_1302 = arith.constant 0 : index
    %c0_1303 = arith.constant 0 : index
    %1018 = vector.load %arg5[%c0_1301, %c0_1302, %c0_1303] : memref<9x8x8xbf16, #tpu.memory_space<vmem>>, vector<1x8x8xbf16>
    %1019 = vector.shape_cast %1018 : vector<1x8x8xbf16> to vector<8x8xbf16>
    %cst_1304 = arith.constant dense<0.000000e+00> : vector<8x8xf32>
    %1020 = tpu.matmul %1019, %1017, %cst_1304 {dimension_numbers = #tpu.dot_dimension_numbers<[1], [0], [0], [1], [0, 0, 1, 1], [], []>} : vector<8x8xbf16>, vector<8x8xbf16>, vector<8x8xf32> -> vector<8x8xf32>
    %1021 = arith.addf %1015, %1020 : vector<8x8xf32>
    %c7_1305 = arith.constant 7 : index
    %c0_1306 = arith.constant 0 : index
    %c1_1307 = arith.constant 1 : index
    %1022 = vector.load %arg9[%c7_1305, %c0_1306, %c1_1307] : memref<10x8x10xbf16, #tpu.memory_space<vmem>>, vector<1x8x8xbf16>
    %1023 = vector.shape_cast %1022 : vector<1x8x8xbf16> to vector<8x8xbf16>
    %c1_1308 = arith.constant 1 : index
    %c0_1309 = arith.constant 0 : index
    %c0_1310 = arith.constant 0 : index
    %1024 = vector.load %arg5[%c1_1308, %c0_1309, %c0_1310] : memref<9x8x8xbf16, #tpu.memory_space<vmem>>, vector<1x8x8xbf16>
    %1025 = vector.shape_cast %1024 : vector<1x8x8xbf16> to vector<8x8xbf16>
    %cst_1311 = arith.constant dense<0.000000e+00> : vector<8x8xf32>
    %1026 = tpu.matmul %1025, %1023, %cst_1311 {dimension_numbers = #tpu.dot_dimension_numbers<[1], [0], [0], [1], [0, 0, 1, 1], [], []>} : vector<8x8xbf16>, vector<8x8xbf16>, vector<8x8xf32> -> vector<8x8xf32>
    %1027 = arith.addf %1021, %1026 : vector<8x8xf32>
    %c7_1312 = arith.constant 7 : index
    %c0_1313 = arith.constant 0 : index
    %c2_1314 = arith.constant 2 : index
    %1028 = vector.load %arg9[%c7_1312, %c0_1313, %c2_1314] : memref<10x8x10xbf16, #tpu.memory_space<vmem>>, vector<1x8x8xbf16>
    %1029 = vector.shape_cast %1028 : vector<1x8x8xbf16> to vector<8x8xbf16>
    %c2_1315 = arith.constant 2 : index
    %c0_1316 = arith.constant 0 : index
    %c0_1317 = arith.constant 0 : index
    %1030 = vector.load %arg5[%c2_1315, %c0_1316, %c0_1317] : memref<9x8x8xbf16, #tpu.memory_space<vmem>>, vector<1x8x8xbf16>
    %1031 = vector.shape_cast %1030 : vector<1x8x8xbf16> to vector<8x8xbf16>
    %cst_1318 = arith.constant dense<0.000000e+00> : vector<8x8xf32>
    %1032 = tpu.matmul %1031, %1029, %cst_1318 {dimension_numbers = #tpu.dot_dimension_numbers<[1], [0], [0], [1], [0, 0, 1, 1], [], []>} : vector<8x8xbf16>, vector<8x8xbf16>, vector<8x8xf32> -> vector<8x8xf32>
    %1033 = arith.addf %1027, %1032 : vector<8x8xf32>
    %c8_1319 = arith.constant 8 : index
    %c0_1320 = arith.constant 0 : index
    %c0_1321 = arith.constant 0 : index
    %1034 = vector.load %arg9[%c8_1319, %c0_1320, %c0_1321] : memref<10x8x10xbf16, #tpu.memory_space<vmem>>, vector<1x8x8xbf16>
    %1035 = vector.shape_cast %1034 : vector<1x8x8xbf16> to vector<8x8xbf16>
    %c3_1322 = arith.constant 3 : index
    %c0_1323 = arith.constant 0 : index
    %c0_1324 = arith.constant 0 : index
    %1036 = vector.load %arg5[%c3_1322, %c0_1323, %c0_1324] : memref<9x8x8xbf16, #tpu.memory_space<vmem>>, vector<1x8x8xbf16>
    %1037 = vector.shape_cast %1036 : vector<1x8x8xbf16> to vector<8x8xbf16>
    %cst_1325 = arith.constant dense<0.000000e+00> : vector<8x8xf32>
    %1038 = tpu.matmul %1037, %1035, %cst_1325 {dimension_numbers = #tpu.dot_dimension_numbers<[1], [0], [0], [1], [0, 0, 1, 1], [], []>} : vector<8x8xbf16>, vector<8x8xbf16>, vector<8x8xf32> -> vector<8x8xf32>
    %1039 = arith.addf %1033, %1038 : vector<8x8xf32>
    %c8_1326 = arith.constant 8 : index
    %c0_1327 = arith.constant 0 : index
    %c1_1328 = arith.constant 1 : index
    %1040 = vector.load %arg9[%c8_1326, %c0_1327, %c1_1328] : memref<10x8x10xbf16, #tpu.memory_space<vmem>>, vector<1x8x8xbf16>
    %1041 = vector.shape_cast %1040 : vector<1x8x8xbf16> to vector<8x8xbf16>
    %c4_1329 = arith.constant 4 : index
    %c0_1330 = arith.constant 0 : index
    %c0_1331 = arith.constant 0 : index
    %1042 = vector.load %arg5[%c4_1329, %c0_1330, %c0_1331] : memref<9x8x8xbf16, #tpu.memory_space<vmem>>, vector<1x8x8xbf16>
    %1043 = vector.shape_cast %1042 : vector<1x8x8xbf16> to vector<8x8xbf16>
    %cst_1332 = arith.constant dense<0.000000e+00> : vector<8x8xf32>
    %1044 = tpu.matmul %1043, %1041, %cst_1332 {dimension_numbers = #tpu.dot_dimension_numbers<[1], [0], [0], [1], [0, 0, 1, 1], [], []>} : vector<8x8xbf16>, vector<8x8xbf16>, vector<8x8xf32> -> vector<8x8xf32>
    %1045 = arith.addf %1039, %1044 : vector<8x8xf32>
    %c8_1333 = arith.constant 8 : index
    %c0_1334 = arith.constant 0 : index
    %c2_1335 = arith.constant 2 : index
    %1046 = vector.load %arg9[%c8_1333, %c0_1334, %c2_1335] : memref<10x8x10xbf16, #tpu.memory_space<vmem>>, vector<1x8x8xbf16>
    %1047 = vector.shape_cast %1046 : vector<1x8x8xbf16> to vector<8x8xbf16>
    %c5_1336 = arith.constant 5 : index
    %c0_1337 = arith.constant 0 : index
    %c0_1338 = arith.constant 0 : index
    %1048 = vector.load %arg5[%c5_1336, %c0_1337, %c0_1338] : memref<9x8x8xbf16, #tpu.memory_space<vmem>>, vector<1x8x8xbf16>
    %1049 = vector.shape_cast %1048 : vector<1x8x8xbf16> to vector<8x8xbf16>
    %cst_1339 = arith.constant dense<0.000000e+00> : vector<8x8xf32>
    %1050 = tpu.matmul %1049, %1047, %cst_1339 {dimension_numbers = #tpu.dot_dimension_numbers<[1], [0], [0], [1], [0, 0, 1, 1], [], []>} : vector<8x8xbf16>, vector<8x8xbf16>, vector<8x8xf32> -> vector<8x8xf32>
    %1051 = arith.addf %1045, %1050 : vector<8x8xf32>
    %c9 = arith.constant 9 : index
    %c0_1340 = arith.constant 0 : index
    %c0_1341 = arith.constant 0 : index
    %1052 = vector.load %arg9[%c9, %c0_1340, %c0_1341] : memref<10x8x10xbf16, #tpu.memory_space<vmem>>, vector<1x8x8xbf16>
    %1053 = vector.shape_cast %1052 : vector<1x8x8xbf16> to vector<8x8xbf16>
    %c6_1342 = arith.constant 6 : index
    %c0_1343 = arith.constant 0 : index
    %c0_1344 = arith.constant 0 : index
    %1054 = vector.load %arg5[%c6_1342, %c0_1343, %c0_1344] : memref<9x8x8xbf16, #tpu.memory_space<vmem>>, vector<1x8x8xbf16>
    %1055 = vector.shape_cast %1054 : vector<1x8x8xbf16> to vector<8x8xbf16>
    %cst_1345 = arith.constant dense<0.000000e+00> : vector<8x8xf32>
    %1056 = tpu.matmul %1055, %1053, %cst_1345 {dimension_numbers = #tpu.dot_dimension_numbers<[1], [0], [0], [1], [0, 0, 1, 1], [], []>} : vector<8x8xbf16>, vector<8x8xbf16>, vector<8x8xf32> -> vector<8x8xf32>
    %1057 = arith.addf %1051, %1056 : vector<8x8xf32>
    %c9_1346 = arith.constant 9 : index
    %c0_1347 = arith.constant 0 : index
    %c1_1348 = arith.constant 1 : index
    %1058 = vector.load %arg9[%c9_1346, %c0_1347, %c1_1348] : memref<10x8x10xbf16, #tpu.memory_space<vmem>>, vector<1x8x8xbf16>
    %1059 = vector.shape_cast %1058 : vector<1x8x8xbf16> to vector<8x8xbf16>
    %c7_1349 = arith.constant 7 : index
    %c0_1350 = arith.constant 0 : index
    %c0_1351 = arith.constant 0 : index
    %1060 = vector.load %arg5[%c7_1349, %c0_1350, %c0_1351] : memref<9x8x8xbf16, #tpu.memory_space<vmem>>, vector<1x8x8xbf16>
    %1061 = vector.shape_cast %1060 : vector<1x8x8xbf16> to vector<8x8xbf16>
    %cst_1352 = arith.constant dense<0.000000e+00> : vector<8x8xf32>
    %1062 = tpu.matmul %1061, %1059, %cst_1352 {dimension_numbers = #tpu.dot_dimension_numbers<[1], [0], [0], [1], [0, 0, 1, 1], [], []>} : vector<8x8xbf16>, vector<8x8xbf16>, vector<8x8xf32> -> vector<8x8xf32>
    %1063 = arith.addf %1057, %1062 : vector<8x8xf32>
    %c9_1353 = arith.constant 9 : index
    %c0_1354 = arith.constant 0 : index
    %c2_1355 = arith.constant 2 : index
    %1064 = vector.load %arg9[%c9_1353, %c0_1354, %c2_1355] : memref<10x8x10xbf16, #tpu.memory_space<vmem>>, vector<1x8x8xbf16>
    %1065 = vector.shape_cast %1064 : vector<1x8x8xbf16> to vector<8x8xbf16>
    %c8_1356 = arith.constant 8 : index
    %c0_1357 = arith.constant 0 : index
    %c0_1358 = arith.constant 0 : index
    %1066 = vector.load %arg5[%c8_1356, %c0_1357, %c0_1358] : memref<9x8x8xbf16, #tpu.memory_space<vmem>>, vector<1x8x8xbf16>
    %1067 = vector.shape_cast %1066 : vector<1x8x8xbf16> to vector<8x8xbf16>
    %cst_1359 = arith.constant dense<0.000000e+00> : vector<8x8xf32>
    %1068 = tpu.matmul %1067, %1065, %cst_1359 {dimension_numbers = #tpu.dot_dimension_numbers<[1], [0], [0], [1], [0, 0, 1, 1], [], []>} : vector<8x8xbf16>, vector<8x8xbf16>, vector<8x8xf32> -> vector<8x8xf32>
    %1069 = arith.addf %1063, %1068 : vector<8x8xf32>
    %c0_1360 = arith.constant 0 : index
    %c0_1361 = arith.constant 0 : index
    %1070 = vector.load %arg6[%c0_1360, %c0_1361] : memref<8x1xf32, #tpu.memory_space<vmem>>, vector<8x1xf32>
    %1071 = vector.broadcast %1070 : vector<8x1xf32> to vector<8x8xf32>
    %1072 = arith.addf %1069, %1071 : vector<8x8xf32>
    %cst_1362 = arith.constant 0.000000e+00 : f32
    %1073 = vector.broadcast %cst_1362 : f32 to vector<8x8xf32>
    %1074 = arith.cmpf oge, %1072, %1073 : vector<8x8xf32>
    %c0_1363 = arith.constant 0 : index
    %c0_1364 = arith.constant 0 : index
    %1075 = vector.load %arg7[%c0_1363, %c0_1364] : memref<8x1xf32, #tpu.memory_space<vmem>>, vector<8x1xf32>
    %1076 = vector.broadcast %1075 : vector<8x1xf32> to vector<8x8xf32>
    %1077 = arith.mulf %1076, %1072 : vector<8x8xf32>
    %1078 = arith.select %1074, %1072, %1077 : vector<8x8xi1>, vector<8x8xf32>
    %c0_1365 = arith.constant 0 : index
    %c7_1366 = arith.constant 7 : index
    %c0_1367 = arith.constant 0 : index
    %c0_1368 = arith.constant 0 : index
    %1079 = vector.load %arg8[%c0_1365, %c7_1366, %c0_1367, %c0_1368] : memref<1x8x8x8xf32, #tpu.memory_space<vmem>>, vector<1x1x8x8xf32>
    %1080 = vector.shape_cast %1079 : vector<1x1x8x8xf32> to vector<8x8xf32>
    %1081 = vector.shape_cast %1078 : vector<8x8xf32> to vector<1x1x8x8xf32>
    tpu.vector_store %arg8[%c0_1365, %c7_1366, %c0_1367, %c0_1368], %1081 {strides = array<i32>} : memref<1x8x8x8xf32, #tpu.memory_space<vmem>>, vector<1x1x8x8xf32>,
    return
  }
  func.func @transform_0(%arg0: i32) -> (i32, i32, i32, i32, i32, i32) {
    %c0_i32 = arith.constant 0 : i32
    %c0_i32_0 = arith.constant 0 : i32
    %c0_i32_1 = arith.constant 0 : i32
    %c0_i32_2 = arith.constant 0 : i32
    %c0_i32_3 = arith.constant 0 : i32
    %c0_i32_4 = arith.constant 0 : i32
    return %arg0, %c0_i32, %c0_i32_0, %c0_i32_1, %c0_i32_2, %c0_i32_3 : i32, i32, i32, i32, i32, i32
  }
  func.func @transform_1(%arg0: i32) -> (i32, i32, i32) {
    %c0_i32 = arith.constant 0 : i32
    %c0_i32_0 = arith.constant 0 : i32
    %c0_i32_1 = arith.constant 0 : i32
    %c0_i32_2 = arith.constant 0 : i32
    return %c0_i32, %c0_i32_0, %c0_i32_1 : i32, i32, i32
  }
  func.func @transform_2(%arg0: i32) -> (i32, i32) {
    %c0_i32 = arith.constant 0 : i32
    %c0_i32_0 = arith.constant 0 : i32
    %c0_i32_1 = arith.constant 0 : i32
    return %c0_i32, %c0_i32_0 : i32, i32
  }
  func.func @transform_3(%arg0: i32) -> (i32, i32) {
    %c0_i32 = arith.constant 0 : i32
    %c0_i32_0 = arith.constant 0 : i32
    %c0_i32_1 = arith.constant 0 : i32
    return %c0_i32, %c0_i32_0 : i32, i32
  }
  func.func @transform_4(%arg0: i32) -> (i32, i32, i32) {
    %c0_i32 = arith.constant 0 : i32
    %c0_i32_0 = arith.constant 0 : i32
    %c0_i32_1 = arith.constant 0 : i32
    %c0_i32_2 = arith.constant 0 : i32
    return %c0_i32, %c0_i32_0, %c0_i32_1 : i32, i32, i32
  }
  func.func @transform_5(%arg0: i32) -> (i32, i32) {
    %c0_i32 = arith.constant 0 : i32
    %c0_i32_0 = arith.constant 0 : i32
    %c0_i32_1 = arith.constant 0 : i32
    return %c0_i32, %c0_i32_0 : i32, i32
  }
  func.func @transform_6(%arg0: i32) -> (i32, i32) {
    %c0_i32 = arith.constant 0 : i32
    %c0_i32_0 = arith.constant 0 : i32
    %c0_i32_1 = arith.constant 0 : i32
    return %c0_i32, %c0_i32_0 : i32, i32
  }
  func.func @transform_7(%arg0: i32) -> (i32, i32, i32, i32) {
    %c0_i32 = arith.constant 0 : i32
    %c0_i32_0 = arith.constant 0 : i32
    %c0_i32_1 = arith.constant 0 : i32
    %c0_i32_2 = arith.constant 0 : i32
    return %arg0, %c0_i32, %c0_i32_0, %c0_i32_1 : i32, i32, i32, i32
  }
}

</mosaic_0001>

<llo_original>
// kernel: conv2_forward.1
$region0: #{conv2_forward.1}
  #allocation0 [shape = 'u32[]', space=smem, size = 0x4, offset = 0x4, fixed_abs, tag = 'smem constant byte address 0x4 - core index']
  #allocation1 [shape = 'u32[72,128]{1,0:T(1,128)}', space=vmem, size = 0x9000, scoped, tag = 'internal scratch']
  #allocation2 [shape = 'bf16[10,8,10]{2,1,0:T(8,128)(2,1)}', space=vmem, size = 0x5000, scoped, tag = 'scratch operand']
  %s0 = inlined_call_operand.vmem [shape: bf16[2,2,2,9,4,9], index: 0, kind: input, shape index: {}]
  %s1 = inlined_call_operand.vmem [shape: bf16[9,8,4], index: 1, kind: input, shape index: {}]
  %s2 = inlined_call_operand.vmem [shape: f32[8,1], index: 2, kind: input, shape index: {}]
  %s3 = inlined_call_operand.vmem [shape: f32[8,1], index: 3, kind: input, shape index: {}]
  %s4 = inlined_call_operand.vmem [shape: bf16[9,8,8], index: 4, kind: input, shape index: {}]
  %s5 = inlined_call_operand.vmem [shape: f32[8,1], index: 5, kind: input, shape index: {}]
  %s6 = inlined_call_operand.vmem [shape: f32[8,1], index: 6, kind: input, shape index: {}]
  %s7 = inlined_call_operand.vmem [shape: f32[2,8,8,8], index: 7, kind: output, shape index: {}]
  %s8 = sld [smem:[#allocation0]]
  $region61: #{conv2_forward.1} parent=0
    _
  %s10 = ssub.s32 1, %s8
  %s11 = scalar_select 0, %s10, %s8
  loop: start=0, step=1, limit=4
  $region2: #{conv2_forward.1} parent=0 // loop_pre_header
    _
  $region3: #{conv2_forward.1} parent=0 // loop_header
    %s13 = sphi 0, %s17
    %p14 = scmp.ge.s32.totalorder %s13, 4
    %s23 = sphi 0, %s25
    %s26 = sphi 0, %s23
    %s27 = sphi 0, %s26
    %s43 = sphi 0, %s27
    %s47 = sphi 0, %s47
    %s49 = sphi 0, %s47
    %s50 = sphi 0, %s49
    %s64 = sphi 0, %s50
    %s68 = sphi 0, %s68
    %s70 = sphi 0, %s68
    %s71 = sphi 0, %s70
    %s85 = sphi 0, %s71
    %s89 = sphi 0, %s89
    %s91 = sphi 0, %s89
    %s92 = sphi 0, %s91
    %s106 = sphi 0, %s92
    %s110 = sphi 0, %s110
    %s112 = sphi 0, %s110
    %s113 = sphi 0, %s112
    %s127 = sphi 0, %s113
    %s131 = sphi 0, %s131
    %s133 = sphi 0, %s131
    %s134 = sphi 0, %s133
    %s148 = sphi 0, %s134
    %s152 = sphi 0, %s152
    %s154 = sphi 0, %s152
    %s155 = sphi 0, %s154
    %s169 = sphi 0, %s155
    %s175 = sphi 0, %s177
    %s178 = sphi 0, %s175
    %s179 = sphi 0, %s178
    %s195 = sphi 0, %s179
  $region4: #{conv2_forward.1} parent=0 // loop_header_branch
    %16 = sbr.rel (%p14) target = $region8
  $region5: #{conv2_forward.1} parent=0 // loop_body
    %s18 = ssub.s32 %s13, 1
    %s19 = ssub.s32 %s13, 2
    %s20 = sadd.s32 %s13, 1
    %s21 = ssub.s32 %s13, %s20
    %p22 = scmp.eq.s32.totalorder %s21, 0
    %s24 = sadd.s32 %s23, 1
    %s25 = scalar_select %p22, %s23, %s24
    %p28 = pneg %p22
    %p29 = scmp.eq.s32.totalorder %s13, 1
    %p30 = por %p28, %p29
    %p31 = scmp.ne.s32.totalorder %s23, %s26
    %p32 = scmp.eq.s32.totalorder %s13, 0
    %p33 = por %p31, %p32
    %p34 = scmp.ne.s32.totalorder %s23, %s26
    %p35 = scmp.eq.s32.totalorder %s18, 1
    %p36 = por %p34, %p35
    %p37 = scmp.ne.s32.totalorder %s26, %s27
    %p38 = scmp.eq.s32.totalorder %s18, 0
    %p39 = por %p37, %p38
    %p40 = scmp.ne.s32.totalorder %s26, %s27
    %p41 = scmp.eq.s32.totalorder %s19, 1
    %p42 = por %p40, %p41
    %p44 = scmp.ne.s32.totalorder %s27, %s43
    %p45 = scmp.eq.s32.totalorder %s19, 0
    %p46 = por %p44, %p45
    %s48 = sadd.s32 %s47, 1
    %p51 = scmp.eq.s32.totalorder %s13, 1
    %p52 = scmp.ne.s32.totalorder %s47, %s49
    %p53 = scmp.eq.s32.totalorder %s13, 0
    %p54 = por %p52, %p53
    %p55 = scmp.ne.s32.totalorder %s47, %s49
    %p56 = scmp.eq.s32.totalorder %s18, 1
    %p57 = por %p55, %p56
    %p58 = scmp.ne.s32.totalorder %s49, %s50
    %p59 = scmp.eq.s32.totalorder %s18, 0
    %p60 = por %p58, %p59
    %p61 = scmp.ne.s32.totalorder %s49, %s50
    %p62 = scmp.eq.s32.totalorder %s19, 1
    %p63 = por %p61, %p62
    %p65 = scmp.ne.s32.totalorder %s50, %s64
    %p66 = scmp.eq.s32.totalorder %s19, 0
    %p67 = por %p65, %p66
    %s69 = sadd.s32 %s68, 1
    %p72 = scmp.eq.s32.totalorder %s13, 1
    %p73 = scmp.ne.s32.totalorder %s68, %s70
    %p74 = scmp.eq.s32.totalorder %s13, 0
    %p75 = por %p73, %p74
    %p76 = scmp.ne.s32.totalorder %s68, %s70
    %p77 = scmp.eq.s32.totalorder %s18, 1
    %p78 = por %p76, %p77
    %p79 = scmp.ne.s32.totalorder %s70, %s71
    %p80 = scmp.eq.s32.totalorder %s18, 0
    %p81 = por %p79, %p80
    %p82 = scmp.ne.s32.totalorder %s70, %s71
    %p83 = scmp.eq.s32.totalorder %s19, 1
    %p84 = por %p82, %p83
    %p86 = scmp.ne.s32.totalorder %s71, %s85
    %p87 = scmp.eq.s32.totalorder %s19, 0
    %p88 = por %p86, %p87
    %s90 = sadd.s32 %s89, 1
    %p93 = scmp.eq.s32.totalorder %s13, 1
    %p94 = scmp.ne.s32.totalorder %s89, %s91
    %p95 = scmp.eq.s32.totalorder %s13, 0
    %p96 = por %p94, %p95
    %p97 = scmp.ne.s32.totalorder %s89, %s91
    %p98 = scmp.eq.s32.totalorder %s18, 1
    %p99 = por %p97, %p98
    %p100 = scmp.ne.s32.totalorder %s91, %s92
    %p101 = scmp.eq.s32.totalorder %s18, 0
    %p102 = por %p100, %p101
    %p103 = scmp.ne.s32.totalorder %s91, %s92
    %p104 = scmp.eq.s32.totalorder %s19, 1
    %p105 = por %p103, %p104
    %p107 = scmp.ne.s32.totalorder %s92, %s106
    %p108 = scmp.eq.s32.totalorder %s19, 0
    %p109 = por %p107, %p108
    %s111 = sadd.s32 %s110, 1
    %p114 = scmp.eq.s32.totalorder %s13, 1
    %p115 = scmp.ne.s32.totalorder %s110, %s112
    %p116 = scmp.eq.s32.totalorder %s13, 0
    %p117 = por %p115, %p116
    %p118 = scmp.ne.s32.totalorder %s110, %s112
    %p119 = scmp.eq.s32.totalorder %s18, 1
    %p120 = por %p118, %p119
    %p121 = scmp.ne.s32.totalorder %s112, %s113
    %p122 = scmp.eq.s32.totalorder %s18, 0
    %p123 = por %p121, %p122
    %p124 = scmp.ne.s32.totalorder %s112, %s113
    %p125 = scmp.eq.s32.totalorder %s19, 1
    %p126 = por %p124, %p125
    %p128 = scmp.ne.s32.totalorder %s113, %s127
    %p129 = scmp.eq.s32.totalorder %s19, 0
    %p130 = por %p128, %p129
    %s132 = sadd.s32 %s131, 1
    %p135 = scmp.eq.s32.totalorder %s13, 1
    %p136 = scmp.ne.s32.totalorder %s131, %s133
    %p137 = scmp.eq.s32.totalorder %s13, 0
    %p138 = por %p136, %p137
    %p139 = scmp.ne.s32.totalorder %s131, %s133
    %p140 = scmp.eq.s32.totalorder %s18, 1
    %p141 = por %p139, %p140
    %p142 = scmp.ne.s32.totalorder %s133, %s134
    %p143 = scmp.eq.s32.totalorder %s18, 0
    %p144 = por %p142, %p143
    %p145 = scmp.ne.s32.totalorder %s133, %s134
    %p146 = scmp.eq.s32.totalorder %s19, 1
    %p147 = por %p145, %p146
    %p149 = scmp.ne.s32.totalorder %s134, %s148
    %p150 = scmp.eq.s32.totalorder %s19, 0
    %p151 = por %p149, %p150
    %s153 = sadd.s32 %s152, 1
    %p156 = scmp.eq.s32.totalorder %s13, 1
    %p157 = scmp.ne.s32.totalorder %s152, %s154
    %p158 = scmp.eq.s32.totalorder %s13, 0
    %p159 = por %p157, %p158
    %p160 = scmp.ne.s32.totalorder %s152, %s154
    %p161 = scmp.eq.s32.totalorder %s18, 1
    %p162 = por %p160, %p161
    %p163 = scmp.ne.s32.totalorder %s154, %s155
    %p164 = scmp.eq.s32.totalorder %s18, 0
    %p165 = por %p163, %p164
    %p166 = scmp.ne.s32.totalorder %s154, %s155
    %p167 = scmp.eq.s32.totalorder %s19, 1
    %p168 = por %p166, %p167
    %p170 = scmp.ne.s32.totalorder %s155, %s169
    %p171 = scmp.eq.s32.totalorder %s19, 0
    %p172 = por %p170, %p171
    %s173 = ssub.s32 %s13, %s20
    %p174 = scmp.eq.s32.totalorder %s173, 0
    %s176 = sadd.s32 %s175, 1
    %s177 = scalar_select %p174, %s175, %s176
    %p180 = pneg %p174
    %p181 = scmp.eq.s32.totalorder %s13, 1
    %p182 = por %p180, %p181
    %p183 = scmp.ne.s32.totalorder %s175, %s178
    %p184 = scmp.eq.s32.totalorder %s13, 0
    %p185 = por %p183, %p184
    %p186 = scmp.ne.s32.totalorder %s175, %s178
    %p187 = scmp.eq.s32.totalorder %s18, 1
    %p188 = por %p186, %p187
    %p189 = scmp.ne.s32.totalorder %s178, %s179
    %p190 = scmp.eq.s32.totalorder %s18, 0
    %p191 = por %p189, %p190
    %p192 = scmp.ne.s32.totalorder %s178, %s179
    %p193 = scmp.eq.s32.totalorder %s19, 1
    %p194 = por %p192, %p193
    %p196 = scmp.ne.s32.totalorder %s179, %s195
    %p197 = scmp.eq.s32.totalorder %s19, 0
    %p198 = por %p196, %p197
    %p199 = scmp.le.s32.totalorder 1, %s13
    %p200 = scmp.lt.s32.totalorder %s13, 3
    %p201 = pnand %p199, %p200
    %p202 = pneg %p201
    // Predicated region
    $region9: #{conv2_forward.1} parent=5 // pred_check
      _
    $region10: #{conv2_forward.1} parent=5 // pred_check_branch
      %204 = sbr.rel (%p201) target = $region12
    $region11: #{conv2_forward.1} parent=5 // pred_region
      %s205 = ssub.s32 %s13, 1
      // Predicated region
      $region13: #{conv2_forward.1} parent=11 // pred_check
        %p206 = pneg %p60
      $region14: #{conv2_forward.1} parent=11 // pred_check_branch
        %208 = sbr.rel (%p206) target = $region16
      $region15: #{conv2_forward.1} parent=11 // pred_region
        _
      $region16: #{conv2_forward.1} parent=11 // pred_fallthru
        _
      // Predicated region
      $region17: #{conv2_forward.1} parent=11 // pred_check
        %p209 = pneg %p81
      $region18: #{conv2_forward.1} parent=11 // pred_check_branch
        %211 = sbr.rel (%p209) target = $region20
      $region19: #{conv2_forward.1} parent=11 // pred_region
        _
      $region20: #{conv2_forward.1} parent=11 // pred_fallthru
        _
      // Predicated region
      $region21: #{conv2_forward.1} parent=11 // pred_check
        %p212 = pneg %p102
      $region22: #{conv2_forward.1} parent=11 // pred_check_branch
        %214 = sbr.rel (%p212) target = $region24
      $region23: #{conv2_forward.1} parent=11 // pred_region
        _
      $region24: #{conv2_forward.1} parent=11 // pred_fallthru
        _
      // Predicated region
      $region25: #{conv2_forward.1} parent=11 // pred_check
        %p215 = pneg %p123
      $region26: #{conv2_forward.1} parent=11 // pred_check_branch
        %217 = sbr.rel (%p215) target = $region28
      $region27: #{conv2_forward.1} parent=11 // pred_region
        _
      $region28: #{conv2_forward.1} parent=11 // pred_fallthru
        _
      // Predicated region
      $region29: #{conv2_forward.1} parent=11 // pred_check
        %p218 = pneg %p144
      $region30: #{conv2_forward.1} parent=11 // pred_check_branch
        %220 = sbr.rel (%p218) target = $region32
      $region31: #{conv2_forward.1} parent=11 // pred_region
        _
      $region32: #{conv2_forward.1} parent=11 // pred_fallthru
        _
      // Predicated region
      $region33: #{conv2_forward.1} parent=11 // pred_check
        %p221 = pneg %p165
      $region34: #{conv2_forward.1} parent=11 // pred_check_branch
        %223 = sbr.rel (%p221) target = $region36
      $region35: #{conv2_forward.1} parent=11 // pred_region
        _
      $region36: #{conv2_forward.1} parent=11 // pred_fallthru
        _
    $region12: #{conv2_forward.1} parent=5 // pred_fallthru
      _
    %p224 = scmp.lt.s32.totalorder %s13, 2
    // Predicated region
    $region37: #{conv2_forward.1} parent=5 // pred_check
      %p225 = pneg %p224
    $region38: #{conv2_forward.1} parent=5 // pred_check_branch
      %227 = sbr.rel (%p225) target = $region40
    $region39: #{conv2_forward.1} parent=5 // pred_region
      // Predicated region
      $region41: #{conv2_forward.1} parent=39 // pred_check
        %p228 = pneg %p33
      $region42: #{conv2_forward.1} parent=39 // pred_check_branch
        %230 = sbr.rel (%p228) target = $region44
      $region43: #{conv2_forward.1} parent=39 // pred_region
        %p231 = scmp.lt.s32.totalorder %s13, 1
        %s232 = scalar_select %p231, %s13, 1
        %s233 = smul.addr %s232, 36
        %s234 = smul.addr %s233, 2
        %s235 = scalar_lea.vmem %s0, %s234
      $region44: #{conv2_forward.1} parent=39 // pred_fallthru
        _
    $region40: #{conv2_forward.1} parent=5 // pred_fallthru
      _
    %p236 = scmp.le.s32.totalorder 1, %s13
    %p237 = scmp.lt.s32.totalorder %s13, 3
    %p238 = pnand %p236, %p237
    %p239 = pneg %p238
    // Predicated region
    $region45: #{conv2_forward.1} parent=5 // pred_check
      _
    $region46: #{conv2_forward.1} parent=5 // pred_check_branch
      %241 = sbr.rel (%p238) target = $region48
    $region47: #{conv2_forward.1} parent=5 // pred_region
      %s242 = ssub.s32 %s13, 1
      %p243 = scmp.lt.s32.totalorder %s18, 1
      %s244 = scalar_select %p243, %s18, 1
      %s245 = smul.addr %s244, 36
      %s246 = smul.addr %s245, 2
      %s247 = scalar_lea.vmem %s0, %s246
      %p248 = pneg %p39
      %p249 = pneg %p36
      %p250 = pneg %p60
      %p251 = pneg %p57
      %p252 = pneg %p81
      %p253 = pneg %p78
      %p254 = pneg %p102
      %p255 = pneg %p99
      %p256 = pneg %p123
      %p257 = pneg %p120
      %p258 = pneg %p144
      %p259 = pneg %p141
      %p260 = pneg %p165
      %p261 = pneg %p162
      %p262 = pneg %p191
      %p263 = pneg %p188
      %p264 = scmp.lt.s32.totalorder %s18, 1
      %s265 = scalar_select %p264, %s18, 1
      %s266 = smul.addr %s265, 8
      %s267 = smul.addr %s266, 8
      %s268 = scalar_lea.vmem %s7, %s267
      %p269 = scmp.lt.s32.totalorder %s18, 1
      %s270 = scalar_select %p269, %s18, 1
      %s271 = smul.addr %s270, 36
      %s272 = smul.addr %s271, 2
      %s273 = scalar_lea.vmem %s0, %s272
      %p274 = scmp.lt.s32.totalorder %s18, 1
      %s275 = scalar_select %p274, %s18, 1
      %s276 = smul.addr %s275, 8
      %s277 = smul.addr %s276, 8
      %s278 = scalar_lea.vmem %s7, %s277
      %vm280 = vcmask 76800
      %281 = vst.msk [vmem:[#allocation2] sm:$0xf] %vm280, 0
      %282 = vst.msk [vmem:[#allocation2 + $0x4] sm:$0xf] %vm280, 0
      %283 = vst.msk [vmem:[#allocation2 + $0x8] sm:$0xf] %vm280, 0
      %284 = vst.msk [vmem:[#allocation2 + $0xc] sm:$0xf] %vm280, 0
      %285 = vst.msk [vmem:[#allocation2 + $0x10] sm:$0xf] %vm280, 0
      %286 = vst.msk [vmem:[#allocation2 + $0x14] sm:$0xf] %vm280, 0
      %287 = vst.msk [vmem:[#allocation2 + $0x18] sm:$0xf] %vm280, 0
      %288 = vst.msk [vmem:[#allocation2 + $0x1c] sm:$0xf] %vm280, 0
      %289 = vst.msk [vmem:[#allocation2 + $0x20] sm:$0xf] %vm280, 0
      %290 = vst.msk [vmem:[#allocation2 + $0x24] sm:$0xf] %vm280, 0
      %v291 = vld [vmem:[%s273] sm:$0x3]
      %v292 = vld [vmem:[%s1] sm:$0xf]
      %s293 = scalar_lea.vmem %s273, 18
      %v294 = vld [vmem:[%s293] sm:$0x3]
      %s295 = scalar_lea.vmem %s1, 4
      %v296 = vld [vmem:[%s295] sm:$0xf]
      %vm297 = vcmask 31744
      %v299 = vsel %vm297, %v296, 0
      %vm301 = vcmask 1041408
      %v303 = vsel %vm301, %v294, 0
      %305 = vmatpush.bf16.msra.mxu0 0
      %306 = vmatpush.bf16.msra.mxu0 0
      %307 = vmatpush.bf16.msra.mxu0 0
      %308 = vmatpush.bf16.msra.mxu0 0
      %309 = vmatpush.bf16.msra.mxu0 0
      %310 = vmatpush.bf16.msra.mxu0 0
      %311 = vmatpush.bf16.msra.mxu0 0
      %312 = vmatpush.bf16.msra.mxu0 %v303
      %313 = vmatmul.bf16.gmra.mxu0 %v299
      %v314 = vpop.f32.mrf.mxu0
      %v315 = vadd.f32 0.0, %v314
      %v316 = vpop.f32.mrf.mxu0
      %317 = vdwg.mxu0
      %v319 = vsel %vm297, %v292, 0
      %v322 = vsel %vm301, %v291, 0
      %324 = vmatpush.bf16.msra.mxu0 0
      %325 = vmatpush.bf16.msra.mxu0 0
      %326 = vmatpush.bf16.msra.mxu0 0
      %327 = vmatpush.bf16.msra.mxu0 0
      %328 = vmatpush.bf16.msra.mxu0 0
      %329 = vmatpush.bf16.msra.mxu0 0
      %330 = vmatpush.bf16.msra.mxu0 0
      %331 = vmatpush.bf16.msra.mxu0 %v322
      %332 = vmatmul.bf16.gmra.mxu0 %v319
      %v333 = vpop.f32.mrf.mxu0
      %v334 = vadd.f32 %v315, %v333
      %v335 = vpop.f32.mrf.mxu0
      %336 = vdwg.mxu0
      %s337 = scalar_lea.vmem %s1, 8
      %v338 = vld [vmem:[%s337] sm:$0xf]
      %339 = vst [vmem:[#allocation1] ss:$4 sm:$0xff] %v291
      %v340 = vld.sshfl [vmem:[#allocation1] sm:$0xff pattern:$0x73625140]
      %342 = vrot.lane.b32.xlu0 %v340, 127
      %v343 = vpop.permute.xlu0 %342
      %v345 = vsel %vm297, %v338, 0
      %v348 = vsel %vm301, %v343, 0
      %350 = vmatpush.bf16.msra.mxu0 0
      %351 = vmatpush.bf16.msra.mxu0 0
      %352 = vmatpush.bf16.msra.mxu0 0
      %353 = vmatpush.bf16.msra.mxu0 0
      %354 = vmatpush.bf16.msra.mxu0 0
      %355 = vmatpush.bf16.msra.mxu0 0
      %356 = vmatpush.bf16.msra.mxu0 0
      %357 = vmatpush.bf16.msra.mxu0 %v348
      %358 = vmatmul.bf16.gmra.mxu0 %v345
      %v359 = vpop.f32.mrf.mxu0
      %v360 = vadd.f32 0.0, %v359
      %v361 = vpop.f32.mrf.mxu0
      %362 = vdwg.mxu0
      %v363 = vadd.f32 %v334, %v360
      %s364 = scalar_lea.vmem %s273, 36
      %v365 = vld [vmem:[%s364] sm:$0x3]
      %s366 = scalar_lea.vmem %s1, 12
      %v367 = vld [vmem:[%s366] sm:$0xf]
      %v369 = vsel %vm297, %v367, 0
      %v372 = vsel %vm301, %v365, 0
      %374 = vmatpush.bf16.msra.mxu0 0
      %375 = vmatpush.bf16.msra.mxu0 0
      %376 = vmatpush.bf16.msra.mxu0 0
      %377 = vmatpush.bf16.msra.mxu0 0
      %378 = vmatpush.bf16.msra.mxu0 0
      %379 = vmatpush.bf16.msra.mxu0 0
      %380 = vmatpush.bf16.msra.mxu0 0
      %381 = vmatpush.bf16.msra.mxu0 %v372
      %382 = vmatmul.bf16.gmra.mxu0 %v369
      %v383 = vpop.f32.mrf.mxu0
      %v384 = vadd.f32 0.0, %v383
      %v385 = vpop.f32.mrf.mxu0
      %386 = vdwg.mxu0
      %v387 = vadd.f32 %v363, %v384
      %s388 = scalar_lea.vmem %s273, 54
      %v389 = vld [vmem:[%s388] sm:$0x3]
      %s390 = scalar_lea.vmem %s1, 16
      %v391 = vld [vmem:[%s390] sm:$0xf]
      %v393 = vsel %vm297, %v391, 0
      %v396 = vsel %vm301, %v389, 0
      %398 = vmatpush.bf16.msra.mxu0 0
      %399 = vmatpush.bf16.msra.mxu0 0
      %400 = vmatpush.bf16.msra.mxu0 0
      %401 = vmatpush.bf16.msra.mxu0 0
      %402 = vmatpush.bf16.msra.mxu0 0
      %403 = vmatpush.bf16.msra.mxu0 0
      %404 = vmatpush.bf16.msra.mxu0 0
      %405 = vmatpush.bf16.msra.mxu0 %v396
      %406 = vmatmul.bf16.gmra.mxu0 %v393
      %v407 = vpop.f32.mrf.mxu0
      %v408 = vadd.f32 0.0, %v407
      %v409 = vpop.f32.mrf.mxu0
      %410 = vdwg.mxu0
      %v411 = vadd.f32 %v387, %v408
      %s412 = scalar_lea.vmem %s1, 20
      %v413 = vld [vmem:[%s412] sm:$0xf]
      %414 = vst [vmem:[#allocation1] ss:$4 sm:$0xff] %v365
      %v415 = vld.sshfl [vmem:[#allocation1] sm:$0xff pattern:$0x73625140]
      %417 = vrot.lane.b32.xlu0 %v415, 127
      %v418 = vpop.permute.xlu0 %417
      %v420 = vsel %vm297, %v413, 0
      %v423 = vsel %vm301, %v418, 0
      %425 = vmatpush.bf16.msra.mxu0 0
      %426 = vmatpush.bf16.msra.mxu0 0
      %427 = vmatpush.bf16.msra.mxu0 0
      %428 = vmatpush.bf16.msra.mxu0 0
      %429 = vmatpush.bf16.msra.mxu0 0
      %430 = vmatpush.bf16.msra.mxu0 0
      %431 = vmatpush.bf16.msra.mxu0 0
      %432 = vmatpush.bf16.msra.mxu0 %v423
      %433 = vmatmul.bf16.gmra.mxu0 %v420
      %v434 = vpop.f32.mrf.mxu0
      %v435 = vadd.f32 0.0, %v434
      %v436 = vpop.f32.mrf.mxu0
      %437 = vdwg.mxu0
      %v438 = vadd.f32 %v411, %v435
      %s439 = scalar_lea.vmem %s273, 2
      %v440 = vld [vmem:[%s439] sm:$0x3]
      %s441 = scalar_lea.vmem %s1, 24
      %v442 = vld [vmem:[%s441] sm:$0xf]
      %v444 = vsel %vm297, %v442, 0
      %v447 = vsel %vm301, %v440, 0
      %449 = vmatpush.bf16.msra.mxu0 0
      %450 = vmatpush.bf16.msra.mxu0 0
      %451 = vmatpush.bf16.msra.mxu0 0
      %452 = vmatpush.bf16.msra.mxu0 0
      %453 = vmatpush.bf16.msra.mxu0 0
      %454 = vmatpush.bf16.msra.mxu0 0
      %455 = vmatpush.bf16.msra.mxu0 0
      %456 = vmatpush.bf16.msra.mxu0 %v447
      %457 = vmatmul.bf16.gmra.mxu0 %v444
      %v458 = vpop.f32.mrf.mxu0
      %v459 = vadd.f32 0.0, %v458
      %v460 = vpop.f32.mrf.mxu0
      %461 = vdwg.mxu0
      %v462 = vadd.f32 %v438, %v459
      %s463 = scalar_lea.vmem %s273, 20
      %v464 = vld [vmem:[%s463] sm:$0x3]
      %s465 = scalar_lea.vmem %s1, 28
      %v466 = vld [vmem:[%s465] sm:$0xf]
      %v468 = vsel %vm297, %v466, 0
      %v471 = vsel %vm301, %v464, 0
      %473 = vmatpush.bf16.msra.mxu0 0
      %474 = vmatpush.bf16.msra.mxu0 0
      %475 = vmatpush.bf16.msra.mxu0 0
      %476 = vmatpush.bf16.msra.mxu0 0
      %477 = vmatpush.bf16.msra.mxu0 0
      %478 = vmatpush.bf16.msra.mxu0 0
      %479 = vmatpush.bf16.msra.mxu0 0
      %480 = vmatpush.bf16.msra.mxu0 %v471
      %481 = vmatmul.bf16.gmra.mxu0 %v468
      %v482 = vpop.f32.mrf.mxu0
      %v483 = vadd.f32 0.0, %v482
      %v484 = vpop.f32.mrf.mxu0
      %485 = vdwg.mxu0
      %v486 = vadd.f32 %v462, %v483
      %s487 = scalar_lea.vmem %s1, 32
      %v488 = vld [vmem:[%s487] sm:$0xf]
      %489 = vst [vmem:[#allocation1] ss:$4 sm:$0xff] %v440
      %v490 = vld.sshfl [vmem:[#allocation1] sm:$0xff pattern:$0x73625140]
      %492 = vrot.lane.b32.xlu0 %v490, 127
      %v493 = vpop.permute.xlu0 %492
      %v495 = vsel %vm297, %v488, 0
      %v498 = vsel %vm301, %v493, 0
      %500 = vmatpush.bf16.msra.mxu0 0
      %501 = vmatpush.bf16.msra.mxu0 0
      %502 = vmatpush.bf16.msra.mxu0 0
      %503 = vmatpush.bf16.msra.mxu0 0
      %504 = vmatpush.bf16.msra.mxu0 0
      %505 = vmatpush.bf16.msra.mxu0 0
      %506 = vmatpush.bf16.msra.mxu0 0
      %507 = vmatpush.bf16.msra.mxu0 %v498
      %508 = vmatmul.bf16.gmra.mxu0 %v495
      %v509 = vpop.f32.mrf.mxu0
      %v510 = vadd.f32 0.0, %v509
      %v511 = vpop.f32.mrf.mxu0
      %512 = vdwg.mxu0
      %v513 = vadd.f32 %v486, %v510
      %v514 = vld [vmem:[%s2] sm:$0xff]
      %516 = vset.pattern.permute.xlu0 0
      %517 = vperm.xlu0 %516, %v514
      %v518 = vpop.permute.xlu0 %517
      %v520 = vadd.f32 %v513, %v518
      %vm521 = vcmp.ge.f32.partialorder %v520, 0.0
      %v522 = vld [vmem:[%s3] sm:$0xff]
      %524 = vset.pattern.permute.xlu0 0
      %525 = vperm.xlu0 %524, %v522
      %v526 = vpop.permute.xlu0 %525
      %v528 = vmul.f32 %v526, %v520
      %v529 = vsel %vm521, %v520, %v528
      %v530 = vpack.c.bf16 %v529, %v529
      %532 = vrot.lane.b32.xlu0 %v530, 1
      %v533 = vpop.permute.xlu0 %532
      %s535 = scalar_lea.vmem [#allocation2], 4
      %vm536 = vcmask 68616
      %537 = vst.msk [vmem:[%s535] sm:$0xf] %vm536, %v533
      %v538 = vld [vmem:[%s439] sm:$0x3]
      %v539 = vld [vmem:[%s1] sm:$0xf]
      %v540 = vld [vmem:[%s463] sm:$0x3]
      %v541 = vld [vmem:[%s295] sm:$0xf]
      %v543 = vsel %vm297, %v541, 0
      %v546 = vsel %vm301, %v540, 0
      %548 = vmatpush.bf16.msra.mxu0 0
      %549 = vmatpush.bf16.msra.mxu0 0
      %550 = vmatpush.bf16.msra.mxu0 0
      %551 = vmatpush.bf16.msra.mxu0 0
      %552 = vmatpush.bf16.msra.mxu0 0
      %553 = vmatpush.bf16.msra.mxu0 0
      %554 = vmatpush.bf16.msra.mxu0 0
      %555 = vmatpush.bf16.msra.mxu0 %v546
      %556 = vmatmul.bf16.gmra.mxu0 %v543
      %v557 = vpop.f32.mrf.mxu0
      %v558 = vadd.f32 0.0, %v557
      %v559 = vpop.f32.mrf.mxu0
      %560 = vdwg.mxu0
      %v562 = vsel %vm297, %v539, 0
      %v565 = vsel %vm301, %v538, 0
      %567 = vmatpush.bf16.msra.mxu0 0
      %568 = vmatpush.bf16.msra.mxu0 0
      %569 = vmatpush.bf16.msra.mxu0 0
      %570 = vmatpush.bf16.msra.mxu0 0
      %571 = vmatpush.bf16.msra.mxu0 0
      %572 = vmatpush.bf16.msra.mxu0 0
      %573 = vmatpush.bf16.msra.mxu0 0
      %574 = vmatpush.bf16.msra.mxu0 %v565
      %575 = vmatmul.bf16.gmra.mxu0 %v562
      %v576 = vpop.f32.mrf.mxu0
      %v577 = vadd.f32 %v558, %v576
      %v578 = vpop.f32.mrf.mxu0
      %579 = vdwg.mxu0
      %v580 = vld [vmem:[%s337] sm:$0xf]
      %581 = vst [vmem:[#allocation1] ss:$4 sm:$0xff] %v538
      %v582 = vld.sshfl [vmem:[#allocation1] sm:$0xff pattern:$0x73625140]
      %584 = vrot.lane.b32.xlu0 %v582, 127
      %v585 = vpop.permute.xlu0 %584
      %v587 = vsel %vm297, %v580, 0
      %v590 = vsel %vm301, %v585, 0
      %592 = vmatpush.bf16.msra.mxu0 0
      %593 = vmatpush.bf16.msra.mxu0 0
      %594 = vmatpush.bf16.msra.mxu0 0
      %595 = vmatpush.bf16.msra.mxu0 0
      %596 = vmatpush.bf16.msra.mxu0 0
      %597 = vmatpush.bf16.msra.mxu0 0
      %598 = vmatpush.bf16.msra.mxu0 0
      %599 = vmatpush.bf16.msra.mxu0 %v590
      %600 = vmatmul.bf16.gmra.mxu0 %v587
      %v601 = vpop.f32.mrf.mxu0
      %v602 = vadd.f32 0.0, %v601
      %v603 = vpop.f32.mrf.mxu0
      %604 = vdwg.mxu0
      %v605 = vadd.f32 %v577, %v602
      %s606 = scalar_lea.vmem %s273, 38
      %v607 = vld [vmem:[%s606] sm:$0x3]
      %v608 = vld [vmem:[%s366] sm:$0xf]
      %v610 = vsel %vm297, %v608, 0
      %v613 = vsel %vm301, %v607, 0
      %615 = vmatpush.bf16.msra.mxu0 0
      %616 = vmatpush.bf16.msra.mxu0 0
      %617 = vmatpush.bf16.msra.mxu0 0
      %618 = vmatpush.bf16.msra.mxu0 0
      %619 = vmatpush.bf16.msra.mxu0 0
      %620 = vmatpush.bf16.msra.mxu0 0
      %621 = vmatpush.bf16.msra.mxu0 0
      %622 = vmatpush.bf16.msra.mxu0 %v613
      %623 = vmatmul.bf16.gmra.mxu0 %v610
      %v624 = vpop.f32.mrf.mxu0
      %v625 = vadd.f32 0.0, %v624
      %v626 = vpop.f32.mrf.mxu0
      %627 = vdwg.mxu0
      %v628 = vadd.f32 %v605, %v625
      %s629 = scalar_lea.vmem %s273, 56
      %v630 = vld [vmem:[%s629] sm:$0x3]
      %v631 = vld [vmem:[%s390] sm:$0xf]
      %v633 = vsel %vm297, %v631, 0
      %v636 = vsel %vm301, %v630, 0
      %638 = vmatpush.bf16.msra.mxu0 0
      %639 = vmatpush.bf16.msra.mxu0 0
      %640 = vmatpush.bf16.msra.mxu0 0
      %641 = vmatpush.bf16.msra.mxu0 0
      %642 = vmatpush.bf16.msra.mxu0 0
      %643 = vmatpush.bf16.msra.mxu0 0
      %644 = vmatpush.bf16.msra.mxu0 0
      %645 = vmatpush.bf16.msra.mxu0 %v636
      %646 = vmatmul.bf16.gmra.mxu0 %v633
      %v647 = vpop.f32.mrf.mxu0
      %v648 = vadd.f32 0.0, %v647
      %v649 = vpop.f32.mrf.mxu0
      %650 = vdwg.mxu0
      %v651 = vadd.f32 %v628, %v648
      %v652 = vld [vmem:[%s412] sm:$0xf]
      %653 = vst [vmem:[#allocation1] ss:$4 sm:$0xff] %v607
      %v654 = vld.sshfl [vmem:[#allocation1] sm:$0xff pattern:$0x73625140]
      %656 = vrot.lane.b32.xlu0 %v654, 127
      %v657 = vpop.permute.xlu0 %656
      %v659 = vsel %vm297, %v652, 0
      %v662 = vsel %vm301, %v657, 0
      %664 = vmatpush.bf16.msra.mxu0 0
      %665 = vmatpush.bf16.msra.mxu0 0
      %666 = vmatpush.bf16.msra.mxu0 0
      %667 = vmatpush.bf16.msra.mxu0 0
      %668 = vmatpush.bf16.msra.mxu0 0
      %669 = vmatpush.bf16.msra.mxu0 0
      %670 = vmatpush.bf16.msra.mxu0 0
      %671 = vmatpush.bf16.msra.mxu0 %v662
      %672 = vmatmul.bf16.gmra.mxu0 %v659
      %v673 = vpop.f32.mrf.mxu0
      %v674 = vadd.f32 0.0, %v673
      %v675 = vpop.f32.mrf.mxu0
      %676 = vdwg.mxu0
      %v677 = vadd.f32 %v651, %v674
      %s678 = scalar_lea.vmem %s273, 4
      %v679 = vld [vmem:[%s678] sm:$0x3]
      %v680 = vld [vmem:[%s441] sm:$0xf]
      %v682 = vsel %vm297, %v680, 0
      %v685 = vsel %vm301, %v679, 0
      %687 = vmatpush.bf16.msra.mxu0 0
      %688 = vmatpush.bf16.msra.mxu0 0
      %689 = vmatpush.bf16.msra.mxu0 0
      %690 = vmatpush.bf16.msra.mxu0 0
      %691 = vmatpush.bf16.msra.mxu0 0
      %692 = vmatpush.bf16.msra.mxu0 0
      %693 = vmatpush.bf16.msra.mxu0 0
      %694 = vmatpush.bf16.msra.mxu0 %v685
      %695 = vmatmul.bf16.gmra.mxu0 %v682
      %v696 = vpop.f32.mrf.mxu0
      %v697 = vadd.f32 0.0, %v696
      %v698 = vpop.f32.mrf.mxu0
      %699 = vdwg.mxu0
      %v700 = vadd.f32 %v677, %v697
      %s701 = scalar_lea.vmem %s273, 22
      %v702 = vld [vmem:[%s701] sm:$0x3]
      %v703 = vld [vmem:[%s465] sm:$0xf]
      %v705 = vsel %vm297, %v703, 0
      %v708 = vsel %vm301, %v702, 0
      %710 = vmatpush.bf16.msra.mxu0 0
      %711 = vmatpush.bf16.msra.mxu0 0
      %712 = vmatpush.bf16.msra.mxu0 0
      %713 = vmatpush.bf16.msra.mxu0 0
      %714 = vmatpush.bf16.msra.mxu0 0
      %715 = vmatpush.bf16.msra.mxu0 0
      %716 = vmatpush.bf16.msra.mxu0 0
      %717 = vmatpush.bf16.msra.mxu0 %v708
      %718 = vmatmul.bf16.gmra.mxu0 %v705
      %v719 = vpop.f32.mrf.mxu0
      %v720 = vadd.f32 0.0, %v719
      %v721 = vpop.f32.mrf.mxu0
      %722 = vdwg.mxu0
      %v723 = vadd.f32 %v700, %v720
      %v724 = vld [vmem:[%s487] sm:$0xf]
      %725 = vst [vmem:[#allocation1] ss:$4 sm:$0xff] %v679
      %v726 = vld.sshfl [vmem:[#allocation1] sm:$0xff pattern:$0x73625140]
      %728 = vrot.lane.b32.xlu0 %v726, 127
      %v729 = vpop.permute.xlu0 %728
      %v731 = vsel %vm297, %v724, 0
      %v734 = vsel %vm301, %v729, 0
      %736 = vmatpush.bf16.msra.mxu0 0
      %737 = vmatpush.bf16.msra.mxu0 0
      %738 = vmatpush.bf16.msra.mxu0 0
      %739 = vmatpush.bf16.msra.mxu0 0
      %740 = vmatpush.bf16.msra.mxu0 0
      %741 = vmatpush.bf16.msra.mxu0 0
      %742 = vmatpush.bf16.msra.mxu0 0
      %743 = vmatpush.bf16.msra.mxu0 %v734
      %744 = vmatmul.bf16.gmra.mxu0 %v731
      %v745 = vpop.f32.mrf.mxu0
      %v746 = vadd.f32 0.0, %v745
      %v747 = vpop.f32.mrf.mxu0
      %748 = vdwg.mxu0
      %v749 = vadd.f32 %v723, %v746
      %v750 = vld [vmem:[%s2] sm:$0xff]
      %752 = vset.pattern.permute.xlu0 0
      %753 = vperm.xlu0 %752, %v750
      %v754 = vpop.permute.xlu0 %753
      %v756 = vadd.f32 %v749, %v754
      %vm757 = vcmp.ge.f32.partialorder %v756, 0.0
      %v758 = vld [vmem:[%s3] sm:$0xff]
      %760 = vset.pattern.permute.xlu0 0
      %761 = vperm.xlu0 %760, %v758
      %v762 = vpop.permute.xlu0 %761
      %v764 = vmul.f32 %v762, %v756
      %v765 = vsel %vm757, %v756, %v764
      %v766 = vpack.c.bf16 %v765, %v765
      %768 = vrot.lane.b32.xlu0 %v766, 1
      %v769 = vpop.permute.xlu0 %768
      %s771 = scalar_lea.vmem [#allocation2], 8
      %772 = vst.msk [vmem:[%s771] sm:$0xf] %vm536, %v769
      %v773 = vld [vmem:[%s678] sm:$0x3]
      %v774 = vld [vmem:[%s1] sm:$0xf]
      %v775 = vld [vmem:[%s701] sm:$0x3]
      %v776 = vld [vmem:[%s295] sm:$0xf]
      %v778 = vsel %vm297, %v776, 0
      %v781 = vsel %vm301, %v775, 0
      %783 = vmatpush.bf16.msra.mxu0 0
      %784 = vmatpush.bf16.msra.mxu0 0
      %785 = vmatpush.bf16.msra.mxu0 0
      %786 = vmatpush.bf16.msra.mxu0 0
      %787 = vmatpush.bf16.msra.mxu0 0
      %788 = vmatpush.bf16.msra.mxu0 0
      %789 = vmatpush.bf16.msra.mxu0 0
      %790 = vmatpush.bf16.msra.mxu0 %v781
      %791 = vmatmul.bf16.gmra.mxu0 %v778
      %v792 = vpop.f32.mrf.mxu0
      %v793 = vadd.f32 0.0, %v792
      %v794 = vpop.f32.mrf.mxu0
      %795 = vdwg.mxu0
      %v797 = vsel %vm297, %v774, 0
      %v800 = vsel %vm301, %v773, 0
      %802 = vmatpush.bf16.msra.mxu0 0
      %803 = vmatpush.bf16.msra.mxu0 0
      %804 = vmatpush.bf16.msra.mxu0 0
      %805 = vmatpush.bf16.msra.mxu0 0
      %806 = vmatpush.bf16.msra.mxu0 0
      %807 = vmatpush.bf16.msra.mxu0 0
      %808 = vmatpush.bf16.msra.mxu0 0
      %809 = vmatpush.bf16.msra.mxu0 %v800
      %810 = vmatmul.bf16.gmra.mxu0 %v797
      %v811 = vpop.f32.mrf.mxu0
      %v812 = vadd.f32 %v793, %v811
      %v813 = vpop.f32.mrf.mxu0
      %814 = vdwg.mxu0
      %v815 = vld [vmem:[%s337] sm:$0xf]
      %816 = vst [vmem:[#allocation1] ss:$4 sm:$0xff] %v773
      %v817 = vld.sshfl [vmem:[#allocation1] sm:$0xff pattern:$0x73625140]
      %819 = vrot.lane.b32.xlu0 %v817, 127
      %v820 = vpop.permute.xlu0 %819
      %v822 = vsel %vm297, %v815, 0
      %v825 = vsel %vm301, %v820, 0
      %827 = vmatpush.bf16.msra.mxu0 0
      %828 = vmatpush.bf16.msra.mxu0 0
      %829 = vmatpush.bf16.msra.mxu0 0
      %830 = vmatpush.bf16.msra.mxu0 0
      %831 = vmatpush.bf16.msra.mxu0 0
      %832 = vmatpush.bf16.msra.mxu0 0
      %833 = vmatpush.bf16.msra.mxu0 0
      %834 = vmatpush.bf16.msra.mxu0 %v825
      %835 = vmatmul.bf16.gmra.mxu0 %v822
      %v836 = vpop.f32.mrf.mxu0
      %v837 = vadd.f32 0.0, %v836
      %v838 = vpop.f32.mrf.mxu0
      %839 = vdwg.mxu0
      %v840 = vadd.f32 %v812, %v837
      %s841 = scalar_lea.vmem %s273, 40
      %v842 = vld [vmem:[%s841] sm:$0x3]
      %v843 = vld [vmem:[%s366] sm:$0xf]
      %v845 = vsel %vm297, %v843, 0
      %v848 = vsel %vm301, %v842, 0
      %850 = vmatpush.bf16.msra.mxu0 0
      %851 = vmatpush.bf16.msra.mxu0 0
      %852 = vmatpush.bf16.msra.mxu0 0
      %853 = vmatpush.bf16.msra.mxu0 0
      %854 = vmatpush.bf16.msra.mxu0 0
      %855 = vmatpush.bf16.msra.mxu0 0
      %856 = vmatpush.bf16.msra.mxu0 0
      %857 = vmatpush.bf16.msra.mxu0 %v848
      %858 = vmatmul.bf16.gmra.mxu0 %v845
      %v859 = vpop.f32.mrf.mxu0
      %v860 = vadd.f32 0.0, %v859
      %v861 = vpop.f32.mrf.mxu0
      %862 = vdwg.mxu0
      %v863 = vadd.f32 %v840, %v860
      %s864 = scalar_lea.vmem %s273, 58
      %v865 = vld [vmem:[%s864] sm:$0x3]
      %v866 = vld [vmem:[%s390] sm:$0xf]
      %v868 = vsel %vm297, %v866, 0
      %v871 = vsel %vm301, %v865, 0
      %873 = vmatpush.bf16.msra.mxu0 0
      %874 = vmatpush.bf16.msra.mxu0 0
      %875 = vmatpush.bf16.msra.mxu0 0
      %876 = vmatpush.bf16.msra.mxu0 0
      %877 = vmatpush.bf16.msra.mxu0 0
      %878 = vmatpush.bf16.msra.mxu0 0
      %879 = vmatpush.bf16.msra.mxu0 0
      %880 = vmatpush.bf16.msra.mxu0 %v871
      %881 = vmatmul.bf16.gmra.mxu0 %v868
      %v882 = vpop.f32.mrf.mxu0
      %v883 = vadd.f32 0.0, %v882
      %v884 = vpop.f32.mrf.mxu0
      %885 = vdwg.mxu0
      %v886 = vadd.f32 %v863, %v883
      %v887 = vld [vmem:[%s412] sm:$0xf]
      %888 = vst [vmem:[#allocation1] ss:$4 sm:$0xff] %v842
      %v889 = vld.sshfl [vmem:[#allocation1] sm:$0xff pattern:$0x73625140]
      %891 = vrot.lane.b32.xlu0 %v889, 127
      %v892 = vpop.permute.xlu0 %891
      %v894 = vsel %vm297, %v887, 0
      %v897 = vsel %vm301, %v892, 0
      %899 = vmatpush.bf16.msra.mxu0 0
      %900 = vmatpush.bf16.msra.mxu0 0
      %901 = vmatpush.bf16.msra.mxu0 0
      %902 = vmatpush.bf16.msra.mxu0 0
      %903 = vmatpush.bf16.msra.mxu0 0
      %904 = vmatpush.bf16.msra.mxu0 0
      %905 = vmatpush.bf16.msra.mxu0 0
      %906 = vmatpush.bf16.msra.mxu0 %v897
      %907 = vmatmul.bf16.gmra.mxu0 %v894
      %v908 = vpop.f32.mrf.mxu0
      %v909 = vadd.f32 0.0, %v908
      %v910 = vpop.f32.mrf.mxu0
      %911 = vdwg.mxu0
      %v912 = vadd.f32 %v886, %v909
      %s913 = scalar_lea.vmem %s273, 6
      %v914 = vld [vmem:[%s913] sm:$0x3]
      %v915 = vld [vmem:[%s441] sm:$0xf]
      %v917 = vsel %vm297, %v915, 0
      %v920 = vsel %vm301, %v914, 0
      %922 = vmatpush.bf16.msra.mxu0 0
      %923 = vmatpush.bf16.msra.mxu0 0
      %924 = vmatpush.bf16.msra.mxu0 0
      %925 = vmatpush.bf16.msra.mxu0 0
      %926 = vmatpush.bf16.msra.mxu0 0
      %927 = vmatpush.bf16.msra.mxu0 0
      %928 = vmatpush.bf16.msra.mxu0 0
      %929 = vmatpush.bf16.msra.mxu0 %v920
      %930 = vmatmul.bf16.gmra.mxu0 %v917
      %v931 = vpop.f32.mrf.mxu0
      %v932 = vadd.f32 0.0, %v931
      %v933 = vpop.f32.mrf.mxu0
      %934 = vdwg.mxu0
      %v935 = vadd.f32 %v912, %v932
      %s936 = scalar_lea.vmem %s273, 24
      %v937 = vld [vmem:[%s936] sm:$0x3]
      %v938 = vld [vmem:[%s465] sm:$0xf]
      %v940 = vsel %vm297, %v938, 0
      %v943 = vsel %vm301, %v937, 0
      %945 = vmatpush.bf16.msra.mxu0 0
      %946 = vmatpush.bf16.msra.mxu0 0
      %947 = vmatpush.bf16.msra.mxu0 0
      %948 = vmatpush.bf16.msra.mxu0 0
      %949 = vmatpush.bf16.msra.mxu0 0
      %950 = vmatpush.bf16.msra.mxu0 0
      %951 = vmatpush.bf16.msra.mxu0 0
      %952 = vmatpush.bf16.msra.mxu0 %v943
      %953 = vmatmul.bf16.gmra.mxu0 %v940
      %v954 = vpop.f32.mrf.mxu0
      %v955 = vadd.f32 0.0, %v954
      %v956 = vpop.f32.mrf.mxu0
      %957 = vdwg.mxu0
      %v958 = vadd.f32 %v935, %v955
      %v959 = vld [vmem:[%s487] sm:$0xf]
      %960 = vst [vmem:[#allocation1] ss:$4 sm:$0xff] %v914
      %v961 = vld.sshfl [vmem:[#allocation1] sm:$0xff pattern:$0x73625140]
      %963 = vrot.lane.b32.xlu0 %v961, 127
      %v964 = vpop.permute.xlu0 %963
      %v966 = vsel %vm297, %v959, 0
      %v969 = vsel %vm301, %v964, 0
      %971 = vmatpush.bf16.msra.mxu0 0
      %972 = vmatpush.bf16.msra.mxu0 0
      %973 = vmatpush.bf16.msra.mxu0 0
      %974 = vmatpush.bf16.msra.mxu0 0
      %975 = vmatpush.bf16.msra.mxu0 0
      %976 = vmatpush.bf16.msra.mxu0 0
      %977 = vmatpush.bf16.msra.mxu0 0
      %978 = vmatpush.bf16.msra.mxu0 %v969
      %979 = vmatmul.bf16.gmra.mxu0 %v966
      %v980 = vpop.f32.mrf.mxu0
      %v981 = vadd.f32 0.0, %v980
      %v982 = vpop.f32.mrf.mxu0
      %983 = vdwg.mxu0
      %v984 = vadd.f32 %v958, %v981
      %v985 = vld [vmem:[%s2] sm:$0xff]
      %987 = vset.pattern.permute.xlu0 0
      %988 = vperm.xlu0 %987, %v985
      %v989 = vpop.permute.xlu0 %988
      %v991 = vadd.f32 %v984, %v989
      %vm992 = vcmp.ge.f32.partialorder %v991, 0.0
      %v993 = vld [vmem:[%s3] sm:$0xff]
      %995 = vset.pattern.permute.xlu0 0
      %996 = vperm.xlu0 %995, %v993
      %v997 = vpop.permute.xlu0 %996
      %v999 = vmul.f32 %v997, %v991
      %v1000 = vsel %vm992, %v991, %v999
      %v1001 = vpack.c.bf16 %v1000, %v1000
      %1003 = vrot.lane.b32.xlu0 %v1001, 1
      %v1004 = vpop.permute.xlu0 %1003
      %s1006 = scalar_lea.vmem [#allocation2], 12
      %1007 = vst.msk [vmem:[%s1006] sm:$0xf] %vm536, %v1004
      %v1008 = vld [vmem:[%s913] sm:$0x3]
      %v1009 = vld [vmem:[%s1] sm:$0xf]
      %v1010 = vld [vmem:[%s936] sm:$0x3]
      %v1011 = vld [vmem:[%s295] sm:$0xf]
      %v1013 = vsel %vm297, %v1011, 0
      %v1016 = vsel %vm301, %v1010, 0
      %1018 = vmatpush.bf16.msra.mxu0 0
      %1019 = vmatpush.bf16.msra.mxu0 0
      %1020 = vmatpush.bf16.msra.mxu0 0
      %1021 = vmatpush.bf16.msra.mxu0 0
      %1022 = vmatpush.bf16.msra.mxu0 0
      %1023 = vmatpush.bf16.msra.mxu0 0
      %1024 = vmatpush.bf16.msra.mxu0 0
      %1025 = vmatpush.bf16.msra.mxu0 %v1016
      %1026 = vmatmul.bf16.gmra.mxu0 %v1013
      %v1027 = vpop.f32.mrf.mxu0
      %v1028 = vadd.f32 0.0, %v1027
      %v1029 = vpop.f32.mrf.mxu0
      %1030 = vdwg.mxu0
      %v1032 = vsel %vm297, %v1009, 0
      %v1035 = vsel %vm301, %v1008, 0
      %1037 = vmatpush.bf16.msra.mxu0 0
      %1038 = vmatpush.bf16.msra.mxu0 0
      %1039 = vmatpush.bf16.msra.mxu0 0
      %1040 = vmatpush.bf16.msra.mxu0 0
      %1041 = vmatpush.bf16.msra.mxu0 0
      %1042 = vmatpush.bf16.msra.mxu0 0
      %1043 = vmatpush.bf16.msra.mxu0 0
      %1044 = vmatpush.bf16.msra.mxu0 %v1035
      %1045 = vmatmul.bf16.gmra.mxu0 %v1032
      %v1046 = vpop.f32.mrf.mxu0
      %v1047 = vadd.f32 %v1028, %v1046
      %v1048 = vpop.f32.mrf.mxu0
      %1049 = vdwg.mxu0
      %v1050 = vld [vmem:[%s337] sm:$0xf]
      %1051 = vst [vmem:[#allocation1] ss:$4 sm:$0xff] %v1008
      %v1052 = vld.sshfl [vmem:[#allocation1] sm:$0xff pattern:$0x73625140]
      %1054 = vrot.lane.b32.xlu0 %v1052, 127
      %v1055 = vpop.permute.xlu0 %1054
      %v1057 = vsel %vm297, %v1050, 0
      %v1060 = vsel %vm301, %v1055, 0
      %1062 = vmatpush.bf16.msra.mxu0 0
      %1063 = vmatpush.bf16.msra.mxu0 0
      %1064 = vmatpush.bf16.msra.mxu0 0
      %1065 = vmatpush.bf16.msra.mxu0 0
      %1066 = vmatpush.bf16.msra.mxu0 0
      %1067 = vmatpush.bf16.msra.mxu0 0
      %1068 = vmatpush.bf16.msra.mxu0 0
      %1069 = vmatpush.bf16.msra.mxu0 %v1060
      %1070 = vmatmul.bf16.gmra.mxu0 %v1057
      %v1071 = vpop.f32.mrf.mxu0
      %v1072 = vadd.f32 0.0, %v1071
      %v1073 = vpop.f32.mrf.mxu0
      %1074 = vdwg.mxu0
      %v1075 = vadd.f32 %v1047, %v1072
      %s1076 = scalar_lea.vmem %s273, 42
      %v1077 = vld [vmem:[%s1076] sm:$0x3]
      %v1078 = vld [vmem:[%s366] sm:$0xf]
      %v1080 = vsel %vm297, %v1078, 0
      %v1083 = vsel %vm301, %v1077, 0
      %1085 = vmatpush.bf16.msra.mxu0 0
      %1086 = vmatpush.bf16.msra.mxu0 0
      %1087 = vmatpush.bf16.msra.mxu0 0
      %1088 = vmatpush.bf16.msra.mxu0 0
      %1089 = vmatpush.bf16.msra.mxu0 0
      %1090 = vmatpush.bf16.msra.mxu0 0
      %1091 = vmatpush.bf16.msra.mxu0 0
      %1092 = vmatpush.bf16.msra.mxu0 %v1083
      %1093 = vmatmul.bf16.gmra.mxu0 %v1080
      %v1094 = vpop.f32.mrf.mxu0
      %v1095 = vadd.f32 0.0, %v1094
      %v1096 = vpop.f32.mrf.mxu0
      %1097 = vdwg.mxu0
      %v1098 = vadd.f32 %v1075, %v1095
      %s1099 = scalar_lea.vmem %s273, 60
      %v1100 = vld [vmem:[%s1099] sm:$0x3]
      %v1101 = vld [vmem:[%s390] sm:$0xf]
      %v1103 = vsel %vm297, %v1101, 0
      %v1106 = vsel %vm301, %v1100, 0
      %1108 = vmatpush.bf16.msra.mxu0 0
      %1109 = vmatpush.bf16.msra.mxu0 0
      %1110 = vmatpush.bf16.msra.mxu0 0
      %1111 = vmatpush.bf16.msra.mxu0 0
      %1112 = vmatpush.bf16.msra.mxu0 0
      %1113 = vmatpush.bf16.msra.mxu0 0
      %1114 = vmatpush.bf16.msra.mxu0 0
      %1115 = vmatpush.bf16.msra.mxu0 %v1106
      %1116 = vmatmul.bf16.gmra.mxu0 %v1103
      %v1117 = vpop.f32.mrf.mxu0
      %v1118 = vadd.f32 0.0, %v1117
      %v1119 = vpop.f32.mrf.mxu0
      %1120 = vdwg.mxu0
      %v1121 = vadd.f32 %v1098, %v1118
      %v1122 = vld [vmem:[%s412] sm:$0xf]
      %1123 = vst [vmem:[#allocation1] ss:$4 sm:$0xff] %v1077
      %v1124 = vld.sshfl [vmem:[#allocation1] sm:$0xff pattern:$0x73625140]
      %1126 = vrot.lane.b32.xlu0 %v1124, 127
      %v1127 = vpop.permute.xlu0 %1126
      %v1129 = vsel %vm297, %v1122, 0
      %v1132 = vsel %vm301, %v1127, 0
      %1134 = vmatpush.bf16.msra.mxu0 0
      %1135 = vmatpush.bf16.msra.mxu0 0
      %1136 = vmatpush.bf16.msra.mxu0 0
      %1137 = vmatpush.bf16.msra.mxu0 0
      %1138 = vmatpush.bf16.msra.mxu0 0
      %1139 = vmatpush.bf16.msra.mxu0 0
      %1140 = vmatpush.bf16.msra.mxu0 0
      %1141 = vmatpush.bf16.msra.mxu0 %v1132
      %1142 = vmatmul.bf16.gmra.mxu0 %v1129
      %v1143 = vpop.f32.mrf.mxu0
      %v1144 = vadd.f32 0.0, %v1143
      %v1145 = vpop.f32.mrf.mxu0
      %1146 = vdwg.mxu0
      %v1147 = vadd.f32 %v1121, %v1144
      %s1148 = scalar_lea.vmem %s273, 8
      %v1149 = vld [vmem:[%s1148] sm:$0x3]
      %v1150 = vld [vmem:[%s441] sm:$0xf]
      %v1152 = vsel %vm297, %v1150, 0
      %v1155 = vsel %vm301, %v1149, 0
      %1157 = vmatpush.bf16.msra.mxu0 0
      %1158 = vmatpush.bf16.msra.mxu0 0
      %1159 = vmatpush.bf16.msra.mxu0 0
      %1160 = vmatpush.bf16.msra.mxu0 0
      %1161 = vmatpush.bf16.msra.mxu0 0
      %1162 = vmatpush.bf16.msra.mxu0 0
      %1163 = vmatpush.bf16.msra.mxu0 0
      %1164 = vmatpush.bf16.msra.mxu0 %v1155
      %1165 = vmatmul.bf16.gmra.mxu0 %v1152
      %v1166 = vpop.f32.mrf.mxu0
      %v1167 = vadd.f32 0.0, %v1166
      %v1168 = vpop.f32.mrf.mxu0
      %1169 = vdwg.mxu0
      %v1170 = vadd.f32 %v1147, %v1167
      %s1171 = scalar_lea.vmem %s273, 26
      %v1172 = vld [vmem:[%s1171] sm:$0x3]
      %v1173 = vld [vmem:[%s465] sm:$0xf]
      %v1175 = vsel %vm297, %v1173, 0
      %v1178 = vsel %vm301, %v1172, 0
      %1180 = vmatpush.bf16.msra.mxu0 0
      %1181 = vmatpush.bf16.msra.mxu0 0
      %1182 = vmatpush.bf16.msra.mxu0 0
      %1183 = vmatpush.bf16.msra.mxu0 0
      %1184 = vmatpush.bf16.msra.mxu0 0
      %1185 = vmatpush.bf16.msra.mxu0 0
      %1186 = vmatpush.bf16.msra.mxu0 0
      %1187 = vmatpush.bf16.msra.mxu0 %v1178
      %1188 = vmatmul.bf16.gmra.mxu0 %v1175
      %v1189 = vpop.f32.mrf.mxu0
      %v1190 = vadd.f32 0.0, %v1189
      %v1191 = vpop.f32.mrf.mxu0
      %1192 = vdwg.mxu0
      %v1193 = vadd.f32 %v1170, %v1190
      %v1194 = vld [vmem:[%s487] sm:$0xf]
      %1195 = vst [vmem:[#allocation1] ss:$4 sm:$0xff] %v1149
      %v1196 = vld.sshfl [vmem:[#allocation1] sm:$0xff pattern:$0x73625140]
      %1198 = vrot.lane.b32.xlu0 %v1196, 127
      %v1199 = vpop.permute.xlu0 %1198
      %v1201 = vsel %vm297, %v1194, 0
      %v1204 = vsel %vm301, %v1199, 0
      %1206 = vmatpush.bf16.msra.mxu0 0
      %1207 = vmatpush.bf16.msra.mxu0 0
      %1208 = vmatpush.bf16.msra.mxu0 0
      %1209 = vmatpush.bf16.msra.mxu0 0
      %1210 = vmatpush.bf16.msra.mxu0 0
      %1211 = vmatpush.bf16.msra.mxu0 0
      %1212 = vmatpush.bf16.msra.mxu0 0
      %1213 = vmatpush.bf16.msra.mxu0 %v1204
      %1214 = vmatmul.bf16.gmra.mxu0 %v1201
      %v1215 = vpop.f32.mrf.mxu0
      %v1216 = vadd.f32 0.0, %v1215
      %v1217 = vpop.f32.mrf.mxu0
      %1218 = vdwg.mxu0
      %v1219 = vadd.f32 %v1193, %v1216
      %v1220 = vld [vmem:[%s2] sm:$0xff]
      %1222 = vset.pattern.permute.xlu0 0
      %1223 = vperm.xlu0 %1222, %v1220
      %v1224 = vpop.permute.xlu0 %1223
      %v1226 = vadd.f32 %v1219, %v1224
      %vm1227 = vcmp.ge.f32.partialorder %v1226, 0.0
      %v1228 = vld [vmem:[%s3] sm:$0xff]
      %1230 = vset.pattern.permute.xlu0 0
      %1231 = vperm.xlu0 %1230, %v1228
      %v1232 = vpop.permute.xlu0 %1231
      %v1234 = vmul.f32 %v1232, %v1226
      %v1235 = vsel %vm1227, %v1226, %v1234
      %v1236 = vpack.c.bf16 %v1235, %v1235
      %1238 = vrot.lane.b32.xlu0 %v1236, 1
      %v1239 = vpop.permute.xlu0 %1238
      %s1241 = scalar_lea.vmem [#allocation2], 16
      %1242 = vst.msk [vmem:[%s1241] sm:$0xf] %vm536, %v1239
      %v1243 = vld [vmem:[%s1148] sm:$0x3]
      %v1244 = vld [vmem:[%s1] sm:$0xf]
      %v1245 = vld [vmem:[%s1171] sm:$0x3]
      %v1246 = vld [vmem:[%s295] sm:$0xf]
      %v1248 = vsel %vm297, %v1246, 0
      %v1251 = vsel %vm301, %v1245, 0
      %1253 = vmatpush.bf16.msra.mxu0 0
      %1254 = vmatpush.bf16.msra.mxu0 0
      %1255 = vmatpush.bf16.msra.mxu0 0
      %1256 = vmatpush.bf16.msra.mxu0 0
      %1257 = vmatpush.bf16.msra.mxu0 0
      %1258 = vmatpush.bf16.msra.mxu0 0
      %1259 = vmatpush.bf16.msra.mxu0 0
      %1260 = vmatpush.bf16.msra.mxu0 %v1251
      %1261 = vmatmul.bf16.gmra.mxu0 %v1248
      %v1262 = vpop.f32.mrf.mxu0
      %v1263 = vadd.f32 0.0, %v1262
      %v1264 = vpop.f32.mrf.mxu0
      %1265 = vdwg.mxu0
      %v1267 = vsel %vm297, %v1244, 0
      %v1270 = vsel %vm301, %v1243, 0
      %1272 = vmatpush.bf16.msra.mxu0 0
      %1273 = vmatpush.bf16.msra.mxu0 0
      %1274 = vmatpush.bf16.msra.mxu0 0
      %1275 = vmatpush.bf16.msra.mxu0 0
      %1276 = vmatpush.bf16.msra.mxu0 0
      %1277 = vmatpush.bf16.msra.mxu0 0
      %1278 = vmatpush.bf16.msra.mxu0 0
      %1279 = vmatpush.bf16.msra.mxu0 %v1270
      %1280 = vmatmul.bf16.gmra.mxu0 %v1267
      %v1281 = vpop.f32.mrf.mxu0
      %v1282 = vadd.f32 %v1263, %v1281
      %v1283 = vpop.f32.mrf.mxu0
      %1284 = vdwg.mxu0
      %v1285 = vld [vmem:[%s337] sm:$0xf]
      %1286 = vst [vmem:[#allocation1] ss:$4 sm:$0xff] %v1243
      %v1287 = vld.sshfl [vmem:[#allocation1] sm:$0xff pattern:$0x73625140]
      %1289 = vrot.lane.b32.xlu0 %v1287, 127
      %v1290 = vpop.permute.xlu0 %1289
      %v1292 = vsel %vm297, %v1285, 0
      %v1295 = vsel %vm301, %v1290, 0
      %1297 = vmatpush.bf16.msra.mxu0 0
      %1298 = vmatpush.bf16.msra.mxu0 0
      %1299 = vmatpush.bf16.msra.mxu0 0
      %1300 = vmatpush.bf16.msra.mxu0 0
      %1301 = vmatpush.bf16.msra.mxu0 0
      %1302 = vmatpush.bf16.msra.mxu0 0
      %1303 = vmatpush.bf16.msra.mxu0 0
      %1304 = vmatpush.bf16.msra.mxu0 %v1295
      %1305 = vmatmul.bf16.gmra.mxu0 %v1292
      %v1306 = vpop.f32.mrf.mxu0
      %v1307 = vadd.f32 0.0, %v1306
      %v1308 = vpop.f32.mrf.mxu0
      %1309 = vdwg.mxu0
      %v1310 = vadd.f32 %v1282, %v1307
      %s1311 = scalar_lea.vmem %s273, 44
      %v1312 = vld [vmem:[%s1311] sm:$0x3]
      %v1313 = vld [vmem:[%s366] sm:$0xf]
      %v1315 = vsel %vm297, %v1313, 0
      %v1318 = vsel %vm301, %v1312, 0
      %1320 = vmatpush.bf16.msra.mxu0 0
      %1321 = vmatpush.bf16.msra.mxu0 0
      %1322 = vmatpush.bf16.msra.mxu0 0
      %1323 = vmatpush.bf16.msra.mxu0 0
      %1324 = vmatpush.bf16.msra.mxu0 0
      %1325 = vmatpush.bf16.msra.mxu0 0
      %1326 = vmatpush.bf16.msra.mxu0 0
      %1327 = vmatpush.bf16.msra.mxu0 %v1318
      %1328 = vmatmul.bf16.gmra.mxu0 %v1315
      %v1329 = vpop.f32.mrf.mxu0
      %v1330 = vadd.f32 0.0, %v1329
      %v1331 = vpop.f32.mrf.mxu0
      %1332 = vdwg.mxu0
      %v1333 = vadd.f32 %v1310, %v1330
      %s1334 = scalar_lea.vmem %s273, 62
      %v1335 = vld [vmem:[%s1334] sm:$0x3]
      %v1336 = vld [vmem:[%s390] sm:$0xf]
      %v1338 = vsel %vm297, %v1336, 0
      %v1341 = vsel %vm301, %v1335, 0
      %1343 = vmatpush.bf16.msra.mxu0 0
      %1344 = vmatpush.bf16.msra.mxu0 0
      %1345 = vmatpush.bf16.msra.mxu0 0
      %1346 = vmatpush.bf16.msra.mxu0 0
      %1347 = vmatpush.bf16.msra.mxu0 0
      %1348 = vmatpush.bf16.msra.mxu0 0
      %1349 = vmatpush.bf16.msra.mxu0 0
      %1350 = vmatpush.bf16.msra.mxu0 %v1341
      %1351 = vmatmul.bf16.gmra.mxu0 %v1338
      %v1352 = vpop.f32.mrf.mxu0
      %v1353 = vadd.f32 0.0, %v1352
      %v1354 = vpop.f32.mrf.mxu0
      %1355 = vdwg.mxu0
      %v1356 = vadd.f32 %v1333, %v1353
      %v1357 = vld [vmem:[%s412] sm:$0xf]
      %1358 = vst [vmem:[#allocation1] ss:$4 sm:$0xff] %v1312
      %v1359 = vld.sshfl [vmem:[#allocation1] sm:$0xff pattern:$0x73625140]
      %1361 = vrot.lane.b32.xlu0 %v1359, 127
      %v1362 = vpop.permute.xlu0 %1361
      %v1364 = vsel %vm297, %v1357, 0
      %v1367 = vsel %vm301, %v1362, 0
      %1369 = vmatpush.bf16.msra.mxu0 0
      %1370 = vmatpush.bf16.msra.mxu0 0
      %1371 = vmatpush.bf16.msra.mxu0 0
      %1372 = vmatpush.bf16.msra.mxu0 0
      %1373 = vmatpush.bf16.msra.mxu0 0
      %1374 = vmatpush.bf16.msra.mxu0 0
      %1375 = vmatpush.bf16.msra.mxu0 0
      %1376 = vmatpush.bf16.msra.mxu0 %v1367
      %1377 = vmatmul.bf16.gmra.mxu0 %v1364
      %v1378 = vpop.f32.mrf.mxu0
      %v1379 = vadd.f32 0.0, %v1378
      %v1380 = vpop.f32.mrf.mxu0
      %1381 = vdwg.mxu0
      %v1382 = vadd.f32 %v1356, %v1379
      %s1383 = scalar_lea.vmem %s273, 10
      %v1384 = vld [vmem:[%s1383] sm:$0x3]
      %v1385 = vld [vmem:[%s441] sm:$0xf]
      %v1387 = vsel %vm297, %v1385, 0
      %v1390 = vsel %vm301, %v1384, 0
      %1392 = vmatpush.bf16.msra.mxu0 0
      %1393 = vmatpush.bf16.msra.mxu0 0
      %1394 = vmatpush.bf16.msra.mxu0 0
      %1395 = vmatpush.bf16.msra.mxu0 0
      %1396 = vmatpush.bf16.msra.mxu0 0
      %1397 = vmatpush.bf16.msra.mxu0 0
      %1398 = vmatpush.bf16.msra.mxu0 0
      %1399 = vmatpush.bf16.msra.mxu0 %v1390
      %1400 = vmatmul.bf16.gmra.mxu0 %v1387
      %v1401 = vpop.f32.mrf.mxu0
      %v1402 = vadd.f32 0.0, %v1401
      %v1403 = vpop.f32.mrf.mxu0
      %1404 = vdwg.mxu0
      %v1405 = vadd.f32 %v1382, %v1402
      %s1406 = scalar_lea.vmem %s273, 28
      %v1407 = vld [vmem:[%s1406] sm:$0x3]
      %v1408 = vld [vmem:[%s465] sm:$0xf]
      %v1410 = vsel %vm297, %v1408, 0
      %v1413 = vsel %vm301, %v1407, 0
      %1415 = vmatpush.bf16.msra.mxu0 0
      %1416 = vmatpush.bf16.msra.mxu0 0
      %1417 = vmatpush.bf16.msra.mxu0 0
      %1418 = vmatpush.bf16.msra.mxu0 0
      %1419 = vmatpush.bf16.msra.mxu0 0
      %1420 = vmatpush.bf16.msra.mxu0 0
      %1421 = vmatpush.bf16.msra.mxu0 0
      %1422 = vmatpush.bf16.msra.mxu0 %v1413
      %1423 = vmatmul.bf16.gmra.mxu0 %v1410
      %v1424 = vpop.f32.mrf.mxu0
      %v1425 = vadd.f32 0.0, %v1424
      %v1426 = vpop.f32.mrf.mxu0
      %1427 = vdwg.mxu0
      %v1428 = vadd.f32 %v1405, %v1425
      %v1429 = vld [vmem:[%s487] sm:$0xf]
      %1430 = vst [vmem:[#allocation1] ss:$4 sm:$0xff] %v1384
      %v1431 = vld.sshfl [vmem:[#allocation1] sm:$0xff pattern:$0x73625140]
      %1433 = vrot.lane.b32.xlu0 %v1431, 127
      %v1434 = vpop.permute.xlu0 %1433
      %v1436 = vsel %vm297, %v1429, 0
      %v1439 = vsel %vm301, %v1434, 0
      %1441 = vmatpush.bf16.msra.mxu0 0
      %1442 = vmatpush.bf16.msra.mxu0 0
      %1443 = vmatpush.bf16.msra.mxu0 0
      %1444 = vmatpush.bf16.msra.mxu0 0
      %1445 = vmatpush.bf16.msra.mxu0 0
      %1446 = vmatpush.bf16.msra.mxu0 0
      %1447 = vmatpush.bf16.msra.mxu0 0
      %1448 = vmatpush.bf16.msra.mxu0 %v1439
      %1449 = vmatmul.bf16.gmra.mxu0 %v1436
      %v1450 = vpop.f32.mrf.mxu0
      %v1451 = vadd.f32 0.0, %v1450
      %v1452 = vpop.f32.mrf.mxu0
      %1453 = vdwg.mxu0
      %v1454 = vadd.f32 %v1428, %v1451
      %v1455 = vld [vmem:[%s2] sm:$0xff]
      %1457 = vset.pattern.permute.xlu0 0
      %1458 = vperm.xlu0 %1457, %v1455
      %v1459 = vpop.permute.xlu0 %1458
      %v1461 = vadd.f32 %v1454, %v1459
      %vm1462 = vcmp.ge.f32.partialorder %v1461, 0.0
      %v1463 = vld [vmem:[%s3] sm:$0xff]
      %1465 = vset.pattern.permute.xlu0 0
      %1466 = vperm.xlu0 %1465, %v1463
      %v1467 = vpop.permute.xlu0 %1466
      %v1469 = vmul.f32 %v1467, %v1461
      %v1470 = vsel %vm1462, %v1461, %v1469
      %v1471 = vpack.c.bf16 %v1470, %v1470
      %1473 = vrot.lane.b32.xlu0 %v1471, 1
      %v1474 = vpop.permute.xlu0 %1473
      %s1476 = scalar_lea.vmem [#allocation2], 20
      %1477 = vst.msk [vmem:[%s1476] sm:$0xf] %vm536, %v1474
      %v1478 = vld [vmem:[%s1383] sm:$0x3]
      %v1479 = vld [vmem:[%s1] sm:$0xf]
      %v1480 = vld [vmem:[%s1406] sm:$0x3]
      %v1481 = vld [vmem:[%s295] sm:$0xf]
      %v1483 = vsel %vm297, %v1481, 0
      %v1486 = vsel %vm301, %v1480, 0
      %1488 = vmatpush.bf16.msra.mxu0 0
      %1489 = vmatpush.bf16.msra.mxu0 0
      %1490 = vmatpush.bf16.msra.mxu0 0
      %1491 = vmatpush.bf16.msra.mxu0 0
      %1492 = vmatpush.bf16.msra.mxu0 0
      %1493 = vmatpush.bf16.msra.mxu0 0
      %1494 = vmatpush.bf16.msra.mxu0 0
      %1495 = vmatpush.bf16.msra.mxu0 %v1486
      %1496 = vmatmul.bf16.gmra.mxu0 %v1483
      %v1497 = vpop.f32.mrf.mxu0
      %v1498 = vadd.f32 0.0, %v1497
      %v1499 = vpop.f32.mrf.mxu0
      %1500 = vdwg.mxu0
      %v1502 = vsel %vm297, %v1479, 0
      %v1505 = vsel %vm301, %v1478, 0
      %1507 = vmatpush.bf16.msra.mxu0 0
      %1508 = vmatpush.bf16.msra.mxu0 0
      %1509 = vmatpush.bf16.msra.mxu0 0
      %1510 = vmatpush.bf16.msra.mxu0 0
      %1511 = vmatpush.bf16.msra.mxu0 0
      %1512 = vmatpush.bf16.msra.mxu0 0
      %1513 = vmatpush.bf16.msra.mxu0 0
      %1514 = vmatpush.bf16.msra.mxu0 %v1505
      %1515 = vmatmul.bf16.gmra.mxu0 %v1502
      %v1516 = vpop.f32.mrf.mxu0
      %v1517 = vadd.f32 %v1498, %v1516
      %v1518 = vpop.f32.mrf.mxu0
      %1519 = vdwg.mxu0
      %v1520 = vld [vmem:[%s337] sm:$0xf]
      %1521 = vst [vmem:[#allocation1] ss:$4 sm:$0xff] %v1478
      %v1522 = vld.sshfl [vmem:[#allocation1] sm:$0xff pattern:$0x73625140]
      %1524 = vrot.lane.b32.xlu0 %v1522, 127
      %v1525 = vpop.permute.xlu0 %1524
      %v1527 = vsel %vm297, %v1520, 0
      %v1530 = vsel %vm301, %v1525, 0
      %1532 = vmatpush.bf16.msra.mxu0 0
      %1533 = vmatpush.bf16.msra.mxu0 0
      %1534 = vmatpush.bf16.msra.mxu0 0
      %1535 = vmatpush.bf16.msra.mxu0 0
      %1536 = vmatpush.bf16.msra.mxu0 0
      %1537 = vmatpush.bf16.msra.mxu0 0
      %1538 = vmatpush.bf16.msra.mxu0 0
      %1539 = vmatpush.bf16.msra.mxu0 %v1530
      %1540 = vmatmul.bf16.gmra.mxu0 %v1527
      %v1541 = vpop.f32.mrf.mxu0
      %v1542 = vadd.f32 0.0, %v1541
      %v1543 = vpop.f32.mrf.mxu0
      %1544 = vdwg.mxu0
      %v1545 = vadd.f32 %v1517, %v1542
      %s1546 = scalar_lea.vmem %s273, 46
      %v1547 = vld [vmem:[%s1546] sm:$0x3]
      %v1548 = vld [vmem:[%s366] sm:$0xf]
      %v1550 = vsel %vm297, %v1548, 0
      %v1553 = vsel %vm301, %v1547, 0
      %1555 = vmatpush.bf16.msra.mxu0 0
      %1556 = vmatpush.bf16.msra.mxu0 0
      %1557 = vmatpush.bf16.msra.mxu0 0
      %1558 = vmatpush.bf16.msra.mxu0 0
      %1559 = vmatpush.bf16.msra.mxu0 0
      %1560 = vmatpush.bf16.msra.mxu0 0
      %1561 = vmatpush.bf16.msra.mxu0 0
      %1562 = vmatpush.bf16.msra.mxu0 %v1553
      %1563 = vmatmul.bf16.gmra.mxu0 %v1550
      %v1564 = vpop.f32.mrf.mxu0
      %v1565 = vadd.f32 0.0, %v1564
      %v1566 = vpop.f32.mrf.mxu0
      %1567 = vdwg.mxu0
      %v1568 = vadd.f32 %v1545, %v1565
      %s1569 = scalar_lea.vmem %s273, 64
      %v1570 = vld [vmem:[%s1569] sm:$0x3]
      %v1571 = vld [vmem:[%s390] sm:$0xf]
      %v1573 = vsel %vm297, %v1571, 0
      %v1576 = vsel %vm301, %v1570, 0
      %1578 = vmatpush.bf16.msra.mxu0 0
      %1579 = vmatpush.bf16.msra.mxu0 0
      %1580 = vmatpush.bf16.msra.mxu0 0
      %1581 = vmatpush.bf16.msra.mxu0 0
      %1582 = vmatpush.bf16.msra.mxu0 0
      %1583 = vmatpush.bf16.msra.mxu0 0
      %1584 = vmatpush.bf16.msra.mxu0 0
      %1585 = vmatpush.bf16.msra.mxu0 %v1576
      %1586 = vmatmul.bf16.gmra.mxu0 %v1573
      %v1587 = vpop.f32.mrf.mxu0
      %v1588 = vadd.f32 0.0, %v1587
      %v1589 = vpop.f32.mrf.mxu0
      %1590 = vdwg.mxu0
      %v1591 = vadd.f32 %v1568, %v1588
      %v1592 = vld [vmem:[%s412] sm:$0xf]
      %1593 = vst [vmem:[#allocation1] ss:$4 sm:$0xff] %v1547
      %v1594 = vld.sshfl [vmem:[#allocation1] sm:$0xff pattern:$0x73625140]
      %1596 = vrot.lane.b32.xlu0 %v1594, 127
      %v1597 = vpop.permute.xlu0 %1596
      %v1599 = vsel %vm297, %v1592, 0
      %v1602 = vsel %vm301, %v1597, 0
      %1604 = vmatpush.bf16.msra.mxu0 0
      %1605 = vmatpush.bf16.msra.mxu0 0
      %1606 = vmatpush.bf16.msra.mxu0 0
      %1607 = vmatpush.bf16.msra.mxu0 0
      %1608 = vmatpush.bf16.msra.mxu0 0
      %1609 = vmatpush.bf16.msra.mxu0 0
      %1610 = vmatpush.bf16.msra.mxu0 0
      %1611 = vmatpush.bf16.msra.mxu0 %v1602
      %1612 = vmatmul.bf16.gmra.mxu0 %v1599
      %v1613 = vpop.f32.mrf.mxu0
      %v1614 = vadd.f32 0.0, %v1613
      %v1615 = vpop.f32.mrf.mxu0
      %1616 = vdwg.mxu0
      %v1617 = vadd.f32 %v1591, %v1614
      %s1618 = scalar_lea.vmem %s273, 12
      %v1619 = vld [vmem:[%s1618] sm:$0x3]
      %v1620 = vld [vmem:[%s441] sm:$0xf]
      %v1622 = vsel %vm297, %v1620, 0
      %v1625 = vsel %vm301, %v1619, 0
      %1627 = vmatpush.bf16.msra.mxu0 0
      %1628 = vmatpush.bf16.msra.mxu0 0
      %1629 = vmatpush.bf16.msra.mxu0 0
      %1630 = vmatpush.bf16.msra.mxu0 0
      %1631 = vmatpush.bf16.msra.mxu0 0
      %1632 = vmatpush.bf16.msra.mxu0 0
      %1633 = vmatpush.bf16.msra.mxu0 0
      %1634 = vmatpush.bf16.msra.mxu0 %v1625
      %1635 = vmatmul.bf16.gmra.mxu0 %v1622
      %v1636 = vpop.f32.mrf.mxu0
      %v1637 = vadd.f32 0.0, %v1636
      %v1638 = vpop.f32.mrf.mxu0
      %1639 = vdwg.mxu0
      %v1640 = vadd.f32 %v1617, %v1637
      %s1641 = scalar_lea.vmem %s273, 30
      %v1642 = vld [vmem:[%s1641] sm:$0x3]
      %v1643 = vld [vmem:[%s465] sm:$0xf]
      %v1645 = vsel %vm297, %v1643, 0
      %v1648 = vsel %vm301, %v1642, 0
      %1650 = vmatpush.bf16.msra.mxu0 0
      %1651 = vmatpush.bf16.msra.mxu0 0
      %1652 = vmatpush.bf16.msra.mxu0 0
      %1653 = vmatpush.bf16.msra.mxu0 0
      %1654 = vmatpush.bf16.msra.mxu0 0
      %1655 = vmatpush.bf16.msra.mxu0 0
      %1656 = vmatpush.bf16.msra.mxu0 0
      %1657 = vmatpush.bf16.msra.mxu0 %v1648
      %1658 = vmatmul.bf16.gmra.mxu0 %v1645
      %v1659 = vpop.f32.mrf.mxu0
      %v1660 = vadd.f32 0.0, %v1659
      %v1661 = vpop.f32.mrf.mxu0
      %1662 = vdwg.mxu0
      %v1663 = vadd.f32 %v1640, %v1660
      %v1664 = vld [vmem:[%s487] sm:$0xf]
      %1665 = vst [vmem:[#allocation1] ss:$4 sm:$0xff] %v1619
      %v1666 = vld.sshfl [vmem:[#allocation1] sm:$0xff pattern:$0x73625140]
      %1668 = vrot.lane.b32.xlu0 %v1666, 127
      %v1669 = vpop.permute.xlu0 %1668
      %v1671 = vsel %vm297, %v1664, 0
      %v1674 = vsel %vm301, %v1669, 0
      %1676 = vmatpush.bf16.msra.mxu0 0
      %1677 = vmatpush.bf16.msra.mxu0 0
      %1678 = vmatpush.bf16.msra.mxu0 0
      %1679 = vmatpush.bf16.msra.mxu0 0
      %1680 = vmatpush.bf16.msra.mxu0 0
      %1681 = vmatpush.bf16.msra.mxu0 0
      %1682 = vmatpush.bf16.msra.mxu0 0
      %1683 = vmatpush.bf16.msra.mxu0 %v1674
      %1684 = vmatmul.bf16.gmra.mxu0 %v1671
      %v1685 = vpop.f32.mrf.mxu0
      %v1686 = vadd.f32 0.0, %v1685
      %v1687 = vpop.f32.mrf.mxu0
      %1688 = vdwg.mxu0
      %v1689 = vadd.f32 %v1663, %v1686
      %v1690 = vld [vmem:[%s2] sm:$0xff]
      %1692 = vset.pattern.permute.xlu0 0
      %1693 = vperm.xlu0 %1692, %v1690
      %v1694 = vpop.permute.xlu0 %1693
      %v1696 = vadd.f32 %v1689, %v1694
      %vm1697 = vcmp.ge.f32.partialorder %v1696, 0.0
      %v1698 = vld [vmem:[%s3] sm:$0xff]
      %1700 = vset.pattern.permute.xlu0 0
      %1701 = vperm.xlu0 %1700, %v1698
      %v1702 = vpop.permute.xlu0 %1701
      %v1704 = vmul.f32 %v1702, %v1696
      %v1705 = vsel %vm1697, %v1696, %v1704
      %v1706 = vpack.c.bf16 %v1705, %v1705
      %1708 = vrot.lane.b32.xlu0 %v1706, 1
      %v1709 = vpop.permute.xlu0 %1708
      %s1711 = scalar_lea.vmem [#allocation2], 24
      %1712 = vst.msk [vmem:[%s1711] sm:$0xf] %vm536, %v1709
      %v1713 = vld [vmem:[%s1618] sm:$0x3]
      %v1714 = vld [vmem:[%s1] sm:$0xf]
      %v1715 = vld [vmem:[%s1641] sm:$0x3]
      %v1716 = vld [vmem:[%s295] sm:$0xf]
      %v1718 = vsel %vm297, %v1716, 0
      %v1721 = vsel %vm301, %v1715, 0
      %1723 = vmatpush.bf16.msra.mxu0 0
      %1724 = vmatpush.bf16.msra.mxu0 0
      %1725 = vmatpush.bf16.msra.mxu0 0
      %1726 = vmatpush.bf16.msra.mxu0 0
      %1727 = vmatpush.bf16.msra.mxu0 0
      %1728 = vmatpush.bf16.msra.mxu0 0
      %1729 = vmatpush.bf16.msra.mxu0 0
      %1730 = vmatpush.bf16.msra.mxu0 %v1721
      %1731 = vmatmul.bf16.gmra.mxu0 %v1718
      %v1732 = vpop.f32.mrf.mxu0
      %v1733 = vadd.f32 0.0, %v1732
      %v1734 = vpop.f32.mrf.mxu0
      %1735 = vdwg.mxu0
      %v1737 = vsel %vm297, %v1714, 0
      %v1740 = vsel %vm301, %v1713, 0
      %1742 = vmatpush.bf16.msra.mxu0 0
      %1743 = vmatpush.bf16.msra.mxu0 0
      %1744 = vmatpush.bf16.msra.mxu0 0
      %1745 = vmatpush.bf16.msra.mxu0 0
      %1746 = vmatpush.bf16.msra.mxu0 0
      %1747 = vmatpush.bf16.msra.mxu0 0
      %1748 = vmatpush.bf16.msra.mxu0 0
      %1749 = vmatpush.bf16.msra.mxu0 %v1740
      %1750 = vmatmul.bf16.gmra.mxu0 %v1737
      %v1751 = vpop.f32.mrf.mxu0
      %v1752 = vadd.f32 %v1733, %v1751
      %v1753 = vpop.f32.mrf.mxu0
      %1754 = vdwg.mxu0
      %v1755 = vld [vmem:[%s337] sm:$0xf]
      %1756 = vst [vmem:[#allocation1] ss:$4 sm:$0xff] %v1713
      %v1757 = vld.sshfl [vmem:[#allocation1] sm:$0xff pattern:$0x73625140]
      %1759 = vrot.lane.b32.xlu0 %v1757, 127
      %v1760 = vpop.permute.xlu0 %1759
      %v1762 = vsel %vm297, %v1755, 0
      %v1765 = vsel %vm301, %v1760, 0
      %1767 = vmatpush.bf16.msra.mxu0 0
      %1768 = vmatpush.bf16.msra.mxu0 0
      %1769 = vmatpush.bf16.msra.mxu0 0
      %1770 = vmatpush.bf16.msra.mxu0 0
      %1771 = vmatpush.bf16.msra.mxu0 0
      %1772 = vmatpush.bf16.msra.mxu0 0
      %1773 = vmatpush.bf16.msra.mxu0 0
      %1774 = vmatpush.bf16.msra.mxu0 %v1765
      %1775 = vmatmul.bf16.gmra.mxu0 %v1762
      %v1776 = vpop.f32.mrf.mxu0
      %v1777 = vadd.f32 0.0, %v1776
      %v1778 = vpop.f32.mrf.mxu0
      %1779 = vdwg.mxu0
      %v1780 = vadd.f32 %v1752, %v1777
      %s1781 = scalar_lea.vmem %s273, 48
      %v1782 = vld [vmem:[%s1781] sm:$0x3]
      %v1783 = vld [vmem:[%s366] sm:$0xf]
      %v1785 = vsel %vm297, %v1783, 0
      %v1788 = vsel %vm301, %v1782, 0
      %1790 = vmatpush.bf16.msra.mxu0 0
      %1791 = vmatpush.bf16.msra.mxu0 0
      %1792 = vmatpush.bf16.msra.mxu0 0
      %1793 = vmatpush.bf16.msra.mxu0 0
      %1794 = vmatpush.bf16.msra.mxu0 0
      %1795 = vmatpush.bf16.msra.mxu0 0
      %1796 = vmatpush.bf16.msra.mxu0 0
      %1797 = vmatpush.bf16.msra.mxu0 %v1788
      %1798 = vmatmul.bf16.gmra.mxu0 %v1785
      %v1799 = vpop.f32.mrf.mxu0
      %v1800 = vadd.f32 0.0, %v1799
      %v1801 = vpop.f32.mrf.mxu0
      %1802 = vdwg.mxu0
      %v1803 = vadd.f32 %v1780, %v1800
      %s1804 = scalar_lea.vmem %s273, 66
      %v1805 = vld [vmem:[%s1804] sm:$0x3]
      %v1806 = vld [vmem:[%s390] sm:$0xf]
      %v1808 = vsel %vm297, %v1806, 0
      %v1811 = vsel %vm301, %v1805, 0
      %1813 = vmatpush.bf16.msra.mxu0 0
      %1814 = vmatpush.bf16.msra.mxu0 0
      %1815 = vmatpush.bf16.msra.mxu0 0
      %1816 = vmatpush.bf16.msra.mxu0 0
      %1817 = vmatpush.bf16.msra.mxu0 0
      %1818 = vmatpush.bf16.msra.mxu0 0
      %1819 = vmatpush.bf16.msra.mxu0 0
      %1820 = vmatpush.bf16.msra.mxu0 %v1811
      %1821 = vmatmul.bf16.gmra.mxu0 %v1808
      %v1822 = vpop.f32.mrf.mxu0
      %v1823 = vadd.f32 0.0, %v1822
      %v1824 = vpop.f32.mrf.mxu0
      %1825 = vdwg.mxu0
      %v1826 = vadd.f32 %v1803, %v1823
      %v1827 = vld [vmem:[%s412] sm:$0xf]
      %1828 = vst [vmem:[#allocation1] ss:$4 sm:$0xff] %v1782
      %v1829 = vld.sshfl [vmem:[#allocation1] sm:$0xff pattern:$0x73625140]
      %1831 = vrot.lane.b32.xlu0 %v1829, 127
      %v1832 = vpop.permute.xlu0 %1831
      %v1834 = vsel %vm297, %v1827, 0
      %v1837 = vsel %vm301, %v1832, 0
      %1839 = vmatpush.bf16.msra.mxu0 0
      %1840 = vmatpush.bf16.msra.mxu0 0
      %1841 = vmatpush.bf16.msra.mxu0 0
      %1842 = vmatpush.bf16.msra.mxu0 0
      %1843 = vmatpush.bf16.msra.mxu0 0
      %1844 = vmatpush.bf16.msra.mxu0 0
      %1845 = vmatpush.bf16.msra.mxu0 0
      %1846 = vmatpush.bf16.msra.mxu0 %v1837
      %1847 = vmatmul.bf16.gmra.mxu0 %v1834
      %v1848 = vpop.f32.mrf.mxu0
      %v1849 = vadd.f32 0.0, %v1848
      %v1850 = vpop.f32.mrf.mxu0
      %1851 = vdwg.mxu0
      %v1852 = vadd.f32 %v1826, %v1849
      %s1853 = scalar_lea.vmem %s273, 14
      %v1854 = vld [vmem:[%s1853] sm:$0x3]
      %v1855 = vld [vmem:[%s441] sm:$0xf]
      %v1857 = vsel %vm297, %v1855, 0
      %v1860 = vsel %vm301, %v1854, 0
      %1862 = vmatpush.bf16.msra.mxu0 0
      %1863 = vmatpush.bf16.msra.mxu0 0
      %1864 = vmatpush.bf16.msra.mxu0 0
      %1865 = vmatpush.bf16.msra.mxu0 0
      %1866 = vmatpush.bf16.msra.mxu0 0
      %1867 = vmatpush.bf16.msra.mxu0 0
      %1868 = vmatpush.bf16.msra.mxu0 0
      %1869 = vmatpush.bf16.msra.mxu0 %v1860
      %1870 = vmatmul.bf16.gmra.mxu0 %v1857
      %v1871 = vpop.f32.mrf.mxu0
      %v1872 = vadd.f32 0.0, %v1871
      %v1873 = vpop.f32.mrf.mxu0
      %1874 = vdwg.mxu0
      %v1875 = vadd.f32 %v1852, %v1872
      %s1876 = scalar_lea.vmem %s273, 32
      %v1877 = vld [vmem:[%s1876] sm:$0x3]
      %v1878 = vld [vmem:[%s465] sm:$0xf]
      %v1880 = vsel %vm297, %v1878, 0
      %v1883 = vsel %vm301, %v1877, 0
      %1885 = vmatpush.bf16.msra.mxu0 0
      %1886 = vmatpush.bf16.msra.mxu0 0
      %1887 = vmatpush.bf16.msra.mxu0 0
      %1888 = vmatpush.bf16.msra.mxu0 0
      %1889 = vmatpush.bf16.msra.mxu0 0
      %1890 = vmatpush.bf16.msra.mxu0 0
      %1891 = vmatpush.bf16.msra.mxu0 0
      %1892 = vmatpush.bf16.msra.mxu0 %v1883
      %1893 = vmatmul.bf16.gmra.mxu0 %v1880
      %v1894 = vpop.f32.mrf.mxu0
      %v1895 = vadd.f32 0.0, %v1894
      %v1896 = vpop.f32.mrf.mxu0
      %1897 = vdwg.mxu0
      %v1898 = vadd.f32 %v1875, %v1895
      %v1899 = vld [vmem:[%s487] sm:$0xf]
      %1900 = vst [vmem:[#allocation1] ss:$4 sm:$0xff] %v1854
      %v1901 = vld.sshfl [vmem:[#allocation1] sm:$0xff pattern:$0x73625140]
      %1903 = vrot.lane.b32.xlu0 %v1901, 127
      %v1904 = vpop.permute.xlu0 %1903
      %v1906 = vsel %vm297, %v1899, 0
      %v1909 = vsel %vm301, %v1904, 0
      %1911 = vmatpush.bf16.msra.mxu0 0
      %1912 = vmatpush.bf16.msra.mxu0 0
      %1913 = vmatpush.bf16.msra.mxu0 0
      %1914 = vmatpush.bf16.msra.mxu0 0
      %1915 = vmatpush.bf16.msra.mxu0 0
      %1916 = vmatpush.bf16.msra.mxu0 0
      %1917 = vmatpush.bf16.msra.mxu0 0
      %1918 = vmatpush.bf16.msra.mxu0 %v1909
      %1919 = vmatmul.bf16.gmra.mxu0 %v1906
      %v1920 = vpop.f32.mrf.mxu0
      %v1921 = vadd.f32 0.0, %v1920
      %v1922 = vpop.f32.mrf.mxu0
      %1923 = vdwg.mxu0
      %v1924 = vadd.f32 %v1898, %v1921
      %v1925 = vld [vmem:[%s2] sm:$0xff]
      %1927 = vset.pattern.permute.xlu0 0
      %1928 = vperm.xlu0 %1927, %v1925
      %v1929 = vpop.permute.xlu0 %1928
      %v1931 = vadd.f32 %v1924, %v1929
      %vm1932 = vcmp.ge.f32.partialorder %v1931, 0.0
      %v1933 = vld [vmem:[%s3] sm:$0xff]
      %1935 = vset.pattern.permute.xlu0 0
      %1936 = vperm.xlu0 %1935, %v1933
      %v1937 = vpop.permute.xlu0 %1936
      %v1939 = vmul.f32 %v1937, %v1931
      %v1940 = vsel %vm1932, %v1931, %v1939
      %v1941 = vpack.c.bf16 %v1940, %v1940
      %1943 = vrot.lane.b32.xlu0 %v1941, 1
      %v1944 = vpop.permute.xlu0 %1943
      %s1946 = scalar_lea.vmem [#allocation2], 28
      %1947 = vst.msk [vmem:[%s1946] sm:$0xf] %vm536, %v1944
      %v1948 = vld [vmem:[%s1853] sm:$0x3]
      %v1949 = vld [vmem:[%s1] sm:$0xf]
      %v1950 = vld [vmem:[%s1876] sm:$0x3]
      %v1951 = vld [vmem:[%s295] sm:$0xf]
      %v1953 = vsel %vm297, %v1951, 0
      %v1956 = vsel %vm301, %v1950, 0
      %1958 = vmatpush.bf16.msra.mxu0 0
      %1959 = vmatpush.bf16.msra.mxu0 0
      %1960 = vmatpush.bf16.msra.mxu0 0
      %1961 = vmatpush.bf16.msra.mxu0 0
      %1962 = vmatpush.bf16.msra.mxu0 0
      %1963 = vmatpush.bf16.msra.mxu0 0
      %1964 = vmatpush.bf16.msra.mxu0 0
      %1965 = vmatpush.bf16.msra.mxu0 %v1956
      %1966 = vmatmul.bf16.gmra.mxu0 %v1953
      %v1967 = vpop.f32.mrf.mxu0
      %v1968 = vadd.f32 0.0, %v1967
      %v1969 = vpop.f32.mrf.mxu0
      %1970 = vdwg.mxu0
      %v1972 = vsel %vm297, %v1949, 0
      %v1975 = vsel %vm301, %v1948, 0
      %1977 = vmatpush.bf16.msra.mxu0 0
      %1978 = vmatpush.bf16.msra.mxu0 0
      %1979 = vmatpush.bf16.msra.mxu0 0
      %1980 = vmatpush.bf16.msra.mxu0 0
      %1981 = vmatpush.bf16.msra.mxu0 0
      %1982 = vmatpush.bf16.msra.mxu0 0
      %1983 = vmatpush.bf16.msra.mxu0 0
      %1984 = vmatpush.bf16.msra.mxu0 %v1975
      %1985 = vmatmul.bf16.gmra.mxu0 %v1972
      %v1986 = vpop.f32.mrf.mxu0
      %v1987 = vadd.f32 %v1968, %v1986
      %v1988 = vpop.f32.mrf.mxu0
      %1989 = vdwg.mxu0
      %v1990 = vld [vmem:[%s337] sm:$0xf]
      %1991 = vst [vmem:[#allocation1] ss:$4 sm:$0xff] %v1948
      %v1992 = vld.sshfl [vmem:[#allocation1] sm:$0xff pattern:$0x73625140]
      %1994 = vrot.lane.b32.xlu0 %v1992, 127
      %v1995 = vpop.permute.xlu0 %1994
      %v1997 = vsel %vm297, %v1990, 0
      %v2000 = vsel %vm301, %v1995, 0
      %2002 = vmatpush.bf16.msra.mxu0 0
      %2003 = vmatpush.bf16.msra.mxu0 0
      %2004 = vmatpush.bf16.msra.mxu0 0
      %2005 = vmatpush.bf16.msra.mxu0 0
      %2006 = vmatpush.bf16.msra.mxu0 0
      %2007 = vmatpush.bf16.msra.mxu0 0
      %2008 = vmatpush.bf16.msra.mxu0 0
      %2009 = vmatpush.bf16.msra.mxu0 %v2000
      %2010 = vmatmul.bf16.gmra.mxu0 %v1997
      %v2011 = vpop.f32.mrf.mxu0
      %v2012 = vadd.f32 0.0, %v2011
      %v2013 = vpop.f32.mrf.mxu0
      %2014 = vdwg.mxu0
      %v2015 = vadd.f32 %v1987, %v2012
      %s2016 = scalar_lea.vmem %s273, 50
      %v2017 = vld [vmem:[%s2016] sm:$0x3]
      %v2018 = vld [vmem:[%s366] sm:$0xf]
      %v2020 = vsel %vm297, %v2018, 0
      %v2023 = vsel %vm301, %v2017, 0
      %2025 = vmatpush.bf16.msra.mxu0 0
      %2026 = vmatpush.bf16.msra.mxu0 0
      %2027 = vmatpush.bf16.msra.mxu0 0
      %2028 = vmatpush.bf16.msra.mxu0 0
      %2029 = vmatpush.bf16.msra.mxu0 0
      %2030 = vmatpush.bf16.msra.mxu0 0
      %2031 = vmatpush.bf16.msra.mxu0 0
      %2032 = vmatpush.bf16.msra.mxu0 %v2023
      %2033 = vmatmul.bf16.gmra.mxu0 %v2020
      %v2034 = vpop.f32.mrf.mxu0
      %v2035 = vadd.f32 0.0, %v2034
      %v2036 = vpop.f32.mrf.mxu0
      %2037 = vdwg.mxu0
      %v2038 = vadd.f32 %v2015, %v2035
      %s2039 = scalar_lea.vmem %s273, 68
      %v2040 = vld [vmem:[%s2039] sm:$0x3]
      %v2041 = vld [vmem:[%s390] sm:$0xf]
      %v2043 = vsel %vm297, %v2041, 0
      %v2046 = vsel %vm301, %v2040, 0
      %2048 = vmatpush.bf16.msra.mxu0 0
      %2049 = vmatpush.bf16.msra.mxu0 0
      %2050 = vmatpush.bf16.msra.mxu0 0
      %2051 = vmatpush.bf16.msra.mxu0 0
      %2052 = vmatpush.bf16.msra.mxu0 0
      %2053 = vmatpush.bf16.msra.mxu0 0
      %2054 = vmatpush.bf16.msra.mxu0 0
      %2055 = vmatpush.bf16.msra.mxu0 %v2046
      %2056 = vmatmul.bf16.gmra.mxu0 %v2043
      %v2057 = vpop.f32.mrf.mxu0
      %v2058 = vadd.f32 0.0, %v2057
      %v2059 = vpop.f32.mrf.mxu0
      %2060 = vdwg.mxu0
      %v2061 = vadd.f32 %v2038, %v2058
      %v2062 = vld [vmem:[%s412] sm:$0xf]
      %2063 = vst [vmem:[#allocation1] ss:$4 sm:$0xff] %v2017
      %v2064 = vld.sshfl [vmem:[#allocation1] sm:$0xff pattern:$0x73625140]
      %2066 = vrot.lane.b32.xlu0 %v2064, 127
      %v2067 = vpop.permute.xlu0 %2066
      %v2069 = vsel %vm297, %v2062, 0
      %v2072 = vsel %vm301, %v2067, 0
      %2074 = vmatpush.bf16.msra.mxu0 0
      %2075 = vmatpush.bf16.msra.mxu0 0
      %2076 = vmatpush.bf16.msra.mxu0 0
      %2077 = vmatpush.bf16.msra.mxu0 0
      %2078 = vmatpush.bf16.msra.mxu0 0
      %2079 = vmatpush.bf16.msra.mxu0 0
      %2080 = vmatpush.bf16.msra.mxu0 0
      %2081 = vmatpush.bf16.msra.mxu0 %v2072
      %2082 = vmatmul.bf16.gmra.mxu0 %v2069
      %v2083 = vpop.f32.mrf.mxu0
      %v2084 = vadd.f32 0.0, %v2083
      %v2085 = vpop.f32.mrf.mxu0
      %2086 = vdwg.mxu0
      %v2087 = vadd.f32 %v2061, %v2084
      %s2088 = scalar_lea.vmem %s273, 16
      %v2089 = vld [vmem:[%s2088] sm:$0x3]
      %v2090 = vld [vmem:[%s441] sm:$0xf]
      %v2092 = vsel %vm297, %v2090, 0
      %v2095 = vsel %vm301, %v2089, 0
      %2097 = vmatpush.bf16.msra.mxu0 0
      %2098 = vmatpush.bf16.msra.mxu0 0
      %2099 = vmatpush.bf16.msra.mxu0 0
      %2100 = vmatpush.bf16.msra.mxu0 0
      %2101 = vmatpush.bf16.msra.mxu0 0
      %2102 = vmatpush.bf16.msra.mxu0 0
      %2103 = vmatpush.bf16.msra.mxu0 0
      %2104 = vmatpush.bf16.msra.mxu0 %v2095
      %2105 = vmatmul.bf16.gmra.mxu0 %v2092
      %v2106 = vpop.f32.mrf.mxu0
      %v2107 = vadd.f32 0.0, %v2106
      %v2108 = vpop.f32.mrf.mxu0
      %2109 = vdwg.mxu0
      %v2110 = vadd.f32 %v2087, %v2107
      %s2111 = scalar_lea.vmem %s273, 34
      %v2112 = vld [vmem:[%s2111] sm:$0x3]
      %v2113 = vld [vmem:[%s465] sm:$0xf]
      %v2115 = vsel %vm297, %v2113, 0
      %v2118 = vsel %vm301, %v2112, 0
      %2120 = vmatpush.bf16.msra.mxu0 0
      %2121 = vmatpush.bf16.msra.mxu0 0
      %2122 = vmatpush.bf16.msra.mxu0 0
      %2123 = vmatpush.bf16.msra.mxu0 0
      %2124 = vmatpush.bf16.msra.mxu0 0
      %2125 = vmatpush.bf16.msra.mxu0 0
      %2126 = vmatpush.bf16.msra.mxu0 0
      %2127 = vmatpush.bf16.msra.mxu0 %v2118
      %2128 = vmatmul.bf16.gmra.mxu0 %v2115
      %v2129 = vpop.f32.mrf.mxu0
      %v2130 = vadd.f32 0.0, %v2129
      %v2131 = vpop.f32.mrf.mxu0
      %2132 = vdwg.mxu0
      %v2133 = vadd.f32 %v2110, %v2130
      %v2134 = vld [vmem:[%s487] sm:$0xf]
      %2135 = vst [vmem:[#allocation1] ss:$4 sm:$0xff] %v2089
      %v2136 = vld.sshfl [vmem:[#allocation1] sm:$0xff pattern:$0x73625140]
      %2138 = vrot.lane.b32.xlu0 %v2136, 127
      %v2139 = vpop.permute.xlu0 %2138
      %v2141 = vsel %vm297, %v2134, 0
      %v2144 = vsel %vm301, %v2139, 0
      %2146 = vmatpush.bf16.msra.mxu0 0
      %2147 = vmatpush.bf16.msra.mxu0 0
      %2148 = vmatpush.bf16.msra.mxu0 0
      %2149 = vmatpush.bf16.msra.mxu0 0
      %2150 = vmatpush.bf16.msra.mxu0 0
      %2151 = vmatpush.bf16.msra.mxu0 0
      %2152 = vmatpush.bf16.msra.mxu0 0
      %2153 = vmatpush.bf16.msra.mxu0 %v2144
      %2154 = vmatmul.bf16.gmra.mxu0 %v2141
      %v2155 = vpop.f32.mrf.mxu0
      %v2156 = vadd.f32 0.0, %v2155
      %v2157 = vpop.f32.mrf.mxu0
      %2158 = vdwg.mxu0
      %v2159 = vadd.f32 %v2133, %v2156
      %v2160 = vld [vmem:[%s2] sm:$0xff]
      %2162 = vset.pattern.permute.xlu0 0
      %2163 = vperm.xlu0 %2162, %v2160
      %v2164 = vpop.permute.xlu0 %2163
      %v2166 = vadd.f32 %v2159, %v2164
      %vm2167 = vcmp.ge.f32.partialorder %v2166, 0.0
      %v2168 = vld [vmem:[%s3] sm:$0xff]
      %2170 = vset.pattern.permute.xlu0 0
      %2171 = vperm.xlu0 %2170, %v2168
      %v2172 = vpop.permute.xlu0 %2171
      %v2174 = vmul.f32 %v2172, %v2166
      %v2175 = vsel %vm2167, %v2166, %v2174
      %v2176 = vpack.c.bf16 %v2175, %v2175
      %2178 = vrot.lane.b32.xlu0 %v2176, 1
      %v2179 = vpop.permute.xlu0 %2178
      %s2181 = scalar_lea.vmem [#allocation2], 32
      %2182 = vst.msk [vmem:[%s2181] sm:$0xf] %vm536, %v2179
      %v2183 = vld [vmem:[#allocation2] sm:$0xf]
      %v2184 = vld [vmem:[%s4] sm:$0xf]
      %s2185 = scalar_lea.vmem %s4, 4
      %v2186 = vld [vmem:[%s2185] sm:$0xf]
      %v2188 = vunpack.c.l.b16 %v2183
      %v2189 = vpack.c.b16 %v2188, %v2188
      %2190 = vrot.lane.b32.xlu0 %v2189, 127
      %v2191 = vpop.permute.xlu0 %2190
      %vm2192 = vcmask 64512
      %v2194 = vsel %vm2192, %v2186, 0
      %vm2196 = vcmask 1043456
      %v2198 = vsel %vm2196, %v2191, 0
      %2200 = vmatpush.bf16.msra.mxu0 0
      %2201 = vmatpush.bf16.msra.mxu0 0
      %2202 = vmatpush.bf16.msra.mxu0 0
      %2203 = vmatpush.bf16.msra.mxu0 0
      %2204 = vmatpush.bf16.msra.mxu0 0
      %2205 = vmatpush.bf16.msra.mxu0 0
      %2206 = vmatpush.bf16.msra.mxu0 0
      %2207 = vmatpush.bf16.msra.mxu0 %v2198
      %2208 = vmatmul.bf16.gmra.mxu0 %v2194
      %v2209 = vpop.f32.mrf.mxu0
      %v2210 = vadd.f32 0.0, %v2209
      %v2211 = vpop.f32.mrf.mxu0
      %2212 = vdwg.mxu0
      %v2214 = vsel %vm2192, %v2184, 0
      %v2217 = vsel %vm2196, %v2183, 0
      %2219 = vmatpush.bf16.msra.mxu0 0
      %2220 = vmatpush.bf16.msra.mxu0 0
      %2221 = vmatpush.bf16.msra.mxu0 0
      %2222 = vmatpush.bf16.msra.mxu0 0
      %2223 = vmatpush.bf16.msra.mxu0 0
      %2224 = vmatpush.bf16.msra.mxu0 0
      %2225 = vmatpush.bf16.msra.mxu0 0
      %2226 = vmatpush.bf16.msra.mxu0 %v2217
      %2227 = vmatmul.bf16.gmra.mxu0 %v2214
      %v2228 = vpop.f32.mrf.mxu0
      %v2229 = vadd.f32 %v2210, %v2228
      %v2230 = vpop.f32.mrf.mxu0
      %2231 = vdwg.mxu0
      %s2232 = scalar_lea.vmem %s4, 8
      %v2233 = vld [vmem:[%s2232] sm:$0xf]
      %2234 = vrot.lane.b32.xlu0 %v2189, 126
      %v2235 = vpop.permute.xlu0 %2234
      %v2237 = vsel %vm2192, %v2233, 0
      %v2240 = vsel %vm2196, %v2235, 0
      %2242 = vmatpush.bf16.msra.mxu0 0
      %2243 = vmatpush.bf16.msra.mxu0 0
      %2244 = vmatpush.bf16.msra.mxu0 0
      %2245 = vmatpush.bf16.msra.mxu0 0
      %2246 = vmatpush.bf16.msra.mxu0 0
      %2247 = vmatpush.bf16.msra.mxu0 0
      %2248 = vmatpush.bf16.msra.mxu0 0
      %2249 = vmatpush.bf16.msra.mxu0 %v2240
      %2250 = vmatmul.bf16.gmra.mxu0 %v2237
      %v2251 = vpop.f32.mrf.mxu0
      %v2252 = vadd.f32 0.0, %v2251
      %v2253 = vpop.f32.mrf.mxu0
      %2254 = vdwg.mxu0
      %v2255 = vadd.f32 %v2229, %v2252
      %v2256 = vld [vmem:[%s535] sm:$0xf]
      %s2257 = scalar_lea.vmem %s4, 12
      %v2258 = vld [vmem:[%s2257] sm:$0xf]
      %v2260 = vsel %vm2192, %v2258, 0
      %v2263 = vsel %vm2196, %v2256, 0
      %2265 = vmatpush.bf16.msra.mxu0 0
      %2266 = vmatpush.bf16.msra.mxu0 0
      %2267 = vmatpush.bf16.msra.mxu0 0
      %2268 = vmatpush.bf16.msra.mxu0 0
      %2269 = vmatpush.bf16.msra.mxu0 0
      %2270 = vmatpush.bf16.msra.mxu0 0
      %2271 = vmatpush.bf16.msra.mxu0 0
      %2272 = vmatpush.bf16.msra.mxu0 %v2263
      %2273 = vmatmul.bf16.gmra.mxu0 %v2260
      %v2274 = vpop.f32.mrf.mxu0
      %v2275 = vadd.f32 0.0, %v2274
      %v2276 = vpop.f32.mrf.mxu0
      %2277 = vdwg.mxu0
      %v2278 = vadd.f32 %v2255, %v2275
      %s2279 = scalar_lea.vmem %s4, 16
      %v2280 = vld [vmem:[%s2279] sm:$0xf]
      %v2282 = vunpack.c.l.b16 %v2256
      %v2283 = vpack.c.b16 %v2282, %v2282
      %2284 = vrot.lane.b32.xlu0 %v2283, 127
      %v2285 = vpop.permute.xlu0 %2284
      %v2287 = vsel %vm2192, %v2280, 0
      %v2290 = vsel %vm2196, %v2285, 0
      %2292 = vmatpush.bf16.msra.mxu0 0
      %2293 = vmatpush.bf16.msra.mxu0 0
      %2294 = vmatpush.bf16.msra.mxu0 0
      %2295 = vmatpush.bf16.msra.mxu0 0
      %2296 = vmatpush.bf16.msra.mxu0 0
      %2297 = vmatpush.bf16.msra.mxu0 0
      %2298 = vmatpush.bf16.msra.mxu0 0
      %2299 = vmatpush.bf16.msra.mxu0 %v2290
      %2300 = vmatmul.bf16.gmra.mxu0 %v2287
      %v2301 = vpop.f32.mrf.mxu0
      %v2302 = vadd.f32 0.0, %v2301
      %v2303 = vpop.f32.mrf.mxu0
      %2304 = vdwg.mxu0
      %v2305 = vadd.f32 %v2278, %v2302
      %s2306 = scalar_lea.vmem %s4, 20
      %v2307 = vld [vmem:[%s2306] sm:$0xf]
      %2308 = vrot.lane.b32.xlu0 %v2283, 126
      %v2309 = vpop.permute.xlu0 %2308
      %v2311 = vsel %vm2192, %v2307, 0
      %v2314 = vsel %vm2196, %v2309, 0
      %2316 = vmatpush.bf16.msra.mxu0 0
      %2317 = vmatpush.bf16.msra.mxu0 0
      %2318 = vmatpush.bf16.msra.mxu0 0
      %2319 = vmatpush.bf16.msra.mxu0 0
      %2320 = vmatpush.bf16.msra.mxu0 0
      %2321 = vmatpush.bf16.msra.mxu0 0
      %2322 = vmatpush.bf16.msra.mxu0 0
      %2323 = vmatpush.bf16.msra.mxu0 %v2314
      %2324 = vmatmul.bf16.gmra.mxu0 %v2311
      %v2325 = vpop.f32.mrf.mxu0
      %v2326 = vadd.f32 0.0, %v2325
      %v2327 = vpop.f32.mrf.mxu0
      %2328 = vdwg.mxu0
      %v2329 = vadd.f32 %v2305, %v2326
      %v2330 = vld [vmem:[%s771] sm:$0xf]
      %s2331 = scalar_lea.vmem %s4, 24
      %v2332 = vld [vmem:[%s2331] sm:$0xf]
      %v2334 = vsel %vm2192, %v2332, 0
      %v2337 = vsel %vm2196, %v2330, 0
      %2339 = vmatpush.bf16.msra.mxu0 0
      %2340 = vmatpush.bf16.msra.mxu0 0
      %2341 = vmatpush.bf16.msra.mxu0 0
      %2342 = vmatpush.bf16.msra.mxu0 0
      %2343 = vmatpush.bf16.msra.mxu0 0
      %2344 = vmatpush.bf16.msra.mxu0 0
      %2345 = vmatpush.bf16.msra.mxu0 0
      %2346 = vmatpush.bf16.msra.mxu0 %v2337
      %2347 = vmatmul.bf16.gmra.mxu0 %v2334
      %v2348 = vpop.f32.mrf.mxu0
      %v2349 = vadd.f32 0.0, %v2348
      %v2350 = vpop.f32.mrf.mxu0
      %2351 = vdwg.mxu0
      %v2352 = vadd.f32 %v2329, %v2349
      %s2353 = scalar_lea.vmem %s4, 28
      %v2354 = vld [vmem:[%s2353] sm:$0xf]
      %v2356 = vunpack.c.l.b16 %v2330
      %v2357 = vpack.c.b16 %v2356, %v2356
      %2358 = vrot.lane.b32.xlu0 %v2357, 127
      %v2359 = vpop.permute.xlu0 %2358
      %v2361 = vsel %vm2192, %v2354, 0
      %v2364 = vsel %vm2196, %v2359, 0
      %2366 = vmatpush.bf16.msra.mxu0 0
      %2367 = vmatpush.bf16.msra.mxu0 0
      %2368 = vmatpush.bf16.msra.mxu0 0
      %2369 = vmatpush.bf16.msra.mxu0 0
      %2370 = vmatpush.bf16.msra.mxu0 0
      %2371 = vmatpush.bf16.msra.mxu0 0
      %2372 = vmatpush.bf16.msra.mxu0 0
      %2373 = vmatpush.bf16.msra.mxu0 %v2364
      %2374 = vmatmul.bf16.gmra.mxu0 %v2361
      %v2375 = vpop.f32.mrf.mxu0
      %v2376 = vadd.f32 0.0, %v2375
      %v2377 = vpop.f32.mrf.mxu0
      %2378 = vdwg.mxu0
      %v2379 = vadd.f32 %v2352, %v2376
      %s2380 = scalar_lea.vmem %s4, 32
      %v2381 = vld [vmem:[%s2380] sm:$0xf]
      %2382 = vrot.lane.b32.xlu0 %v2357, 126
      %v2383 = vpop.permute.xlu0 %2382
      %v2385 = vsel %vm2192, %v2381, 0
      %v2388 = vsel %vm2196, %v2383, 0
      %2390 = vmatpush.bf16.msra.mxu0 0
      %2391 = vmatpush.bf16.msra.mxu0 0
      %2392 = vmatpush.bf16.msra.mxu0 0
      %2393 = vmatpush.bf16.msra.mxu0 0
      %2394 = vmatpush.bf16.msra.mxu0 0
      %2395 = vmatpush.bf16.msra.mxu0 0
      %2396 = vmatpush.bf16.msra.mxu0 0
      %2397 = vmatpush.bf16.msra.mxu0 %v2388
      %2398 = vmatmul.bf16.gmra.mxu0 %v2385
      %v2399 = vpop.f32.mrf.mxu0
      %v2400 = vadd.f32 0.0, %v2399
      %v2401 = vpop.f32.mrf.mxu0
      %2402 = vdwg.mxu0
      %v2403 = vadd.f32 %v2379, %v2400
      %v2404 = vld [vmem:[%s5] sm:$0xff]
      %2406 = vset.pattern.permute.xlu0 0
      %2407 = vperm.xlu0 %2406, %v2404
      %v2408 = vpop.permute.xlu0 %2407
      %v2410 = vadd.f32 %v2403, %v2408
      %vm2411 = vcmp.ge.f32.partialorder %v2410, 0.0
      %v2412 = vld [vmem:[%s6] sm:$0xff]
      %2414 = vset.pattern.permute.xlu0 0
      %2415 = vperm.xlu0 %2414, %v2412
      %v2416 = vpop.permute.xlu0 %2415
      %v2418 = vmul.f32 %v2416, %v2410
      %v2419 = vsel %vm2411, %v2410, %v2418
      %2420 = vst.msk [vmem:[%s278] sm:$0xff] %vm2192, %v2419
      %v2421 = vld [vmem:[%s535] sm:$0xf]
      %v2422 = vld [vmem:[%s4] sm:$0xf]
      %v2423 = vld [vmem:[%s2185] sm:$0xf]
      %v2425 = vunpack.c.l.b16 %v2421
      %v2426 = vpack.c.b16 %v2425, %v2425
      %2427 = vrot.lane.b32.xlu0 %v2426, 127
      %v2428 = vpop.permute.xlu0 %2427
      %v2430 = vsel %vm2192, %v2423, 0
      %v2433 = vsel %vm2196, %v2428, 0
      %2435 = vmatpush.bf16.msra.mxu0 0
      %2436 = vmatpush.bf16.msra.mxu0 0
      %2437 = vmatpush.bf16.msra.mxu0 0
      %2438 = vmatpush.bf16.msra.mxu0 0
      %2439 = vmatpush.bf16.msra.mxu0 0
      %2440 = vmatpush.bf16.msra.mxu0 0
      %2441 = vmatpush.bf16.msra.mxu0 0
      %2442 = vmatpush.bf16.msra.mxu0 %v2433
      %2443 = vmatmul.bf16.gmra.mxu0 %v2430
      %v2444 = vpop.f32.mrf.mxu0
      %v2445 = vadd.f32 0.0, %v2444
      %v2446 = vpop.f32.mrf.mxu0
      %2447 = vdwg.mxu0
      %v2449 = vsel %vm2192, %v2422, 0
      %v2452 = vsel %vm2196, %v2421, 0
      %2454 = vmatpush.bf16.msra.mxu0 0
      %2455 = vmatpush.bf16.msra.mxu0 0
      %2456 = vmatpush.bf16.msra.mxu0 0
      %2457 = vmatpush.bf16.msra.mxu0 0
      %2458 = vmatpush.bf16.msra.mxu0 0
      %2459 = vmatpush.bf16.msra.mxu0 0
      %2460 = vmatpush.bf16.msra.mxu0 0
      %2461 = vmatpush.bf16.msra.mxu0 %v2452
      %2462 = vmatmul.bf16.gmra.mxu0 %v2449
      %v2463 = vpop.f32.mrf.mxu0
      %v2464 = vadd.f32 %v2445, %v2463
      %v2465 = vpop.f32.mrf.mxu0
      %2466 = vdwg.mxu0
      %v2467 = vld [vmem:[%s2232] sm:$0xf]
      %2468 = vrot.lane.b32.xlu0 %v2426, 126
      %v2469 = vpop.permute.xlu0 %2468
      %v2471 = vsel %vm2192, %v2467, 0
      %v2474 = vsel %vm2196, %v2469, 0
      %2476 = vmatpush.bf16.msra.mxu0 0
      %2477 = vmatpush.bf16.msra.mxu0 0
      %2478 = vmatpush.bf16.msra.mxu0 0
      %2479 = vmatpush.bf16.msra.mxu0 0
      %2480 = vmatpush.bf16.msra.mxu0 0
      %2481 = vmatpush.bf16.msra.mxu0 0
      %2482 = vmatpush.bf16.msra.mxu0 0
      %2483 = vmatpush.bf16.msra.mxu0 %v2474
      %2484 = vmatmul.bf16.gmra.mxu0 %v2471
      %v2485 = vpop.f32.mrf.mxu0
      %v2486 = vadd.f32 0.0, %v2485
      %v2487 = vpop.f32.mrf.mxu0
      %2488 = vdwg.mxu0
      %v2489 = vadd.f32 %v2464, %v2486
      %v2490 = vld [vmem:[%s771] sm:$0xf]
      %v2491 = vld [vmem:[%s2257] sm:$0xf]
      %v2493 = vsel %vm2192, %v2491, 0
      %v2496 = vsel %vm2196, %v2490, 0
      %2498 = vmatpush.bf16.msra.mxu0 0
      %2499 = vmatpush.bf16.msra.mxu0 0
      %2500 = vmatpush.bf16.msra.mxu0 0
      %2501 = vmatpush.bf16.msra.mxu0 0
      %2502 = vmatpush.bf16.msra.mxu0 0
      %2503 = vmatpush.bf16.msra.mxu0 0
      %2504 = vmatpush.bf16.msra.mxu0 0
      %2505 = vmatpush.bf16.msra.mxu0 %v2496
      %2506 = vmatmul.bf16.gmra.mxu0 %v2493
      %v2507 = vpop.f32.mrf.mxu0
      %v2508 = vadd.f32 0.0, %v2507
      %v2509 = vpop.f32.mrf.mxu0
      %2510 = vdwg.mxu0
      %v2511 = vadd.f32 %v2489, %v2508
      %v2512 = vld [vmem:[%s2279] sm:$0xf]
      %v2514 = vunpack.c.l.b16 %v2490
      %v2515 = vpack.c.b16 %v2514, %v2514
      %2516 = vrot.lane.b32.xlu0 %v2515, 127
      %v2517 = vpop.permute.xlu0 %2516
      %v2519 = vsel %vm2192, %v2512, 0
      %v2522 = vsel %vm2196, %v2517, 0
      %2524 = vmatpush.bf16.msra.mxu0 0
      %2525 = vmatpush.bf16.msra.mxu0 0
      %2526 = vmatpush.bf16.msra.mxu0 0
      %2527 = vmatpush.bf16.msra.mxu0 0
      %2528 = vmatpush.bf16.msra.mxu0 0
      %2529 = vmatpush.bf16.msra.mxu0 0
      %2530 = vmatpush.bf16.msra.mxu0 0
      %2531 = vmatpush.bf16.msra.mxu0 %v2522
      %2532 = vmatmul.bf16.gmra.mxu0 %v2519
      %v2533 = vpop.f32.mrf.mxu0
      %v2534 = vadd.f32 0.0, %v2533
      %v2535 = vpop.f32.mrf.mxu0
      %2536 = vdwg.mxu0
      %v2537 = vadd.f32 %v2511, %v2534
      %v2538 = vld [vmem:[%s2306] sm:$0xf]
      %2539 = vrot.lane.b32.xlu0 %v2515, 126
      %v2540 = vpop.permute.xlu0 %2539
      %v2542 = vsel %vm2192, %v2538, 0
      %v2545 = vsel %vm2196, %v2540, 0
      %2547 = vmatpush.bf16.msra.mxu0 0
      %2548 = vmatpush.bf16.msra.mxu0 0
      %2549 = vmatpush.bf16.msra.mxu0 0
      %2550 = vmatpush.bf16.msra.mxu0 0
      %2551 = vmatpush.bf16.msra.mxu0 0
      %2552 = vmatpush.bf16.msra.mxu0 0
      %2553 = vmatpush.bf16.msra.mxu0 0
      %2554 = vmatpush.bf16.msra.mxu0 %v2545
      %2555 = vmatmul.bf16.gmra.mxu0 %v2542
      %v2556 = vpop.f32.mrf.mxu0
      %v2557 = vadd.f32 0.0, %v2556
      %v2558 = vpop.f32.mrf.mxu0
      %2559 = vdwg.mxu0
      %v2560 = vadd.f32 %v2537, %v2557
      %v2561 = vld [vmem:[%s1006] sm:$0xf]
      %v2562 = vld [vmem:[%s2331] sm:$0xf]
      %v2564 = vsel %vm2192, %v2562, 0
      %v2567 = vsel %vm2196, %v2561, 0
      %2569 = vmatpush.bf16.msra.mxu0 0
      %2570 = vmatpush.bf16.msra.mxu0 0
      %2571 = vmatpush.bf16.msra.mxu0 0
      %2572 = vmatpush.bf16.msra.mxu0 0
      %2573 = vmatpush.bf16.msra.mxu0 0
      %2574 = vmatpush.bf16.msra.mxu0 0
      %2575 = vmatpush.bf16.msra.mxu0 0
      %2576 = vmatpush.bf16.msra.mxu0 %v2567
      %2577 = vmatmul.bf16.gmra.mxu0 %v2564
      %v2578 = vpop.f32.mrf.mxu0
      %v2579 = vadd.f32 0.0, %v2578
      %v2580 = vpop.f32.mrf.mxu0
      %2581 = vdwg.mxu0
      %v2582 = vadd.f32 %v2560, %v2579
      %v2583 = vld [vmem:[%s2353] sm:$0xf]
      %v2585 = vunpack.c.l.b16 %v2561
      %v2586 = vpack.c.b16 %v2585, %v2585
      %2587 = vrot.lane.b32.xlu0 %v2586, 127
      %v2588 = vpop.permute.xlu0 %2587
      %v2590 = vsel %vm2192, %v2583, 0
      %v2593 = vsel %vm2196, %v2588, 0
      %2595 = vmatpush.bf16.msra.mxu0 0
      %2596 = vmatpush.bf16.msra.mxu0 0
      %2597 = vmatpush.bf16.msra.mxu0 0
      %2598 = vmatpush.bf16.msra.mxu0 0
      %2599 = vmatpush.bf16.msra.mxu0 0
      %2600 = vmatpush.bf16.msra.mxu0 0
      %2601 = vmatpush.bf16.msra.mxu0 0
      %2602 = vmatpush.bf16.msra.mxu0 %v2593
      %2603 = vmatmul.bf16.gmra.mxu0 %v2590
      %v2604 = vpop.f32.mrf.mxu0
      %v2605 = vadd.f32 0.0, %v2604
      %v2606 = vpop.f32.mrf.mxu0
      %2607 = vdwg.mxu0
      %v2608 = vadd.f32 %v2582, %v2605
      %v2609 = vld [vmem:[%s2380] sm:$0xf]
      %2610 = vrot.lane.b32.xlu0 %v2586, 126
      %v2611 = vpop.permute.xlu0 %2610
      %v2613 = vsel %vm2192, %v2609, 0
      %v2616 = vsel %vm2196, %v2611, 0
      %2618 = vmatpush.bf16.msra.mxu0 0
      %2619 = vmatpush.bf16.msra.mxu0 0
      %2620 = vmatpush.bf16.msra.mxu0 0
      %2621 = vmatpush.bf16.msra.mxu0 0
      %2622 = vmatpush.bf16.msra.mxu0 0
      %2623 = vmatpush.bf16.msra.mxu0 0
      %2624 = vmatpush.bf16.msra.mxu0 0
      %2625 = vmatpush.bf16.msra.mxu0 %v2616
      %2626 = vmatmul.bf16.gmra.mxu0 %v2613
      %v2627 = vpop.f32.mrf.mxu0
      %v2628 = vadd.f32 0.0, %v2627
      %v2629 = vpop.f32.mrf.mxu0
      %2630 = vdwg.mxu0
      %v2631 = vadd.f32 %v2608, %v2628
      %v2632 = vld [vmem:[%s5] sm:$0xff]
      %2634 = vset.pattern.permute.xlu0 0
      %2635 = vperm.xlu0 %2634, %v2632
      %v2636 = vpop.permute.xlu0 %2635
      %v2638 = vadd.f32 %v2631, %v2636
      %vm2639 = vcmp.ge.f32.partialorder %v2638, 0.0
      %v2640 = vld [vmem:[%s6] sm:$0xff]
      %2642 = vset.pattern.permute.xlu0 0
      %2643 = vperm.xlu0 %2642, %v2640
      %v2644 = vpop.permute.xlu0 %2643
      %v2646 = vmul.f32 %v2644, %v2638
      %v2647 = vsel %vm2639, %v2638, %v2646
      %s2648 = scalar_lea.vmem %s278, 8
      %2649 = vst.msk [vmem:[%s2648] sm:$0xff] %vm2192, %v2647
      %v2650 = vld [vmem:[%s771] sm:$0xf]
      %v2651 = vld [vmem:[%s4] sm:$0xf]
      %v2652 = vld [vmem:[%s2185] sm:$0xf]
      %v2654 = vunpack.c.l.b16 %v2650
      %v2655 = vpack.c.b16 %v2654, %v2654
      %2656 = vrot.lane.b32.xlu0 %v2655, 127
      %v2657 = vpop.permute.xlu0 %2656
      %v2659 = vsel %vm2192, %v2652, 0
      %v2662 = vsel %vm2196, %v2657, 0
      %2664 = vmatpush.bf16.msra.mxu0 0
      %2665 = vmatpush.bf16.msra.mxu0 0
      %2666 = vmatpush.bf16.msra.mxu0 0
      %2667 = vmatpush.bf16.msra.mxu0 0
      %2668 = vmatpush.bf16.msra.mxu0 0
      %2669 = vmatpush.bf16.msra.mxu0 0
      %2670 = vmatpush.bf16.msra.mxu0 0
      %2671 = vmatpush.bf16.msra.mxu0 %v2662
      %2672 = vmatmul.bf16.gmra.mxu0 %v2659
      %v2673 = vpop.f32.mrf.mxu0
      %v2674 = vadd.f32 0.0, %v2673
      %v2675 = vpop.f32.mrf.mxu0
      %2676 = vdwg.mxu0
      %v2678 = vsel %vm2192, %v2651, 0
      %v2681 = vsel %vm2196, %v2650, 0
      %2683 = vmatpush.bf16.msra.mxu0 0
      %2684 = vmatpush.bf16.msra.mxu0 0
      %2685 = vmatpush.bf16.msra.mxu0 0
      %2686 = vmatpush.bf16.msra.mxu0 0
      %2687 = vmatpush.bf16.msra.mxu0 0
      %2688 = vmatpush.bf16.msra.mxu0 0
      %2689 = vmatpush.bf16.msra.mxu0 0
      %2690 = vmatpush.bf16.msra.mxu0 %v2681
      %2691 = vmatmul.bf16.gmra.mxu0 %v2678
      %v2692 = vpop.f32.mrf.mxu0
      %v2693 = vadd.f32 %v2674, %v2692
      %v2694 = vpop.f32.mrf.mxu0
      %2695 = vdwg.mxu0
      %v2696 = vld [vmem:[%s2232] sm:$0xf]
      %2697 = vrot.lane.b32.xlu0 %v2655, 126
      %v2698 = vpop.permute.xlu0 %2697
      %v2700 = vsel %vm2192, %v2696, 0
      %v2703 = vsel %vm2196, %v2698, 0
      %2705 = vmatpush.bf16.msra.mxu0 0
      %2706 = vmatpush.bf16.msra.mxu0 0
      %2707 = vmatpush.bf16.msra.mxu0 0
      %2708 = vmatpush.bf16.msra.mxu0 0
      %2709 = vmatpush.bf16.msra.mxu0 0
      %2710 = vmatpush.bf16.msra.mxu0 0
      %2711 = vmatpush.bf16.msra.mxu0 0
      %2712 = vmatpush.bf16.msra.mxu0 %v2703
      %2713 = vmatmul.bf16.gmra.mxu0 %v2700
      %v2714 = vpop.f32.mrf.mxu0
      %v2715 = vadd.f32 0.0, %v2714
      %v2716 = vpop.f32.mrf.mxu0
      %2717 = vdwg.mxu0
      %v2718 = vadd.f32 %v2693, %v2715
      %v2719 = vld [vmem:[%s1006] sm:$0xf]
      %v2720 = vld [vmem:[%s2257] sm:$0xf]
      %v2722 = vsel %vm2192, %v2720, 0
      %v2725 = vsel %vm2196, %v2719, 0
      %2727 = vmatpush.bf16.msra.mxu0 0
      %2728 = vmatpush.bf16.msra.mxu0 0
      %2729 = vmatpush.bf16.msra.mxu0 0
      %2730 = vmatpush.bf16.msra.mxu0 0
      %2731 = vmatpush.bf16.msra.mxu0 0
      %2732 = vmatpush.bf16.msra.mxu0 0
      %2733 = vmatpush.bf16.msra.mxu0 0
      %2734 = vmatpush.bf16.msra.mxu0 %v2725
      %2735 = vmatmul.bf16.gmra.mxu0 %v2722
      %v2736 = vpop.f32.mrf.mxu0
      %v2737 = vadd.f32 0.0, %v2736
      %v2738 = vpop.f32.mrf.mxu0
      %2739 = vdwg.mxu0
      %v2740 = vadd.f32 %v2718, %v2737
      %v2741 = vld [vmem:[%s2279] sm:$0xf]
      %v2743 = vunpack.c.l.b16 %v2719
      %v2744 = vpack.c.b16 %v2743, %v2743
      %2745 = vrot.lane.b32.xlu0 %v2744, 127
      %v2746 = vpop.permute.xlu0 %2745
      %v2748 = vsel %vm2192, %v2741, 0
      %v2751 = vsel %vm2196, %v2746, 0
      %2753 = vmatpush.bf16.msra.mxu0 0
      %2754 = vmatpush.bf16.msra.mxu0 0
      %2755 = vmatpush.bf16.msra.mxu0 0
      %2756 = vmatpush.bf16.msra.mxu0 0
      %2757 = vmatpush.bf16.msra.mxu0 0
      %2758 = vmatpush.bf16.msra.mxu0 0
      %2759 = vmatpush.bf16.msra.mxu0 0
      %2760 = vmatpush.bf16.msra.mxu0 %v2751
      %2761 = vmatmul.bf16.gmra.mxu0 %v2748
      %v2762 = vpop.f32.mrf.mxu0
      %v2763 = vadd.f32 0.0, %v2762
      %v2764 = vpop.f32.mrf.mxu0
      %2765 = vdwg.mxu0
      %v2766 = vadd.f32 %v2740, %v2763
      %v2767 = vld [vmem:[%s2306] sm:$0xf]
      %2768 = vrot.lane.b32.xlu0 %v2744, 126
      %v2769 = vpop.permute.xlu0 %2768
      %v2771 = vsel %vm2192, %v2767, 0
      %v2774 = vsel %vm2196, %v2769, 0
      %2776 = vmatpush.bf16.msra.mxu0 0
      %2777 = vmatpush.bf16.msra.mxu0 0
      %2778 = vmatpush.bf16.msra.mxu0 0
      %2779 = vmatpush.bf16.msra.mxu0 0
      %2780 = vmatpush.bf16.msra.mxu0 0
      %2781 = vmatpush.bf16.msra.mxu0 0
      %2782 = vmatpush.bf16.msra.mxu0 0
      %2783 = vmatpush.bf16.msra.mxu0 %v2774
      %2784 = vmatmul.bf16.gmra.mxu0 %v2771
      %v2785 = vpop.f32.mrf.mxu0
      %v2786 = vadd.f32 0.0, %v2785
      %v2787 = vpop.f32.mrf.mxu0
      %2788 = vdwg.mxu0
      %v2789 = vadd.f32 %v2766, %v2786
      %v2790 = vld [vmem:[%s1241] sm:$0xf]
      %v2791 = vld [vmem:[%s2331] sm:$0xf]
      %v2793 = vsel %vm2192, %v2791, 0
      %v2796 = vsel %vm2196, %v2790, 0
      %2798 = vmatpush.bf16.msra.mxu0 0
      %2799 = vmatpush.bf16.msra.mxu0 0
      %2800 = vmatpush.bf16.msra.mxu0 0
      %2801 = vmatpush.bf16.msra.mxu0 0
      %2802 = vmatpush.bf16.msra.mxu0 0
      %2803 = vmatpush.bf16.msra.mxu0 0
      %2804 = vmatpush.bf16.msra.mxu0 0
      %2805 = vmatpush.bf16.msra.mxu0 %v2796
      %2806 = vmatmul.bf16.gmra.mxu0 %v2793
      %v2807 = vpop.f32.mrf.mxu0
      %v2808 = vadd.f32 0.0, %v2807
      %v2809 = vpop.f32.mrf.mxu0
      %2810 = vdwg.mxu0
      %v2811 = vadd.f32 %v2789, %v2808
      %v2812 = vld [vmem:[%s2353] sm:$0xf]
      %v2814 = vunpack.c.l.b16 %v2790
      %v2815 = vpack.c.b16 %v2814, %v2814
      %2816 = vrot.lane.b32.xlu0 %v2815, 127
      %v2817 = vpop.permute.xlu0 %2816
      %v2819 = vsel %vm2192, %v2812, 0
      %v2822 = vsel %vm2196, %v2817, 0
      %2824 = vmatpush.bf16.msra.mxu0 0
      %2825 = vmatpush.bf16.msra.mxu0 0
      %2826 = vmatpush.bf16.msra.mxu0 0
      %2827 = vmatpush.bf16.msra.mxu0 0
      %2828 = vmatpush.bf16.msra.mxu0 0
      %2829 = vmatpush.bf16.msra.mxu0 0
      %2830 = vmatpush.bf16.msra.mxu0 0
      %2831 = vmatpush.bf16.msra.mxu0 %v2822
      %2832 = vmatmul.bf16.gmra.mxu0 %v2819
      %v2833 = vpop.f32.mrf.mxu0
      %v2834 = vadd.f32 0.0, %v2833
      %v2835 = vpop.f32.mrf.mxu0
      %2836 = vdwg.mxu0
      %v2837 = vadd.f32 %v2811, %v2834
      %v2838 = vld [vmem:[%s2380] sm:$0xf]
      %2839 = vrot.lane.b32.xlu0 %v2815, 126
      %v2840 = vpop.permute.xlu0 %2839
      %v2842 = vsel %vm2192, %v2838, 0
      %v2845 = vsel %vm2196, %v2840, 0
      %2847 = vmatpush.bf16.msra.mxu0 0
      %2848 = vmatpush.bf16.msra.mxu0 0
      %2849 = vmatpush.bf16.msra.mxu0 0
      %2850 = vmatpush.bf16.msra.mxu0 0
      %2851 = vmatpush.bf16.msra.mxu0 0
      %2852 = vmatpush.bf16.msra.mxu0 0
      %2853 = vmatpush.bf16.msra.mxu0 0
      %2854 = vmatpush.bf16.msra.mxu0 %v2845
      %2855 = vmatmul.bf16.gmra.mxu0 %v2842
      %v2856 = vpop.f32.mrf.mxu0
      %v2857 = vadd.f32 0.0, %v2856
      %v2858 = vpop.f32.mrf.mxu0
      %2859 = vdwg.mxu0
      %v2860 = vadd.f32 %v2837, %v2857
      %v2861 = vld [vmem:[%s5] sm:$0xff]
      %2863 = vset.pattern.permute.xlu0 0
      %2864 = vperm.xlu0 %2863, %v2861
      %v2865 = vpop.permute.xlu0 %2864
      %v2867 = vadd.f32 %v2860, %v2865
      %vm2868 = vcmp.ge.f32.partialorder %v2867, 0.0
      %v2869 = vld [vmem:[%s6] sm:$0xff]
      %2871 = vset.pattern.permute.xlu0 0
      %2872 = vperm.xlu0 %2871, %v2869
      %v2873 = vpop.permute.xlu0 %2872
      %v2875 = vmul.f32 %v2873, %v2867
      %v2876 = vsel %vm2868, %v2867, %v2875
      %s2877 = scalar_lea.vmem %s278, 16
      %2878 = vst.msk [vmem:[%s2877] sm:$0xff] %vm2192, %v2876
      %v2879 = vld [vmem:[%s1006] sm:$0xf]
      %v2880 = vld [vmem:[%s4] sm:$0xf]
      %v2881 = vld [vmem:[%s2185] sm:$0xf]
      %v2883 = vunpack.c.l.b16 %v2879
      %v2884 = vpack.c.b16 %v2883, %v2883
      %2885 = vrot.lane.b32.xlu0 %v2884, 127
      %v2886 = vpop.permute.xlu0 %2885
      %v2888 = vsel %vm2192, %v2881, 0
      %v2891 = vsel %vm2196, %v2886, 0
      %2893 = vmatpush.bf16.msra.mxu0 0
      %2894 = vmatpush.bf16.msra.mxu0 0
      %2895 = vmatpush.bf16.msra.mxu0 0
      %2896 = vmatpush.bf16.msra.mxu0 0
      %2897 = vmatpush.bf16.msra.mxu0 0
      %2898 = vmatpush.bf16.msra.mxu0 0
      %2899 = vmatpush.bf16.msra.mxu0 0
      %2900 = vmatpush.bf16.msra.mxu0 %v2891
      %2901 = vmatmul.bf16.gmra.mxu0 %v2888
      %v2902 = vpop.f32.mrf.mxu0
      %v2903 = vadd.f32 0.0, %v2902
      %v2904 = vpop.f32.mrf.mxu0
      %2905 = vdwg.mxu0
      %v2907 = vsel %vm2192, %v2880, 0
      %v2910 = vsel %vm2196, %v2879, 0
      %2912 = vmatpush.bf16.msra.mxu0 0
      %2913 = vmatpush.bf16.msra.mxu0 0
      %2914 = vmatpush.bf16.msra.mxu0 0
      %2915 = vmatpush.bf16.msra.mxu0 0
      %2916 = vmatpush.bf16.msra.mxu0 0
      %2917 = vmatpush.bf16.msra.mxu0 0
      %2918 = vmatpush.bf16.msra.mxu0 0
      %2919 = vmatpush.bf16.msra.mxu0 %v2910
      %2920 = vmatmul.bf16.gmra.mxu0 %v2907
      %v2921 = vpop.f32.mrf.mxu0
      %v2922 = vadd.f32 %v2903, %v2921
      %v2923 = vpop.f32.mrf.mxu0
      %2924 = vdwg.mxu0
      %v2925 = vld [vmem:[%s2232] sm:$0xf]
      %2926 = vrot.lane.b32.xlu0 %v2884, 126
      %v2927 = vpop.permute.xlu0 %2926
      %v2929 = vsel %vm2192, %v2925, 0
      %v2932 = vsel %vm2196, %v2927, 0
      %2934 = vmatpush.bf16.msra.mxu0 0
      %2935 = vmatpush.bf16.msra.mxu0 0
      %2936 = vmatpush.bf16.msra.mxu0 0
      %2937 = vmatpush.bf16.msra.mxu0 0
      %2938 = vmatpush.bf16.msra.mxu0 0
      %2939 = vmatpush.bf16.msra.mxu0 0
      %2940 = vmatpush.bf16.msra.mxu0 0
      %2941 = vmatpush.bf16.msra.mxu0 %v2932
      %2942 = vmatmul.bf16.gmra.mxu0 %v2929
      %v2943 = vpop.f32.mrf.mxu0
      %v2944 = vadd.f32 0.0, %v2943
      %v2945 = vpop.f32.mrf.mxu0
      %2946 = vdwg.mxu0
      %v2947 = vadd.f32 %v2922, %v2944
      %v2948 = vld [vmem:[%s1241] sm:$0xf]
      %v2949 = vld [vmem:[%s2257] sm:$0xf]
      %v2951 = vsel %vm2192, %v2949, 0
      %v2954 = vsel %vm2196, %v2948, 0
      %2956 = vmatpush.bf16.msra.mxu0 0
      %2957 = vmatpush.bf16.msra.mxu0 0
      %2958 = vmatpush.bf16.msra.mxu0 0
      %2959 = vmatpush.bf16.msra.mxu0 0
      %2960 = vmatpush.bf16.msra.mxu0 0
      %2961 = vmatpush.bf16.msra.mxu0 0
      %2962 = vmatpush.bf16.msra.mxu0 0
      %2963 = vmatpush.bf16.msra.mxu0 %v2954
      %2964 = vmatmul.bf16.gmra.mxu0 %v2951
      %v2965 = vpop.f32.mrf.mxu0
      %v2966 = vadd.f32 0.0, %v2965
      %v2967 = vpop.f32.mrf.mxu0
      %2968 = vdwg.mxu0
      %v2969 = vadd.f32 %v2947, %v2966
      %v2970 = vld [vmem:[%s2279] sm:$0xf]
      %v2972 = vunpack.c.l.b16 %v2948
      %v2973 = vpack.c.b16 %v2972, %v2972
      %2974 = vrot.lane.b32.xlu0 %v2973, 127
      %v2975 = vpop.permute.xlu0 %2974
      %v2977 = vsel %vm2192, %v2970, 0
      %v2980 = vsel %vm2196, %v2975, 0
      %2982 = vmatpush.bf16.msra.mxu0 0
      %2983 = vmatpush.bf16.msra.mxu0 0
      %2984 = vmatpush.bf16.msra.mxu0 0
      %2985 = vmatpush.bf16.msra.mxu0 0
      %2986 = vmatpush.bf16.msra.mxu0 0
      %2987 = vmatpush.bf16.msra.mxu0 0
      %2988 = vmatpush.bf16.msra.mxu0 0
      %2989 = vmatpush.bf16.msra.mxu0 %v2980
      %2990 = vmatmul.bf16.gmra.mxu0 %v2977
      %v2991 = vpop.f32.mrf.mxu0
      %v2992 = vadd.f32 0.0, %v2991
      %v2993 = vpop.f32.mrf.mxu0
      %2994 = vdwg.mxu0
      %v2995 = vadd.f32 %v2969, %v2992
      %v2996 = vld [vmem:[%s2306] sm:$0xf]
      %2997 = vrot.lane.b32.xlu0 %v2973, 126
      %v2998 = vpop.permute.xlu0 %2997
      %v3000 = vsel %vm2192, %v2996, 0
      %v3003 = vsel %vm2196, %v2998, 0
      %3005 = vmatpush.bf16.msra.mxu0 0
      %3006 = vmatpush.bf16.msra.mxu0 0
      %3007 = vmatpush.bf16.msra.mxu0 0
      %3008 = vmatpush.bf16.msra.mxu0 0
      %3009 = vmatpush.bf16.msra.mxu0 0
      %3010 = vmatpush.bf16.msra.mxu0 0
      %3011 = vmatpush.bf16.msra.mxu0 0
      %3012 = vmatpush.bf16.msra.mxu0 %v3003
      %3013 = vmatmul.bf16.gmra.mxu0 %v3000
      %v3014 = vpop.f32.mrf.mxu0
      %v3015 = vadd.f32 0.0, %v3014
      %v3016 = vpop.f32.mrf.mxu0
      %3017 = vdwg.mxu0
      %v3018 = vadd.f32 %v2995, %v3015
      %v3019 = vld [vmem:[%s1476] sm:$0xf]
      %v3020 = vld [vmem:[%s2331] sm:$0xf]
      %v3022 = vsel %vm2192, %v3020, 0
      %v3025 = vsel %vm2196, %v3019, 0
      %3027 = vmatpush.bf16.msra.mxu0 0
      %3028 = vmatpush.bf16.msra.mxu0 0
      %3029 = vmatpush.bf16.msra.mxu0 0
      %3030 = vmatpush.bf16.msra.mxu0 0
      %3031 = vmatpush.bf16.msra.mxu0 0
      %3032 = vmatpush.bf16.msra.mxu0 0
      %3033 = vmatpush.bf16.msra.mxu0 0
      %3034 = vmatpush.bf16.msra.mxu0 %v3025
      %3035 = vmatmul.bf16.gmra.mxu0 %v3022
      %v3036 = vpop.f32.mrf.mxu0
      %v3037 = vadd.f32 0.0, %v3036
      %v3038 = vpop.f32.mrf.mxu0
      %3039 = vdwg.mxu0
      %v3040 = vadd.f32 %v3018, %v3037
      %v3041 = vld [vmem:[%s2353] sm:$0xf]
      %v3043 = vunpack.c.l.b16 %v3019
      %v3044 = vpack.c.b16 %v3043, %v3043
      %3045 = vrot.lane.b32.xlu0 %v3044, 127
      %v3046 = vpop.permute.xlu0 %3045
      %v3048 = vsel %vm2192, %v3041, 0
      %v3051 = vsel %vm2196, %v3046, 0
      %3053 = vmatpush.bf16.msra.mxu0 0
      %3054 = vmatpush.bf16.msra.mxu0 0
      %3055 = vmatpush.bf16.msra.mxu0 0
      %3056 = vmatpush.bf16.msra.mxu0 0
      %3057 = vmatpush.bf16.msra.mxu0 0
      %3058 = vmatpush.bf16.msra.mxu0 0
      %3059 = vmatpush.bf16.msra.mxu0 0
      %3060 = vmatpush.bf16.msra.mxu0 %v3051
      %3061 = vmatmul.bf16.gmra.mxu0 %v3048
      %v3062 = vpop.f32.mrf.mxu0
      %v3063 = vadd.f32 0.0, %v3062
      %v3064 = vpop.f32.mrf.mxu0
      %3065 = vdwg.mxu0
      %v3066 = vadd.f32 %v3040, %v3063
      %v3067 = vld [vmem:[%s2380] sm:$0xf]
      %3068 = vrot.lane.b32.xlu0 %v3044, 126
      %v3069 = vpop.permute.xlu0 %3068
      %v3071 = vsel %vm2192, %v3067, 0
      %v3074 = vsel %vm2196, %v3069, 0
      %3076 = vmatpush.bf16.msra.mxu0 0
      %3077 = vmatpush.bf16.msra.mxu0 0
      %3078 = vmatpush.bf16.msra.mxu0 0
      %3079 = vmatpush.bf16.msra.mxu0 0
      %3080 = vmatpush.bf16.msra.mxu0 0
      %3081 = vmatpush.bf16.msra.mxu0 0
      %3082 = vmatpush.bf16.msra.mxu0 0
      %3083 = vmatpush.bf16.msra.mxu0 %v3074
      %3084 = vmatmul.bf16.gmra.mxu0 %v3071
      %v3085 = vpop.f32.mrf.mxu0
      %v3086 = vadd.f32 0.0, %v3085
      %v3087 = vpop.f32.mrf.mxu0
      %3088 = vdwg.mxu0
      %v3089 = vadd.f32 %v3066, %v3086
      %v3090 = vld [vmem:[%s5] sm:$0xff]
      %3092 = vset.pattern.permute.xlu0 0
      %3093 = vperm.xlu0 %3092, %v3090
      %v3094 = vpop.permute.xlu0 %3093
      %v3096 = vadd.f32 %v3089, %v3094
      %vm3097 = vcmp.ge.f32.partialorder %v3096, 0.0
      %v3098 = vld [vmem:[%s6] sm:$0xff]
      %3100 = vset.pattern.permute.xlu0 0
      %3101 = vperm.xlu0 %3100, %v3098
      %v3102 = vpop.permute.xlu0 %3101
      %v3104 = vmul.f32 %v3102, %v3096
      %v3105 = vsel %vm3097, %v3096, %v3104
      %s3106 = scalar_lea.vmem %s278, 24
      %3107 = vst.msk [vmem:[%s3106] sm:$0xff] %vm2192, %v3105
      %v3108 = vld [vmem:[%s1241] sm:$0xf]
      %v3109 = vld [vmem:[%s4] sm:$0xf]
      %v3110 = vld [vmem:[%s2185] sm:$0xf]
      %v3112 = vunpack.c.l.b16 %v3108
      %v3113 = vpack.c.b16 %v3112, %v3112
      %3114 = vrot.lane.b32.xlu0 %v3113, 127
      %v3115 = vpop.permute.xlu0 %3114
      %v3117 = vsel %vm2192, %v3110, 0
      %v3120 = vsel %vm2196, %v3115, 0
      %3122 = vmatpush.bf16.msra.mxu0 0
      %3123 = vmatpush.bf16.msra.mxu0 0
      %3124 = vmatpush.bf16.msra.mxu0 0
      %3125 = vmatpush.bf16.msra.mxu0 0
      %3126 = vmatpush.bf16.msra.mxu0 0
      %3127 = vmatpush.bf16.msra.mxu0 0
      %3128 = vmatpush.bf16.msra.mxu0 0
      %3129 = vmatpush.bf16.msra.mxu0 %v3120
      %3130 = vmatmul.bf16.gmra.mxu0 %v3117
      %v3131 = vpop.f32.mrf.mxu0
      %v3132 = vadd.f32 0.0, %v3131
      %v3133 = vpop.f32.mrf.mxu0
      %3134 = vdwg.mxu0
      %v3136 = vsel %vm2192, %v3109, 0
      %v3139 = vsel %vm2196, %v3108, 0
      %3141 = vmatpush.bf16.msra.mxu0 0
      %3142 = vmatpush.bf16.msra.mxu0 0
      %3143 = vmatpush.bf16.msra.mxu0 0
      %3144 = vmatpush.bf16.msra.mxu0 0
      %3145 = vmatpush.bf16.msra.mxu0 0
      %3146 = vmatpush.bf16.msra.mxu0 0
      %3147 = vmatpush.bf16.msra.mxu0 0
      %3148 = vmatpush.bf16.msra.mxu0 %v3139
      %3149 = vmatmul.bf16.gmra.mxu0 %v3136
      %v3150 = vpop.f32.mrf.mxu0
      %v3151 = vadd.f32 %v3132, %v3150
      %v3152 = vpop.f32.mrf.mxu0
      %3153 = vdwg.mxu0
      %v3154 = vld [vmem:[%s2232] sm:$0xf]
      %3155 = vrot.lane.b32.xlu0 %v3113, 126
      %v3156 = vpop.permute.xlu0 %3155
      %v3158 = vsel %vm2192, %v3154, 0
      %v3161 = vsel %vm2196, %v3156, 0
      %3163 = vmatpush.bf16.msra.mxu0 0
      %3164 = vmatpush.bf16.msra.mxu0 0
      %3165 = vmatpush.bf16.msra.mxu0 0
      %3166 = vmatpush.bf16.msra.mxu0 0
      %3167 = vmatpush.bf16.msra.mxu0 0
      %3168 = vmatpush.bf16.msra.mxu0 0
      %3169 = vmatpush.bf16.msra.mxu0 0
      %3170 = vmatpush.bf16.msra.mxu0 %v3161
      %3171 = vmatmul.bf16.gmra.mxu0 %v3158
      %v3172 = vpop.f32.mrf.mxu0
      %v3173 = vadd.f32 0.0, %v3172
      %v3174 = vpop.f32.mrf.mxu0
      %3175 = vdwg.mxu0
      %v3176 = vadd.f32 %v3151, %v3173
      %v3177 = vld [vmem:[%s1476] sm:$0xf]
      %v3178 = vld [vmem:[%s2257] sm:$0xf]
      %v3180 = vsel %vm2192, %v3178, 0
      %v3183 = vsel %vm2196, %v3177, 0
      %3185 = vmatpush.bf16.msra.mxu0 0
      %3186 = vmatpush.bf16.msra.mxu0 0
      %3187 = vmatpush.bf16.msra.mxu0 0
      %3188 = vmatpush.bf16.msra.mxu0 0
      %3189 = vmatpush.bf16.msra.mxu0 0
      %3190 = vmatpush.bf16.msra.mxu0 0
      %3191 = vmatpush.bf16.msra.mxu0 0
      %3192 = vmatpush.bf16.msra.mxu0 %v3183
      %3193 = vmatmul.bf16.gmra.mxu0 %v3180
      %v3194 = vpop.f32.mrf.mxu0
      %v3195 = vadd.f32 0.0, %v3194
      %v3196 = vpop.f32.mrf.mxu0
      %3197 = vdwg.mxu0
      %v3198 = vadd.f32 %v3176, %v3195
      %v3199 = vld [vmem:[%s2279] sm:$0xf]
      %v3201 = vunpack.c.l.b16 %v3177
      %v3202 = vpack.c.b16 %v3201, %v3201
      %3203 = vrot.lane.b32.xlu0 %v3202, 127
      %v3204 = vpop.permute.xlu0 %3203
      %v3206 = vsel %vm2192, %v3199, 0
      %v3209 = vsel %vm2196, %v3204, 0
      %3211 = vmatpush.bf16.msra.mxu0 0
      %3212 = vmatpush.bf16.msra.mxu0 0
      %3213 = vmatpush.bf16.msra.mxu0 0
      %3214 = vmatpush.bf16.msra.mxu0 0
      %3215 = vmatpush.bf16.msra.mxu0 0
      %3216 = vmatpush.bf16.msra.mxu0 0
      %3217 = vmatpush.bf16.msra.mxu0 0
      %3218 = vmatpush.bf16.msra.mxu0 %v3209
      %3219 = vmatmul.bf16.gmra.mxu0 %v3206
      %v3220 = vpop.f32.mrf.mxu0
      %v3221 = vadd.f32 0.0, %v3220
      %v3222 = vpop.f32.mrf.mxu0
      %3223 = vdwg.mxu0
      %v3224 = vadd.f32 %v3198, %v3221
      %v3225 = vld [vmem:[%s2306] sm:$0xf]
      %3226 = vrot.lane.b32.xlu0 %v3202, 126
      %v3227 = vpop.permute.xlu0 %3226
      %v3229 = vsel %vm2192, %v3225, 0
      %v3232 = vsel %vm2196, %v3227, 0
      %3234 = vmatpush.bf16.msra.mxu0 0
      %3235 = vmatpush.bf16.msra.mxu0 0
      %3236 = vmatpush.bf16.msra.mxu0 0
      %3237 = vmatpush.bf16.msra.mxu0 0
      %3238 = vmatpush.bf16.msra.mxu0 0
      %3239 = vmatpush.bf16.msra.mxu0 0
      %3240 = vmatpush.bf16.msra.mxu0 0
      %3241 = vmatpush.bf16.msra.mxu0 %v3232
      %3242 = vmatmul.bf16.gmra.mxu0 %v3229
      %v3243 = vpop.f32.mrf.mxu0
      %v3244 = vadd.f32 0.0, %v3243
      %v3245 = vpop.f32.mrf.mxu0
      %3246 = vdwg.mxu0
      %v3247 = vadd.f32 %v3224, %v3244
      %v3248 = vld [vmem:[%s1711] sm:$0xf]
      %v3249 = vld [vmem:[%s2331] sm:$0xf]
      %v3251 = vsel %vm2192, %v3249, 0
      %v3254 = vsel %vm2196, %v3248, 0
      %3256 = vmatpush.bf16.msra.mxu0 0
      %3257 = vmatpush.bf16.msra.mxu0 0
      %3258 = vmatpush.bf16.msra.mxu0 0
      %3259 = vmatpush.bf16.msra.mxu0 0
      %3260 = vmatpush.bf16.msra.mxu0 0
      %3261 = vmatpush.bf16.msra.mxu0 0
      %3262 = vmatpush.bf16.msra.mxu0 0
      %3263 = vmatpush.bf16.msra.mxu0 %v3254
      %3264 = vmatmul.bf16.gmra.mxu0 %v3251
      %v3265 = vpop.f32.mrf.mxu0
      %v3266 = vadd.f32 0.0, %v3265
      %v3267 = vpop.f32.mrf.mxu0
      %3268 = vdwg.mxu0
      %v3269 = vadd.f32 %v3247, %v3266
      %v3270 = vld [vmem:[%s2353] sm:$0xf]
      %v3272 = vunpack.c.l.b16 %v3248
      %v3273 = vpack.c.b16 %v3272, %v3272
      %3274 = vrot.lane.b32.xlu0 %v3273, 127
      %v3275 = vpop.permute.xlu0 %3274
      %v3277 = vsel %vm2192, %v3270, 0
      %v3280 = vsel %vm2196, %v3275, 0
      %3282 = vmatpush.bf16.msra.mxu0 0
      %3283 = vmatpush.bf16.msra.mxu0 0
      %3284 = vmatpush.bf16.msra.mxu0 0
      %3285 = vmatpush.bf16.msra.mxu0 0
      %3286 = vmatpush.bf16.msra.mxu0 0
      %3287 = vmatpush.bf16.msra.mxu0 0
      %3288 = vmatpush.bf16.msra.mxu0 0
      %3289 = vmatpush.bf16.msra.mxu0 %v3280
      %3290 = vmatmul.bf16.gmra.mxu0 %v3277
      %v3291 = vpop.f32.mrf.mxu0
      %v3292 = vadd.f32 0.0, %v3291
      %v3293 = vpop.f32.mrf.mxu0
      %3294 = vdwg.mxu0
      %v3295 = vadd.f32 %v3269, %v3292
      %v3296 = vld [vmem:[%s2380] sm:$0xf]
      %3297 = vrot.lane.b32.xlu0 %v3273, 126
      %v3298 = vpop.permute.xlu0 %3297
      %v3300 = vsel %vm2192, %v3296, 0
      %v3303 = vsel %vm2196, %v3298, 0
      %3305 = vmatpush.bf16.msra.mxu0 0
      %3306 = vmatpush.bf16.msra.mxu0 0
      %3307 = vmatpush.bf16.msra.mxu0 0
      %3308 = vmatpush.bf16.msra.mxu0 0
      %3309 = vmatpush.bf16.msra.mxu0 0
      %3310 = vmatpush.bf16.msra.mxu0 0
      %3311 = vmatpush.bf16.msra.mxu0 0
      %3312 = vmatpush.bf16.msra.mxu0 %v3303
      %3313 = vmatmul.bf16.gmra.mxu0 %v3300
      %v3314 = vpop.f32.mrf.mxu0
      %v3315 = vadd.f32 0.0, %v3314
      %v3316 = vpop.f32.mrf.mxu0
      %3317 = vdwg.mxu0
      %v3318 = vadd.f32 %v3295, %v3315
      %v3319 = vld [vmem:[%s5] sm:$0xff]
      %3321 = vset.pattern.permute.xlu0 0
      %3322 = vperm.xlu0 %3321, %v3319
      %v3323 = vpop.permute.xlu0 %3322
      %v3325 = vadd.f32 %v3318, %v3323
      %vm3326 = vcmp.ge.f32.partialorder %v3325, 0.0
      %v3327 = vld [vmem:[%s6] sm:$0xff]
      %3329 = vset.pattern.permute.xlu0 0
      %3330 = vperm.xlu0 %3329, %v3327
      %v3331 = vpop.permute.xlu0 %3330
      %v3333 = vmul.f32 %v3331, %v3325
      %v3334 = vsel %vm3326, %v3325, %v3333
      %s3335 = scalar_lea.vmem %s278, 32
      %3336 = vst.msk [vmem:[%s3335] sm:$0xff] %vm2192, %v3334
      %v3337 = vld [vmem:[%s1476] sm:$0xf]
      %v3338 = vld [vmem:[%s4] sm:$0xf]
      %v3339 = vld [vmem:[%s2185] sm:$0xf]
      %v3341 = vunpack.c.l.b16 %v3337
      %v3342 = vpack.c.b16 %v3341, %v3341
      %3343 = vrot.lane.b32.xlu0 %v3342, 127
      %v3344 = vpop.permute.xlu0 %3343
      %v3346 = vsel %vm2192, %v3339, 0
      %v3349 = vsel %vm2196, %v3344, 0
      %3351 = vmatpush.bf16.msra.mxu0 0
      %3352 = vmatpush.bf16.msra.mxu0 0
      %3353 = vmatpush.bf16.msra.mxu0 0
      %3354 = vmatpush.bf16.msra.mxu0 0
      %3355 = vmatpush.bf16.msra.mxu0 0
      %3356 = vmatpush.bf16.msra.mxu0 0
      %3357 = vmatpush.bf16.msra.mxu0 0
      %3358 = vmatpush.bf16.msra.mxu0 %v3349
      %3359 = vmatmul.bf16.gmra.mxu0 %v3346
      %v3360 = vpop.f32.mrf.mxu0
      %v3361 = vadd.f32 0.0, %v3360
      %v3362 = vpop.f32.mrf.mxu0
      %3363 = vdwg.mxu0
      %v3365 = vsel %vm2192, %v3338, 0
      %v3368 = vsel %vm2196, %v3337, 0
      %3370 = vmatpush.bf16.msra.mxu0 0
      %3371 = vmatpush.bf16.msra.mxu0 0
      %3372 = vmatpush.bf16.msra.mxu0 0
      %3373 = vmatpush.bf16.msra.mxu0 0
      %3374 = vmatpush.bf16.msra.mxu0 0
      %3375 = vmatpush.bf16.msra.mxu0 0
      %3376 = vmatpush.bf16.msra.mxu0 0
      %3377 = vmatpush.bf16.msra.mxu0 %v3368
      %3378 = vmatmul.bf16.gmra.mxu0 %v3365
      %v3379 = vpop.f32.mrf.mxu0
      %v3380 = vadd.f32 %v3361, %v3379
      %v3381 = vpop.f32.mrf.mxu0
      %3382 = vdwg.mxu0
      %v3383 = vld [vmem:[%s2232] sm:$0xf]
      %3384 = vrot.lane.b32.xlu0 %v3342, 126
      %v3385 = vpop.permute.xlu0 %3384
      %v3387 = vsel %vm2192, %v3383, 0
      %v3390 = vsel %vm2196, %v3385, 0
      %3392 = vmatpush.bf16.msra.mxu0 0
      %3393 = vmatpush.bf16.msra.mxu0 0
      %3394 = vmatpush.bf16.msra.mxu0 0
      %3395 = vmatpush.bf16.msra.mxu0 0
      %3396 = vmatpush.bf16.msra.mxu0 0
      %3397 = vmatpush.bf16.msra.mxu0 0
      %3398 = vmatpush.bf16.msra.mxu0 0
      %3399 = vmatpush.bf16.msra.mxu0 %v3390
      %3400 = vmatmul.bf16.gmra.mxu0 %v3387
      %v3401 = vpop.f32.mrf.mxu0
      %v3402 = vadd.f32 0.0, %v3401
      %v3403 = vpop.f32.mrf.mxu0
      %3404 = vdwg.mxu0
      %v3405 = vadd.f32 %v3380, %v3402
      %v3406 = vld [vmem:[%s1711] sm:$0xf]
      %v3407 = vld [vmem:[%s2257] sm:$0xf]
      %v3409 = vsel %vm2192, %v3407, 0
      %v3412 = vsel %vm2196, %v3406, 0
      %3414 = vmatpush.bf16.msra.mxu0 0
      %3415 = vmatpush.bf16.msra.mxu0 0
      %3416 = vmatpush.bf16.msra.mxu0 0
      %3417 = vmatpush.bf16.msra.mxu0 0
      %3418 = vmatpush.bf16.msra.mxu0 0
      %3419 = vmatpush.bf16.msra.mxu0 0
      %3420 = vmatpush.bf16.msra.mxu0 0
      %3421 = vmatpush.bf16.msra.mxu0 %v3412
      %3422 = vmatmul.bf16.gmra.mxu0 %v3409
      %v3423 = vpop.f32.mrf.mxu0
      %v3424 = vadd.f32 0.0, %v3423
      %v3425 = vpop.f32.mrf.mxu0
      %3426 = vdwg.mxu0
      %v3427 = vadd.f32 %v3405, %v3424
      %v3428 = vld [vmem:[%s2279] sm:$0xf]
      %v3430 = vunpack.c.l.b16 %v3406
      %v3431 = vpack.c.b16 %v3430, %v3430
      %3432 = vrot.lane.b32.xlu0 %v3431, 127
      %v3433 = vpop.permute.xlu0 %3432
      %v3435 = vsel %vm2192, %v3428, 0
      %v3438 = vsel %vm2196, %v3433, 0
      %3440 = vmatpush.bf16.msra.mxu0 0
      %3441 = vmatpush.bf16.msra.mxu0 0
      %3442 = vmatpush.bf16.msra.mxu0 0
      %3443 = vmatpush.bf16.msra.mxu0 0
      %3444 = vmatpush.bf16.msra.mxu0 0
      %3445 = vmatpush.bf16.msra.mxu0 0
      %3446 = vmatpush.bf16.msra.mxu0 0
      %3447 = vmatpush.bf16.msra.mxu0 %v3438
      %3448 = vmatmul.bf16.gmra.mxu0 %v3435
      %v3449 = vpop.f32.mrf.mxu0
      %v3450 = vadd.f32 0.0, %v3449
      %v3451 = vpop.f32.mrf.mxu0
      %3452 = vdwg.mxu0
      %v3453 = vadd.f32 %v3427, %v3450
      %v3454 = vld [vmem:[%s2306] sm:$0xf]
      %3455 = vrot.lane.b32.xlu0 %v3431, 126
      %v3456 = vpop.permute.xlu0 %3455
      %v3458 = vsel %vm2192, %v3454, 0
      %v3461 = vsel %vm2196, %v3456, 0
      %3463 = vmatpush.bf16.msra.mxu0 0
      %3464 = vmatpush.bf16.msra.mxu0 0
      %3465 = vmatpush.bf16.msra.mxu0 0
      %3466 = vmatpush.bf16.msra.mxu0 0
      %3467 = vmatpush.bf16.msra.mxu0 0
      %3468 = vmatpush.bf16.msra.mxu0 0
      %3469 = vmatpush.bf16.msra.mxu0 0
      %3470 = vmatpush.bf16.msra.mxu0 %v3461
      %3471 = vmatmul.bf16.gmra.mxu0 %v3458
      %v3472 = vpop.f32.mrf.mxu0
      %v3473 = vadd.f32 0.0, %v3472
      %v3474 = vpop.f32.mrf.mxu0
      %3475 = vdwg.mxu0
      %v3476 = vadd.f32 %v3453, %v3473
      %v3477 = vld [vmem:[%s1946] sm:$0xf]
      %v3478 = vld [vmem:[%s2331] sm:$0xf]
      %v3480 = vsel %vm2192, %v3478, 0
      %v3483 = vsel %vm2196, %v3477, 0
      %3485 = vmatpush.bf16.msra.mxu0 0
      %3486 = vmatpush.bf16.msra.mxu0 0
      %3487 = vmatpush.bf16.msra.mxu0 0
      %3488 = vmatpush.bf16.msra.mxu0 0
      %3489 = vmatpush.bf16.msra.mxu0 0
      %3490 = vmatpush.bf16.msra.mxu0 0
      %3491 = vmatpush.bf16.msra.mxu0 0
      %3492 = vmatpush.bf16.msra.mxu0 %v3483
      %3493 = vmatmul.bf16.gmra.mxu0 %v3480
      %v3494 = vpop.f32.mrf.mxu0
      %v3495 = vadd.f32 0.0, %v3494
      %v3496 = vpop.f32.mrf.mxu0
      %3497 = vdwg.mxu0
      %v3498 = vadd.f32 %v3476, %v3495
      %v3499 = vld [vmem:[%s2353] sm:$0xf]
      %v3501 = vunpack.c.l.b16 %v3477
      %v3502 = vpack.c.b16 %v3501, %v3501
      %3503 = vrot.lane.b32.xlu0 %v3502, 127
      %v3504 = vpop.permute.xlu0 %3503
      %v3506 = vsel %vm2192, %v3499, 0
      %v3509 = vsel %vm2196, %v3504, 0
      %3511 = vmatpush.bf16.msra.mxu0 0
      %3512 = vmatpush.bf16.msra.mxu0 0
      %3513 = vmatpush.bf16.msra.mxu0 0
      %3514 = vmatpush.bf16.msra.mxu0 0
      %3515 = vmatpush.bf16.msra.mxu0 0
      %3516 = vmatpush.bf16.msra.mxu0 0
      %3517 = vmatpush.bf16.msra.mxu0 0
      %3518 = vmatpush.bf16.msra.mxu0 %v3509
      %3519 = vmatmul.bf16.gmra.mxu0 %v3506
      %v3520 = vpop.f32.mrf.mxu0
      %v3521 = vadd.f32 0.0, %v3520
      %v3522 = vpop.f32.mrf.mxu0
      %3523 = vdwg.mxu0
      %v3524 = vadd.f32 %v3498, %v3521
      %v3525 = vld [vmem:[%s2380] sm:$0xf]
      %3526 = vrot.lane.b32.xlu0 %v3502, 126
      %v3527 = vpop.permute.xlu0 %3526
      %v3529 = vsel %vm2192, %v3525, 0
      %v3532 = vsel %vm2196, %v3527, 0
      %3534 = vmatpush.bf16.msra.mxu0 0
      %3535 = vmatpush.bf16.msra.mxu0 0
      %3536 = vmatpush.bf16.msra.mxu0 0
      %3537 = vmatpush.bf16.msra.mxu0 0
      %3538 = vmatpush.bf16.msra.mxu0 0
      %3539 = vmatpush.bf16.msra.mxu0 0
      %3540 = vmatpush.bf16.msra.mxu0 0
      %3541 = vmatpush.bf16.msra.mxu0 %v3532
      %3542 = vmatmul.bf16.gmra.mxu0 %v3529
      %v3543 = vpop.f32.mrf.mxu0
      %v3544 = vadd.f32 0.0, %v3543
      %v3545 = vpop.f32.mrf.mxu0
      %3546 = vdwg.mxu0
      %v3547 = vadd.f32 %v3524, %v3544
      %v3548 = vld [vmem:[%s5] sm:$0xff]
      %3550 = vset.pattern.permute.xlu0 0
      %3551 = vperm.xlu0 %3550, %v3548
      %v3552 = vpop.permute.xlu0 %3551
      %v3554 = vadd.f32 %v3547, %v3552
      %vm3555 = vcmp.ge.f32.partialorder %v3554, 0.0
      %v3556 = vld [vmem:[%s6] sm:$0xff]
      %3558 = vset.pattern.permute.xlu0 0
      %3559 = vperm.xlu0 %3558, %v3556
      %v3560 = vpop.permute.xlu0 %3559
      %v3562 = vmul.f32 %v3560, %v3554
      %v3563 = vsel %vm3555, %v3554, %v3562
      %s3564 = scalar_lea.vmem %s278, 40
      %3565 = vst.msk [vmem:[%s3564] sm:$0xff] %vm2192, %v3563
      %v3566 = vld [vmem:[%s1711] sm:$0xf]
      %v3567 = vld [vmem:[%s4] sm:$0xf]
      %v3568 = vld [vmem:[%s2185] sm:$0xf]
      %v3570 = vunpack.c.l.b16 %v3566
      %v3571 = vpack.c.b16 %v3570, %v3570
      %3572 = vrot.lane.b32.xlu0 %v3571, 127
      %v3573 = vpop.permute.xlu0 %3572
      %v3575 = vsel %vm2192, %v3568, 0
      %v3578 = vsel %vm2196, %v3573, 0
      %3580 = vmatpush.bf16.msra.mxu0 0
      %3581 = vmatpush.bf16.msra.mxu0 0
      %3582 = vmatpush.bf16.msra.mxu0 0
      %3583 = vmatpush.bf16.msra.mxu0 0
      %3584 = vmatpush.bf16.msra.mxu0 0
      %3585 = vmatpush.bf16.msra.mxu0 0
      %3586 = vmatpush.bf16.msra.mxu0 0
      %3587 = vmatpush.bf16.msra.mxu0 %v3578
      %3588 = vmatmul.bf16.gmra.mxu0 %v3575
      %v3589 = vpop.f32.mrf.mxu0
      %v3590 = vadd.f32 0.0, %v3589
      %v3591 = vpop.f32.mrf.mxu0
      %3592 = vdwg.mxu0
      %v3594 = vsel %vm2192, %v3567, 0
      %v3597 = vsel %vm2196, %v3566, 0
      %3599 = vmatpush.bf16.msra.mxu0 0
      %3600 = vmatpush.bf16.msra.mxu0 0
      %3601 = vmatpush.bf16.msra.mxu0 0
      %3602 = vmatpush.bf16.msra.mxu0 0
      %3603 = vmatpush.bf16.msra.mxu0 0
      %3604 = vmatpush.bf16.msra.mxu0 0
      %3605 = vmatpush.bf16.msra.mxu0 0
      %3606 = vmatpush.bf16.msra.mxu0 %v3597
      %3607 = vmatmul.bf16.gmra.mxu0 %v3594
      %v3608 = vpop.f32.mrf.mxu0
      %v3609 = vadd.f32 %v3590, %v3608
      %v3610 = vpop.f32.mrf.mxu0
      %3611 = vdwg.mxu0
      %v3612 = vld [vmem:[%s2232] sm:$0xf]
      %3613 = vrot.lane.b32.xlu0 %v3571, 126
      %v3614 = vpop.permute.xlu0 %3613
      %v3616 = vsel %vm2192, %v3612, 0
      %v3619 = vsel %vm2196, %v3614, 0
      %3621 = vmatpush.bf16.msra.mxu0 0
      %3622 = vmatpush.bf16.msra.mxu0 0
      %3623 = vmatpush.bf16.msra.mxu0 0
      %3624 = vmatpush.bf16.msra.mxu0 0
      %3625 = vmatpush.bf16.msra.mxu0 0
      %3626 = vmatpush.bf16.msra.mxu0 0
      %3627 = vmatpush.bf16.msra.mxu0 0
      %3628 = vmatpush.bf16.msra.mxu0 %v3619
      %3629 = vmatmul.bf16.gmra.mxu0 %v3616
      %v3630 = vpop.f32.mrf.mxu0
      %v3631 = vadd.f32 0.0, %v3630
      %v3632 = vpop.f32.mrf.mxu0
      %3633 = vdwg.mxu0
      %v3634 = vadd.f32 %v3609, %v3631
      %v3635 = vld [vmem:[%s1946] sm:$0xf]
      %v3636 = vld [vmem:[%s2257] sm:$0xf]
      %v3638 = vsel %vm2192, %v3636, 0
      %v3641 = vsel %vm2196, %v3635, 0
      %3643 = vmatpush.bf16.msra.mxu0 0
      %3644 = vmatpush.bf16.msra.mxu0 0
      %3645 = vmatpush.bf16.msra.mxu0 0
      %3646 = vmatpush.bf16.msra.mxu0 0
      %3647 = vmatpush.bf16.msra.mxu0 0
      %3648 = vmatpush.bf16.msra.mxu0 0
      %3649 = vmatpush.bf16.msra.mxu0 0
      %3650 = vmatpush.bf16.msra.mxu0 %v3641
      %3651 = vmatmul.bf16.gmra.mxu0 %v3638
      %v3652 = vpop.f32.mrf.mxu0
      %v3653 = vadd.f32 0.0, %v3652
      %v3654 = vpop.f32.mrf.mxu0
      %3655 = vdwg.mxu0
      %v3656 = vadd.f32 %v3634, %v3653
      %v3657 = vld [vmem:[%s2279] sm:$0xf]
      %v3659 = vunpack.c.l.b16 %v3635
      %v3660 = vpack.c.b16 %v3659, %v3659
      %3661 = vrot.lane.b32.xlu0 %v3660, 127
      %v3662 = vpop.permute.xlu0 %3661
      %v3664 = vsel %vm2192, %v3657, 0
      %v3667 = vsel %vm2196, %v3662, 0
      %3669 = vmatpush.bf16.msra.mxu0 0
      %3670 = vmatpush.bf16.msra.mxu0 0
      %3671 = vmatpush.bf16.msra.mxu0 0
      %3672 = vmatpush.bf16.msra.mxu0 0
      %3673 = vmatpush.bf16.msra.mxu0 0
      %3674 = vmatpush.bf16.msra.mxu0 0
      %3675 = vmatpush.bf16.msra.mxu0 0
      %3676 = vmatpush.bf16.msra.mxu0 %v3667
      %3677 = vmatmul.bf16.gmra.mxu0 %v3664
      %v3678 = vpop.f32.mrf.mxu0
      %v3679 = vadd.f32 0.0, %v3678
      %v3680 = vpop.f32.mrf.mxu0
      %3681 = vdwg.mxu0
      %v3682 = vadd.f32 %v3656, %v3679
      %v3683 = vld [vmem:[%s2306] sm:$0xf]
      %3684 = vrot.lane.b32.xlu0 %v3660, 126
      %v3685 = vpop.permute.xlu0 %3684
      %v3687 = vsel %vm2192, %v3683, 0
      %v3690 = vsel %vm2196, %v3685, 0
      %3692 = vmatpush.bf16.msra.mxu0 0
      %3693 = vmatpush.bf16.msra.mxu0 0
      %3694 = vmatpush.bf16.msra.mxu0 0
      %3695 = vmatpush.bf16.msra.mxu0 0
      %3696 = vmatpush.bf16.msra.mxu0 0
      %3697 = vmatpush.bf16.msra.mxu0 0
      %3698 = vmatpush.bf16.msra.mxu0 0
      %3699 = vmatpush.bf16.msra.mxu0 %v3690
      %3700 = vmatmul.bf16.gmra.mxu0 %v3687
      %v3701 = vpop.f32.mrf.mxu0
      %v3702 = vadd.f32 0.0, %v3701
      %v3703 = vpop.f32.mrf.mxu0
      %3704 = vdwg.mxu0
      %v3705 = vadd.f32 %v3682, %v3702
      %v3706 = vld [vmem:[%s2181] sm:$0xf]
      %v3707 = vld [vmem:[%s2331] sm:$0xf]
      %v3709 = vsel %vm2192, %v3707, 0
      %v3712 = vsel %vm2196, %v3706, 0
      %3714 = vmatpush.bf16.msra.mxu0 0
      %3715 = vmatpush.bf16.msra.mxu0 0
      %3716 = vmatpush.bf16.msra.mxu0 0
      %3717 = vmatpush.bf16.msra.mxu0 0
      %3718 = vmatpush.bf16.msra.mxu0 0
      %3719 = vmatpush.bf16.msra.mxu0 0
      %3720 = vmatpush.bf16.msra.mxu0 0
      %3721 = vmatpush.bf16.msra.mxu0 %v3712
      %3722 = vmatmul.bf16.gmra.mxu0 %v3709
      %v3723 = vpop.f32.mrf.mxu0
      %v3724 = vadd.f32 0.0, %v3723
      %v3725 = vpop.f32.mrf.mxu0
      %3726 = vdwg.mxu0
      %v3727 = vadd.f32 %v3705, %v3724
      %v3728 = vld [vmem:[%s2353] sm:$0xf]
      %v3730 = vunpack.c.l.b16 %v3706
      %v3731 = vpack.c.b16 %v3730, %v3730
      %3732 = vrot.lane.b32.xlu0 %v3731, 127
      %v3733 = vpop.permute.xlu0 %3732
      %v3735 = vsel %vm2192, %v3728, 0
      %v3738 = vsel %vm2196, %v3733, 0
      %3740 = vmatpush.bf16.msra.mxu0 0
      %3741 = vmatpush.bf16.msra.mxu0 0
      %3742 = vmatpush.bf16.msra.mxu0 0
      %3743 = vmatpush.bf16.msra.mxu0 0
      %3744 = vmatpush.bf16.msra.mxu0 0
      %3745 = vmatpush.bf16.msra.mxu0 0
      %3746 = vmatpush.bf16.msra.mxu0 0
      %3747 = vmatpush.bf16.msra.mxu0 %v3738
      %3748 = vmatmul.bf16.gmra.mxu0 %v3735
      %v3749 = vpop.f32.mrf.mxu0
      %v3750 = vadd.f32 0.0, %v3749
      %v3751 = vpop.f32.mrf.mxu0
      %3752 = vdwg.mxu0
      %v3753 = vadd.f32 %v3727, %v3750
      %v3754 = vld [vmem:[%s2380] sm:$0xf]
      %3755 = vrot.lane.b32.xlu0 %v3731, 126
      %v3756 = vpop.permute.xlu0 %3755
      %v3758 = vsel %vm2192, %v3754, 0
      %v3761 = vsel %vm2196, %v3756, 0
      %3763 = vmatpush.bf16.msra.mxu0 0
      %3764 = vmatpush.bf16.msra.mxu0 0
      %3765 = vmatpush.bf16.msra.mxu0 0
      %3766 = vmatpush.bf16.msra.mxu0 0
      %3767 = vmatpush.bf16.msra.mxu0 0
      %3768 = vmatpush.bf16.msra.mxu0 0
      %3769 = vmatpush.bf16.msra.mxu0 0
      %3770 = vmatpush.bf16.msra.mxu0 %v3761
      %3771 = vmatmul.bf16.gmra.mxu0 %v3758
      %v3772 = vpop.f32.mrf.mxu0
      %v3773 = vadd.f32 0.0, %v3772
      %v3774 = vpop.f32.mrf.mxu0
      %3775 = vdwg.mxu0
      %v3776 = vadd.f32 %v3753, %v3773
      %v3777 = vld [vmem:[%s5] sm:$0xff]
      %3779 = vset.pattern.permute.xlu0 0
      %3780 = vperm.xlu0 %3779, %v3777
      %v3781 = vpop.permute.xlu0 %3780
      %v3783 = vadd.f32 %v3776, %v3781
      %vm3784 = vcmp.ge.f32.partialorder %v3783, 0.0
      %v3785 = vld [vmem:[%s6] sm:$0xff]
      %3787 = vset.pattern.permute.xlu0 0
      %3788 = vperm.xlu0 %3787, %v3785
      %v3789 = vpop.permute.xlu0 %3788
      %v3791 = vmul.f32 %v3789, %v3783
      %v3792 = vsel %vm3784, %v3783, %v3791
      %s3793 = scalar_lea.vmem %s278, 48
      %3794 = vst.msk [vmem:[%s3793] sm:$0xff] %vm2192, %v3792
      %v3795 = vld [vmem:[%s1946] sm:$0xf]
      %v3796 = vld [vmem:[%s4] sm:$0xf]
      %v3797 = vld [vmem:[%s2185] sm:$0xf]
      %v3799 = vunpack.c.l.b16 %v3795
      %v3800 = vpack.c.b16 %v3799, %v3799
      %3801 = vrot.lane.b32.xlu0 %v3800, 127
      %v3802 = vpop.permute.xlu0 %3801
      %v3804 = vsel %vm2192, %v3797, 0
      %v3807 = vsel %vm2196, %v3802, 0
      %3809 = vmatpush.bf16.msra.mxu0 0
      %3810 = vmatpush.bf16.msra.mxu0 0
      %3811 = vmatpush.bf16.msra.mxu0 0
      %3812 = vmatpush.bf16.msra.mxu0 0
      %3813 = vmatpush.bf16.msra.mxu0 0
      %3814 = vmatpush.bf16.msra.mxu0 0
      %3815 = vmatpush.bf16.msra.mxu0 0
      %3816 = vmatpush.bf16.msra.mxu0 %v3807
      %3817 = vmatmul.bf16.gmra.mxu0 %v3804
      %v3818 = vpop.f32.mrf.mxu0
      %v3819 = vadd.f32 0.0, %v3818
      %v3820 = vpop.f32.mrf.mxu0
      %3821 = vdwg.mxu0
      %v3823 = vsel %vm2192, %v3796, 0
      %v3826 = vsel %vm2196, %v3795, 0
      %3828 = vmatpush.bf16.msra.mxu0 0
      %3829 = vmatpush.bf16.msra.mxu0 0
      %3830 = vmatpush.bf16.msra.mxu0 0
      %3831 = vmatpush.bf16.msra.mxu0 0
      %3832 = vmatpush.bf16.msra.mxu0 0
      %3833 = vmatpush.bf16.msra.mxu0 0
      %3834 = vmatpush.bf16.msra.mxu0 0
      %3835 = vmatpush.bf16.msra.mxu0 %v3826
      %3836 = vmatmul.bf16.gmra.mxu0 %v3823
      %v3837 = vpop.f32.mrf.mxu0
      %v3838 = vadd.f32 %v3819, %v3837
      %v3839 = vpop.f32.mrf.mxu0
      %3840 = vdwg.mxu0
      %v3841 = vld [vmem:[%s2232] sm:$0xf]
      %3842 = vrot.lane.b32.xlu0 %v3800, 126
      %v3843 = vpop.permute.xlu0 %3842
      %v3845 = vsel %vm2192, %v3841, 0
      %v3848 = vsel %vm2196, %v3843, 0
      %3850 = vmatpush.bf16.msra.mxu0 0
      %3851 = vmatpush.bf16.msra.mxu0 0
      %3852 = vmatpush.bf16.msra.mxu0 0
      %3853 = vmatpush.bf16.msra.mxu0 0
      %3854 = vmatpush.bf16.msra.mxu0 0
      %3855 = vmatpush.bf16.msra.mxu0 0
      %3856 = vmatpush.bf16.msra.mxu0 0
      %3857 = vmatpush.bf16.msra.mxu0 %v3848
      %3858 = vmatmul.bf16.gmra.mxu0 %v3845
      %v3859 = vpop.f32.mrf.mxu0
      %v3860 = vadd.f32 0.0, %v3859
      %v3861 = vpop.f32.mrf.mxu0
      %3862 = vdwg.mxu0
      %v3863 = vadd.f32 %v3838, %v3860
      %v3864 = vld [vmem:[%s2181] sm:$0xf]
      %v3865 = vld [vmem:[%s2257] sm:$0xf]
      %v3867 = vsel %vm2192, %v3865, 0
      %v3870 = vsel %vm2196, %v3864, 0
      %3872 = vmatpush.bf16.msra.mxu0 0
      %3873 = vmatpush.bf16.msra.mxu0 0
      %3874 = vmatpush.bf16.msra.mxu0 0
      %3875 = vmatpush.bf16.msra.mxu0 0
      %3876 = vmatpush.bf16.msra.mxu0 0
      %3877 = vmatpush.bf16.msra.mxu0 0
      %3878 = vmatpush.bf16.msra.mxu0 0
      %3879 = vmatpush.bf16.msra.mxu0 %v3870
      %3880 = vmatmul.bf16.gmra.mxu0 %v3867
      %v3881 = vpop.f32.mrf.mxu0
      %v3882 = vadd.f32 0.0, %v3881
      %v3883 = vpop.f32.mrf.mxu0
      %3884 = vdwg.mxu0
      %v3885 = vadd.f32 %v3863, %v3882
      %v3886 = vld [vmem:[%s2279] sm:$0xf]
      %v3888 = vunpack.c.l.b16 %v3864
      %v3889 = vpack.c.b16 %v3888, %v3888
      %3890 = vrot.lane.b32.xlu0 %v3889, 127
      %v3891 = vpop.permute.xlu0 %3890
      %v3893 = vsel %vm2192, %v3886, 0
      %v3896 = vsel %vm2196, %v3891, 0
      %3898 = vmatpush.bf16.msra.mxu0 0
      %3899 = vmatpush.bf16.msra.mxu0 0
      %3900 = vmatpush.bf16.msra.mxu0 0
      %3901 = vmatpush.bf16.msra.mxu0 0
      %3902 = vmatpush.bf16.msra.mxu0 0
      %3903 = vmatpush.bf16.msra.mxu0 0
      %3904 = vmatpush.bf16.msra.mxu0 0
      %3905 = vmatpush.bf16.msra.mxu0 %v3896
      %3906 = vmatmul.bf16.gmra.mxu0 %v3893
      %v3907 = vpop.f32.mrf.mxu0
      %v3908 = vadd.f32 0.0, %v3907
      %v3909 = vpop.f32.mrf.mxu0
      %3910 = vdwg.mxu0
      %v3911 = vadd.f32 %v3885, %v3908
      %v3912 = vld [vmem:[%s2306] sm:$0xf]
      %3913 = vrot.lane.b32.xlu0 %v3889, 126
      %v3914 = vpop.permute.xlu0 %3913
      %v3916 = vsel %vm2192, %v3912, 0
      %v3919 = vsel %vm2196, %v3914, 0
      %3921 = vmatpush.bf16.msra.mxu0 0
      %3922 = vmatpush.bf16.msra.mxu0 0
      %3923 = vmatpush.bf16.msra.mxu0 0
      %3924 = vmatpush.bf16.msra.mxu0 0
      %3925 = vmatpush.bf16.msra.mxu0 0
      %3926 = vmatpush.bf16.msra.mxu0 0
      %3927 = vmatpush.bf16.msra.mxu0 0
      %3928 = vmatpush.bf16.msra.mxu0 %v3919
      %3929 = vmatmul.bf16.gmra.mxu0 %v3916
      %v3930 = vpop.f32.mrf.mxu0
      %v3931 = vadd.f32 0.0, %v3930
      %v3932 = vpop.f32.mrf.mxu0
      %3933 = vdwg.mxu0
      %v3934 = vadd.f32 %v3911, %v3931
      %s3935 = scalar_lea.vmem [#allocation2], 36
      %v3936 = vld [vmem:[%s3935] sm:$0xf]
      %v3937 = vld [vmem:[%s2331] sm:$0xf]
      %v3939 = vsel %vm2192, %v3937, 0
      %v3942 = vsel %vm2196, %v3936, 0
      %3944 = vmatpush.bf16.msra.mxu0 0
      %3945 = vmatpush.bf16.msra.mxu0 0
      %3946 = vmatpush.bf16.msra.mxu0 0
      %3947 = vmatpush.bf16.msra.mxu0 0
      %3948 = vmatpush.bf16.msra.mxu0 0
      %3949 = vmatpush.bf16.msra.mxu0 0
      %3950 = vmatpush.bf16.msra.mxu0 0
      %3951 = vmatpush.bf16.msra.mxu0 %v3942
      %3952 = vmatmul.bf16.gmra.mxu0 %v3939
      %v3953 = vpop.f32.mrf.mxu0
      %v3954 = vadd.f32 0.0, %v3953
      %v3955 = vpop.f32.mrf.mxu0
      %3956 = vdwg.mxu0
      %v3957 = vadd.f32 %v3934, %v3954
      %v3958 = vld [vmem:[%s2353] sm:$0xf]
      %v3960 = vunpack.c.l.b16 %v3936
      %v3961 = vpack.c.b16 %v3960, %v3960
      %3962 = vrot.lane.b32.xlu0 %v3961, 127
      %v3963 = vpop.permute.xlu0 %3962
      %v3965 = vsel %vm2192, %v3958, 0
      %v3968 = vsel %vm2196, %v3963, 0
      %3970 = vmatpush.bf16.msra.mxu0 0
      %3971 = vmatpush.bf16.msra.mxu0 0
      %3972 = vmatpush.bf16.msra.mxu0 0
      %3973 = vmatpush.bf16.msra.mxu0 0
      %3974 = vmatpush.bf16.msra.mxu0 0
      %3975 = vmatpush.bf16.msra.mxu0 0
      %3976 = vmatpush.bf16.msra.mxu0 0
      %3977 = vmatpush.bf16.msra.mxu0 %v3968
      %3978 = vmatmul.bf16.gmra.mxu0 %v3965
      %v3979 = vpop.f32.mrf.mxu0
      %v3980 = vadd.f32 0.0, %v3979
      %v3981 = vpop.f32.mrf.mxu0
      %3982 = vdwg.mxu0
      %v3983 = vadd.f32 %v3957, %v3980
      %v3984 = vld [vmem:[%s2380] sm:$0xf]
      %3985 = vrot.lane.b32.xlu0 %v3961, 126
      %v3986 = vpop.permute.xlu0 %3985
      %v3988 = vsel %vm2192, %v3984, 0
      %v3991 = vsel %vm2196, %v3986, 0
      %3993 = vmatpush.bf16.msra.mxu0 0
      %3994 = vmatpush.bf16.msra.mxu0 0
      %3995 = vmatpush.bf16.msra.mxu0 0
      %3996 = vmatpush.bf16.msra.mxu0 0
      %3997 = vmatpush.bf16.msra.mxu0 0
      %3998 = vmatpush.bf16.msra.mxu0 0
      %3999 = vmatpush.bf16.msra.mxu0 0
      %4000 = vmatpush.bf16.msra.mxu0 %v3991
      %4001 = vmatmul.bf16.gmra.mxu0 %v3988
      %v4002 = vpop.f32.mrf.mxu0
      %v4003 = vadd.f32 0.0, %v4002
      %v4004 = vpop.f32.mrf.mxu0
      %4005 = vdwg.mxu0
      %v4006 = vadd.f32 %v3983, %v4003
      %v4007 = vld [vmem:[%s5] sm:$0xff]
      %4009 = vset.pattern.permute.xlu0 0
      %4010 = vperm.xlu0 %4009, %v4007
      %v4011 = vpop.permute.xlu0 %4010
      %v4013 = vadd.f32 %v4006, %v4011
      %vm4014 = vcmp.ge.f32.partialorder %v4013, 0.0
      %v4015 = vld [vmem:[%s6] sm:$0xff]
      %4017 = vset.pattern.permute.xlu0 0
      %4018 = vperm.xlu0 %4017, %v4015
      %v4019 = vpop.permute.xlu0 %4018
      %v4021 = vmul.f32 %v4019, %v4013
      %v4022 = vsel %vm4014, %v4013, %v4021
      %s4023 = scalar_lea.vmem %s278, 56
      %4024 = vst.msk [vmem:[%s4023] sm:$0xff] %vm2192, %v4022
      %p4025 = scmp.lt.s32.totalorder %s18, 1
      %s4026 = scalar_select %p4025, %s18, 1
      %s4027 = smul.addr %s4026, 8
      %s4028 = smul.addr %s4027, 8
      %s4029 = scalar_lea.vmem %s7, %s4028
      // Predicated region
      $region49: #{conv2_forward.1} parent=47 // pred_check
        %p4030 = pneg %p188
      $region50: #{conv2_forward.1} parent=47 // pred_check_branch
        %4032 = sbr.rel (%p4030) target = $region52
      $region51: #{conv2_forward.1} parent=47 // pred_region
        _
      $region52: #{conv2_forward.1} parent=47 // pred_fallthru
        _
    $region48: #{conv2_forward.1} parent=5 // pred_fallthru
      _
    %p4033 = scmp.le.s32.totalorder 2, %s13
    // Predicated region
    $region53: #{conv2_forward.1} parent=5 // pred_check
      %p4034 = pneg %p4033
    $region54: #{conv2_forward.1} parent=5 // pred_check_branch
      %4036 = sbr.rel (%p4034) target = $region56
    $region55: #{conv2_forward.1} parent=5 // pred_region
      %s4037 = ssub.s32 %s13, 2
      // Predicated region
      $region57: #{conv2_forward.1} parent=55 // pred_check
        %p4038 = pneg %p194
      $region58: #{conv2_forward.1} parent=55 // pred_check_branch
        %4040 = sbr.rel (%p4038) target = $region60
      $region59: #{conv2_forward.1} parent=55 // pred_region
        %p4041 = scmp.lt.s32.totalorder %s19, 1
        %s4042 = scalar_select %p4041, %s19, 1
        %s4043 = smul.addr %s4042, 8
        %s4044 = smul.addr %s4043, 8
        %s4045 = scalar_lea.vmem %s7, %s4044
      $region60: #{conv2_forward.1} parent=55 // pred_fallthru
        _
    $region56: #{conv2_forward.1} parent=5 // pred_fallthru
      _
  $region6: #{conv2_forward.1} parent=0 // loop_footer
    %s17 = sadd.s32 1, %s13
  $region7: #{conv2_forward.1} parent=0 // loop_footer_branch
    %12 = sbr.rel target = $region3
  $region8: #{conv2_forward.1} parent=0 // loop_exit
    _

</llo_original>
